<compile_context>
chip_gen: v7x
topology: tpu7x:2x2x1
jax: 0.10.0
libtpu: 0.0.40
codegen_flags: <defaults>
</compile_context>

<pallas_src>
import functools

import jax
import jax.numpy as jnp
from jax.experimental import pallas as pl
from jax.experimental.pallas import tpu as pltpu

HIDDEN = 40          # hidden_dim (must be divisible by n_head=5)
N_HEAD = 5           # UtilityLayer default
D_H = HIDDEN // N_HEAD
PAD_SIZE = 64        # hard-coded in UtilityBlock.__init__
FFN_DIM = 1024       # feedforward_dim (UtilityLayer default)
LN_EPS = 1e-5


# ----------------------------------------------------------------------------
# Fused kernel: one grid step = one utility block t, whole batch in the block.
# ----------------------------------------------------------------------------
def _utility_layer_kernel(alpha_ref, s_ref, m_ref, b_ref, q_ref,
                          kbd_ref, vbd_ref, w1_ref, b1_ref, w2_ref, b2_ref,
                          o_ref, slab_ref):
    t = pl.program_id(0)                           # which utility block
    bt, m, hdim = s_ref.shape
    rows = bt * m

    srcs = [r[...].astype(jnp.float32) for r in (s_ref, m_ref, b_ref, q_ref)]

    # Select the target utility (t: 0=S, 1=M, 2=B, 3=Q) without a duplicate
    # target input / wrapper-side stack.
    tgt3 = jnp.zeros_like(srcs[0])
    for j in range(4):
        tgt3 = tgt3 + (t == j).astype(jnp.float32) * srcs[j]
    tgt2 = tgt3.reshape(rows, hdim)

    # ---- pad-key attention, all heads in one matmul via block-diag params --
    sim_p = jnp.dot(tgt2, kbd_ref[t], preferred_element_type=jnp.float32)
    sim_p3 = sim_p.reshape(bt, m, N_HEAD * PAD_SIZE)

    max_p, sum_p0, pp0_list = [], [], []
    for hh in range(N_HEAD):
        sp = sim_p3[:, :, hh * PAD_SIZE:(hh + 1) * PAD_SIZE]     # [bt, m, P]
        mp = jnp.max(sp, axis=-1, keepdims=True)                 # [bt, m, 1]
        p0 = jnp.exp(sp - mp)
        max_p.append(mp)
        sum_p0.append(jnp.sum(p0, axis=-1, keepdims=True))
        pp0_list.append(p0)
    pp0_all = jnp.concatenate(pp0_list, axis=-1).reshape(rows, N_HEAD * PAD_SIZE)
    ctx_p0 = jnp.dot(pp0_all, vbd_ref[t],
                     preferred_element_type=jnp.float32).reshape(bt, m, hdim)

    # ---- per-source attention; pad stats reused through an exp rescale -----
    for j in range(4):
        src = srcs[j]
        for hh in range(N_HEAD):
            sl = slice(hh * D_H, (hh + 1) * D_H)
            q_h = tgt3[:, :, sl]                                   # [bt, m, dh]
            k_h = src[:, :, sl]                                    # [bt, m, dh]
            sim_s = jnp.einsum('bqd,bkd->bqk', q_h, k_h,
                               preferred_element_type=jnp.float32)  # [bt, m, m]
            row_max = jnp.maximum(max_p[hh],
                                  jnp.max(sim_s, axis=-1, keepdims=True))
            ps = jnp.exp(sim_s - row_max)
            scale = jnp.exp(max_p[hh] - row_max)                   # pad rescale
            denom = scale * sum_p0[hh] + jnp.sum(ps, axis=-1, keepdims=True)
            ctx_s = jnp.einsum('bqk,bkd->bqd', ps, k_h,
                               preferred_element_type=jnp.float32)
            ctx_h = (scale * ctx_p0[:, :, sl] + ctx_s) / denom     # exact div
            lo = j * HIDDEN + hh * D_H
            slab_ref[:, lo:lo + D_H] = ctx_h.reshape(rows, D_H)

    # ---- single fused linear1 + PReLU + linear2 + PReLU + residual + LN ----
    slab = slab_ref[...]                                           # [rows, 160]
    h1 = jnp.dot(slab, w1_ref[t], preferred_element_type=jnp.float32) + b1_ref[t]
    a1 = alpha_ref[t, 0]
    h1 = jnp.where(h1 >= 0.0, h1, a1 * h1)                         # PReLU 1
    # TODO(synk): nn.Dropout(p=0.1) omitted — identity under eval semantics.
    z = jnp.dot(h1, w2_ref[t], preferred_element_type=jnp.float32) + b2_ref[t]
    a2 = alpha_ref[t, 1]
    z = jnp.where(z >= 0.0, z, a2 * z)                             # PReLU 2
    z = z + tgt2                                                   # residual
    mu = jnp.mean(z, axis=-1, keepdims=True)
    var = jnp.mean((z - mu) ** 2, axis=-1, keepdims=True)
    out = (z - mu) * jax.lax.rsqrt(var + LN_EPS)
    o_ref[0] = out.reshape(bt, m, hdim).astype(o_ref.dtype)


# ----------------------------------------------------------------------------
# Wrapper: one pallas_call for the whole layer.
# ----------------------------------------------------------------------------
def utility_layer(packed, S, M, B, Q):
    b, m, h = S.shape
    assert h == HIDDEN

    src_spec = pl.BlockSpec((b, m, h), lambda t: (0, 0, 0))

    def full(*shape):  # parameter hoisted to VMEM once (constant index_map)
        return pl.BlockSpec(shape, lambda t: (0,) * len(shape))

    out = pl.pallas_call(
        _utility_layer_kernel,
        out_shape=jax.ShapeDtypeStruct((4, b, m, h), S.dtype),
        grid=(4,),
        in_specs=[
            pl.BlockSpec(memory_space=pltpu.MemorySpace.SMEM),     # alphas [4,2]
            src_spec, src_spec, src_spec, src_spec,                # S, M, B, Q
            full(4, h, N_HEAD * PAD_SIZE),                         # Kpad block-diag
            full(4, N_HEAD * PAD_SIZE, h),                         # Vpad block-diag
            full(4, 4 * h, FFN_DIM),                               # W1 (permuted, flat)
            full(4, 1, FFN_DIM),                                   # b1
            full(4, FFN_DIM, h),                                   # W2
            full(4, 1, h),                                         # b2
        ],
        out_specs=pl.BlockSpec((1, b, m, h), lambda t: (t, 0, 0, 0)),
        scratch_shapes=[pltpu.VMEM((b * m, 4 * h), jnp.float32)],  # ctx slab
        compiler_params=pltpu.CompilerParams(
            dimension_semantics=("parallel",),
            vmem_limit_bytes=32 * 1024 * 1024),
    )(packed["alphas"], S, M, B, Q, packed["kbd"], packed["vbd"],
      packed["w1"], packed["b1"], packed["w2"], packed["b2"])

    return out[0], out[1], out[2], out[3]


# ----------------------------------------------------------------------------
# Synthetic parameter init (shapes follow the module __init__) + packing.
# ----------------------------------------------------------------------------
def _kaiming_uniform(key, shape):
    bound = (6.0 / shape[0]) ** 0.5
    return jax.random.uniform(key, shape, jnp.float32, -bound, bound)


def init_block_params(key):
    k_pad, k_w1, k_b1, k_w2, k_b2 = jax.random.split(key, 5)
    return {
        # pad_x exists in the torch module but never affects Y_attends_in_X.
        "pad_y": _kaiming_uniform(k_pad, (PAD_SIZE, HIDDEN)),
        "w1": _kaiming_uniform(k_w1, (4 * HIDDEN, FFN_DIM)),   # linear1 (in, out)
        "b1": jax.random.uniform(k_b1, (FFN_DIM,), jnp.float32, -0.05, 0.05),
        "w2": _kaiming_uniform(k_w2, (FFN_DIM, HIDDEN)),       # linear2 (in, out)
        "b2": jax.random.uniform(k_b2, (HIDDEN,), jnp.float32, -0.05, 0.05),
        "a1": jnp.array(0.25, jnp.float32),                    # nn.PReLU default
        "a2": jnp.array(0.25, jnp.float32),
    }


def _pad_blockdiag(pad_y):
    """Block-diagonal pad key/value matrices so one matmul covers all heads."""
    kbd = jnp.zeros((HIDDEN, N_HEAD * PAD_SIZE), jnp.float32)
    vbd = jnp.zeros((N_HEAD * PAD_SIZE, HIDDEN), jnp.float32)
    for hh in range(N_HEAD):
        blk = pad_y[:, hh * D_H:(hh + 1) * D_H]                 # [P, dh]
        kbd = kbd.at[hh * D_H:(hh + 1) * D_H,
                     hh * PAD_SIZE:(hh + 1) * PAD_SIZE].set(blk.T)
        vbd = vbd.at[hh * PAD_SIZE:(hh + 1) * PAD_SIZE,
                     hh * D_H:(hh + 1) * D_H].set(blk)
    return kbd, vbd


def pack_layer_params(block_params):
    """block_params: 4 per-block dicts in utility order (S, M, B, Q)."""
    kbds, vbds = zip(*[_pad_blockdiag(p["pad_y"]) for p in block_params])
    b1 = jnp.stack([p["b1"].reshape(1, FFN_DIM) for p in block_params])     # [4,1,F]
    w2 = jnp.stack([p["w2"] for p in block_params])                         # [4,F,H]
    b2 = jnp.stack([p["b2"].reshape(1, HIDDEN) for p in block_params])      # [4,1,H]
    alphas = jnp.stack([jnp.stack([p["a1"], p["a2"]]) for p in block_params])

    # Pre-permute + flatten linear1 so slab lanes [j*H:(j+1)*H] (utility j in
    # fixed order S,M,B,Q) multiply the W1 rows of whatever concat position
    # utility j occupies in block t's torch forward ([target, rest ascending]).
    w1p = []
    for t, p in enumerate(block_params):
        w1_t = p["w1"].reshape(4, HIDDEN, FFN_DIM)          # position-major slices
        order = [t] + [j for j in range(4) if j != t]       # utility at each position
        pos = {j: pidx for pidx, j in enumerate(order)}
        w1p.append(jnp.concatenate([w1_t[pos[j]] for j in range(4)], axis=0))
    w1p = jnp.stack(w1p)                                                    # [4,160,F]

    return dict(kbd=jnp.stack(kbds), vbd=jnp.stack(vbds),
                w1=w1p, b1=b1, w2=w2, b2=b2, alphas=alphas)


# ----------------------------------------------------------------------------
# Pure-JAX reference (mirrors the torch module) for a correctness check.
# ----------------------------------------------------------------------------
def _ref_attend(tgt, src, pad_y):
    b, m, _ = tgt.shape
    keys = jnp.concatenate(
        [jnp.broadcast_to(pad_y[None], (b, PAD_SIZE, HIDDEN)), src], axis=1)
    q = tgt.reshape(b, m, N_HEAD, D_H)
    k = keys.reshape(b, PAD_SIZE + src.shape[1], N_HEAD, D_H)
    sim = jnp.einsum('bqhd,bkhd->bhqk', q, k)                # no 1/sqrt(d_h)
    attn = jax.nn.softmax(sim, axis=-1)
    ctx = jnp.einsum('bhqk,bkhd->bqhd', attn, k)
    return ctx.reshape(b, m, HIDDEN)


def _ref_block(t, utils, prm):
    tgt = utils[t]
    order = [t] + [j for j in range(4) if j != t]
    cat = jnp.concatenate([_ref_attend(tgt, utils[j], prm["pad_y"]) for j in order],
                          axis=-1)
    h1 = cat @ prm["w1"] + prm["b1"]
    h1 = jnp.where(h1 >= 0, h1, prm["a1"] * h1)
    z = h1 @ prm["w2"] + prm["b2"]
    z = jnp.where(z >= 0, z, prm["a2"] * z)
    z = z + tgt
    mu = z.mean(-1, keepdims=True)
    var = ((z - mu) ** 2).mean(-1, keepdims=True)
    return (z - mu) * jax.lax.rsqrt(var + LN_EPS)


if __name__ == "__main__":
    key = jax.random.PRNGKey(0)
    k_par, k_s, k_m, k_b, k_q = jax.random.split(key, 5)

    block_keys = jax.random.split(k_par, 4)
    block_params = [init_block_params(k) for k in block_keys]
    packed = pack_layer_params(block_params)

    batch, seq = 2, 8
    S = jax.random.normal(k_s, (batch, seq, HIDDEN), jnp.float32)
    M = jax.random.normal(k_m, (batch, seq, HIDDEN), jnp.float32)
    B = jax.random.normal(k_b, (batch, seq, HIDDEN), jnp.float32)
    Q = jax.random.normal(k_q, (batch, seq, HIDDEN), jnp.float32)

    fwd = jax.jit(functools.partial(utility_layer, packed))
    outs = fwd(S, M, B, Q)
    jax.block_until_ready(outs)

    with jax.default_matmul_precision("highest"):
        refs = [_ref_block(t, [S, M, B, Q], block_params[t]) for t in range(4)]

    for o, r in zip(outs, refs):
        assert o.shape == (batch, seq, HIDDEN)
        assert bool(jnp.isfinite(o).all())
        err = float(jnp.max(jnp.abs(o.astype(jnp.float32) - r)))
        assert err < 2e-2, f"max abs error vs reference: {err}"

    print("KERNEL_OK")
</pallas_src>

<mosaic_0001>
module attributes {stable_mosaic.version = 11 : i64} {
  func.func @_utility_layer_kernel(%arg0: i32, %arg1: memref<4x2xf32, #tpu.memory_space<smem>>, %arg2: memref<2x8x40xf32, #tpu.memory_space<vmem>>, %arg3: memref<2x8x40xf32, #tpu.memory_space<vmem>>, %arg4: memref<2x8x40xf32, #tpu.memory_space<vmem>>, %arg5: memref<2x8x40xf32, #tpu.memory_space<vmem>>, %arg6: memref<4x40x320xf32, #tpu.memory_space<vmem>>, %arg7: memref<4x320x40xf32, #tpu.memory_space<vmem>>, %arg8: memref<4x160x1024xf32, #tpu.memory_space<vmem>>, %arg9: memref<4x1x1024xf32, #tpu.memory_space<vmem>>, %arg10: memref<4x1024x40xf32, #tpu.memory_space<vmem>>, %arg11: memref<4x1x40xf32, #tpu.memory_space<vmem>>, %arg12: memref<1x2x8x40xf32, #tpu.memory_space<vmem>>, %arg13: memref<16x160xf32, #tpu.memory_space<vmem>>) attributes {dimension_semantics = [#tpu.dimension_semantics<parallel>], iteration_bounds = array<i64: 4>, scalar_prefetch = 0 : i64, scratch_operands = 1 : i64, tpu.core_type = #tpu.core_type<tc>, window_params = [{transform_indices = @transform_0, window_bounds = array<i64: 4, 2>}, {pipeline_mode = #tpu.pipeline_mode<synchronous>, transform_indices = @transform_1, window_bounds = array<i64: 2, 8, 40>}, {pipeline_mode = #tpu.pipeline_mode<synchronous>, transform_indices = @transform_2, window_bounds = array<i64: 2, 8, 40>}, {pipeline_mode = #tpu.pipeline_mode<synchronous>, transform_indices = @transform_3, window_bounds = array<i64: 2, 8, 40>}, {pipeline_mode = #tpu.pipeline_mode<synchronous>, transform_indices = @transform_4, window_bounds = array<i64: 2, 8, 40>}, {pipeline_mode = #tpu.pipeline_mode<synchronous>, transform_indices = @transform_5, window_bounds = array<i64: 4, 40, 320>}, {pipeline_mode = #tpu.pipeline_mode<synchronous>, transform_indices = @transform_6, window_bounds = array<i64: 4, 320, 40>}, {pipeline_mode = #tpu.pipeline_mode<synchronous>, transform_indices = @transform_7, window_bounds = array<i64: 4, 160, 1024>}, {pipeline_mode = #tpu.pipeline_mode<synchronous>, transform_indices = @transform_8, window_bounds = array<i64: 4, 1, 1024>}, {pipeline_mode = #tpu.pipeline_mode<synchronous>, transform_indices = @transform_9, window_bounds = array<i64: 4, 1024, 40>}, {pipeline_mode = #tpu.pipeline_mode<synchronous>, transform_indices = @transform_10, window_bounds = array<i64: 4, 1, 40>}, {transform_indices = @transform_11, window_bounds = array<i64: 1, 2, 8, 40>}]} {
    %c0 = arith.constant 0 : index
    %c0_0 = arith.constant 0 : index
    %c0_1 = arith.constant 0 : index
    %0 = vector.load %arg2[%c0, %c0_0, %c0_1] : memref<2x8x40xf32, #tpu.memory_space<vmem>>, vector<2x8x40xf32>
    %c0_2 = arith.constant 0 : index
    %c0_3 = arith.constant 0 : index
    %c0_4 = arith.constant 0 : index
    %1 = vector.load %arg3[%c0_2, %c0_3, %c0_4] : memref<2x8x40xf32, #tpu.memory_space<vmem>>, vector<2x8x40xf32>
    %c0_5 = arith.constant 0 : index
    %c0_6 = arith.constant 0 : index
    %c0_7 = arith.constant 0 : index
    %2 = vector.load %arg4[%c0_5, %c0_6, %c0_7] : memref<2x8x40xf32, #tpu.memory_space<vmem>>, vector<2x8x40xf32>
    %c0_8 = arith.constant 0 : index
    %c0_9 = arith.constant 0 : index
    %c0_10 = arith.constant 0 : index
    %3 = vector.load %arg5[%c0_8, %c0_9, %c0_10] : memref<2x8x40xf32, #tpu.memory_space<vmem>>, vector<2x8x40xf32>
    %cst = arith.constant 0.000000e+00 : f32
    %4 = vector.broadcast %cst : f32 to vector<2x8x40xf32>
    %c0_i32 = arith.constant 0 : i32
    %5 = arith.cmpi eq, %arg0, %c0_i32 : i32
    %6 = arith.extui %5 : i1 to i32
    %7 = arith.sitofp %6 : i32 to f32
    %8 = vector.broadcast %7 : f32 to vector<2x8x40xf32>
    %9 = arith.mulf %8, %0 : vector<2x8x40xf32>
    %10 = arith.addf %4, %9 : vector<2x8x40xf32>
    %c1_i32 = arith.constant 1 : i32
    %11 = arith.cmpi eq, %arg0, %c1_i32 : i32
    %12 = arith.extui %11 : i1 to i32
    %13 = arith.sitofp %12 : i32 to f32
    %14 = vector.broadcast %13 : f32 to vector<2x8x40xf32>
    %15 = arith.mulf %14, %1 : vector<2x8x40xf32>
    %16 = arith.addf %10, %15 : vector<2x8x40xf32>
    %c2_i32 = arith.constant 2 : i32
    %17 = arith.cmpi eq, %arg0, %c2_i32 : i32
    %18 = arith.extui %17 : i1 to i32
    %19 = arith.sitofp %18 : i32 to f32
    %20 = vector.broadcast %19 : f32 to vector<2x8x40xf32>
    %21 = arith.mulf %20, %2 : vector<2x8x40xf32>
    %22 = arith.addf %16, %21 : vector<2x8x40xf32>
    %c3_i32 = arith.constant 3 : i32
    %23 = arith.cmpi eq, %arg0, %c3_i32 : i32
    %24 = arith.extui %23 : i1 to i32
    %25 = arith.sitofp %24 : i32 to f32
    %26 = vector.broadcast %25 : f32 to vector<2x8x40xf32>
    %27 = arith.mulf %26, %3 : vector<2x8x40xf32>
    %28 = arith.addf %22, %27 : vector<2x8x40xf32>
    %29 = vector.shape_cast %28 : vector<2x8x40xf32> to vector<16x40xf32>
    %30 = arith.index_cast %arg0 : i32 to index
    %c0_11 = arith.constant 0 : index
    %c0_12 = arith.constant 0 : index
    %31 = vector.load %arg6[%30, %c0_11, %c0_12] : memref<4x40x320xf32, #tpu.memory_space<vmem>>, vector<1x40x320xf32>
    %32 = vector.shape_cast %31 : vector<1x40x320xf32> to vector<40x320xf32>
    %cst_13 = arith.constant dense<0.000000e+00> : vector<16x320xf32>
    %33 = tpu.matmul %29, %32, %cst_13 {dimension_numbers = #tpu.dot_dimension_numbers<[1], [0], [0], [1], [0, 0, 1, 1], [], []>} : vector<16x40xf32>, vector<40x320xf32>, vector<16x320xf32> -> vector<16x320xf32>
    %34 = vector.shape_cast %33 : vector<16x320xf32> to vector<2x8x320xf32>
    %35 = vector.extract_strided_slice %34 {offsets = [0, 0, 0], sizes = [2, 8, 64], strides = [1, 1, 1]} : vector<2x8x320xf32> to vector<2x8x64xf32>
    %cst_14 = arith.constant dense<0xFF800000> : vector<2x8xf32>
    %36 = vector.multi_reduction <maximumf>, %35, %cst_14 [2] : vector<2x8x64xf32> to vector<2x8xf32>
    %37 = vector.shape_cast %36 : vector<2x8xf32> to vector<2x8x1xf32>
    %38 = vector.broadcast %37 : vector<2x8x1xf32> to vector<2x8x64xf32>
    %39 = arith.subf %35, %38 : vector<2x8x64xf32>
    %40 = math.exp %39 : vector<2x8x64xf32>
    %cst_15 = arith.constant dense<0.000000e+00> : vector<2x8xf32>
    %41 = vector.multi_reduction <add>, %40, %cst_15 [2] : vector<2x8x64xf32> to vector<2x8xf32>
    %42 = vector.shape_cast %41 : vector<2x8xf32> to vector<2x8x1xf32>
    %43 = vector.extract_strided_slice %34 {offsets = [0, 0, 64], sizes = [2, 8, 64], strides = [1, 1, 1]} : vector<2x8x320xf32> to vector<2x8x64xf32>
    %cst_16 = arith.constant dense<0xFF800000> : vector<2x8xf32>
    %44 = vector.multi_reduction <maximumf>, %43, %cst_16 [2] : vector<2x8x64xf32> to vector<2x8xf32>
    %45 = vector.shape_cast %44 : vector<2x8xf32> to vector<2x8x1xf32>
    %46 = vector.broadcast %45 : vector<2x8x1xf32> to vector<2x8x64xf32>
    %47 = arith.subf %43, %46 : vector<2x8x64xf32>
    %48 = math.exp %47 : vector<2x8x64xf32>
    %cst_17 = arith.constant dense<0.000000e+00> : vector<2x8xf32>
    %49 = vector.multi_reduction <add>, %48, %cst_17 [2] : vector<2x8x64xf32> to vector<2x8xf32>
    %50 = vector.shape_cast %49 : vector<2x8xf32> to vector<2x8x1xf32>
    %51 = vector.extract_strided_slice %34 {offsets = [0, 0, 128], sizes = [2, 8, 64], strides = [1, 1, 1]} : vector<2x8x320xf32> to vector<2x8x64xf32>
    %cst_18 = arith.constant dense<0xFF800000> : vector<2x8xf32>
    %52 = vector.multi_reduction <maximumf>, %51, %cst_18 [2] : vector<2x8x64xf32> to vector<2x8xf32>
    %53 = vector.shape_cast %52 : vector<2x8xf32> to vector<2x8x1xf32>
    %54 = vector.broadcast %53 : vector<2x8x1xf32> to vector<2x8x64xf32>
    %55 = arith.subf %51, %54 : vector<2x8x64xf32>
    %56 = math.exp %55 : vector<2x8x64xf32>
    %cst_19 = arith.constant dense<0.000000e+00> : vector<2x8xf32>
    %57 = vector.multi_reduction <add>, %56, %cst_19 [2] : vector<2x8x64xf32> to vector<2x8xf32>
    %58 = vector.shape_cast %57 : vector<2x8xf32> to vector<2x8x1xf32>
    %59 = vector.extract_strided_slice %34 {offsets = [0, 0, 192], sizes = [2, 8, 64], strides = [1, 1, 1]} : vector<2x8x320xf32> to vector<2x8x64xf32>
    %cst_20 = arith.constant dense<0xFF800000> : vector<2x8xf32>
    %60 = vector.multi_reduction <maximumf>, %59, %cst_20 [2] : vector<2x8x64xf32> to vector<2x8xf32>
    %61 = vector.shape_cast %60 : vector<2x8xf32> to vector<2x8x1xf32>
    %62 = vector.broadcast %61 : vector<2x8x1xf32> to vector<2x8x64xf32>
    %63 = arith.subf %59, %62 : vector<2x8x64xf32>
    %64 = math.exp %63 : vector<2x8x64xf32>
    %cst_21 = arith.constant dense<0.000000e+00> : vector<2x8xf32>
    %65 = vector.multi_reduction <add>, %64, %cst_21 [2] : vector<2x8x64xf32> to vector<2x8xf32>
    %66 = vector.shape_cast %65 : vector<2x8xf32> to vector<2x8x1xf32>
    %67 = vector.extract_strided_slice %34 {offsets = [0, 0, 256], sizes = [2, 8, 64], strides = [1, 1, 1]} : vector<2x8x320xf32> to vector<2x8x64xf32>
    %cst_22 = arith.constant dense<0xFF800000> : vector<2x8xf32>
    %68 = vector.multi_reduction <maximumf>, %67, %cst_22 [2] : vector<2x8x64xf32> to vector<2x8xf32>
    %69 = vector.shape_cast %68 : vector<2x8xf32> to vector<2x8x1xf32>
    %70 = vector.broadcast %69 : vector<2x8x1xf32> to vector<2x8x64xf32>
    %71 = arith.subf %67, %70 : vector<2x8x64xf32>
    %72 = math.exp %71 : vector<2x8x64xf32>
    %cst_23 = arith.constant dense<0.000000e+00> : vector<2x8xf32>
    %73 = vector.multi_reduction <add>, %72, %cst_23 [2] : vector<2x8x64xf32> to vector<2x8xf32>
    %74 = vector.shape_cast %73 : vector<2x8xf32> to vector<2x8x1xf32>
    %75 = tpu.concatenate %40, %48, %56, %64, %72 in 2 : vector<2x8x64xf32>, vector<2x8x64xf32>, vector<2x8x64xf32>, vector<2x8x64xf32>, vector<2x8x64xf32> -> vector<2x8x320xf32>
    %76 = vector.shape_cast %75 : vector<2x8x320xf32> to vector<16x320xf32>
    %77 = arith.index_cast %arg0 : i32 to index
    %c0_24 = arith.constant 0 : index
    %c0_25 = arith.constant 0 : index
    %78 = vector.load %arg7[%77, %c0_24, %c0_25] : memref<4x320x40xf32, #tpu.memory_space<vmem>>, vector<1x320x40xf32>
    %79 = vector.shape_cast %78 : vector<1x320x40xf32> to vector<320x40xf32>
    %cst_26 = arith.constant dense<0.000000e+00> : vector<16x40xf32>
    %80 = tpu.matmul %76, %79, %cst_26 {dimension_numbers = #tpu.dot_dimension_numbers<[1], [0], [0], [1], [0, 0, 1, 1], [], []>} : vector<16x320xf32>, vector<320x40xf32>, vector<16x40xf32> -> vector<16x40xf32>
    %81 = vector.shape_cast %80 : vector<16x40xf32> to vector<2x8x40xf32>
    %82 = vector.extract_strided_slice %28 {offsets = [0, 0, 0], sizes = [2, 8, 8], strides = [1, 1, 1]} : vector<2x8x40xf32> to vector<2x8x8xf32>
    %83 = vector.extract_strided_slice %0 {offsets = [0, 0, 0], sizes = [2, 8, 8], strides = [1, 1, 1]} : vector<2x8x40xf32> to vector<2x8x8xf32>
    "tpu.trace_start"() <{level = 10 : i32, message = "bqd,bkd->bqk"}> : () -> ()
    %cst_27 = arith.constant dense<0.000000e+00> : vector<2x8x8xf32>
    %84 = tpu.matmul %82, %83, %cst_27 {dimension_numbers = #tpu.dot_dimension_numbers<[2], [2], [1], [1], [0, 0, 0, 1, 1, 1], [0], [0]>} : vector<2x8x8xf32>, vector<2x8x8xf32>, vector<2x8x8xf32> -> vector<2x8x8xf32>
    "tpu.trace_stop"() : () -> ()
    %cst_28 = arith.constant dense<0xFF800000> : vector<2x8xf32>
    %85 = vector.multi_reduction <maximumf>, %84, %cst_28 [2] : vector<2x8x8xf32> to vector<2x8xf32>
    %86 = vector.shape_cast %85 : vector<2x8xf32> to vector<2x8x1xf32>
    %87 = arith.maximumf %37, %86 : vector<2x8x1xf32>
    %88 = vector.broadcast %87 : vector<2x8x1xf32> to vector<2x8x8xf32>
    %89 = arith.subf %84, %88 : vector<2x8x8xf32>
    %90 = math.exp %89 : vector<2x8x8xf32>
    %91 = arith.subf %37, %87 : vector<2x8x1xf32>
    %92 = math.exp %91 : vector<2x8x1xf32>
    %93 = arith.mulf %92, %42 : vector<2x8x1xf32>
    %cst_29 = arith.constant dense<0.000000e+00> : vector<2x8xf32>
    %94 = vector.multi_reduction <add>, %90, %cst_29 [2] : vector<2x8x8xf32> to vector<2x8xf32>
    %95 = vector.shape_cast %94 : vector<2x8xf32> to vector<2x8x1xf32>
    %96 = arith.addf %93, %95 : vector<2x8x1xf32>
    "tpu.trace_start"() <{level = 10 : i32, message = "bqk,bkd->bqd"}> : () -> ()
    %cst_30 = arith.constant dense<0.000000e+00> : vector<2x8x8xf32>
    %97 = tpu.matmul %90, %83, %cst_30 {dimension_numbers = #tpu.dot_dimension_numbers<[2], [1], [1], [2], [0, 0, 0, 1, 1, 2], [0], [0]>} : vector<2x8x8xf32>, vector<2x8x8xf32>, vector<2x8x8xf32> -> vector<2x8x8xf32>
    "tpu.trace_stop"() : () -> ()
    %98 = vector.extract_strided_slice %81 {offsets = [0, 0, 0], sizes = [2, 8, 8], strides = [1, 1, 1]} : vector<2x8x40xf32> to vector<2x8x8xf32>
    %99 = vector.broadcast %92 : vector<2x8x1xf32> to vector<2x8x8xf32>
    %100 = arith.mulf %99, %98 : vector<2x8x8xf32>
    %101 = arith.addf %100, %97 : vector<2x8x8xf32>
    %102 = vector.broadcast %96 : vector<2x8x1xf32> to vector<2x8x8xf32>
    %103 = arith.divf %101, %102 : vector<2x8x8xf32>
    %104 = vector.shape_cast %103 : vector<2x8x8xf32> to vector<16x8xf32>
    %c0_31 = arith.constant 0 : index
    %c0_32 = arith.constant 0 : index
    %105 = vector.load %arg13[%c0_31, %c0_32] : memref<16x160xf32, #tpu.memory_space<vmem>>, vector<16x8xf32>
    tpu.vector_store %arg13[%c0_31, %c0_32], %104 {strides = array<i32>} : memref<16x160xf32, #tpu.memory_space<vmem>>, vector<16x8xf32>,
    %106 = vector.extract_strided_slice %28 {offsets = [0, 0, 8], sizes = [2, 8, 8], strides = [1, 1, 1]} : vector<2x8x40xf32> to vector<2x8x8xf32>
    %107 = vector.extract_strided_slice %0 {offsets = [0, 0, 8], sizes = [2, 8, 8], strides = [1, 1, 1]} : vector<2x8x40xf32> to vector<2x8x8xf32>
    "tpu.trace_start"() <{level = 10 : i32, message = "bqd,bkd->bqk"}> : () -> ()
    %cst_33 = arith.constant dense<0.000000e+00> : vector<2x8x8xf32>
    %108 = tpu.matmul %106, %107, %cst_33 {dimension_numbers = #tpu.dot_dimension_numbers<[2], [2], [1], [1], [0, 0, 0, 1, 1, 1], [0], [0]>} : vector<2x8x8xf32>, vector<2x8x8xf32>, vector<2x8x8xf32> -> vector<2x8x8xf32>
    "tpu.trace_stop"() : () -> ()
    %cst_34 = arith.constant dense<0xFF800000> : vector<2x8xf32>
    %109 = vector.multi_reduction <maximumf>, %108, %cst_34 [2] : vector<2x8x8xf32> to vector<2x8xf32>
    %110 = vector.shape_cast %109 : vector<2x8xf32> to vector<2x8x1xf32>
    %111 = arith.maximumf %45, %110 : vector<2x8x1xf32>
    %112 = vector.broadcast %111 : vector<2x8x1xf32> to vector<2x8x8xf32>
    %113 = arith.subf %108, %112 : vector<2x8x8xf32>
    %114 = math.exp %113 : vector<2x8x8xf32>
    %115 = arith.subf %45, %111 : vector<2x8x1xf32>
    %116 = math.exp %115 : vector<2x8x1xf32>
    %117 = arith.mulf %116, %50 : vector<2x8x1xf32>
    %cst_35 = arith.constant dense<0.000000e+00> : vector<2x8xf32>
    %118 = vector.multi_reduction <add>, %114, %cst_35 [2] : vector<2x8x8xf32> to vector<2x8xf32>
    %119 = vector.shape_cast %118 : vector<2x8xf32> to vector<2x8x1xf32>
    %120 = arith.addf %117, %119 : vector<2x8x1xf32>
    "tpu.trace_start"() <{level = 10 : i32, message = "bqk,bkd->bqd"}> : () -> ()
    %cst_36 = arith.constant dense<0.000000e+00> : vector<2x8x8xf32>
    %121 = tpu.matmul %114, %107, %cst_36 {dimension_numbers = #tpu.dot_dimension_numbers<[2], [1], [1], [2], [0, 0, 0, 1, 1, 2], [0], [0]>} : vector<2x8x8xf32>, vector<2x8x8xf32>, vector<2x8x8xf32> -> vector<2x8x8xf32>
    "tpu.trace_stop"() : () -> ()
    %122 = vector.extract_strided_slice %81 {offsets = [0, 0, 8], sizes = [2, 8, 8], strides = [1, 1, 1]} : vector<2x8x40xf32> to vector<2x8x8xf32>
    %123 = vector.broadcast %116 : vector<2x8x1xf32> to vector<2x8x8xf32>
    %124 = arith.mulf %123, %122 : vector<2x8x8xf32>
    %125 = arith.addf %124, %121 : vector<2x8x8xf32>
    %126 = vector.broadcast %120 : vector<2x8x1xf32> to vector<2x8x8xf32>
    %127 = arith.divf %125, %126 : vector<2x8x8xf32>
    %128 = vector.shape_cast %127 : vector<2x8x8xf32> to vector<16x8xf32>
    %c0_37 = arith.constant 0 : index
    %c8 = arith.constant 8 : index
    %129 = vector.load %arg13[%c0_37, %c8] : memref<16x160xf32, #tpu.memory_space<vmem>>, vector<16x8xf32>
    tpu.vector_store %arg13[%c0_37, %c8], %128 {strides = array<i32>} : memref<16x160xf32, #tpu.memory_space<vmem>>, vector<16x8xf32>,
    %130 = vector.extract_strided_slice %28 {offsets = [0, 0, 16], sizes = [2, 8, 8], strides = [1, 1, 1]} : vector<2x8x40xf32> to vector<2x8x8xf32>
    %131 = vector.extract_strided_slice %0 {offsets = [0, 0, 16], sizes = [2, 8, 8], strides = [1, 1, 1]} : vector<2x8x40xf32> to vector<2x8x8xf32>
    "tpu.trace_start"() <{level = 10 : i32, message = "bqd,bkd->bqk"}> : () -> ()
    %cst_38 = arith.constant dense<0.000000e+00> : vector<2x8x8xf32>
    %132 = tpu.matmul %130, %131, %cst_38 {dimension_numbers = #tpu.dot_dimension_numbers<[2], [2], [1], [1], [0, 0, 0, 1, 1, 1], [0], [0]>} : vector<2x8x8xf32>, vector<2x8x8xf32>, vector<2x8x8xf32> -> vector<2x8x8xf32>
    "tpu.trace_stop"() : () -> ()
    %cst_39 = arith.constant dense<0xFF800000> : vector<2x8xf32>
    %133 = vector.multi_reduction <maximumf>, %132, %cst_39 [2] : vector<2x8x8xf32> to vector<2x8xf32>
    %134 = vector.shape_cast %133 : vector<2x8xf32> to vector<2x8x1xf32>
    %135 = arith.maximumf %53, %134 : vector<2x8x1xf32>
    %136 = vector.broadcast %135 : vector<2x8x1xf32> to vector<2x8x8xf32>
    %137 = arith.subf %132, %136 : vector<2x8x8xf32>
    %138 = math.exp %137 : vector<2x8x8xf32>
    %139 = arith.subf %53, %135 : vector<2x8x1xf32>
    %140 = math.exp %139 : vector<2x8x1xf32>
    %141 = arith.mulf %140, %58 : vector<2x8x1xf32>
    %cst_40 = arith.constant dense<0.000000e+00> : vector<2x8xf32>
    %142 = vector.multi_reduction <add>, %138, %cst_40 [2] : vector<2x8x8xf32> to vector<2x8xf32>
    %143 = vector.shape_cast %142 : vector<2x8xf32> to vector<2x8x1xf32>
    %144 = arith.addf %141, %143 : vector<2x8x1xf32>
    "tpu.trace_start"() <{level = 10 : i32, message = "bqk,bkd->bqd"}> : () -> ()
    %cst_41 = arith.constant dense<0.000000e+00> : vector<2x8x8xf32>
    %145 = tpu.matmul %138, %131, %cst_41 {dimension_numbers = #tpu.dot_dimension_numbers<[2], [1], [1], [2], [0, 0, 0, 1, 1, 2], [0], [0]>} : vector<2x8x8xf32>, vector<2x8x8xf32>, vector<2x8x8xf32> -> vector<2x8x8xf32>
    "tpu.trace_stop"() : () -> ()
    %146 = vector.extract_strided_slice %81 {offsets = [0, 0, 16], sizes = [2, 8, 8], strides = [1, 1, 1]} : vector<2x8x40xf32> to vector<2x8x8xf32>
    %147 = vector.broadcast %140 : vector<2x8x1xf32> to vector<2x8x8xf32>
    %148 = arith.mulf %147, %146 : vector<2x8x8xf32>
    %149 = arith.addf %148, %145 : vector<2x8x8xf32>
    %150 = vector.broadcast %144 : vector<2x8x1xf32> to vector<2x8x8xf32>
    %151 = arith.divf %149, %150 : vector<2x8x8xf32>
    %152 = vector.shape_cast %151 : vector<2x8x8xf32> to vector<16x8xf32>
    %c0_42 = arith.constant 0 : index
    %c16 = arith.constant 16 : index
    %153 = vector.load %arg13[%c0_42, %c16] : memref<16x160xf32, #tpu.memory_space<vmem>>, vector<16x8xf32>
    tpu.vector_store %arg13[%c0_42, %c16], %152 {strides = array<i32>} : memref<16x160xf32, #tpu.memory_space<vmem>>, vector<16x8xf32>,
    %154 = vector.extract_strided_slice %28 {offsets = [0, 0, 24], sizes = [2, 8, 8], strides = [1, 1, 1]} : vector<2x8x40xf32> to vector<2x8x8xf32>
    %155 = vector.extract_strided_slice %0 {offsets = [0, 0, 24], sizes = [2, 8, 8], strides = [1, 1, 1]} : vector<2x8x40xf32> to vector<2x8x8xf32>
    "tpu.trace_start"() <{level = 10 : i32, message = "bqd,bkd->bqk"}> : () -> ()
    %cst_43 = arith.constant dense<0.000000e+00> : vector<2x8x8xf32>
    %156 = tpu.matmul %154, %155, %cst_43 {dimension_numbers = #tpu.dot_dimension_numbers<[2], [2], [1], [1], [0, 0, 0, 1, 1, 1], [0], [0]>} : vector<2x8x8xf32>, vector<2x8x8xf32>, vector<2x8x8xf32> -> vector<2x8x8xf32>
    "tpu.trace_stop"() : () -> ()
    %cst_44 = arith.constant dense<0xFF800000> : vector<2x8xf32>
    %157 = vector.multi_reduction <maximumf>, %156, %cst_44 [2] : vector<2x8x8xf32> to vector<2x8xf32>
    %158 = vector.shape_cast %157 : vector<2x8xf32> to vector<2x8x1xf32>
    %159 = arith.maximumf %61, %158 : vector<2x8x1xf32>
    %160 = vector.broadcast %159 : vector<2x8x1xf32> to vector<2x8x8xf32>
    %161 = arith.subf %156, %160 : vector<2x8x8xf32>
    %162 = math.exp %161 : vector<2x8x8xf32>
    %163 = arith.subf %61, %159 : vector<2x8x1xf32>
    %164 = math.exp %163 : vector<2x8x1xf32>
    %165 = arith.mulf %164, %66 : vector<2x8x1xf32>
    %cst_45 = arith.constant dense<0.000000e+00> : vector<2x8xf32>
    %166 = vector.multi_reduction <add>, %162, %cst_45 [2] : vector<2x8x8xf32> to vector<2x8xf32>
    %167 = vector.shape_cast %166 : vector<2x8xf32> to vector<2x8x1xf32>
    %168 = arith.addf %165, %167 : vector<2x8x1xf32>
    "tpu.trace_start"() <{level = 10 : i32, message = "bqk,bkd->bqd"}> : () -> ()
    %cst_46 = arith.constant dense<0.000000e+00> : vector<2x8x8xf32>
    %169 = tpu.matmul %162, %155, %cst_46 {dimension_numbers = #tpu.dot_dimension_numbers<[2], [1], [1], [2], [0, 0, 0, 1, 1, 2], [0], [0]>} : vector<2x8x8xf32>, vector<2x8x8xf32>, vector<2x8x8xf32> -> vector<2x8x8xf32>
    "tpu.trace_stop"() : () -> ()
    %170 = vector.extract_strided_slice %81 {offsets = [0, 0, 24], sizes = [2, 8, 8], strides = [1, 1, 1]} : vector<2x8x40xf32> to vector<2x8x8xf32>
    %171 = vector.broadcast %164 : vector<2x8x1xf32> to vector<2x8x8xf32>
    %172 = arith.mulf %171, %170 : vector<2x8x8xf32>
    %173 = arith.addf %172, %169 : vector<2x8x8xf32>
    %174 = vector.broadcast %168 : vector<2x8x1xf32> to vector<2x8x8xf32>
    %175 = arith.divf %173, %174 : vector<2x8x8xf32>
    %176 = vector.shape_cast %175 : vector<2x8x8xf32> to vector<16x8xf32>
    %c0_47 = arith.constant 0 : index
    %c24 = arith.constant 24 : index
    %177 = vector.load %arg13[%c0_47, %c24] : memref<16x160xf32, #tpu.memory_space<vmem>>, vector<16x8xf32>
    tpu.vector_store %arg13[%c0_47, %c24], %176 {strides = array<i32>} : memref<16x160xf32, #tpu.memory_space<vmem>>, vector<16x8xf32>,
    %178 = vector.extract_strided_slice %28 {offsets = [0, 0, 32], sizes = [2, 8, 8], strides = [1, 1, 1]} : vector<2x8x40xf32> to vector<2x8x8xf32>
    %179 = vector.extract_strided_slice %0 {offsets = [0, 0, 32], sizes = [2, 8, 8], strides = [1, 1, 1]} : vector<2x8x40xf32> to vector<2x8x8xf32>
    "tpu.trace_start"() <{level = 10 : i32, message = "bqd,bkd->bqk"}> : () -> ()
    %cst_48 = arith.constant dense<0.000000e+00> : vector<2x8x8xf32>
    %180 = tpu.matmul %178, %179, %cst_48 {dimension_numbers = #tpu.dot_dimension_numbers<[2], [2], [1], [1], [0, 0, 0, 1, 1, 1], [0], [0]>} : vector<2x8x8xf32>, vector<2x8x8xf32>, vector<2x8x8xf32> -> vector<2x8x8xf32>
    "tpu.trace_stop"() : () -> ()
    %cst_49 = arith.constant dense<0xFF800000> : vector<2x8xf32>
    %181 = vector.multi_reduction <maximumf>, %180, %cst_49 [2] : vector<2x8x8xf32> to vector<2x8xf32>
    %182 = vector.shape_cast %181 : vector<2x8xf32> to vector<2x8x1xf32>
    %183 = arith.maximumf %69, %182 : vector<2x8x1xf32>
    %184 = vector.broadcast %183 : vector<2x8x1xf32> to vector<2x8x8xf32>
    %185 = arith.subf %180, %184 : vector<2x8x8xf32>
    %186 = math.exp %185 : vector<2x8x8xf32>
    %187 = arith.subf %69, %183 : vector<2x8x1xf32>
    %188 = math.exp %187 : vector<2x8x1xf32>
    %189 = arith.mulf %188, %74 : vector<2x8x1xf32>
    %cst_50 = arith.constant dense<0.000000e+00> : vector<2x8xf32>
    %190 = vector.multi_reduction <add>, %186, %cst_50 [2] : vector<2x8x8xf32> to vector<2x8xf32>
    %191 = vector.shape_cast %190 : vector<2x8xf32> to vector<2x8x1xf32>
    %192 = arith.addf %189, %191 : vector<2x8x1xf32>
    "tpu.trace_start"() <{level = 10 : i32, message = "bqk,bkd->bqd"}> : () -> ()
    %cst_51 = arith.constant dense<0.000000e+00> : vector<2x8x8xf32>
    %193 = tpu.matmul %186, %179, %cst_51 {dimension_numbers = #tpu.dot_dimension_numbers<[2], [1], [1], [2], [0, 0, 0, 1, 1, 2], [0], [0]>} : vector<2x8x8xf32>, vector<2x8x8xf32>, vector<2x8x8xf32> -> vector<2x8x8xf32>
    "tpu.trace_stop"() : () -> ()
    %194 = vector.extract_strided_slice %81 {offsets = [0, 0, 32], sizes = [2, 8, 8], strides = [1, 1, 1]} : vector<2x8x40xf32> to vector<2x8x8xf32>
    %195 = vector.broadcast %188 : vector<2x8x1xf32> to vector<2x8x8xf32>
    %196 = arith.mulf %195, %194 : vector<2x8x8xf32>
    %197 = arith.addf %196, %193 : vector<2x8x8xf32>
    %198 = vector.broadcast %192 : vector<2x8x1xf32> to vector<2x8x8xf32>
    %199 = arith.divf %197, %198 : vector<2x8x8xf32>
    %200 = vector.shape_cast %199 : vector<2x8x8xf32> to vector<16x8xf32>
    %c0_52 = arith.constant 0 : index
    %c32 = arith.constant 32 : index
    %201 = vector.load %arg13[%c0_52, %c32] : memref<16x160xf32, #tpu.memory_space<vmem>>, vector<16x8xf32>
    tpu.vector_store %arg13[%c0_52, %c32], %200 {strides = array<i32>} : memref<16x160xf32, #tpu.memory_space<vmem>>, vector<16x8xf32>,
    %202 = vector.extract_strided_slice %28 {offsets = [0, 0, 0], sizes = [2, 8, 8], strides = [1, 1, 1]} : vector<2x8x40xf32> to vector<2x8x8xf32>
    %203 = vector.extract_strided_slice %1 {offsets = [0, 0, 0], sizes = [2, 8, 8], strides = [1, 1, 1]} : vector<2x8x40xf32> to vector<2x8x8xf32>
    "tpu.trace_start"() <{level = 10 : i32, message = "bqd,bkd->bqk"}> : () -> ()
    %cst_53 = arith.constant dense<0.000000e+00> : vector<2x8x8xf32>
    %204 = tpu.matmul %202, %203, %cst_53 {dimension_numbers = #tpu.dot_dimension_numbers<[2], [2], [1], [1], [0, 0, 0, 1, 1, 1], [0], [0]>} : vector<2x8x8xf32>, vector<2x8x8xf32>, vector<2x8x8xf32> -> vector<2x8x8xf32>
    "tpu.trace_stop"() : () -> ()
    %cst_54 = arith.constant dense<0xFF800000> : vector<2x8xf32>
    %205 = vector.multi_reduction <maximumf>, %204, %cst_54 [2] : vector<2x8x8xf32> to vector<2x8xf32>
    %206 = vector.shape_cast %205 : vector<2x8xf32> to vector<2x8x1xf32>
    %207 = arith.maximumf %37, %206 : vector<2x8x1xf32>
    %208 = vector.broadcast %207 : vector<2x8x1xf32> to vector<2x8x8xf32>
    %209 = arith.subf %204, %208 : vector<2x8x8xf32>
    %210 = math.exp %209 : vector<2x8x8xf32>
    %211 = arith.subf %37, %207 : vector<2x8x1xf32>
    %212 = math.exp %211 : vector<2x8x1xf32>
    %213 = arith.mulf %212, %42 : vector<2x8x1xf32>
    %cst_55 = arith.constant dense<0.000000e+00> : vector<2x8xf32>
    %214 = vector.multi_reduction <add>, %210, %cst_55 [2] : vector<2x8x8xf32> to vector<2x8xf32>
    %215 = vector.shape_cast %214 : vector<2x8xf32> to vector<2x8x1xf32>
    %216 = arith.addf %213, %215 : vector<2x8x1xf32>
    "tpu.trace_start"() <{level = 10 : i32, message = "bqk,bkd->bqd"}> : () -> ()
    %cst_56 = arith.constant dense<0.000000e+00> : vector<2x8x8xf32>
    %217 = tpu.matmul %210, %203, %cst_56 {dimension_numbers = #tpu.dot_dimension_numbers<[2], [1], [1], [2], [0, 0, 0, 1, 1, 2], [0], [0]>} : vector<2x8x8xf32>, vector<2x8x8xf32>, vector<2x8x8xf32> -> vector<2x8x8xf32>
    "tpu.trace_stop"() : () -> ()
    %218 = vector.extract_strided_slice %81 {offsets = [0, 0, 0], sizes = [2, 8, 8], strides = [1, 1, 1]} : vector<2x8x40xf32> to vector<2x8x8xf32>
    %219 = vector.broadcast %212 : vector<2x8x1xf32> to vector<2x8x8xf32>
    %220 = arith.mulf %219, %218 : vector<2x8x8xf32>
    %221 = arith.addf %220, %217 : vector<2x8x8xf32>
    %222 = vector.broadcast %216 : vector<2x8x1xf32> to vector<2x8x8xf32>
    %223 = arith.divf %221, %222 : vector<2x8x8xf32>
    %224 = vector.shape_cast %223 : vector<2x8x8xf32> to vector<16x8xf32>
    %c0_57 = arith.constant 0 : index
    %c40 = arith.constant 40 : index
    %225 = vector.load %arg13[%c0_57, %c40] : memref<16x160xf32, #tpu.memory_space<vmem>>, vector<16x8xf32>
    tpu.vector_store %arg13[%c0_57, %c40], %224 {strides = array<i32>} : memref<16x160xf32, #tpu.memory_space<vmem>>, vector<16x8xf32>,
    %226 = vector.extract_strided_slice %28 {offsets = [0, 0, 8], sizes = [2, 8, 8], strides = [1, 1, 1]} : vector<2x8x40xf32> to vector<2x8x8xf32>
    %227 = vector.extract_strided_slice %1 {offsets = [0, 0, 8], sizes = [2, 8, 8], strides = [1, 1, 1]} : vector<2x8x40xf32> to vector<2x8x8xf32>
    "tpu.trace_start"() <{level = 10 : i32, message = "bqd,bkd->bqk"}> : () -> ()
    %cst_58 = arith.constant dense<0.000000e+00> : vector<2x8x8xf32>
    %228 = tpu.matmul %226, %227, %cst_58 {dimension_numbers = #tpu.dot_dimension_numbers<[2], [2], [1], [1], [0, 0, 0, 1, 1, 1], [0], [0]>} : vector<2x8x8xf32>, vector<2x8x8xf32>, vector<2x8x8xf32> -> vector<2x8x8xf32>
    "tpu.trace_stop"() : () -> ()
    %cst_59 = arith.constant dense<0xFF800000> : vector<2x8xf32>
    %229 = vector.multi_reduction <maximumf>, %228, %cst_59 [2] : vector<2x8x8xf32> to vector<2x8xf32>
    %230 = vector.shape_cast %229 : vector<2x8xf32> to vector<2x8x1xf32>
    %231 = arith.maximumf %45, %230 : vector<2x8x1xf32>
    %232 = vector.broadcast %231 : vector<2x8x1xf32> to vector<2x8x8xf32>
    %233 = arith.subf %228, %232 : vector<2x8x8xf32>
    %234 = math.exp %233 : vector<2x8x8xf32>
    %235 = arith.subf %45, %231 : vector<2x8x1xf32>
    %236 = math.exp %235 : vector<2x8x1xf32>
    %237 = arith.mulf %236, %50 : vector<2x8x1xf32>
    %cst_60 = arith.constant dense<0.000000e+00> : vector<2x8xf32>
    %238 = vector.multi_reduction <add>, %234, %cst_60 [2] : vector<2x8x8xf32> to vector<2x8xf32>
    %239 = vector.shape_cast %238 : vector<2x8xf32> to vector<2x8x1xf32>
    %240 = arith.addf %237, %239 : vector<2x8x1xf32>
    "tpu.trace_start"() <{level = 10 : i32, message = "bqk,bkd->bqd"}> : () -> ()
    %cst_61 = arith.constant dense<0.000000e+00> : vector<2x8x8xf32>
    %241 = tpu.matmul %234, %227, %cst_61 {dimension_numbers = #tpu.dot_dimension_numbers<[2], [1], [1], [2], [0, 0, 0, 1, 1, 2], [0], [0]>} : vector<2x8x8xf32>, vector<2x8x8xf32>, vector<2x8x8xf32> -> vector<2x8x8xf32>
    "tpu.trace_stop"() : () -> ()
    %242 = vector.extract_strided_slice %81 {offsets = [0, 0, 8], sizes = [2, 8, 8], strides = [1, 1, 1]} : vector<2x8x40xf32> to vector<2x8x8xf32>
    %243 = vector.broadcast %236 : vector<2x8x1xf32> to vector<2x8x8xf32>
    %244 = arith.mulf %243, %242 : vector<2x8x8xf32>
    %245 = arith.addf %244, %241 : vector<2x8x8xf32>
    %246 = vector.broadcast %240 : vector<2x8x1xf32> to vector<2x8x8xf32>
    %247 = arith.divf %245, %246 : vector<2x8x8xf32>
    %248 = vector.shape_cast %247 : vector<2x8x8xf32> to vector<16x8xf32>
    %c0_62 = arith.constant 0 : index
    %c48 = arith.constant 48 : index
    %249 = vector.load %arg13[%c0_62, %c48] : memref<16x160xf32, #tpu.memory_space<vmem>>, vector<16x8xf32>
    tpu.vector_store %arg13[%c0_62, %c48], %248 {strides = array<i32>} : memref<16x160xf32, #tpu.memory_space<vmem>>, vector<16x8xf32>,
    %250 = vector.extract_strided_slice %28 {offsets = [0, 0, 16], sizes = [2, 8, 8], strides = [1, 1, 1]} : vector<2x8x40xf32> to vector<2x8x8xf32>
    %251 = vector.extract_strided_slice %1 {offsets = [0, 0, 16], sizes = [2, 8, 8], strides = [1, 1, 1]} : vector<2x8x40xf32> to vector<2x8x8xf32>
    "tpu.trace_start"() <{level = 10 : i32, message = "bqd,bkd->bqk"}> : () -> ()
    %cst_63 = arith.constant dense<0.000000e+00> : vector<2x8x8xf32>
    %252 = tpu.matmul %250, %251, %cst_63 {dimension_numbers = #tpu.dot_dimension_numbers<[2], [2], [1], [1], [0, 0, 0, 1, 1, 1], [0], [0]>} : vector<2x8x8xf32>, vector<2x8x8xf32>, vector<2x8x8xf32> -> vector<2x8x8xf32>
    "tpu.trace_stop"() : () -> ()
    %cst_64 = arith.constant dense<0xFF800000> : vector<2x8xf32>
    %253 = vector.multi_reduction <maximumf>, %252, %cst_64 [2] : vector<2x8x8xf32> to vector<2x8xf32>
    %254 = vector.shape_cast %253 : vector<2x8xf32> to vector<2x8x1xf32>
    %255 = arith.maximumf %53, %254 : vector<2x8x1xf32>
    %256 = vector.broadcast %255 : vector<2x8x1xf32> to vector<2x8x8xf32>
    %257 = arith.subf %252, %256 : vector<2x8x8xf32>
    %258 = math.exp %257 : vector<2x8x8xf32>
    %259 = arith.subf %53, %255 : vector<2x8x1xf32>
    %260 = math.exp %259 : vector<2x8x1xf32>
    %261 = arith.mulf %260, %58 : vector<2x8x1xf32>
    %cst_65 = arith.constant dense<0.000000e+00> : vector<2x8xf32>
    %262 = vector.multi_reduction <add>, %258, %cst_65 [2] : vector<2x8x8xf32> to vector<2x8xf32>
    %263 = vector.shape_cast %262 : vector<2x8xf32> to vector<2x8x1xf32>
    %264 = arith.addf %261, %263 : vector<2x8x1xf32>
    "tpu.trace_start"() <{level = 10 : i32, message = "bqk,bkd->bqd"}> : () -> ()
    %cst_66 = arith.constant dense<0.000000e+00> : vector<2x8x8xf32>
    %265 = tpu.matmul %258, %251, %cst_66 {dimension_numbers = #tpu.dot_dimension_numbers<[2], [1], [1], [2], [0, 0, 0, 1, 1, 2], [0], [0]>} : vector<2x8x8xf32>, vector<2x8x8xf32>, vector<2x8x8xf32> -> vector<2x8x8xf32>
    "tpu.trace_stop"() : () -> ()
    %266 = vector.extract_strided_slice %81 {offsets = [0, 0, 16], sizes = [2, 8, 8], strides = [1, 1, 1]} : vector<2x8x40xf32> to vector<2x8x8xf32>
    %267 = vector.broadcast %260 : vector<2x8x1xf32> to vector<2x8x8xf32>
    %268 = arith.mulf %267, %266 : vector<2x8x8xf32>
    %269 = arith.addf %268, %265 : vector<2x8x8xf32>
    %270 = vector.broadcast %264 : vector<2x8x1xf32> to vector<2x8x8xf32>
    %271 = arith.divf %269, %270 : vector<2x8x8xf32>
    %272 = vector.shape_cast %271 : vector<2x8x8xf32> to vector<16x8xf32>
    %c0_67 = arith.constant 0 : index
    %c56 = arith.constant 56 : index
    %273 = vector.load %arg13[%c0_67, %c56] : memref<16x160xf32, #tpu.memory_space<vmem>>, vector<16x8xf32>
    tpu.vector_store %arg13[%c0_67, %c56], %272 {strides = array<i32>} : memref<16x160xf32, #tpu.memory_space<vmem>>, vector<16x8xf32>,
    %274 = vector.extract_strided_slice %28 {offsets = [0, 0, 24], sizes = [2, 8, 8], strides = [1, 1, 1]} : vector<2x8x40xf32> to vector<2x8x8xf32>
    %275 = vector.extract_strided_slice %1 {offsets = [0, 0, 24], sizes = [2, 8, 8], strides = [1, 1, 1]} : vector<2x8x40xf32> to vector<2x8x8xf32>
    "tpu.trace_start"() <{level = 10 : i32, message = "bqd,bkd->bqk"}> : () -> ()
    %cst_68 = arith.constant dense<0.000000e+00> : vector<2x8x8xf32>
    %276 = tpu.matmul %274, %275, %cst_68 {dimension_numbers = #tpu.dot_dimension_numbers<[2], [2], [1], [1], [0, 0, 0, 1, 1, 1], [0], [0]>} : vector<2x8x8xf32>, vector<2x8x8xf32>, vector<2x8x8xf32> -> vector<2x8x8xf32>
    "tpu.trace_stop"() : () -> ()
    %cst_69 = arith.constant dense<0xFF800000> : vector<2x8xf32>
    %277 = vector.multi_reduction <maximumf>, %276, %cst_69 [2] : vector<2x8x8xf32> to vector<2x8xf32>
    %278 = vector.shape_cast %277 : vector<2x8xf32> to vector<2x8x1xf32>
    %279 = arith.maximumf %61, %278 : vector<2x8x1xf32>
    %280 = vector.broadcast %279 : vector<2x8x1xf32> to vector<2x8x8xf32>
    %281 = arith.subf %276, %280 : vector<2x8x8xf32>
    %282 = math.exp %281 : vector<2x8x8xf32>
    %283 = arith.subf %61, %279 : vector<2x8x1xf32>
    %284 = math.exp %283 : vector<2x8x1xf32>
    %285 = arith.mulf %284, %66 : vector<2x8x1xf32>
    %cst_70 = arith.constant dense<0.000000e+00> : vector<2x8xf32>
    %286 = vector.multi_reduction <add>, %282, %cst_70 [2] : vector<2x8x8xf32> to vector<2x8xf32>
    %287 = vector.shape_cast %286 : vector<2x8xf32> to vector<2x8x1xf32>
    %288 = arith.addf %285, %287 : vector<2x8x1xf32>
    "tpu.trace_start"() <{level = 10 : i32, message = "bqk,bkd->bqd"}> : () -> ()
    %cst_71 = arith.constant dense<0.000000e+00> : vector<2x8x8xf32>
    %289 = tpu.matmul %282, %275, %cst_71 {dimension_numbers = #tpu.dot_dimension_numbers<[2], [1], [1], [2], [0, 0, 0, 1, 1, 2], [0], [0]>} : vector<2x8x8xf32>, vector<2x8x8xf32>, vector<2x8x8xf32> -> vector<2x8x8xf32>
    "tpu.trace_stop"() : () -> ()
    %290 = vector.extract_strided_slice %81 {offsets = [0, 0, 24], sizes = [2, 8, 8], strides = [1, 1, 1]} : vector<2x8x40xf32> to vector<2x8x8xf32>
    %291 = vector.broadcast %284 : vector<2x8x1xf32> to vector<2x8x8xf32>
    %292 = arith.mulf %291, %290 : vector<2x8x8xf32>
    %293 = arith.addf %292, %289 : vector<2x8x8xf32>
    %294 = vector.broadcast %288 : vector<2x8x1xf32> to vector<2x8x8xf32>
    %295 = arith.divf %293, %294 : vector<2x8x8xf32>
    %296 = vector.shape_cast %295 : vector<2x8x8xf32> to vector<16x8xf32>
    %c0_72 = arith.constant 0 : index
    %c64 = arith.constant 64 : index
    %297 = vector.load %arg13[%c0_72, %c64] : memref<16x160xf32, #tpu.memory_space<vmem>>, vector<16x8xf32>
    tpu.vector_store %arg13[%c0_72, %c64], %296 {strides = array<i32>} : memref<16x160xf32, #tpu.memory_space<vmem>>, vector<16x8xf32>,
    %298 = vector.extract_strided_slice %28 {offsets = [0, 0, 32], sizes = [2, 8, 8], strides = [1, 1, 1]} : vector<2x8x40xf32> to vector<2x8x8xf32>
    %299 = vector.extract_strided_slice %1 {offsets = [0, 0, 32], sizes = [2, 8, 8], strides = [1, 1, 1]} : vector<2x8x40xf32> to vector<2x8x8xf32>
    "tpu.trace_start"() <{level = 10 : i32, message = "bqd,bkd->bqk"}> : () -> ()
    %cst_73 = arith.constant dense<0.000000e+00> : vector<2x8x8xf32>
    %300 = tpu.matmul %298, %299, %cst_73 {dimension_numbers = #tpu.dot_dimension_numbers<[2], [2], [1], [1], [0, 0, 0, 1, 1, 1], [0], [0]>} : vector<2x8x8xf32>, vector<2x8x8xf32>, vector<2x8x8xf32> -> vector<2x8x8xf32>
    "tpu.trace_stop"() : () -> ()
    %cst_74 = arith.constant dense<0xFF800000> : vector<2x8xf32>
    %301 = vector.multi_reduction <maximumf>, %300, %cst_74 [2] : vector<2x8x8xf32> to vector<2x8xf32>
    %302 = vector.shape_cast %301 : vector<2x8xf32> to vector<2x8x1xf32>
    %303 = arith.maximumf %69, %302 : vector<2x8x1xf32>
    %304 = vector.broadcast %303 : vector<2x8x1xf32> to vector<2x8x8xf32>
    %305 = arith.subf %300, %304 : vector<2x8x8xf32>
    %306 = math.exp %305 : vector<2x8x8xf32>
    %307 = arith.subf %69, %303 : vector<2x8x1xf32>
    %308 = math.exp %307 : vector<2x8x1xf32>
    %309 = arith.mulf %308, %74 : vector<2x8x1xf32>
    %cst_75 = arith.constant dense<0.000000e+00> : vector<2x8xf32>
    %310 = vector.multi_reduction <add>, %306, %cst_75 [2] : vector<2x8x8xf32> to vector<2x8xf32>
    %311 = vector.shape_cast %310 : vector<2x8xf32> to vector<2x8x1xf32>
    %312 = arith.addf %309, %311 : vector<2x8x1xf32>
    "tpu.trace_start"() <{level = 10 : i32, message = "bqk,bkd->bqd"}> : () -> ()
    %cst_76 = arith.constant dense<0.000000e+00> : vector<2x8x8xf32>
    %313 = tpu.matmul %306, %299, %cst_76 {dimension_numbers = #tpu.dot_dimension_numbers<[2], [1], [1], [2], [0, 0, 0, 1, 1, 2], [0], [0]>} : vector<2x8x8xf32>, vector<2x8x8xf32>, vector<2x8x8xf32> -> vector<2x8x8xf32>
    "tpu.trace_stop"() : () -> ()
    %314 = vector.extract_strided_slice %81 {offsets = [0, 0, 32], sizes = [2, 8, 8], strides = [1, 1, 1]} : vector<2x8x40xf32> to vector<2x8x8xf32>
    %315 = vector.broadcast %308 : vector<2x8x1xf32> to vector<2x8x8xf32>
    %316 = arith.mulf %315, %314 : vector<2x8x8xf32>
    %317 = arith.addf %316, %313 : vector<2x8x8xf32>
    %318 = vector.broadcast %312 : vector<2x8x1xf32> to vector<2x8x8xf32>
    %319 = arith.divf %317, %318 : vector<2x8x8xf32>
    %320 = vector.shape_cast %319 : vector<2x8x8xf32> to vector<16x8xf32>
    %c0_77 = arith.constant 0 : index
    %c72 = arith.constant 72 : index
    %321 = vector.load %arg13[%c0_77, %c72] : memref<16x160xf32, #tpu.memory_space<vmem>>, vector<16x8xf32>
    tpu.vector_store %arg13[%c0_77, %c72], %320 {strides = array<i32>} : memref<16x160xf32, #tpu.memory_space<vmem>>, vector<16x8xf32>,
    %322 = vector.extract_strided_slice %28 {offsets = [0, 0, 0], sizes = [2, 8, 8], strides = [1, 1, 1]} : vector<2x8x40xf32> to vector<2x8x8xf32>
    %323 = vector.extract_strided_slice %2 {offsets = [0, 0, 0], sizes = [2, 8, 8], strides = [1, 1, 1]} : vector<2x8x40xf32> to vector<2x8x8xf32>
    "tpu.trace_start"() <{level = 10 : i32, message = "bqd,bkd->bqk"}> : () -> ()
    %cst_78 = arith.constant dense<0.000000e+00> : vector<2x8x8xf32>
    %324 = tpu.matmul %322, %323, %cst_78 {dimension_numbers = #tpu.dot_dimension_numbers<[2], [2], [1], [1], [0, 0, 0, 1, 1, 1], [0], [0]>} : vector<2x8x8xf32>, vector<2x8x8xf32>, vector<2x8x8xf32> -> vector<2x8x8xf32>
    "tpu.trace_stop"() : () -> ()
    %cst_79 = arith.constant dense<0xFF800000> : vector<2x8xf32>
    %325 = vector.multi_reduction <maximumf>, %324, %cst_79 [2] : vector<2x8x8xf32> to vector<2x8xf32>
    %326 = vector.shape_cast %325 : vector<2x8xf32> to vector<2x8x1xf32>
    %327 = arith.maximumf %37, %326 : vector<2x8x1xf32>
    %328 = vector.broadcast %327 : vector<2x8x1xf32> to vector<2x8x8xf32>
    %329 = arith.subf %324, %328 : vector<2x8x8xf32>
    %330 = math.exp %329 : vector<2x8x8xf32>
    %331 = arith.subf %37, %327 : vector<2x8x1xf32>
    %332 = math.exp %331 : vector<2x8x1xf32>
    %333 = arith.mulf %332, %42 : vector<2x8x1xf32>
    %cst_80 = arith.constant dense<0.000000e+00> : vector<2x8xf32>
    %334 = vector.multi_reduction <add>, %330, %cst_80 [2] : vector<2x8x8xf32> to vector<2x8xf32>
    %335 = vector.shape_cast %334 : vector<2x8xf32> to vector<2x8x1xf32>
    %336 = arith.addf %333, %335 : vector<2x8x1xf32>
    "tpu.trace_start"() <{level = 10 : i32, message = "bqk,bkd->bqd"}> : () -> ()
    %cst_81 = arith.constant dense<0.000000e+00> : vector<2x8x8xf32>
    %337 = tpu.matmul %330, %323, %cst_81 {dimension_numbers = #tpu.dot_dimension_numbers<[2], [1], [1], [2], [0, 0, 0, 1, 1, 2], [0], [0]>} : vector<2x8x8xf32>, vector<2x8x8xf32>, vector<2x8x8xf32> -> vector<2x8x8xf32>
    "tpu.trace_stop"() : () -> ()
    %338 = vector.extract_strided_slice %81 {offsets = [0, 0, 0], sizes = [2, 8, 8], strides = [1, 1, 1]} : vector<2x8x40xf32> to vector<2x8x8xf32>
    %339 = vector.broadcast %332 : vector<2x8x1xf32> to vector<2x8x8xf32>
    %340 = arith.mulf %339, %338 : vector<2x8x8xf32>
    %341 = arith.addf %340, %337 : vector<2x8x8xf32>
    %342 = vector.broadcast %336 : vector<2x8x1xf32> to vector<2x8x8xf32>
    %343 = arith.divf %341, %342 : vector<2x8x8xf32>
    %344 = vector.shape_cast %343 : vector<2x8x8xf32> to vector<16x8xf32>
    %c0_82 = arith.constant 0 : index
    %c80 = arith.constant 80 : index
    %345 = vector.load %arg13[%c0_82, %c80] : memref<16x160xf32, #tpu.memory_space<vmem>>, vector<16x8xf32>
    tpu.vector_store %arg13[%c0_82, %c80], %344 {strides = array<i32>} : memref<16x160xf32, #tpu.memory_space<vmem>>, vector<16x8xf32>,
    %346 = vector.extract_strided_slice %28 {offsets = [0, 0, 8], sizes = [2, 8, 8], strides = [1, 1, 1]} : vector<2x8x40xf32> to vector<2x8x8xf32>
    %347 = vector.extract_strided_slice %2 {offsets = [0, 0, 8], sizes = [2, 8, 8], strides = [1, 1, 1]} : vector<2x8x40xf32> to vector<2x8x8xf32>
    "tpu.trace_start"() <{level = 10 : i32, message = "bqd,bkd->bqk"}> : () -> ()
    %cst_83 = arith.constant dense<0.000000e+00> : vector<2x8x8xf32>
    %348 = tpu.matmul %346, %347, %cst_83 {dimension_numbers = #tpu.dot_dimension_numbers<[2], [2], [1], [1], [0, 0, 0, 1, 1, 1], [0], [0]>} : vector<2x8x8xf32>, vector<2x8x8xf32>, vector<2x8x8xf32> -> vector<2x8x8xf32>
    "tpu.trace_stop"() : () -> ()
    %cst_84 = arith.constant dense<0xFF800000> : vector<2x8xf32>
    %349 = vector.multi_reduction <maximumf>, %348, %cst_84 [2] : vector<2x8x8xf32> to vector<2x8xf32>
    %350 = vector.shape_cast %349 : vector<2x8xf32> to vector<2x8x1xf32>
    %351 = arith.maximumf %45, %350 : vector<2x8x1xf32>
    %352 = vector.broadcast %351 : vector<2x8x1xf32> to vector<2x8x8xf32>
    %353 = arith.subf %348, %352 : vector<2x8x8xf32>
    %354 = math.exp %353 : vector<2x8x8xf32>
    %355 = arith.subf %45, %351 : vector<2x8x1xf32>
    %356 = math.exp %355 : vector<2x8x1xf32>
    %357 = arith.mulf %356, %50 : vector<2x8x1xf32>
    %cst_85 = arith.constant dense<0.000000e+00> : vector<2x8xf32>
    %358 = vector.multi_reduction <add>, %354, %cst_85 [2] : vector<2x8x8xf32> to vector<2x8xf32>
    %359 = vector.shape_cast %358 : vector<2x8xf32> to vector<2x8x1xf32>
    %360 = arith.addf %357, %359 : vector<2x8x1xf32>
    "tpu.trace_start"() <{level = 10 : i32, message = "bqk,bkd->bqd"}> : () -> ()
    %cst_86 = arith.constant dense<0.000000e+00> : vector<2x8x8xf32>
    %361 = tpu.matmul %354, %347, %cst_86 {dimension_numbers = #tpu.dot_dimension_numbers<[2], [1], [1], [2], [0, 0, 0, 1, 1, 2], [0], [0]>} : vector<2x8x8xf32>, vector<2x8x8xf32>, vector<2x8x8xf32> -> vector<2x8x8xf32>
    "tpu.trace_stop"() : () -> ()
    %362 = vector.extract_strided_slice %81 {offsets = [0, 0, 8], sizes = [2, 8, 8], strides = [1, 1, 1]} : vector<2x8x40xf32> to vector<2x8x8xf32>
    %363 = vector.broadcast %356 : vector<2x8x1xf32> to vector<2x8x8xf32>
    %364 = arith.mulf %363, %362 : vector<2x8x8xf32>
    %365 = arith.addf %364, %361 : vector<2x8x8xf32>
    %366 = vector.broadcast %360 : vector<2x8x1xf32> to vector<2x8x8xf32>
    %367 = arith.divf %365, %366 : vector<2x8x8xf32>
    %368 = vector.shape_cast %367 : vector<2x8x8xf32> to vector<16x8xf32>
    %c0_87 = arith.constant 0 : index
    %c88 = arith.constant 88 : index
    %369 = vector.load %arg13[%c0_87, %c88] : memref<16x160xf32, #tpu.memory_space<vmem>>, vector<16x8xf32>
    tpu.vector_store %arg13[%c0_87, %c88], %368 {strides = array<i32>} : memref<16x160xf32, #tpu.memory_space<vmem>>, vector<16x8xf32>,
    %370 = vector.extract_strided_slice %28 {offsets = [0, 0, 16], sizes = [2, 8, 8], strides = [1, 1, 1]} : vector<2x8x40xf32> to vector<2x8x8xf32>
    %371 = vector.extract_strided_slice %2 {offsets = [0, 0, 16], sizes = [2, 8, 8], strides = [1, 1, 1]} : vector<2x8x40xf32> to vector<2x8x8xf32>
    "tpu.trace_start"() <{level = 10 : i32, message = "bqd,bkd->bqk"}> : () -> ()
    %cst_88 = arith.constant dense<0.000000e+00> : vector<2x8x8xf32>
    %372 = tpu.matmul %370, %371, %cst_88 {dimension_numbers = #tpu.dot_dimension_numbers<[2], [2], [1], [1], [0, 0, 0, 1, 1, 1], [0], [0]>} : vector<2x8x8xf32>, vector<2x8x8xf32>, vector<2x8x8xf32> -> vector<2x8x8xf32>
    "tpu.trace_stop"() : () -> ()
    %cst_89 = arith.constant dense<0xFF800000> : vector<2x8xf32>
    %373 = vector.multi_reduction <maximumf>, %372, %cst_89 [2] : vector<2x8x8xf32> to vector<2x8xf32>
    %374 = vector.shape_cast %373 : vector<2x8xf32> to vector<2x8x1xf32>
    %375 = arith.maximumf %53, %374 : vector<2x8x1xf32>
    %376 = vector.broadcast %375 : vector<2x8x1xf32> to vector<2x8x8xf32>
    %377 = arith.subf %372, %376 : vector<2x8x8xf32>
    %378 = math.exp %377 : vector<2x8x8xf32>
    %379 = arith.subf %53, %375 : vector<2x8x1xf32>
    %380 = math.exp %379 : vector<2x8x1xf32>
    %381 = arith.mulf %380, %58 : vector<2x8x1xf32>
    %cst_90 = arith.constant dense<0.000000e+00> : vector<2x8xf32>
    %382 = vector.multi_reduction <add>, %378, %cst_90 [2] : vector<2x8x8xf32> to vector<2x8xf32>
    %383 = vector.shape_cast %382 : vector<2x8xf32> to vector<2x8x1xf32>
    %384 = arith.addf %381, %383 : vector<2x8x1xf32>
    "tpu.trace_start"() <{level = 10 : i32, message = "bqk,bkd->bqd"}> : () -> ()
    %cst_91 = arith.constant dense<0.000000e+00> : vector<2x8x8xf32>
    %385 = tpu.matmul %378, %371, %cst_91 {dimension_numbers = #tpu.dot_dimension_numbers<[2], [1], [1], [2], [0, 0, 0, 1, 1, 2], [0], [0]>} : vector<2x8x8xf32>, vector<2x8x8xf32>, vector<2x8x8xf32> -> vector<2x8x8xf32>
    "tpu.trace_stop"() : () -> ()
    %386 = vector.extract_strided_slice %81 {offsets = [0, 0, 16], sizes = [2, 8, 8], strides = [1, 1, 1]} : vector<2x8x40xf32> to vector<2x8x8xf32>
    %387 = vector.broadcast %380 : vector<2x8x1xf32> to vector<2x8x8xf32>
    %388 = arith.mulf %387, %386 : vector<2x8x8xf32>
    %389 = arith.addf %388, %385 : vector<2x8x8xf32>
    %390 = vector.broadcast %384 : vector<2x8x1xf32> to vector<2x8x8xf32>
    %391 = arith.divf %389, %390 : vector<2x8x8xf32>
    %392 = vector.shape_cast %391 : vector<2x8x8xf32> to vector<16x8xf32>
    %c0_92 = arith.constant 0 : index
    %c96 = arith.constant 96 : index
    %393 = vector.load %arg13[%c0_92, %c96] : memref<16x160xf32, #tpu.memory_space<vmem>>, vector<16x8xf32>
    tpu.vector_store %arg13[%c0_92, %c96], %392 {strides = array<i32>} : memref<16x160xf32, #tpu.memory_space<vmem>>, vector<16x8xf32>,
    %394 = vector.extract_strided_slice %28 {offsets = [0, 0, 24], sizes = [2, 8, 8], strides = [1, 1, 1]} : vector<2x8x40xf32> to vector<2x8x8xf32>
    %395 = vector.extract_strided_slice %2 {offsets = [0, 0, 24], sizes = [2, 8, 8], strides = [1, 1, 1]} : vector<2x8x40xf32> to vector<2x8x8xf32>
    "tpu.trace_start"() <{level = 10 : i32, message = "bqd,bkd->bqk"}> : () -> ()
    %cst_93 = arith.constant dense<0.000000e+00> : vector<2x8x8xf32>
    %396 = tpu.matmul %394, %395, %cst_93 {dimension_numbers = #tpu.dot_dimension_numbers<[2], [2], [1], [1], [0, 0, 0, 1, 1, 1], [0], [0]>} : vector<2x8x8xf32>, vector<2x8x8xf32>, vector<2x8x8xf32> -> vector<2x8x8xf32>
    "tpu.trace_stop"() : () -> ()
    %cst_94 = arith.constant dense<0xFF800000> : vector<2x8xf32>
    %397 = vector.multi_reduction <maximumf>, %396, %cst_94 [2] : vector<2x8x8xf32> to vector<2x8xf32>
    %398 = vector.shape_cast %397 : vector<2x8xf32> to vector<2x8x1xf32>
    %399 = arith.maximumf %61, %398 : vector<2x8x1xf32>
    %400 = vector.broadcast %399 : vector<2x8x1xf32> to vector<2x8x8xf32>
    %401 = arith.subf %396, %400 : vector<2x8x8xf32>
    %402 = math.exp %401 : vector<2x8x8xf32>
    %403 = arith.subf %61, %399 : vector<2x8x1xf32>
    %404 = math.exp %403 : vector<2x8x1xf32>
    %405 = arith.mulf %404, %66 : vector<2x8x1xf32>
    %cst_95 = arith.constant dense<0.000000e+00> : vector<2x8xf32>
    %406 = vector.multi_reduction <add>, %402, %cst_95 [2] : vector<2x8x8xf32> to vector<2x8xf32>
    %407 = vector.shape_cast %406 : vector<2x8xf32> to vector<2x8x1xf32>
    %408 = arith.addf %405, %407 : vector<2x8x1xf32>
    "tpu.trace_start"() <{level = 10 : i32, message = "bqk,bkd->bqd"}> : () -> ()
    %cst_96 = arith.constant dense<0.000000e+00> : vector<2x8x8xf32>
    %409 = tpu.matmul %402, %395, %cst_96 {dimension_numbers = #tpu.dot_dimension_numbers<[2], [1], [1], [2], [0, 0, 0, 1, 1, 2], [0], [0]>} : vector<2x8x8xf32>, vector<2x8x8xf32>, vector<2x8x8xf32> -> vector<2x8x8xf32>
    "tpu.trace_stop"() : () -> ()
    %410 = vector.extract_strided_slice %81 {offsets = [0, 0, 24], sizes = [2, 8, 8], strides = [1, 1, 1]} : vector<2x8x40xf32> to vector<2x8x8xf32>
    %411 = vector.broadcast %404 : vector<2x8x1xf32> to vector<2x8x8xf32>
    %412 = arith.mulf %411, %410 : vector<2x8x8xf32>
    %413 = arith.addf %412, %409 : vector<2x8x8xf32>
    %414 = vector.broadcast %408 : vector<2x8x1xf32> to vector<2x8x8xf32>
    %415 = arith.divf %413, %414 : vector<2x8x8xf32>
    %416 = vector.shape_cast %415 : vector<2x8x8xf32> to vector<16x8xf32>
    %c0_97 = arith.constant 0 : index
    %c104 = arith.constant 104 : index
    %417 = vector.load %arg13[%c0_97, %c104] : memref<16x160xf32, #tpu.memory_space<vmem>>, vector<16x8xf32>
    tpu.vector_store %arg13[%c0_97, %c104], %416 {strides = array<i32>} : memref<16x160xf32, #tpu.memory_space<vmem>>, vector<16x8xf32>,
    %418 = vector.extract_strided_slice %28 {offsets = [0, 0, 32], sizes = [2, 8, 8], strides = [1, 1, 1]} : vector<2x8x40xf32> to vector<2x8x8xf32>
    %419 = vector.extract_strided_slice %2 {offsets = [0, 0, 32], sizes = [2, 8, 8], strides = [1, 1, 1]} : vector<2x8x40xf32> to vector<2x8x8xf32>
    "tpu.trace_start"() <{level = 10 : i32, message = "bqd,bkd->bqk"}> : () -> ()
    %cst_98 = arith.constant dense<0.000000e+00> : vector<2x8x8xf32>
    %420 = tpu.matmul %418, %419, %cst_98 {dimension_numbers = #tpu.dot_dimension_numbers<[2], [2], [1], [1], [0, 0, 0, 1, 1, 1], [0], [0]>} : vector<2x8x8xf32>, vector<2x8x8xf32>, vector<2x8x8xf32> -> vector<2x8x8xf32>
    "tpu.trace_stop"() : () -> ()
    %cst_99 = arith.constant dense<0xFF800000> : vector<2x8xf32>
    %421 = vector.multi_reduction <maximumf>, %420, %cst_99 [2] : vector<2x8x8xf32> to vector<2x8xf32>
    %422 = vector.shape_cast %421 : vector<2x8xf32> to vector<2x8x1xf32>
    %423 = arith.maximumf %69, %422 : vector<2x8x1xf32>
    %424 = vector.broadcast %423 : vector<2x8x1xf32> to vector<2x8x8xf32>
    %425 = arith.subf %420, %424 : vector<2x8x8xf32>
    %426 = math.exp %425 : vector<2x8x8xf32>
    %427 = arith.subf %69, %423 : vector<2x8x1xf32>
    %428 = math.exp %427 : vector<2x8x1xf32>
    %429 = arith.mulf %428, %74 : vector<2x8x1xf32>
    %cst_100 = arith.constant dense<0.000000e+00> : vector<2x8xf32>
    %430 = vector.multi_reduction <add>, %426, %cst_100 [2] : vector<2x8x8xf32> to vector<2x8xf32>
    %431 = vector.shape_cast %430 : vector<2x8xf32> to vector<2x8x1xf32>
    %432 = arith.addf %429, %431 : vector<2x8x1xf32>
    "tpu.trace_start"() <{level = 10 : i32, message = "bqk,bkd->bqd"}> : () -> ()
    %cst_101 = arith.constant dense<0.000000e+00> : vector<2x8x8xf32>
    %433 = tpu.matmul %426, %419, %cst_101 {dimension_numbers = #tpu.dot_dimension_numbers<[2], [1], [1], [2], [0, 0, 0, 1, 1, 2], [0], [0]>} : vector<2x8x8xf32>, vector<2x8x8xf32>, vector<2x8x8xf32> -> vector<2x8x8xf32>
    "tpu.trace_stop"() : () -> ()
    %434 = vector.extract_strided_slice %81 {offsets = [0, 0, 32], sizes = [2, 8, 8], strides = [1, 1, 1]} : vector<2x8x40xf32> to vector<2x8x8xf32>
    %435 = vector.broadcast %428 : vector<2x8x1xf32> to vector<2x8x8xf32>
    %436 = arith.mulf %435, %434 : vector<2x8x8xf32>
    %437 = arith.addf %436, %433 : vector<2x8x8xf32>
    %438 = vector.broadcast %432 : vector<2x8x1xf32> to vector<2x8x8xf32>
    %439 = arith.divf %437, %438 : vector<2x8x8xf32>
    %440 = vector.shape_cast %439 : vector<2x8x8xf32> to vector<16x8xf32>
    %c0_102 = arith.constant 0 : index
    %c112 = arith.constant 112 : index
    %441 = vector.load %arg13[%c0_102, %c112] : memref<16x160xf32, #tpu.memory_space<vmem>>, vector<16x8xf32>
    tpu.vector_store %arg13[%c0_102, %c112], %440 {strides = array<i32>} : memref<16x160xf32, #tpu.memory_space<vmem>>, vector<16x8xf32>,
    %442 = vector.extract_strided_slice %28 {offsets = [0, 0, 0], sizes = [2, 8, 8], strides = [1, 1, 1]} : vector<2x8x40xf32> to vector<2x8x8xf32>
    %443 = vector.extract_strided_slice %3 {offsets = [0, 0, 0], sizes = [2, 8, 8], strides = [1, 1, 1]} : vector<2x8x40xf32> to vector<2x8x8xf32>
    "tpu.trace_start"() <{level = 10 : i32, message = "bqd,bkd->bqk"}> : () -> ()
    %cst_103 = arith.constant dense<0.000000e+00> : vector<2x8x8xf32>
    %444 = tpu.matmul %442, %443, %cst_103 {dimension_numbers = #tpu.dot_dimension_numbers<[2], [2], [1], [1], [0, 0, 0, 1, 1, 1], [0], [0]>} : vector<2x8x8xf32>, vector<2x8x8xf32>, vector<2x8x8xf32> -> vector<2x8x8xf32>
    "tpu.trace_stop"() : () -> ()
    %cst_104 = arith.constant dense<0xFF800000> : vector<2x8xf32>
    %445 = vector.multi_reduction <maximumf>, %444, %cst_104 [2] : vector<2x8x8xf32> to vector<2x8xf32>
    %446 = vector.shape_cast %445 : vector<2x8xf32> to vector<2x8x1xf32>
    %447 = arith.maximumf %37, %446 : vector<2x8x1xf32>
    %448 = vector.broadcast %447 : vector<2x8x1xf32> to vector<2x8x8xf32>
    %449 = arith.subf %444, %448 : vector<2x8x8xf32>
    %450 = math.exp %449 : vector<2x8x8xf32>
    %451 = arith.subf %37, %447 : vector<2x8x1xf32>
    %452 = math.exp %451 : vector<2x8x1xf32>
    %453 = arith.mulf %452, %42 : vector<2x8x1xf32>
    %cst_105 = arith.constant dense<0.000000e+00> : vector<2x8xf32>
    %454 = vector.multi_reduction <add>, %450, %cst_105 [2] : vector<2x8x8xf32> to vector<2x8xf32>
    %455 = vector.shape_cast %454 : vector<2x8xf32> to vector<2x8x1xf32>
    %456 = arith.addf %453, %455 : vector<2x8x1xf32>
    "tpu.trace_start"() <{level = 10 : i32, message = "bqk,bkd->bqd"}> : () -> ()
    %cst_106 = arith.constant dense<0.000000e+00> : vector<2x8x8xf32>
    %457 = tpu.matmul %450, %443, %cst_106 {dimension_numbers = #tpu.dot_dimension_numbers<[2], [1], [1], [2], [0, 0, 0, 1, 1, 2], [0], [0]>} : vector<2x8x8xf32>, vector<2x8x8xf32>, vector<2x8x8xf32> -> vector<2x8x8xf32>
    "tpu.trace_stop"() : () -> ()
    %458 = vector.extract_strided_slice %81 {offsets = [0, 0, 0], sizes = [2, 8, 8], strides = [1, 1, 1]} : vector<2x8x40xf32> to vector<2x8x8xf32>
    %459 = vector.broadcast %452 : vector<2x8x1xf32> to vector<2x8x8xf32>
    %460 = arith.mulf %459, %458 : vector<2x8x8xf32>
    %461 = arith.addf %460, %457 : vector<2x8x8xf32>
    %462 = vector.broadcast %456 : vector<2x8x1xf32> to vector<2x8x8xf32>
    %463 = arith.divf %461, %462 : vector<2x8x8xf32>
    %464 = vector.shape_cast %463 : vector<2x8x8xf32> to vector<16x8xf32>
    %c0_107 = arith.constant 0 : index
    %c120 = arith.constant 120 : index
    %465 = vector.load %arg13[%c0_107, %c120] : memref<16x160xf32, #tpu.memory_space<vmem>>, vector<16x8xf32>
    tpu.vector_store %arg13[%c0_107, %c120], %464 {strides = array<i32>} : memref<16x160xf32, #tpu.memory_space<vmem>>, vector<16x8xf32>,
    %466 = vector.extract_strided_slice %28 {offsets = [0, 0, 8], sizes = [2, 8, 8], strides = [1, 1, 1]} : vector<2x8x40xf32> to vector<2x8x8xf32>
    %467 = vector.extract_strided_slice %3 {offsets = [0, 0, 8], sizes = [2, 8, 8], strides = [1, 1, 1]} : vector<2x8x40xf32> to vector<2x8x8xf32>
    "tpu.trace_start"() <{level = 10 : i32, message = "bqd,bkd->bqk"}> : () -> ()
    %cst_108 = arith.constant dense<0.000000e+00> : vector<2x8x8xf32>
    %468 = tpu.matmul %466, %467, %cst_108 {dimension_numbers = #tpu.dot_dimension_numbers<[2], [2], [1], [1], [0, 0, 0, 1, 1, 1], [0], [0]>} : vector<2x8x8xf32>, vector<2x8x8xf32>, vector<2x8x8xf32> -> vector<2x8x8xf32>
    "tpu.trace_stop"() : () -> ()
    %cst_109 = arith.constant dense<0xFF800000> : vector<2x8xf32>
    %469 = vector.multi_reduction <maximumf>, %468, %cst_109 [2] : vector<2x8x8xf32> to vector<2x8xf32>
    %470 = vector.shape_cast %469 : vector<2x8xf32> to vector<2x8x1xf32>
    %471 = arith.maximumf %45, %470 : vector<2x8x1xf32>
    %472 = vector.broadcast %471 : vector<2x8x1xf32> to vector<2x8x8xf32>
    %473 = arith.subf %468, %472 : vector<2x8x8xf32>
    %474 = math.exp %473 : vector<2x8x8xf32>
    %475 = arith.subf %45, %471 : vector<2x8x1xf32>
    %476 = math.exp %475 : vector<2x8x1xf32>
    %477 = arith.mulf %476, %50 : vector<2x8x1xf32>
    %cst_110 = arith.constant dense<0.000000e+00> : vector<2x8xf32>
    %478 = vector.multi_reduction <add>, %474, %cst_110 [2] : vector<2x8x8xf32> to vector<2x8xf32>
    %479 = vector.shape_cast %478 : vector<2x8xf32> to vector<2x8x1xf32>
    %480 = arith.addf %477, %479 : vector<2x8x1xf32>
    "tpu.trace_start"() <{level = 10 : i32, message = "bqk,bkd->bqd"}> : () -> ()
    %cst_111 = arith.constant dense<0.000000e+00> : vector<2x8x8xf32>
    %481 = tpu.matmul %474, %467, %cst_111 {dimension_numbers = #tpu.dot_dimension_numbers<[2], [1], [1], [2], [0, 0, 0, 1, 1, 2], [0], [0]>} : vector<2x8x8xf32>, vector<2x8x8xf32>, vector<2x8x8xf32> -> vector<2x8x8xf32>
    "tpu.trace_stop"() : () -> ()
    %482 = vector.extract_strided_slice %81 {offsets = [0, 0, 8], sizes = [2, 8, 8], strides = [1, 1, 1]} : vector<2x8x40xf32> to vector<2x8x8xf32>
    %483 = vector.broadcast %476 : vector<2x8x1xf32> to vector<2x8x8xf32>
    %484 = arith.mulf %483, %482 : vector<2x8x8xf32>
    %485 = arith.addf %484, %481 : vector<2x8x8xf32>
    %486 = vector.broadcast %480 : vector<2x8x1xf32> to vector<2x8x8xf32>
    %487 = arith.divf %485, %486 : vector<2x8x8xf32>
    %488 = vector.shape_cast %487 : vector<2x8x8xf32> to vector<16x8xf32>
    %c0_112 = arith.constant 0 : index
    %c128 = arith.constant 128 : index
    %489 = vector.load %arg13[%c0_112, %c128] : memref<16x160xf32, #tpu.memory_space<vmem>>, vector<16x8xf32>
    tpu.vector_store %arg13[%c0_112, %c128], %488 {strides = array<i32>} : memref<16x160xf32, #tpu.memory_space<vmem>>, vector<16x8xf32>,
    %490 = vector.extract_strided_slice %28 {offsets = [0, 0, 16], sizes = [2, 8, 8], strides = [1, 1, 1]} : vector<2x8x40xf32> to vector<2x8x8xf32>
    %491 = vector.extract_strided_slice %3 {offsets = [0, 0, 16], sizes = [2, 8, 8], strides = [1, 1, 1]} : vector<2x8x40xf32> to vector<2x8x8xf32>
    "tpu.trace_start"() <{level = 10 : i32, message = "bqd,bkd->bqk"}> : () -> ()
    %cst_113 = arith.constant dense<0.000000e+00> : vector<2x8x8xf32>
    %492 = tpu.matmul %490, %491, %cst_113 {dimension_numbers = #tpu.dot_dimension_numbers<[2], [2], [1], [1], [0, 0, 0, 1, 1, 1], [0], [0]>} : vector<2x8x8xf32>, vector<2x8x8xf32>, vector<2x8x8xf32> -> vector<2x8x8xf32>
    "tpu.trace_stop"() : () -> ()
    %cst_114 = arith.constant dense<0xFF800000> : vector<2x8xf32>
    %493 = vector.multi_reduction <maximumf>, %492, %cst_114 [2] : vector<2x8x8xf32> to vector<2x8xf32>
    %494 = vector.shape_cast %493 : vector<2x8xf32> to vector<2x8x1xf32>
    %495 = arith.maximumf %53, %494 : vector<2x8x1xf32>
    %496 = vector.broadcast %495 : vector<2x8x1xf32> to vector<2x8x8xf32>
    %497 = arith.subf %492, %496 : vector<2x8x8xf32>
    %498 = math.exp %497 : vector<2x8x8xf32>
    %499 = arith.subf %53, %495 : vector<2x8x1xf32>
    %500 = math.exp %499 : vector<2x8x1xf32>
    %501 = arith.mulf %500, %58 : vector<2x8x1xf32>
    %cst_115 = arith.constant dense<0.000000e+00> : vector<2x8xf32>
    %502 = vector.multi_reduction <add>, %498, %cst_115 [2] : vector<2x8x8xf32> to vector<2x8xf32>
    %503 = vector.shape_cast %502 : vector<2x8xf32> to vector<2x8x1xf32>
    %504 = arith.addf %501, %503 : vector<2x8x1xf32>
    "tpu.trace_start"() <{level = 10 : i32, message = "bqk,bkd->bqd"}> : () -> ()
    %cst_116 = arith.constant dense<0.000000e+00> : vector<2x8x8xf32>
    %505 = tpu.matmul %498, %491, %cst_116 {dimension_numbers = #tpu.dot_dimension_numbers<[2], [1], [1], [2], [0, 0, 0, 1, 1, 2], [0], [0]>} : vector<2x8x8xf32>, vector<2x8x8xf32>, vector<2x8x8xf32> -> vector<2x8x8xf32>
    "tpu.trace_stop"() : () -> ()
    %506 = vector.extract_strided_slice %81 {offsets = [0, 0, 16], sizes = [2, 8, 8], strides = [1, 1, 1]} : vector<2x8x40xf32> to vector<2x8x8xf32>
    %507 = vector.broadcast %500 : vector<2x8x1xf32> to vector<2x8x8xf32>
    %508 = arith.mulf %507, %506 : vector<2x8x8xf32>
    %509 = arith.addf %508, %505 : vector<2x8x8xf32>
    %510 = vector.broadcast %504 : vector<2x8x1xf32> to vector<2x8x8xf32>
    %511 = arith.divf %509, %510 : vector<2x8x8xf32>
    %512 = vector.shape_cast %511 : vector<2x8x8xf32> to vector<16x8xf32>
    %c0_117 = arith.constant 0 : index
    %c136 = arith.constant 136 : index
    %513 = vector.load %arg13[%c0_117, %c136] : memref<16x160xf32, #tpu.memory_space<vmem>>, vector<16x8xf32>
    tpu.vector_store %arg13[%c0_117, %c136], %512 {strides = array<i32>} : memref<16x160xf32, #tpu.memory_space<vmem>>, vector<16x8xf32>,
    %514 = vector.extract_strided_slice %28 {offsets = [0, 0, 24], sizes = [2, 8, 8], strides = [1, 1, 1]} : vector<2x8x40xf32> to vector<2x8x8xf32>
    %515 = vector.extract_strided_slice %3 {offsets = [0, 0, 24], sizes = [2, 8, 8], strides = [1, 1, 1]} : vector<2x8x40xf32> to vector<2x8x8xf32>
    "tpu.trace_start"() <{level = 10 : i32, message = "bqd,bkd->bqk"}> : () -> ()
    %cst_118 = arith.constant dense<0.000000e+00> : vector<2x8x8xf32>
    %516 = tpu.matmul %514, %515, %cst_118 {dimension_numbers = #tpu.dot_dimension_numbers<[2], [2], [1], [1], [0, 0, 0, 1, 1, 1], [0], [0]>} : vector<2x8x8xf32>, vector<2x8x8xf32>, vector<2x8x8xf32> -> vector<2x8x8xf32>
    "tpu.trace_stop"() : () -> ()
    %cst_119 = arith.constant dense<0xFF800000> : vector<2x8xf32>
    %517 = vector.multi_reduction <maximumf>, %516, %cst_119 [2] : vector<2x8x8xf32> to vector<2x8xf32>
    %518 = vector.shape_cast %517 : vector<2x8xf32> to vector<2x8x1xf32>
    %519 = arith.maximumf %61, %518 : vector<2x8x1xf32>
    %520 = vector.broadcast %519 : vector<2x8x1xf32> to vector<2x8x8xf32>
    %521 = arith.subf %516, %520 : vector<2x8x8xf32>
    %522 = math.exp %521 : vector<2x8x8xf32>
    %523 = arith.subf %61, %519 : vector<2x8x1xf32>
    %524 = math.exp %523 : vector<2x8x1xf32>
    %525 = arith.mulf %524, %66 : vector<2x8x1xf32>
    %cst_120 = arith.constant dense<0.000000e+00> : vector<2x8xf32>
    %526 = vector.multi_reduction <add>, %522, %cst_120 [2] : vector<2x8x8xf32> to vector<2x8xf32>
    %527 = vector.shape_cast %526 : vector<2x8xf32> to vector<2x8x1xf32>
    %528 = arith.addf %525, %527 : vector<2x8x1xf32>
    "tpu.trace_start"() <{level = 10 : i32, message = "bqk,bkd->bqd"}> : () -> ()
    %cst_121 = arith.constant dense<0.000000e+00> : vector<2x8x8xf32>
    %529 = tpu.matmul %522, %515, %cst_121 {dimension_numbers = #tpu.dot_dimension_numbers<[2], [1], [1], [2], [0, 0, 0, 1, 1, 2], [0], [0]>} : vector<2x8x8xf32>, vector<2x8x8xf32>, vector<2x8x8xf32> -> vector<2x8x8xf32>
    "tpu.trace_stop"() : () -> ()
    %530 = vector.extract_strided_slice %81 {offsets = [0, 0, 24], sizes = [2, 8, 8], strides = [1, 1, 1]} : vector<2x8x40xf32> to vector<2x8x8xf32>
    %531 = vector.broadcast %524 : vector<2x8x1xf32> to vector<2x8x8xf32>
    %532 = arith.mulf %531, %530 : vector<2x8x8xf32>
    %533 = arith.addf %532, %529 : vector<2x8x8xf32>
    %534 = vector.broadcast %528 : vector<2x8x1xf32> to vector<2x8x8xf32>
    %535 = arith.divf %533, %534 : vector<2x8x8xf32>
    %536 = vector.shape_cast %535 : vector<2x8x8xf32> to vector<16x8xf32>
    %c0_122 = arith.constant 0 : index
    %c144 = arith.constant 144 : index
    %537 = vector.load %arg13[%c0_122, %c144] : memref<16x160xf32, #tpu.memory_space<vmem>>, vector<16x8xf32>
    tpu.vector_store %arg13[%c0_122, %c144], %536 {strides = array<i32>} : memref<16x160xf32, #tpu.memory_space<vmem>>, vector<16x8xf32>,
    %538 = vector.extract_strided_slice %28 {offsets = [0, 0, 32], sizes = [2, 8, 8], strides = [1, 1, 1]} : vector<2x8x40xf32> to vector<2x8x8xf32>
    %539 = vector.extract_strided_slice %3 {offsets = [0, 0, 32], sizes = [2, 8, 8], strides = [1, 1, 1]} : vector<2x8x40xf32> to vector<2x8x8xf32>
    "tpu.trace_start"() <{level = 10 : i32, message = "bqd,bkd->bqk"}> : () -> ()
    %cst_123 = arith.constant dense<0.000000e+00> : vector<2x8x8xf32>
    %540 = tpu.matmul %538, %539, %cst_123 {dimension_numbers = #tpu.dot_dimension_numbers<[2], [2], [1], [1], [0, 0, 0, 1, 1, 1], [0], [0]>} : vector<2x8x8xf32>, vector<2x8x8xf32>, vector<2x8x8xf32> -> vector<2x8x8xf32>
    "tpu.trace_stop"() : () -> ()
    %cst_124 = arith.constant dense<0xFF800000> : vector<2x8xf32>
    %541 = vector.multi_reduction <maximumf>, %540, %cst_124 [2] : vector<2x8x8xf32> to vector<2x8xf32>
    %542 = vector.shape_cast %541 : vector<2x8xf32> to vector<2x8x1xf32>
    %543 = arith.maximumf %69, %542 : vector<2x8x1xf32>
    %544 = vector.broadcast %543 : vector<2x8x1xf32> to vector<2x8x8xf32>
    %545 = arith.subf %540, %544 : vector<2x8x8xf32>
    %546 = math.exp %545 : vector<2x8x8xf32>
    %547 = arith.subf %69, %543 : vector<2x8x1xf32>
    %548 = math.exp %547 : vector<2x8x1xf32>
    %549 = arith.mulf %548, %74 : vector<2x8x1xf32>
    %cst_125 = arith.constant dense<0.000000e+00> : vector<2x8xf32>
    %550 = vector.multi_reduction <add>, %546, %cst_125 [2] : vector<2x8x8xf32> to vector<2x8xf32>
    %551 = vector.shape_cast %550 : vector<2x8xf32> to vector<2x8x1xf32>
    %552 = arith.addf %549, %551 : vector<2x8x1xf32>
    "tpu.trace_start"() <{level = 10 : i32, message = "bqk,bkd->bqd"}> : () -> ()
    %cst_126 = arith.constant dense<0.000000e+00> : vector<2x8x8xf32>
    %553 = tpu.matmul %546, %539, %cst_126 {dimension_numbers = #tpu.dot_dimension_numbers<[2], [1], [1], [2], [0, 0, 0, 1, 1, 2], [0], [0]>} : vector<2x8x8xf32>, vector<2x8x8xf32>, vector<2x8x8xf32> -> vector<2x8x8xf32>
    "tpu.trace_stop"() : () -> ()
    %554 = vector.extract_strided_slice %81 {offsets = [0, 0, 32], sizes = [2, 8, 8], strides = [1, 1, 1]} : vector<2x8x40xf32> to vector<2x8x8xf32>
    %555 = vector.broadcast %548 : vector<2x8x1xf32> to vector<2x8x8xf32>
    %556 = arith.mulf %555, %554 : vector<2x8x8xf32>
    %557 = arith.addf %556, %553 : vector<2x8x8xf32>
    %558 = vector.broadcast %552 : vector<2x8x1xf32> to vector<2x8x8xf32>
    %559 = arith.divf %557, %558 : vector<2x8x8xf32>
    %560 = vector.shape_cast %559 : vector<2x8x8xf32> to vector<16x8xf32>
    %c0_127 = arith.constant 0 : index
    %c152 = arith.constant 152 : index
    %561 = vector.load %arg13[%c0_127, %c152] : memref<16x160xf32, #tpu.memory_space<vmem>>, vector<16x8xf32>
    tpu.vector_store %arg13[%c0_127, %c152], %560 {strides = array<i32>} : memref<16x160xf32, #tpu.memory_space<vmem>>, vector<16x8xf32>,
    %c0_128 = arith.constant 0 : index
    %c0_129 = arith.constant 0 : index
    %562 = vector.load %arg13[%c0_128, %c0_129] : memref<16x160xf32, #tpu.memory_space<vmem>>, vector<16x160xf32>
    %563 = arith.index_cast %arg0 : i32 to index
    %c0_130 = arith.constant 0 : index
    %c0_131 = arith.constant 0 : index
    %564 = vector.load %arg8[%563, %c0_130, %c0_131] : memref<4x160x1024xf32, #tpu.memory_space<vmem>>, vector<1x160x1024xf32>
    %565 = vector.shape_cast %564 : vector<1x160x1024xf32> to vector<160x1024xf32>
    %cst_132 = arith.constant dense<0.000000e+00> : vector<16x1024xf32>
    %566 = tpu.matmul %562, %565, %cst_132 {dimension_numbers = #tpu.dot_dimension_numbers<[1], [0], [0], [1], [0, 0, 1, 1], [], []>} : vector<16x160xf32>, vector<160x1024xf32>, vector<16x1024xf32> -> vector<16x1024xf32>
    %567 = arith.index_cast %arg0 : i32 to index
    %c0_133 = arith.constant 0 : index
    %c0_134 = arith.constant 0 : index
    %568 = vector.load %arg9[%567, %c0_133, %c0_134] : memref<4x1x1024xf32, #tpu.memory_space<vmem>>, vector<1x1x1024xf32>
    %569 = vector.shape_cast %568 : vector<1x1x1024xf32> to vector<1x1024xf32>
    %570 = vector.broadcast %569 : vector<1x1024xf32> to vector<16x1024xf32>
    %571 = arith.addf %566, %570 : vector<16x1024xf32>
    %572 = arith.index_cast %arg0 : i32 to index
    %c0_135 = arith.constant 0 : index
    %573 = memref.load %arg1[%572, %c0_135] : memref<4x2xf32, #tpu.memory_space<smem>>
    %cst_136 = arith.constant 0.000000e+00 : f32
    %574 = vector.broadcast %cst_136 : f32 to vector<16x1024xf32>
    %575 = arith.cmpf oge, %571, %574 : vector<16x1024xf32>
    %576 = vector.broadcast %573 : f32 to vector<16x1024xf32>
    %577 = arith.mulf %576, %571 : vector<16x1024xf32>
    %578 = arith.select %575, %571, %577 : vector<16x1024xi1>, vector<16x1024xf32>
    %579 = arith.index_cast %arg0 : i32 to index
    %c0_137 = arith.constant 0 : index
    %c0_138 = arith.constant 0 : index
    %580 = vector.load %arg10[%579, %c0_137, %c0_138] : memref<4x1024x40xf32, #tpu.memory_space<vmem>>, vector<1x1024x40xf32>
    %581 = vector.shape_cast %580 : vector<1x1024x40xf32> to vector<1024x40xf32>
    %cst_139 = arith.constant dense<0.000000e+00> : vector<16x40xf32>
    %582 = tpu.matmul %578, %581, %cst_139 {dimension_numbers = #tpu.dot_dimension_numbers<[1], [0], [0], [1], [0, 0, 1, 1], [], []>} : vector<16x1024xf32>, vector<1024x40xf32>, vector<16x40xf32> -> vector<16x40xf32>
    %583 = arith.index_cast %arg0 : i32 to index
    %c0_140 = arith.constant 0 : index
    %c0_141 = arith.constant 0 : index
    %584 = vector.load %arg11[%583, %c0_140, %c0_141] : memref<4x1x40xf32, #tpu.memory_space<vmem>>, vector<1x1x40xf32>
    %585 = vector.shape_cast %584 : vector<1x1x40xf32> to vector<1x40xf32>
    %586 = vector.broadcast %585 : vector<1x40xf32> to vector<16x40xf32>
    %587 = arith.addf %582, %586 : vector<16x40xf32>
    %588 = arith.index_cast %arg0 : i32 to index
    %c1 = arith.constant 1 : index
    %589 = memref.load %arg1[%588, %c1] : memref<4x2xf32, #tpu.memory_space<smem>>
    %cst_142 = arith.constant 0.000000e+00 : f32
    %590 = vector.broadcast %cst_142 : f32 to vector<16x40xf32>
    %591 = arith.cmpf oge, %587, %590 : vector<16x40xf32>
    %592 = vector.broadcast %589 : f32 to vector<16x40xf32>
    %593 = arith.mulf %592, %587 : vector<16x40xf32>
    %594 = arith.select %591, %587, %593 : vector<16x40xi1>, vector<16x40xf32>
    %595 = arith.addf %594, %29 : vector<16x40xf32>
    %cst_143 = arith.constant dense<0.000000e+00> : vector<16xf32>
    %596 = vector.multi_reduction <add>, %595, %cst_143 [1] : vector<16x40xf32> to vector<16xf32>
    %597 = vector.shape_cast %596 : vector<16xf32> to vector<16x1xf32>
    %cst_144 = arith.constant 4.000000e+01 : f32
    %598 = vector.broadcast %cst_144 : f32 to vector<16x1xf32>
    %599 = arith.divf %597, %598 : vector<16x1xf32>
    %600 = vector.broadcast %599 : vector<16x1xf32> to vector<16x40xf32>
    %601 = arith.subf %595, %600 : vector<16x40xf32>
    %602 = arith.mulf %601, %601 : vector<16x40xf32>
    %cst_145 = arith.constant dense<0.000000e+00> : vector<16xf32>
    %603 = vector.multi_reduction <add>, %602, %cst_145 [1] : vector<16x40xf32> to vector<16xf32>
    %604 = vector.shape_cast %603 : vector<16xf32> to vector<16x1xf32>
    %cst_146 = arith.constant 4.000000e+01 : f32
    %605 = vector.broadcast %cst_146 : f32 to vector<16x1xf32>
    %606 = arith.divf %604, %605 : vector<16x1xf32>
    %607 = vector.broadcast %599 : vector<16x1xf32> to vector<16x40xf32>
    %608 = arith.subf %595, %607 : vector<16x40xf32>
    %cst_147 = arith.constant 9.99999974E-6 : f32
    %609 = vector.broadcast %cst_147 : f32 to vector<16x1xf32>
    %610 = arith.addf %606, %609 : vector<16x1xf32>
    %611 = math.rsqrt %610 : vector<16x1xf32>
    %612 = vector.broadcast %611 : vector<16x1xf32> to vector<16x40xf32>
    %613 = arith.mulf %608, %612 : vector<16x40xf32>
    %614 = vector.shape_cast %613 : vector<16x40xf32> to vector<2x8x40xf32>
    %c0_148 = arith.constant 0 : index
    %c0_149 = arith.constant 0 : index
    %c0_150 = arith.constant 0 : index
    %c0_151 = arith.constant 0 : index
    %615 = vector.load %arg12[%c0_148, %c0_149, %c0_150, %c0_151] : memref<1x2x8x40xf32, #tpu.memory_space<vmem>>, vector<1x2x8x40xf32>
    %616 = vector.shape_cast %615 : vector<1x2x8x40xf32> to vector<2x8x40xf32>
    %617 = vector.shape_cast %614 : vector<2x8x40xf32> to vector<1x2x8x40xf32>
    tpu.vector_store %arg12[%c0_148, %c0_149, %c0_150, %c0_151], %617 {strides = array<i32>} : memref<1x2x8x40xf32, #tpu.memory_space<vmem>>, vector<1x2x8x40xf32>,
    return
  }
  func.func @transform_0(%arg0: i32) -> (i32, i32) {
    %c0_i32 = arith.constant 0 : i32
    %c0_i32_0 = arith.constant 0 : i32
    %c0_i32_1 = arith.constant 0 : i32
    return %c0_i32, %c0_i32_0 : i32, i32
  }
  func.func @transform_1(%arg0: i32) -> (i32, i32, i32) {
    %c0_i32 = arith.constant 0 : i32
    %c0_i32_0 = arith.constant 0 : i32
    %c0_i32_1 = arith.constant 0 : i32
    %c0_i32_2 = arith.constant 0 : i32
    return %c0_i32, %c0_i32_0, %c0_i32_1 : i32, i32, i32
  }
  func.func @transform_2(%arg0: i32) -> (i32, i32, i32) {
    %c0_i32 = arith.constant 0 : i32
    %c0_i32_0 = arith.constant 0 : i32
    %c0_i32_1 = arith.constant 0 : i32
    %c0_i32_2 = arith.constant 0 : i32
    return %c0_i32, %c0_i32_0, %c0_i32_1 : i32, i32, i32
  }
  func.func @transform_3(%arg0: i32) -> (i32, i32, i32) {
    %c0_i32 = arith.constant 0 : i32
    %c0_i32_0 = arith.constant 0 : i32
    %c0_i32_1 = arith.constant 0 : i32
    %c0_i32_2 = arith.constant 0 : i32
    return %c0_i32, %c0_i32_0, %c0_i32_1 : i32, i32, i32
  }
  func.func @transform_4(%arg0: i32) -> (i32, i32, i32) {
    %c0_i32 = arith.constant 0 : i32
    %c0_i32_0 = arith.constant 0 : i32
    %c0_i32_1 = arith.constant 0 : i32
    %c0_i32_2 = arith.constant 0 : i32
    return %c0_i32, %c0_i32_0, %c0_i32_1 : i32, i32, i32
  }
  func.func @transform_5(%arg0: i32) -> (i32, i32, i32) {
    %c0_i32 = arith.constant 0 : i32
    %c0_i32_0 = arith.constant 0 : i32
    %c0_i32_1 = arith.constant 0 : i32
    %c0_i32_2 = arith.constant 0 : i32
    return %c0_i32, %c0_i32_0, %c0_i32_1 : i32, i32, i32
  }
  func.func @transform_6(%arg0: i32) -> (i32, i32, i32) {
    %c0_i32 = arith.constant 0 : i32
    %c0_i32_0 = arith.constant 0 : i32
    %c0_i32_1 = arith.constant 0 : i32
    %c0_i32_2 = arith.constant 0 : i32
    return %c0_i32, %c0_i32_0, %c0_i32_1 : i32, i32, i32
  }
  func.func @transform_7(%arg0: i32) -> (i32, i32, i32) {
    %c0_i32 = arith.constant 0 : i32
    %c0_i32_0 = arith.constant 0 : i32
    %c0_i32_1 = arith.constant 0 : i32
    %c0_i32_2 = arith.constant 0 : i32
    return %c0_i32, %c0_i32_0, %c0_i32_1 : i32, i32, i32
  }
  func.func @transform_8(%arg0: i32) -> (i32, i32, i32) {
    %c0_i32 = arith.constant 0 : i32
    %c0_i32_0 = arith.constant 0 : i32
    %c0_i32_1 = arith.constant 0 : i32
    %c0_i32_2 = arith.constant 0 : i32
    return %c0_i32, %c0_i32_0, %c0_i32_1 : i32, i32, i32
  }
  func.func @transform_9(%arg0: i32) -> (i32, i32, i32) {
    %c0_i32 = arith.constant 0 : i32
    %c0_i32_0 = arith.constant 0 : i32
    %c0_i32_1 = arith.constant 0 : i32
    %c0_i32_2 = arith.constant 0 : i32
    return %c0_i32, %c0_i32_0, %c0_i32_1 : i32, i32, i32
  }
  func.func @transform_10(%arg0: i32) -> (i32, i32, i32) {
    %c0_i32 = arith.constant 0 : i32
    %c0_i32_0 = arith.constant 0 : i32
    %c0_i32_1 = arith.constant 0 : i32
    %c0_i32_2 = arith.constant 0 : i32
    return %c0_i32, %c0_i32_0, %c0_i32_1 : i32, i32, i32
  }
  func.func @transform_11(%arg0: i32) -> (i32, i32, i32, i32) {
    %c0_i32 = arith.constant 0 : i32
    %c0_i32_0 = arith.constant 0 : i32
    %c0_i32_1 = arith.constant 0 : i32
    %c0_i32_2 = arith.constant 0 : i32
    return %arg0, %c0_i32, %c0_i32_0, %c0_i32_1 : i32, i32, i32, i32
  }
}

</mosaic_0001>

<llo_original>
// kernel: utility_layer.1
$region0: #{utility_layer.1}
  #allocation0 [shape = 'u32[]', space=smem, size = 0x4, offset = 0x4, fixed_abs, tag = 'smem constant byte address 0x4 - core index']
  #allocation1 [shape = 'u32[144,128]{1,0:T(1,128)}', space=vmem, size = 0x12000, scoped, tag = 'internal scratch']
  #allocation2 [shape = 'f32[16,160]{1,0:T(8,128)}', space=vmem, size = 0x4000, scoped, tag = 'scratch operand']
  %s0 = inlined_call_operand.vmem [shape: f32[4,2], index: 0, kind: input, shape index: {}]
  %s1 = inlined_call_operand.hbm [shape: f32[2,8,40], index: 1, kind: input, shape index: {}]
  %s2 = inlined_call_operand.hbm [shape: f32[2,8,40], index: 2, kind: input, shape index: {}]
  %s3 = inlined_call_operand.hbm [shape: f32[2,8,40], index: 3, kind: input, shape index: {}]
  %s4 = inlined_call_operand.hbm [shape: f32[2,8,40], index: 4, kind: input, shape index: {}]
  %s5 = inlined_call_operand.hbm [shape: f32[4,40,320], index: 5, kind: input, shape index: {}]
  %s6 = inlined_call_operand.hbm [shape: f32[4,320,40], index: 6, kind: input, shape index: {}]
  %s7 = inlined_call_operand.hbm [shape: f32[4,160,1024], index: 7, kind: input, shape index: {}]
  %s8 = inlined_call_operand.hbm [shape: f32[4,1,1024], index: 8, kind: input, shape index: {}]
  %s9 = inlined_call_operand.hbm [shape: f32[4,1024,40], index: 9, kind: input, shape index: {}]
  %s10 = inlined_call_operand.hbm [shape: f32[4,1,40], index: 10, kind: input, shape index: {}]
  %s11 = inlined_call_operand.vmem [shape: f32[4,2,8,40], index: 11, kind: output, shape index: {}]
  %s12 = sld [smem:[#allocation0]]
  $region121: #{utility_layer.1} parent=0
    _
  %s14 = ssub.s32 1, %s12
  %s15 = scalar_select 0, %s14, %s12
  $region1: #{utility_layer.1} parent=0
    #allocation3 [shape = 'u8[2048]{0}', space=smem, size = 0x800, scoped, tag = 'input window, operand 0, single buffered']
    #allocation4 [shape = 's32[2]{0}', space=sflag, size = 0x8, scoped, tag = 'scoped memory for utility_layer.1']
    #allocation5 [shape = 's32[2]{0}', space=sflag, size = 0x8, scoped, tag = 'scoped memory for utility_layer.1']
    #allocation6 [shape = 'u8[8192]{0}', space=vmem, size = 0x2000, scoped, tag = 'input window, operand 1, single buffered']
    #allocation7 [shape = 'u8[8192]{0}', space=vmem, size = 0x2000, scoped, tag = 'input window, operand 2, single buffered']
    #allocation8 [shape = 's32[1]{0}', space=sflag, size = 0x4, scoped, tag = 'scoped memory for utility_layer.1']
    #allocation9 [shape = 'u8[8192]{0}', space=vmem, size = 0x2000, scoped, tag = 'input window, operand 3, single buffered']
    #allocation10 [shape = 'u8[8192]{0}', space=vmem, size = 0x2000, scoped, tag = 'input window, operand 4, single buffered']
    #allocation11 [shape = 's32[1]{0}', space=sflag, size = 0x4, scoped, tag = 'scoped memory for utility_layer.1']
    #allocation12 [shape = 'u8[245760]{0}', space=vmem, size = 0x3c000, scoped, tag = 'input window, operand 5, single buffered']
    #allocation13 [shape = 'u8[655360]{0}', space=vmem, size = 0xa0000, scoped, tag = 'input window, operand 6, single buffered']
    #allocation14 [shape = 's32[1]{0}', space=sflag, size = 0x4, scoped, tag = 'scoped memory for utility_layer.1']
    #allocation15 [shape = 'u8[2621440]{0}', space=vmem, size = 0x280000, scoped, tag = 'input window, operand 7, single buffered']
    #allocation16 [shape = 'u8[16384]{0}', space=vmem, size = 0x4000, scoped, tag = 'input window, operand 8, single buffered']
    #allocation17 [shape = 's32[1]{0}', space=sflag, size = 0x4, scoped, tag = 'scoped memory for utility_layer.1']
    #allocation18 [shape = 'u8[2097152]{0}', space=vmem, size = 0x200000, scoped, tag = 'input window, operand 9, single buffered']
    #allocation19 [shape = 'u8[2048]{0}', space=vmem, size = 0x800, scoped, tag = 'input window, operand 10, single buffered']
    #allocation20 [shape = 's32[1]{0}', space=sflag, size = 0x4, scoped, tag = 'scoped memory for utility_layer.1']
    %16 = vsyncpa [#allocation5], 0
    %17 = vsyncpa [#allocation4], 0
    %18 = vsyncpa [#allocation8], 0
    %19 = vsyncpa [#allocation11], 0
    %20 = vsyncpa [#allocation14], 0
    %21 = vsyncpa [#allocation17], 0
    %22 = vsyncpa [#allocation20], 0
    loop: start=0, step=1, limit=6
    $region2: #{utility_layer.1} parent=1 // loop_pre_header
      _
    $region3: #{utility_layer.1} parent=1 // loop_header
      %s24 = sphi 0, %s28
      %p25 = scmp.ge.s32.totalorder %s24, 6
      %s32 = sphi 0, %s32
      %s34 = sphi 0, %s32
      %s35 = sphi 0, %s34
      %s49 = sphi 0, %s35
      %s53 = sphi 0, %s53
      %s55 = sphi 0, %s53
      %s56 = sphi 0, %s55
      %s70 = sphi 0, %s56
      %s74 = sphi 0, %s74
      %s76 = sphi 0, %s74
      %s77 = sphi 0, %s76
      %s91 = sphi 0, %s77
      %s95 = sphi 0, %s95
      %s97 = sphi 0, %s95
      %s98 = sphi 0, %s97
      %s112 = sphi 0, %s98
      %s116 = sphi 0, %s116
      %s118 = sphi 0, %s116
      %s119 = sphi 0, %s118
      %s133 = sphi 0, %s119
      %s137 = sphi 0, %s137
      %s139 = sphi 0, %s137
      %s140 = sphi 0, %s139
      %s154 = sphi 0, %s140
      %s158 = sphi 0, %s158
      %s160 = sphi 0, %s158
      %s161 = sphi 0, %s160
      %s175 = sphi 0, %s161
      %s179 = sphi 0, %s179
      %s181 = sphi 0, %s179
      %s182 = sphi 0, %s181
      %s196 = sphi 0, %s182
      %s200 = sphi 0, %s200
      %s202 = sphi 0, %s200
      %s203 = sphi 0, %s202
      %s217 = sphi 0, %s203
      %s221 = sphi 0, %s221
      %s223 = sphi 0, %s221
      %s224 = sphi 0, %s223
      %s238 = sphi 0, %s224
      %s242 = sphi 0, %s242
      %s244 = sphi 0, %s242
      %s245 = sphi 0, %s244
      %s259 = sphi 0, %s245
      %s265 = sphi 0, %s267
      %s268 = sphi 0, %s265
      %s269 = sphi 0, %s268
      %s285 = sphi 0, %s269
    $region4: #{utility_layer.1} parent=1 // loop_header_branch
      %27 = sbr.rel (%p25) target = $region8
    $region5: #{utility_layer.1} parent=1 // loop_body
      %s29 = ssub.s32 %s24, 1
      %s30 = ssub.s32 %s24, 2
      %s31 = sadd.s32 %s24, 1
      %s33 = sadd.s32 %s32, 1
      %p36 = scmp.eq.s32.totalorder %s24, 3
      %p37 = scmp.ne.s32.totalorder %s32, %s34
      %p38 = scmp.eq.s32.totalorder %s24, 0
      %p39 = por %p37, %p38
      %p40 = scmp.ne.s32.totalorder %s32, %s34
      %p41 = scmp.eq.s32.totalorder %s29, 3
      %p42 = por %p40, %p41
      %p43 = scmp.ne.s32.totalorder %s34, %s35
      %p44 = scmp.eq.s32.totalorder %s29, 0
      %p45 = por %p43, %p44
      %p46 = scmp.ne.s32.totalorder %s34, %s35
      %p47 = scmp.eq.s32.totalorder %s30, 3
      %p48 = por %p46, %p47
      %p50 = scmp.ne.s32.totalorder %s35, %s49
      %p51 = scmp.eq.s32.totalorder %s30, 0
      %p52 = por %p50, %p51
      %s54 = sadd.s32 %s53, 1
      %p57 = scmp.eq.s32.totalorder %s24, 3
      %p58 = scmp.ne.s32.totalorder %s53, %s55
      %p59 = scmp.eq.s32.totalorder %s24, 0
      %p60 = por %p58, %p59
      %p61 = scmp.ne.s32.totalorder %s53, %s55
      %p62 = scmp.eq.s32.totalorder %s29, 3
      %p63 = por %p61, %p62
      %p64 = scmp.ne.s32.totalorder %s55, %s56
      %p65 = scmp.eq.s32.totalorder %s29, 0
      %p66 = por %p64, %p65
      %p67 = scmp.ne.s32.totalorder %s55, %s56
      %p68 = scmp.eq.s32.totalorder %s30, 3
      %p69 = por %p67, %p68
      %p71 = scmp.ne.s32.totalorder %s56, %s70
      %p72 = scmp.eq.s32.totalorder %s30, 0
      %p73 = por %p71, %p72
      %s75 = sadd.s32 %s74, 1
      %p78 = scmp.eq.s32.totalorder %s24, 3
      %p79 = scmp.ne.s32.totalorder %s74, %s76
      %p80 = scmp.eq.s32.totalorder %s24, 0
      %p81 = por %p79, %p80
      %p82 = scmp.ne.s32.totalorder %s74, %s76
      %p83 = scmp.eq.s32.totalorder %s29, 3
      %p84 = por %p82, %p83
      %p85 = scmp.ne.s32.totalorder %s76, %s77
      %p86 = scmp.eq.s32.totalorder %s29, 0
      %p87 = por %p85, %p86
      %p88 = scmp.ne.s32.totalorder %s76, %s77
      %p89 = scmp.eq.s32.totalorder %s30, 3
      %p90 = por %p88, %p89
      %p92 = scmp.ne.s32.totalorder %s77, %s91
      %p93 = scmp.eq.s32.totalorder %s30, 0
      %p94 = por %p92, %p93
      %s96 = sadd.s32 %s95, 1
      %p99 = scmp.eq.s32.totalorder %s24, 3
      %p100 = scmp.ne.s32.totalorder %s95, %s97
      %p101 = scmp.eq.s32.totalorder %s24, 0
      %p102 = por %p100, %p101
      %p103 = scmp.ne.s32.totalorder %s95, %s97
      %p104 = scmp.eq.s32.totalorder %s29, 3
      %p105 = por %p103, %p104
      %p106 = scmp.ne.s32.totalorder %s97, %s98
      %p107 = scmp.eq.s32.totalorder %s29, 0
      %p108 = por %p106, %p107
      %p109 = scmp.ne.s32.totalorder %s97, %s98
      %p110 = scmp.eq.s32.totalorder %s30, 3
      %p111 = por %p109, %p110
      %p113 = scmp.ne.s32.totalorder %s98, %s112
      %p114 = scmp.eq.s32.totalorder %s30, 0
      %p115 = por %p113, %p114
      %s117 = sadd.s32 %s116, 1
      %p120 = scmp.eq.s32.totalorder %s24, 3
      %p121 = scmp.ne.s32.totalorder %s116, %s118
      %p122 = scmp.eq.s32.totalorder %s24, 0
      %p123 = por %p121, %p122
      %p124 = scmp.ne.s32.totalorder %s116, %s118
      %p125 = scmp.eq.s32.totalorder %s29, 3
      %p126 = por %p124, %p125
      %p127 = scmp.ne.s32.totalorder %s118, %s119
      %p128 = scmp.eq.s32.totalorder %s29, 0
      %p129 = por %p127, %p128
      %p130 = scmp.ne.s32.totalorder %s118, %s119
      %p131 = scmp.eq.s32.totalorder %s30, 3
      %p132 = por %p130, %p131
      %p134 = scmp.ne.s32.totalorder %s119, %s133
      %p135 = scmp.eq.s32.totalorder %s30, 0
      %p136 = por %p134, %p135
      %s138 = sadd.s32 %s137, 1
      %p141 = scmp.eq.s32.totalorder %s24, 3
      %p142 = scmp.ne.s32.totalorder %s137, %s139
      %p143 = scmp.eq.s32.totalorder %s24, 0
      %p144 = por %p142, %p143
      %p145 = scmp.ne.s32.totalorder %s137, %s139
      %p146 = scmp.eq.s32.totalorder %s29, 3
      %p147 = por %p145, %p146
      %p148 = scmp.ne.s32.totalorder %s139, %s140
      %p149 = scmp.eq.s32.totalorder %s29, 0
      %p150 = por %p148, %p149
      %p151 = scmp.ne.s32.totalorder %s139, %s140
      %p152 = scmp.eq.s32.totalorder %s30, 3
      %p153 = por %p151, %p152
      %p155 = scmp.ne.s32.totalorder %s140, %s154
      %p156 = scmp.eq.s32.totalorder %s30, 0
      %p157 = por %p155, %p156
      %s159 = sadd.s32 %s158, 1
      %p162 = scmp.eq.s32.totalorder %s24, 3
      %p163 = scmp.ne.s32.totalorder %s158, %s160
      %p164 = scmp.eq.s32.totalorder %s24, 0
      %p165 = por %p163, %p164
      %p166 = scmp.ne.s32.totalorder %s158, %s160
      %p167 = scmp.eq.s32.totalorder %s29, 3
      %p168 = por %p166, %p167
      %p169 = scmp.ne.s32.totalorder %s160, %s161
      %p170 = scmp.eq.s32.totalorder %s29, 0
      %p171 = por %p169, %p170
      %p172 = scmp.ne.s32.totalorder %s160, %s161
      %p173 = scmp.eq.s32.totalorder %s30, 3
      %p174 = por %p172, %p173
      %p176 = scmp.ne.s32.totalorder %s161, %s175
      %p177 = scmp.eq.s32.totalorder %s30, 0
      %p178 = por %p176, %p177
      %s180 = sadd.s32 %s179, 1
      %p183 = scmp.eq.s32.totalorder %s24, 3
      %p184 = scmp.ne.s32.totalorder %s179, %s181
      %p185 = scmp.eq.s32.totalorder %s24, 0
      %p186 = por %p184, %p185
      %p187 = scmp.ne.s32.totalorder %s179, %s181
      %p188 = scmp.eq.s32.totalorder %s29, 3
      %p189 = por %p187, %p188
      %p190 = scmp.ne.s32.totalorder %s181, %s182
      %p191 = scmp.eq.s32.totalorder %s29, 0
      %p192 = por %p190, %p191
      %p193 = scmp.ne.s32.totalorder %s181, %s182
      %p194 = scmp.eq.s32.totalorder %s30, 3
      %p195 = por %p193, %p194
      %p197 = scmp.ne.s32.totalorder %s182, %s196
      %p198 = scmp.eq.s32.totalorder %s30, 0
      %p199 = por %p197, %p198
      %s201 = sadd.s32 %s200, 1
      %p204 = scmp.eq.s32.totalorder %s24, 3
      %p205 = scmp.ne.s32.totalorder %s200, %s202
      %p206 = scmp.eq.s32.totalorder %s24, 0
      %p207 = por %p205, %p206
      %p208 = scmp.ne.s32.totalorder %s200, %s202
      %p209 = scmp.eq.s32.totalorder %s29, 3
      %p210 = por %p208, %p209
      %p211 = scmp.ne.s32.totalorder %s202, %s203
      %p212 = scmp.eq.s32.totalorder %s29, 0
      %p213 = por %p211, %p212
      %p214 = scmp.ne.s32.totalorder %s202, %s203
      %p215 = scmp.eq.s32.totalorder %s30, 3
      %p216 = por %p214, %p215
      %p218 = scmp.ne.s32.totalorder %s203, %s217
      %p219 = scmp.eq.s32.totalorder %s30, 0
      %p220 = por %p218, %p219
      %s222 = sadd.s32 %s221, 1
      %p225 = scmp.eq.s32.totalorder %s24, 3
      %p226 = scmp.ne.s32.totalorder %s221, %s223
      %p227 = scmp.eq.s32.totalorder %s24, 0
      %p228 = por %p226, %p227
      %p229 = scmp.ne.s32.totalorder %s221, %s223
      %p230 = scmp.eq.s32.totalorder %s29, 3
      %p231 = por %p229, %p230
      %p232 = scmp.ne.s32.totalorder %s223, %s224
      %p233 = scmp.eq.s32.totalorder %s29, 0
      %p234 = por %p232, %p233
      %p235 = scmp.ne.s32.totalorder %s223, %s224
      %p236 = scmp.eq.s32.totalorder %s30, 3
      %p237 = por %p235, %p236
      %p239 = scmp.ne.s32.totalorder %s224, %s238
      %p240 = scmp.eq.s32.totalorder %s30, 0
      %p241 = por %p239, %p240
      %s243 = sadd.s32 %s242, 1
      %p246 = scmp.eq.s32.totalorder %s24, 3
      %p247 = scmp.ne.s32.totalorder %s242, %s244
      %p248 = scmp.eq.s32.totalorder %s24, 0
      %p249 = por %p247, %p248
      %p250 = scmp.ne.s32.totalorder %s242, %s244
      %p251 = scmp.eq.s32.totalorder %s29, 3
      %p252 = por %p250, %p251
      %p253 = scmp.ne.s32.totalorder %s244, %s245
      %p254 = scmp.eq.s32.totalorder %s29, 0
      %p255 = por %p253, %p254
      %p256 = scmp.ne.s32.totalorder %s244, %s245
      %p257 = scmp.eq.s32.totalorder %s30, 3
      %p258 = por %p256, %p257
      %p260 = scmp.ne.s32.totalorder %s245, %s259
      %p261 = scmp.eq.s32.totalorder %s30, 0
      %p262 = por %p260, %p261
      %s263 = ssub.s32 %s24, %s31
      %p264 = scmp.eq.s32.totalorder %s263, 0
      %s266 = sadd.s32 %s265, 1
      %s267 = scalar_select %p264, %s265, %s266
      %p270 = pneg %p264
      %p271 = scmp.eq.s32.totalorder %s24, 3
      %p272 = por %p270, %p271
      %p273 = scmp.ne.s32.totalorder %s265, %s268
      %p274 = scmp.eq.s32.totalorder %s24, 0
      %p275 = por %p273, %p274
      %p276 = scmp.ne.s32.totalorder %s265, %s268
      %p277 = scmp.eq.s32.totalorder %s29, 3
      %p278 = por %p276, %p277
      %p279 = scmp.ne.s32.totalorder %s268, %s269
      %p280 = scmp.eq.s32.totalorder %s29, 0
      %p281 = por %p279, %p280
      %p282 = scmp.ne.s32.totalorder %s268, %s269
      %p283 = scmp.eq.s32.totalorder %s30, 3
      %p284 = por %p282, %p283
      %p286 = scmp.ne.s32.totalorder %s269, %s285
      %p287 = scmp.eq.s32.totalorder %s30, 0
      %p288 = por %p286, %p287
      %p289 = scmp.le.s32.totalorder 1, %s24
      %p290 = scmp.lt.s32.totalorder %s24, 5
      %p291 = pnand %p289, %p290
      %p292 = pneg %p291
      // Predicated region
      $region9: #{utility_layer.1} parent=5 // pred_check
        _
      $region10: #{utility_layer.1} parent=5 // pred_check_branch
        %294 = sbr.rel (%p291) target = $region12
      $region11: #{utility_layer.1} parent=5 // pred_region
        %s295 = ssub.s32 %s24, 1
        // Predicated region
        $region13: #{utility_layer.1} parent=11 // pred_check
          %p296 = pneg %p45
        $region14: #{utility_layer.1} parent=11 // pred_check_branch
          %298 = sbr.rel (%p296) target = $region16
        $region15: #{utility_layer.1} parent=11 // pred_region
          %s300 = ssub.s32 64, 64
          %301 = vsyncadd [#allocation5], %s300
          %s303 = sshll.u32 %s0, 4
          %s304 = int_to_ptr.vmem [resolvable:$true] %s303
          %306 = dma.vmem_to_smem %s304, 64, [#allocation3], [#allocation5]
        $region16: #{utility_layer.1} parent=11 // pred_fallthru
          _
        // Predicated region
        $region17: #{utility_layer.1} parent=11 // pred_check
          %p307 = pneg %p66
        $region18: #{utility_layer.1} parent=11 // pred_check_branch
          %309 = sbr.rel (%p307) target = $region20
        $region19: #{utility_layer.1} parent=11 // pred_region
          %s311 = ssub.s32 256, 256
          %312 = vsyncadd [#allocation4], %s311
          %s313 = sshll.u32 [#allocation6], 4
          %s314 = int_to_ptr.vmem [resolvable:$true] %s313
          %319 = dma.hbm_to_vmem [thread:$0]  %s1, 256, %s314, [#allocation4], 128, 128, 8
        $region20: #{utility_layer.1} parent=11 // pred_fallthru
          _
        // Predicated region
        $region21: #{utility_layer.1} parent=11 // pred_check
          %p320 = pneg %p87
        $region22: #{utility_layer.1} parent=11 // pred_check_branch
          %322 = sbr.rel (%p320) target = $region24
        $region23: #{utility_layer.1} parent=11 // pred_region
          %s324 = ssub.s32 256, 256
          %325 = vsyncadd [#allocation8], %s324
          %s326 = sshll.u32 [#allocation7], 4
          %s327 = int_to_ptr.vmem [resolvable:$true] %s326
          %332 = dma.hbm_to_vmem [thread:$0]  %s2, 256, %s327, [#allocation8], 128, 128, 8
        $region24: #{utility_layer.1} parent=11 // pred_fallthru
          _
        // Predicated region
        $region25: #{utility_layer.1} parent=11 // pred_check
          %p333 = pneg %p108
        $region26: #{utility_layer.1} parent=11 // pred_check_branch
          %335 = sbr.rel (%p333) target = $region28
        $region27: #{utility_layer.1} parent=11 // pred_region
          %s337 = ssub.s32 256, 256
          %338 = vsyncadd [#allocation8], %s337
          %s339 = sshll.u32 [#allocation9], 4
          %s340 = int_to_ptr.vmem [resolvable:$true] %s339
          %345 = dma.hbm_to_vmem [thread:$0]  %s3, 256, %s340, [#allocation8], 128, 128, 8
        $region28: #{utility_layer.1} parent=11 // pred_fallthru
          _
        // Predicated region
        $region29: #{utility_layer.1} parent=11 // pred_check
          %p346 = pneg %p129
        $region30: #{utility_layer.1} parent=11 // pred_check_branch
          %348 = sbr.rel (%p346) target = $region32
        $region31: #{utility_layer.1} parent=11 // pred_region
          %s350 = ssub.s32 256, 256
          %351 = vsyncadd [#allocation11], %s350
          %s352 = sshll.u32 [#allocation10], 4
          %s353 = int_to_ptr.vmem [resolvable:$true] %s352
          %358 = dma.hbm_to_vmem [thread:$0]  %s4, 256, %s353, [#allocation11], 128, 128, 8
        $region32: #{utility_layer.1} parent=11 // pred_fallthru
          _
        // Predicated region
        $region33: #{utility_layer.1} parent=11 // pred_check
          %p359 = pneg %p150
        $region34: #{utility_layer.1} parent=11 // pred_check_branch
          %361 = sbr.rel (%p359) target = $region36
        $region35: #{utility_layer.1} parent=11 // pred_region
          %s363 = ssub.s32 7680, 7680
          %364 = vsyncadd [#allocation11], %s363
          %s365 = sshll.u32 [#allocation12], 4
          %s366 = int_to_ptr.vmem [resolvable:$true] %s365
          %371 = dma.hbm_to_vmem [thread:$0]  %s5, 7680, %s366, [#allocation11], 384, 384, 24
        $region36: #{utility_layer.1} parent=11 // pred_fallthru
          _
        // Predicated region
        $region37: #{utility_layer.1} parent=11 // pred_check
          %p372 = pneg %p171
        $region38: #{utility_layer.1} parent=11 // pred_check_branch
          %374 = sbr.rel (%p372) target = $region40
        $region39: #{utility_layer.1} parent=11 // pred_region
          %s376 = ssub.s32 20480, 20480
          %377 = vsyncadd [#allocation14], %s376
          %s378 = sshll.u32 [#allocation13], 4
          %s379 = int_to_ptr.vmem [resolvable:$true] %s378
          %384 = dma.hbm_to_vmem [thread:$0]  %s6, 20480, %s379, [#allocation14], 128, 128, 8
        $region40: #{utility_layer.1} parent=11 // pred_fallthru
          _
        // Predicated region
        $region41: #{utility_layer.1} parent=11 // pred_check
          %p385 = pneg %p192
        $region42: #{utility_layer.1} parent=11 // pred_check_branch
          %387 = sbr.rel (%p385) target = $region44
        $region43: #{utility_layer.1} parent=11 // pred_region
          %s389 = ssub.s32 81920, 81920
          %390 = vsyncadd [#allocation14], %s389
          %s391 = sshll.u32 [#allocation15], 4
          %s392 = int_to_ptr.vmem [resolvable:$true] %s391
          %397 = dma.hbm_to_vmem [thread:$0]  %s7, 81920, %s392, [#allocation14], 1024, 1024, 64
        $region44: #{utility_layer.1} parent=11 // pred_fallthru
          _
        // Predicated region
        $region45: #{utility_layer.1} parent=11 // pred_check
          %p398 = pneg %p213
        $region46: #{utility_layer.1} parent=11 // pred_check_branch
          %400 = sbr.rel (%p398) target = $region48
        $region47: #{utility_layer.1} parent=11 // pred_region
          %s402 = ssub.s32 512, 512
          %403 = vsyncadd [#allocation17], %s402
          %s404 = sshll.u32 [#allocation16], 4
          %s405 = int_to_ptr.vmem [resolvable:$true] %s404
          %410 = dma.hbm_to_vmem [thread:$0]  %s8, 512, %s405, [#allocation17], 128, 128, 8
        $region48: #{utility_layer.1} parent=11 // pred_fallthru
          _
        // Predicated region
        $region49: #{utility_layer.1} parent=11 // pred_check
          %p411 = pneg %p234
        $region50: #{utility_layer.1} parent=11 // pred_check_branch
          %413 = sbr.rel (%p411) target = $region52
        $region51: #{utility_layer.1} parent=11 // pred_region
          %s415 = ssub.s32 65536, 65536
          %416 = vsyncadd [#allocation17], %s415
          %s417 = sshll.u32 [#allocation18], 4
          %s418 = int_to_ptr.vmem [resolvable:$true] %s417
          %423 = dma.hbm_to_vmem [thread:$0]  %s9, 65536, %s418, [#allocation17], 128, 128, 8
        $region52: #{utility_layer.1} parent=11 // pred_fallthru
          _
        // Predicated region
        $region53: #{utility_layer.1} parent=11 // pred_check
          %p424 = pneg %p255
        $region54: #{utility_layer.1} parent=11 // pred_check_branch
          %426 = sbr.rel (%p424) target = $region56
        $region55: #{utility_layer.1} parent=11 // pred_region
          %s428 = ssub.s32 64, 64
          %429 = vsyncadd [#allocation20], %s428
          %s430 = sshll.u32 [#allocation19], 4
          %s431 = int_to_ptr.vmem [resolvable:$true] %s430
          %436 = dma.hbm_to_vmem [thread:$0]  %s10, 64, %s431, [#allocation20], 16, 16, 1
        $region56: #{utility_layer.1} parent=11 // pred_fallthru
          _
      $region12: #{utility_layer.1} parent=5 // pred_fallthru
        _
      %p437 = scmp.lt.s32.totalorder %s24, 4
      // Predicated region
      $region57: #{utility_layer.1} parent=5 // pred_check
        %p438 = pneg %p437
      $region58: #{utility_layer.1} parent=5 // pred_check_branch
        %440 = sbr.rel (%p438) target = $region60
      $region59: #{utility_layer.1} parent=5 // pred_region
        _
      $region60: #{utility_layer.1} parent=5 // pred_fallthru
        _
      %p441 = scmp.le.s32.totalorder 1, %s24
      %p442 = scmp.lt.s32.totalorder %s24, 5
      %p443 = pnand %p441, %p442
      %p444 = pneg %p443
      // Predicated region
      $region61: #{utility_layer.1} parent=5 // pred_check
        _
      $region62: #{utility_layer.1} parent=5 // pred_check_branch
        %446 = sbr.rel (%p443) target = $region64
      $region63: #{utility_layer.1} parent=5 // pred_region
        %s447 = ssub.s32 %s24, 1
        // Predicated region
        $region65: #{utility_layer.1} parent=63 // pred_check
          %p448 = pneg %p45
        $region66: #{utility_layer.1} parent=63 // pred_check_branch
          %450 = sbr.rel (%p448) target = $region68
        $region67: #{utility_layer.1} parent=63 // pred_region
          %451 = dma.done [#allocation5], 64
        $region68: #{utility_layer.1} parent=63 // pred_fallthru
          _
        // Predicated region
        $region69: #{utility_layer.1} parent=63 // pred_check
          %p452 = pneg %p66
        $region70: #{utility_layer.1} parent=63 // pred_check_branch
          %454 = sbr.rel (%p452) target = $region72
        $region71: #{utility_layer.1} parent=63 // pred_region
          %455 = dma.done [#allocation4], 256
        $region72: #{utility_layer.1} parent=63 // pred_fallthru
          _
        // Predicated region
        $region73: #{utility_layer.1} parent=63 // pred_check
          %p456 = pneg %p87
        $region74: #{utility_layer.1} parent=63 // pred_check_branch
          %458 = sbr.rel (%p456) target = $region76
        $region75: #{utility_layer.1} parent=63 // pred_region
          %459 = dma.done [#allocation8], 256
        $region76: #{utility_layer.1} parent=63 // pred_fallthru
          _
        // Predicated region
        $region77: #{utility_layer.1} parent=63 // pred_check
          %p460 = pneg %p108
        $region78: #{utility_layer.1} parent=63 // pred_check_branch
          %462 = sbr.rel (%p460) target = $region80
        $region79: #{utility_layer.1} parent=63 // pred_region
          %463 = dma.done [#allocation8], 256
        $region80: #{utility_layer.1} parent=63 // pred_fallthru
          _
        // Predicated region
        $region81: #{utility_layer.1} parent=63 // pred_check
          %p464 = pneg %p129
        $region82: #{utility_layer.1} parent=63 // pred_check_branch
          %466 = sbr.rel (%p464) target = $region84
        $region83: #{utility_layer.1} parent=63 // pred_region
          %467 = dma.done [#allocation11], 256
        $region84: #{utility_layer.1} parent=63 // pred_fallthru
          _
        // Predicated region
        $region85: #{utility_layer.1} parent=63 // pred_check
          %p468 = pneg %p150
        $region86: #{utility_layer.1} parent=63 // pred_check_branch
          %470 = sbr.rel (%p468) target = $region88
        $region87: #{utility_layer.1} parent=63 // pred_region
          %471 = dma.done [#allocation11], 7680
        $region88: #{utility_layer.1} parent=63 // pred_fallthru
          _
        // Predicated region
        $region89: #{utility_layer.1} parent=63 // pred_check
          %p472 = pneg %p171
        $region90: #{utility_layer.1} parent=63 // pred_check_branch
          %474 = sbr.rel (%p472) target = $region92
        $region91: #{utility_layer.1} parent=63 // pred_region
          %475 = dma.done [#allocation14], 20480
        $region92: #{utility_layer.1} parent=63 // pred_fallthru
          _
        // Predicated region
        $region93: #{utility_layer.1} parent=63 // pred_check
          %p476 = pneg %p192
        $region94: #{utility_layer.1} parent=63 // pred_check_branch
          %478 = sbr.rel (%p476) target = $region96
        $region95: #{utility_layer.1} parent=63 // pred_region
          %479 = dma.done [#allocation14], 81920
        $region96: #{utility_layer.1} parent=63 // pred_fallthru
          _
        // Predicated region
        $region97: #{utility_layer.1} parent=63 // pred_check
          %p480 = pneg %p213
        $region98: #{utility_layer.1} parent=63 // pred_check_branch
          %482 = sbr.rel (%p480) target = $region100
        $region99: #{utility_layer.1} parent=63 // pred_region
          %483 = dma.done [#allocation17], 512
        $region100: #{utility_layer.1} parent=63 // pred_fallthru
          _
        // Predicated region
        $region101: #{utility_layer.1} parent=63 // pred_check
          %p484 = pneg %p234
        $region102: #{utility_layer.1} parent=63 // pred_check_branch
          %486 = sbr.rel (%p484) target = $region104
        $region103: #{utility_layer.1} parent=63 // pred_region
          %487 = dma.done [#allocation17], 65536
        $region104: #{utility_layer.1} parent=63 // pred_fallthru
          _
        // Predicated region
        $region105: #{utility_layer.1} parent=63 // pred_check
          %p488 = pneg %p255
        $region106: #{utility_layer.1} parent=63 // pred_check_branch
          %490 = sbr.rel (%p488) target = $region108
        $region107: #{utility_layer.1} parent=63 // pred_region
          %491 = dma.done [#allocation20], 64
        $region108: #{utility_layer.1} parent=63 // pred_fallthru
          _
        %492 = sfence
        %p493 = pneg %p45
        %p494 = pneg %p42
        %p495 = pneg %p66
        %p496 = pneg %p63
        %p497 = pneg %p87
        %p498 = pneg %p84
        %p499 = pneg %p108
        %p500 = pneg %p105
        %p501 = pneg %p129
        %p502 = pneg %p126
        %p503 = pneg %p150
        %p504 = pneg %p147
        %p505 = pneg %p171
        %p506 = pneg %p168
        %p507 = pneg %p192
        %p508 = pneg %p189
        %p509 = pneg %p213
        %p510 = pneg %p210
        %p511 = pneg %p234
        %p512 = pneg %p231
        %p513 = pneg %p255
        %p514 = pneg %p252
        %p515 = pneg %p281
        %p516 = pneg %p278
        %p517 = scmp.lt.s32.totalorder %s29, 3
        %s518 = scalar_select %p517, %s29, 3
        %s519 = smul.addr %s518, 2
        %s520 = smul.addr %s519, 8
        %s521 = scalar_lea.vmem %s11, %s520
        %p522 = scmp.lt.s32.totalorder %s29, 3
        %s523 = scalar_select %p522, %s29, 3
        %s524 = smul.addr %s523, 2
        %s525 = smul.addr %s524, 8
        %s526 = scalar_lea.vmem %s11, %s525
        %v527 = vld [vmem:[#allocation6] sm:$0xff]
        %v528 = vld [vmem:[#allocation6 + $0x8] sm:$0xff]
        %v529 = vld [vmem:[#allocation7] sm:$0xff]
        %v530 = vld [vmem:[#allocation7 + $0x8] sm:$0xff]
        %v531 = vld [vmem:[#allocation9] sm:$0xff]
        %v532 = vld [vmem:[#allocation9 + $0x8] sm:$0xff]
        %v533 = vld [vmem:[#allocation10] sm:$0xff]
        %v534 = vld [vmem:[#allocation10 + $0x8] sm:$0xff]
        %p535 = scmp.eq.s32.totalorder %s29, 0
        %s536 = scalar_select %p535, 1, 0
        %s537 = scvt.s32.f32 %s536
        %v538 = vstv %s537
        %v539 = vmul.f32 %v538, %v527
        %v540 = vmul.f32 %v538, %v528
        %v541 = vadd.f32 %v539, 0.0
        %v542 = vadd.f32 %v540, 0.0
        %p543 = scmp.eq.s32.totalorder %s29, 1
        %s544 = scalar_select %p543, 1, 0
        %s545 = scvt.s32.f32 %s544
        %v546 = vstv %s545
        %v547 = vmul.f32 %v546, %v529
        %v548 = vmul.f32 %v546, %v530
        %v549 = vadd.f32 %v541, %v547
        %v550 = vadd.f32 %v542, %v548
        %p551 = scmp.eq.s32.totalorder %s29, 2
        %s552 = scalar_select %p551, 1, 0
        %s553 = scvt.s32.f32 %s552
        %v554 = vstv %s553
        %v555 = vmul.f32 %v554, %v531
        %v556 = vmul.f32 %v554, %v532
        %v557 = vadd.f32 %v549, %v555
        %v558 = vadd.f32 %v550, %v556
        %p559 = scmp.eq.s32.totalorder %s29, 3
        %s560 = scalar_select %p559, 1, 0
        %s561 = scvt.s32.f32 %s560
        %v562 = vstv %s561
        %v563 = vmul.f32 %v562, %v533
        %v564 = vmul.f32 %v562, %v534
        %v565 = vadd.f32 %v557, %v563
        %v566 = vadd.f32 %v558, %v564
        %s567 = smul.u32 %s29, 15
        %s568 = smul.addr %s567, 8
        %s569 = scalar_lea.vmem [#allocation12], %s568
        %v570 = vld [vmem:[%s569] sm:$0xff]
        %v571 = vld [vmem:[%s569 + $0x8] sm:$0xff]
        %v572 = vld [vmem:[%s569 + $0x10] sm:$0xff]
        %v573 = vld [vmem:[%s569 + $0x18] sm:$0xff]
        %v574 = vld [vmem:[%s569 + $0x20] sm:$0xff]
        %v575 = vld [vmem:[%s569 + $0x28] sm:$0xff]
        %v576 = vld [vmem:[%s569 + $0x30] sm:$0xff]
        %v577 = vld [vmem:[%s569 + $0x38] sm:$0xff]
        %v578 = vld [vmem:[%s569 + $0x40] sm:$0xff]
        %v579 = vld [vmem:[%s569 + $0x48] sm:$0xff]
        %v580 = vld [vmem:[%s569 + $0x50] sm:$0xff]
        %v581 = vld [vmem:[%s569 + $0x58] sm:$0xff]
        %v582 = vld [vmem:[%s569 + $0x60] sm:$0xff]
        %v583 = vld [vmem:[%s569 + $0x68] sm:$0xff]
        %v584 = vld [vmem:[%s569 + $0x70] sm:$0xff]
        %vm585 = vcmask 326656
        %v587 = vsel %vm585, %v565, 0
        %v590 = vsel %vm585, %v566, 0
        %592 = vmatprep.subr.mxu0 %v571
        %593 = vmatpush1.msra.mxu0 %v570
        %594 = vmatprep.subr.mxu0 %v574
        %595 = vmatpush1.msra.mxu0 %v573
        %596 = vmatprep.subr.mxu0 %v577
        %597 = vmatpush1.msra.mxu0 %v576
        %598 = vmatprep.subr.mxu0 %v580
        %599 = vmatpush1.msra.mxu0 %v579
        %600 = vmatprep.subr.mxu0 %v583
        %601 = vmatpush1.msra.mxu0 %v582
        %602 = vmatprep.subr.mxu0 0.0
        %603 = vmatpush1.msra.mxu0 0.0
        %604 = vmatprep.subr.mxu0 0.0
        %605 = vmatpush1.msra.mxu0 0.0
        %606 = vmatprep.subr.mxu0 0.0
        %607 = vmatpush1.msra.mxu0 0.0
        %608 = vmatprep.subr.mxu0 0.0
        %609 = vmatpush1.msra.mxu0 0.0
        %610 = vmatprep.subr.mxu0 0.0
        %611 = vmatpush1.msra.mxu0 0.0
        %612 = vmatprep.subr.mxu0 0.0
        %613 = vmatpush1.msra.mxu0 0.0
        %614 = vmatprep.subr.mxu0 0.0
        %615 = vmatpush1.msra.mxu0 0.0
        %616 = vmatprep.subr.mxu0 0.0
        %617 = vmatpush1.msra.mxu0 0.0
        %618 = vmatprep.subr.mxu0 0.0
        %619 = vmatpush1.msra.mxu0 0.0
        %620 = vmatprep.subr.mxu0 0.0
        %621 = vmatpush1.msra.mxu0 0.0
        %622 = vmatprep.subr.mxu0 0.0
        %623 = vmatpush1.msra.mxu0 0.0
        %624 = vmatprep.subr.mxu0 0.0
        %625 = vmatpush1.msra.mxu0 0.0
        %626 = vmatprep.subr.mxu0 0.0
        %627 = vmatpush1.msra.mxu0 0.0
        %628 = vmatprep.subr.mxu0 0.0
        %629 = vmatpush1.msra.mxu0 0.0
        %630 = vmatprep.subr.mxu0 0.0
        %631 = vmatpush1.msra.mxu0 0.0
        %632 = vmatprep.subr.mxu0 0.0
        %633 = vmatpush1.msra.mxu0 0.0
        %634 = vmatprep.subr.mxu0 0.0
        %635 = vmatpush1.msra.mxu0 0.0
        %636 = vmatprep.subr.mxu0 0.0
        %637 = vmatpush1.msra.mxu0 0.0
        %638 = vmatprep.subr.mxu0 0.0
        %639 = vmatpush1.msra.mxu0 0.0
        %640 = vmatprep.subr.mxu0 0.0
        %641 = vmatpush1.msra.mxu0 0.0
        %642 = vmatprep.subr.mxu0 0.0
        %643 = vmatpush1.msra.mxu0 0.0
        %644 = vmatprep.subr.mxu0 0.0
        %645 = vmatpush1.msra.mxu0 0.0
        %646 = vmatprep.subr.mxu0 0.0
        %647 = vmatpush1.msra.mxu0 0.0
        %648 = vmatprep.subr.mxu0 0.0
        %649 = vmatpush1.msra.mxu0 0.0
        %650 = vmatprep.subr.mxu0 0.0
        %651 = vmatpush1.msra.mxu0 0.0
        %652 = vmatprep.subr.mxu0 0.0
        %653 = vmatpush1.msra.mxu0 0.0
        %654 = vmatprep.subr.mxu0 0.0
        %655 = vmatpush1.msra.mxu0 0.0
        %656 = vmatprep.mubr.f32.mxu0 0.0
        %657 = vmatmul.mubr.f32.gmra.mrb[0].mxu0 %v587
        %v658 = vpop.f32.mrb[0].mxu0
        %v659 = vadd.f32 0.0, %v658
        %v660 = vpop.f32.mrb[0].mxu0
        %v661 = vadd.f32 0.0, %v660
        %662 = vmatprep.mubr.f32.mxu0 0.0
        %663 = vmatmul.mubr.f32.gmra.mrb[0].mxu0 %v590
        %v664 = vpop.f32.mrb[0].mxu0
        %v665 = vadd.f32 0.0, %v664
        %v666 = vpop.f32.mrb[0].mxu0
        %v667 = vadd.f32 0.0, %v666
        %668 = vdwg.mxu0
        %669 = vmatprep.subr.mxu0 0.0
        %670 = vmatpush1.msra.mxu0 %v572
        %671 = vmatprep.subr.mxu0 0.0
        %672 = vmatpush1.msra.mxu0 %v575
        %673 = vmatprep.subr.mxu0 0.0
        %674 = vmatpush1.msra.mxu0 %v578
        %675 = vmatprep.subr.mxu0 0.0
        %676 = vmatpush1.msra.mxu0 %v581
        %677 = vmatprep.subr.mxu0 0.0
        %678 = vmatpush1.msra.mxu0 %v584
        %679 = vmatprep.subr.mxu0 0.0
        %680 = vmatpush1.msra.mxu0 0.0
        %681 = vmatprep.subr.mxu0 0.0
        %682 = vmatpush1.msra.mxu0 0.0
        %683 = vmatprep.subr.mxu0 0.0
        %684 = vmatpush1.msra.mxu0 0.0
        %685 = vmatprep.subr.mxu0 0.0
        %686 = vmatpush1.msra.mxu0 0.0
        %687 = vmatprep.subr.mxu0 0.0
        %688 = vmatpush1.msra.mxu0 0.0
        %689 = vmatprep.subr.mxu0 0.0
        %690 = vmatpush1.msra.mxu0 0.0
        %691 = vmatprep.subr.mxu0 0.0
        %692 = vmatpush1.msra.mxu0 0.0
        %693 = vmatprep.subr.mxu0 0.0
        %694 = vmatpush1.msra.mxu0 0.0
        %695 = vmatprep.subr.mxu0 0.0
        %696 = vmatpush1.msra.mxu0 0.0
        %697 = vmatprep.subr.mxu0 0.0
        %698 = vmatpush1.msra.mxu0 0.0
        %699 = vmatprep.subr.mxu0 0.0
        %700 = vmatpush1.msra.mxu0 0.0
        %701 = vmatprep.subr.mxu0 0.0
        %702 = vmatpush1.msra.mxu0 0.0
        %703 = vmatprep.subr.mxu0 0.0
        %704 = vmatpush1.msra.mxu0 0.0
        %705 = vmatprep.subr.mxu0 0.0
        %706 = vmatpush1.msra.mxu0 0.0
        %707 = vmatprep.subr.mxu0 0.0
        %708 = vmatpush1.msra.mxu0 0.0
        %709 = vmatprep.subr.mxu0 0.0
        %710 = vmatpush1.msra.mxu0 0.0
        %711 = vmatprep.subr.mxu0 0.0
        %712 = vmatpush1.msra.mxu0 0.0
        %713 = vmatprep.subr.mxu0 0.0
        %714 = vmatpush1.msra.mxu0 0.0
        %715 = vmatprep.subr.mxu0 0.0
        %716 = vmatpush1.msra.mxu0 0.0
        %717 = vmatprep.subr.mxu0 0.0
        %718 = vmatpush1.msra.mxu0 0.0
        %719 = vmatprep.subr.mxu0 0.0
        %720 = vmatpush1.msra.mxu0 0.0
        %721 = vmatprep.subr.mxu0 0.0
        %722 = vmatpush1.msra.mxu0 0.0
        %723 = vmatprep.subr.mxu0 0.0
        %724 = vmatpush1.msra.mxu0 0.0
        %725 = vmatprep.subr.mxu0 0.0
        %726 = vmatpush1.msra.mxu0 0.0
        %727 = vmatprep.subr.mxu0 0.0
        %728 = vmatpush1.msra.mxu0 0.0
        %729 = vmatprep.subr.mxu0 0.0
        %730 = vmatpush1.msra.mxu0 0.0
        %731 = vmatprep.subr.mxu0 0.0
        %732 = vmatpush1.msra.mxu0 0.0
        %733 = vmatprep.mubr.f32.mxu0 0.0
        %734 = vmatmul.mubr.f32.gmra.mrb[0].mxu0 %v587
        %v735 = vpop.f32.mrb[0].mxu0
        %v736 = vadd.f32 0.0, %v735
        %v737 = vpop.f32.mrb[0].mxu0
        %738 = vmatprep.mubr.f32.mxu0 0.0
        %739 = vmatmul.mubr.f32.gmra.mrb[0].mxu0 %v590
        %v740 = vpop.f32.mrb[0].mxu0
        %v741 = vadd.f32 0.0, %v740
        %v742 = vpop.f32.mrb[0].mxu0
        %743 = vdwg.mxu0
        %vm744 = vcmask 523264
        %v745 = vsel %vm744, %v659, -inf
        %746 = vmax.xlane.f32.xlu0 %v745
        %v747 = vpop.xlane.xlu0 %746
        %v748 = vsel %vm744, %v665, -inf
        %749 = vmax.xlane.f32.xlu0 %v748
        %v750 = vpop.xlane.xlu0 %749
        %v751 = vsub.f32 %v659, %v747
        %v752 = vsub.f32 %v665, %v750
        %v753 = vmul.f32 %v751, 1.442695
        %v754 = vpow.pop %v753
        %v755 = vmul.f32 %v752, 1.442695
        %v756 = vpow.pop %v755
        %v757 = vsel %vm744, %v754, 0.0
        %758 = vadd.xlane.f32.xlu0 %v757
        %v759 = vpop.xlane.xlu0 %758
        %v760 = vsel %vm744, %v756, 0.0
        %761 = vadd.xlane.f32.xlu0 %v760
        %v762 = vpop.xlane.xlu0 %761
        %vm763 = vcmask 1048064
        %v764 = vsel %vm763, %v659, -inf
        %765 = vmax.xlane.f32.xlu0 %v764
        %v766 = vpop.xlane.xlu0 %765
        %v767 = vsel %vm763, %v665, -inf
        %768 = vmax.xlane.f32.xlu0 %v767
        %v769 = vpop.xlane.xlu0 %768
        %v770 = vsub.f32 %v659, %v766
        %v771 = vsub.f32 %v665, %v769
        %v772 = vmul.f32 %v770, 1.442695
        %v773 = vpow.pop %v772
        %v774 = vmul.f32 %v771, 1.442695
        %v775 = vpow.pop %v774
        %778 = vrot.lane.b32.xlu0 %v773, 64
        %v779 = vpop.permute.xlu0 %778
        %780 = vrot.lane.b32.xlu0 %v775, 64
        %v781 = vpop.permute.xlu0 %780
        %v784 = vsel %vm744, %v779, 0.0
        %785 = vadd.xlane.f32.xlu0 %v784
        %v786 = vpop.xlane.xlu0 %785
        %v787 = vsel %vm744, %v781, 0.0
        %788 = vadd.xlane.f32.xlu0 %v787
        %v789 = vpop.xlane.xlu0 %788
        %v790 = vsel %vm744, %v661, -inf
        %791 = vmax.xlane.f32.xlu0 %v790
        %v792 = vpop.xlane.xlu0 %791
        %v793 = vsel %vm744, %v667, -inf
        %794 = vmax.xlane.f32.xlu0 %v793
        %v795 = vpop.xlane.xlu0 %794
        %v796 = vsub.f32 %v661, %v792
        %v797 = vsub.f32 %v667, %v795
        %v798 = vmul.f32 %v796, 1.442695
        %v799 = vpow.pop %v798
        %v800 = vmul.f32 %v797, 1.442695
        %v801 = vpow.pop %v800
        %v802 = vsel %vm744, %v799, 0.0
        %803 = vadd.xlane.f32.xlu0 %v802
        %v804 = vpop.xlane.xlu0 %803
        %v805 = vsel %vm744, %v801, 0.0
        %806 = vadd.xlane.f32.xlu0 %v805
        %v807 = vpop.xlane.xlu0 %806
        %v808 = vsel %vm763, %v661, -inf
        %809 = vmax.xlane.f32.xlu0 %v808
        %v810 = vpop.xlane.xlu0 %809
        %v811 = vsel %vm763, %v667, -inf
        %812 = vmax.xlane.f32.xlu0 %v811
        %v813 = vpop.xlane.xlu0 %812
        %v814 = vsub.f32 %v661, %v810
        %v815 = vsub.f32 %v667, %v813
        %v816 = vmul.f32 %v814, 1.442695
        %v817 = vpow.pop %v816
        %v818 = vmul.f32 %v815, 1.442695
        %v819 = vpow.pop %v818
        %822 = vrot.lane.b32.xlu0 %v817, 64
        %v823 = vpop.permute.xlu0 %822
        %824 = vrot.lane.b32.xlu0 %v819, 64
        %v825 = vpop.permute.xlu0 %824
        %v828 = vsel %vm744, %v823, 0.0
        %829 = vadd.xlane.f32.xlu0 %v828
        %v830 = vpop.xlane.xlu0 %829
        %v831 = vsel %vm744, %v825, 0.0
        %832 = vadd.xlane.f32.xlu0 %v831
        %v833 = vpop.xlane.xlu0 %832
        %v834 = vsel %vm744, %v736, -inf
        %835 = vmax.xlane.f32.xlu0 %v834
        %v836 = vpop.xlane.xlu0 %835
        %v837 = vsel %vm744, %v741, -inf
        %838 = vmax.xlane.f32.xlu0 %v837
        %v839 = vpop.xlane.xlu0 %838
        %v840 = vsub.f32 %v736, %v836
        %v841 = vsub.f32 %v741, %v839
        %v842 = vmul.f32 %v840, 1.442695
        %v843 = vpow.pop %v842
        %v844 = vmul.f32 %v841, 1.442695
        %v845 = vpow.pop %v844
        %v846 = vsel %vm744, %v843, 0.0
        %847 = vadd.xlane.f32.xlu0 %v846
        %v848 = vpop.xlane.xlu0 %847
        %v849 = vsel %vm744, %v845, 0.0
        %850 = vadd.xlane.f32.xlu0 %v849
        %v851 = vpop.xlane.xlu0 %850
        %v852 = vsel %vm744, %v754, %v773
        %v853 = vsel %vm744, %v756, %v775
        %v854 = vsel %vm744, %v799, %v817
        %v855 = vsel %vm744, %v801, %v819
        %s856 = smul.u32 %s29, 320
        %s857 = scalar_lea.vmem [#allocation13], %s856
        %v858 = vld [vmem:[%s857] sm:$0xff]
        %v859 = vld [vmem:[%s857 + $0x8] sm:$0xff]
        %v860 = vld [vmem:[%s857 + $0x10] sm:$0xff]
        %v861 = vld [vmem:[%s857 + $0x18] sm:$0xff]
        %v862 = vld [vmem:[%s857 + $0x20] sm:$0xff]
        %v863 = vld [vmem:[%s857 + $0x28] sm:$0xff]
        %v864 = vld [vmem:[%s857 + $0x30] sm:$0xff]
        %v865 = vld [vmem:[%s857 + $0x38] sm:$0xff]
        %v866 = vld [vmem:[%s857 + $0x40] sm:$0xff]
        %v867 = vld [vmem:[%s857 + $0x48] sm:$0xff]
        %v868 = vld [vmem:[%s857 + $0x50] sm:$0xff]
        %v869 = vld [vmem:[%s857 + $0x58] sm:$0xff]
        %v870 = vld [vmem:[%s857 + $0x60] sm:$0xff]
        %v871 = vld [vmem:[%s857 + $0x68] sm:$0xff]
        %v872 = vld [vmem:[%s857 + $0x70] sm:$0xff]
        %v873 = vld [vmem:[%s857 + $0x78] sm:$0xff]
        %v874 = vld [vmem:[%s857 + $0x80] sm:$0xff]
        %v875 = vld [vmem:[%s857 + $0x88] sm:$0xff]
        %v876 = vld [vmem:[%s857 + $0x90] sm:$0xff]
        %v877 = vld [vmem:[%s857 + $0x98] sm:$0xff]
        %v878 = vld [vmem:[%s857 + $0xa0] sm:$0xff]
        %v879 = vld [vmem:[%s857 + $0xa8] sm:$0xff]
        %v880 = vld [vmem:[%s857 + $0xb0] sm:$0xff]
        %v881 = vld [vmem:[%s857 + $0xb8] sm:$0xff]
        %v882 = vld [vmem:[%s857 + $0xc0] sm:$0xff]
        %v883 = vld [vmem:[%s857 + $0xc8] sm:$0xff]
        %v884 = vld [vmem:[%s857 + $0xd0] sm:$0xff]
        %v885 = vld [vmem:[%s857 + $0xd8] sm:$0xff]
        %v886 = vld [vmem:[%s857 + $0xe0] sm:$0xff]
        %v887 = vld [vmem:[%s857 + $0xe8] sm:$0xff]
        %v888 = vld [vmem:[%s857 + $0xf0] sm:$0xff]
        %v889 = vld [vmem:[%s857 + $0xf8] sm:$0xff]
        %v890 = vld [vmem:[%s857 + $0x100] sm:$0xff]
        %v891 = vld [vmem:[%s857 + $0x108] sm:$0xff]
        %v892 = vld [vmem:[%s857 + $0x110] sm:$0xff]
        %v893 = vld [vmem:[%s857 + $0x118] sm:$0xff]
        %v894 = vld [vmem:[%s857 + $0x120] sm:$0xff]
        %v895 = vld [vmem:[%s857 + $0x128] sm:$0xff]
        %v896 = vld [vmem:[%s857 + $0x130] sm:$0xff]
        %v897 = vld [vmem:[%s857 + $0x138] sm:$0xff]
        %v899 = vsel %vm744, %v843, 0
        %v902 = vsel %vm744, %v845, 0
        %904 = vmatprep.subr.mxu0 0.0
        %905 = vmatpush1.msra.mxu0 %v858
        %906 = vmatprep.subr.mxu0 0.0
        %907 = vmatpush1.msra.mxu0 %v859
        %908 = vmatprep.subr.mxu0 0.0
        %909 = vmatpush1.msra.mxu0 %v860
        %910 = vmatprep.subr.mxu0 0.0
        %911 = vmatpush1.msra.mxu0 %v861
        %912 = vmatprep.subr.mxu0 0.0
        %913 = vmatpush1.msra.mxu0 %v862
        %914 = vmatprep.subr.mxu0 0.0
        %915 = vmatpush1.msra.mxu0 %v863
        %916 = vmatprep.subr.mxu0 0.0
        %917 = vmatpush1.msra.mxu0 %v864
        %918 = vmatprep.subr.mxu0 0.0
        %919 = vmatpush1.msra.mxu0 %v865
        %920 = vmatprep.subr.mxu0 0.0
        %921 = vmatpush1.msra.mxu0 %v866
        %922 = vmatprep.subr.mxu0 0.0
        %923 = vmatpush1.msra.mxu0 %v867
        %924 = vmatprep.subr.mxu0 0.0
        %925 = vmatpush1.msra.mxu0 %v868
        %926 = vmatprep.subr.mxu0 0.0
        %927 = vmatpush1.msra.mxu0 %v869
        %928 = vmatprep.subr.mxu0 0.0
        %929 = vmatpush1.msra.mxu0 %v870
        %930 = vmatprep.subr.mxu0 0.0
        %931 = vmatpush1.msra.mxu0 %v871
        %932 = vmatprep.subr.mxu0 0.0
        %933 = vmatpush1.msra.mxu0 %v872
        %934 = vmatprep.subr.mxu0 0.0
        %935 = vmatpush1.msra.mxu0 %v873
        %936 = vmatprep.subr.mxu0 0.0
        %937 = vmatpush1.msra.mxu0 %v874
        %938 = vmatprep.subr.mxu0 0.0
        %939 = vmatpush1.msra.mxu0 %v875
        %940 = vmatprep.subr.mxu0 0.0
        %941 = vmatpush1.msra.mxu0 %v876
        %942 = vmatprep.subr.mxu0 0.0
        %943 = vmatpush1.msra.mxu0 %v877
        %944 = vmatprep.subr.mxu0 0.0
        %945 = vmatpush1.msra.mxu0 %v878
        %946 = vmatprep.subr.mxu0 0.0
        %947 = vmatpush1.msra.mxu0 %v879
        %948 = vmatprep.subr.mxu0 0.0
        %949 = vmatpush1.msra.mxu0 %v880
        %950 = vmatprep.subr.mxu0 0.0
        %951 = vmatpush1.msra.mxu0 %v881
        %952 = vmatprep.subr.mxu0 0.0
        %953 = vmatpush1.msra.mxu0 %v882
        %954 = vmatprep.subr.mxu0 0.0
        %955 = vmatpush1.msra.mxu0 %v883
        %956 = vmatprep.subr.mxu0 0.0
        %957 = vmatpush1.msra.mxu0 %v884
        %958 = vmatprep.subr.mxu0 0.0
        %959 = vmatpush1.msra.mxu0 %v885
        %960 = vmatprep.subr.mxu0 0.0
        %961 = vmatpush1.msra.mxu0 %v886
        %962 = vmatprep.subr.mxu0 0.0
        %963 = vmatpush1.msra.mxu0 %v887
        %964 = vmatprep.subr.mxu0 0.0
        %965 = vmatpush1.msra.mxu0 %v888
        %966 = vmatprep.subr.mxu0 0.0
        %967 = vmatpush1.msra.mxu0 %v889
        %968 = vmatprep.mubr.f32.mxu0 %v854
        %969 = vmatmul.mubr.f32.gmra.mrb[0].mxu0 %v852
        %v970 = vpop.f32.mrb[0].mxu0
        %v971 = vadd.f32 0.0, %v970
        %v972 = vpop.f32.mrb[0].mxu0
        %973 = vmatprep.mubr.f32.mxu0 %v855
        %974 = vmatmul.mubr.f32.gmra.mrb[0].mxu0 %v853
        %v975 = vpop.f32.mrb[0].mxu0
        %v976 = vadd.f32 0.0, %v975
        %v977 = vpop.f32.mrb[0].mxu0
        %978 = vdwg.mxu0
        %979 = vmatprep.subr.mxu0 0.0
        %980 = vmatpush1.msra.mxu0 %v890
        %981 = vmatprep.subr.mxu0 0.0
        %982 = vmatpush1.msra.mxu0 %v891
        %983 = vmatprep.subr.mxu0 0.0
        %984 = vmatpush1.msra.mxu0 %v892
        %985 = vmatprep.subr.mxu0 0.0
        %986 = vmatpush1.msra.mxu0 %v893
        %987 = vmatprep.subr.mxu0 0.0
        %988 = vmatpush1.msra.mxu0 %v894
        %989 = vmatprep.subr.mxu0 0.0
        %990 = vmatpush1.msra.mxu0 %v895
        %991 = vmatprep.subr.mxu0 0.0
        %992 = vmatpush1.msra.mxu0 %v896
        %993 = vmatprep.subr.mxu0 0.0
        %994 = vmatpush1.msra.mxu0 %v897
        %995 = vmatprep.subr.mxu0 0.0
        %996 = vmatpush1.msra.mxu0 0.0
        %997 = vmatprep.subr.mxu0 0.0
        %998 = vmatpush1.msra.mxu0 0.0
        %999 = vmatprep.subr.mxu0 0.0
        %1000 = vmatpush1.msra.mxu0 0.0
        %1001 = vmatprep.subr.mxu0 0.0
        %1002 = vmatpush1.msra.mxu0 0.0
        %1003 = vmatprep.subr.mxu0 0.0
        %1004 = vmatpush1.msra.mxu0 0.0
        %1005 = vmatprep.subr.mxu0 0.0
        %1006 = vmatpush1.msra.mxu0 0.0
        %1007 = vmatprep.subr.mxu0 0.0
        %1008 = vmatpush1.msra.mxu0 0.0
        %1009 = vmatprep.subr.mxu0 0.0
        %1010 = vmatpush1.msra.mxu0 0.0
        %1011 = vmatprep.subr.mxu0 0.0
        %1012 = vmatpush1.msra.mxu0 0.0
        %1013 = vmatprep.subr.mxu0 0.0
        %1014 = vmatpush1.msra.mxu0 0.0
        %1015 = vmatprep.subr.mxu0 0.0
        %1016 = vmatpush1.msra.mxu0 0.0
        %1017 = vmatprep.subr.mxu0 0.0
        %1018 = vmatpush1.msra.mxu0 0.0
        %1019 = vmatprep.subr.mxu0 0.0
        %1020 = vmatpush1.msra.mxu0 0.0
        %1021 = vmatprep.subr.mxu0 0.0
        %1022 = vmatpush1.msra.mxu0 0.0
        %1023 = vmatprep.subr.mxu0 0.0
        %1024 = vmatpush1.msra.mxu0 0.0
        %1025 = vmatprep.subr.mxu0 0.0
        %1026 = vmatpush1.msra.mxu0 0.0
        %1027 = vmatprep.subr.mxu0 0.0
        %1028 = vmatpush1.msra.mxu0 0.0
        %1029 = vmatprep.subr.mxu0 0.0
        %1030 = vmatpush1.msra.mxu0 0.0
        %1031 = vmatprep.subr.mxu0 0.0
        %1032 = vmatpush1.msra.mxu0 0.0
        %1033 = vmatprep.subr.mxu0 0.0
        %1034 = vmatpush1.msra.mxu0 0.0
        %1035 = vmatprep.subr.mxu0 0.0
        %1036 = vmatpush1.msra.mxu0 0.0
        %1037 = vmatprep.subr.mxu0 0.0
        %1038 = vmatpush1.msra.mxu0 0.0
        %1039 = vmatprep.subr.mxu0 0.0
        %1040 = vmatpush1.msra.mxu0 0.0
        %1041 = vmatprep.subr.mxu0 0.0
        %1042 = vmatpush1.msra.mxu0 0.0
        %1043 = vmatprep.mubr.f32.mxu0 0.0
        %1044 = vmatmul.mubr.f32.gmra.mrb[0].mxu0 %v899
        %v1045 = vpop.f32.mrb[0].mxu0
        %v1046 = vadd.f32 %v971, %v1045
        %v1047 = vpop.f32.mrb[0].mxu0
        %1048 = vmatprep.mubr.f32.mxu0 0.0
        %1049 = vmatmul.mubr.f32.gmra.mrb[0].mxu0 %v902
        %v1050 = vpop.f32.mrb[0].mxu0
        %v1051 = vadd.f32 %v976, %v1050
        %v1052 = vpop.f32.mrb[0].mxu0
        %1053 = vdwg.mxu0
        %vm1054 = vcmask 64512
        %v1055 = vsel %vm1054, %v565, 0
        %v1058 = vsel %vm1054, %v527, 0
        %1060 = vmatprep.subr.mxu0 0.0
        %1061 = vmatpush1.xpose.msra.mxu0 %v1058
        %1062 = vmatprep.subr.mxu0 0.0
        %1063 = vmatpush1.xpose.msra.mxu0 0.0
        %1064 = vmatprep.subr.mxu0 0.0
        %1065 = vmatpush1.xpose.msra.mxu0 0.0
        %1066 = vmatprep.subr.mxu0 0.0
        %1067 = vmatpush1.xpose.msra.mxu0 0.0
        %1068 = vmatprep.subr.mxu0 0.0
        %1069 = vmatpush1.xpose.msra.mxu0 0.0
        %1070 = vmatprep.subr.mxu0 0.0
        %1071 = vmatpush1.xpose.msra.mxu0 0.0
        %1072 = vmatprep.subr.mxu0 0.0
        %1073 = vmatpush1.xpose.msra.mxu0 0.0
        %1074 = vmatprep.subr.mxu0 0.0
        %1075 = vmatpush1.xpose.msra.mxu0 0.0
        %1076 = vmatprep.subr.mxu0 0.0
        %1077 = vmatpush1.xpose.msra.mxu0 0.0
        %1078 = vmatprep.subr.mxu0 0.0
        %1079 = vmatpush1.xpose.msra.mxu0 0.0
        %1080 = vmatprep.subr.mxu0 0.0
        %1081 = vmatpush1.xpose.msra.mxu0 0.0
        %1082 = vmatprep.subr.mxu0 0.0
        %1083 = vmatpush1.xpose.msra.mxu0 0.0
        %1084 = vmatprep.subr.mxu0 0.0
        %1085 = vmatpush1.xpose.msra.mxu0 0.0
        %1086 = vmatprep.subr.mxu0 0.0
        %1087 = vmatpush1.xpose.msra.mxu0 0.0
        %1088 = vmatprep.subr.mxu0 0.0
        %1089 = vmatpush1.xpose.msra.mxu0 0.0
        %1090 = vmatprep.subr.mxu0 0.0
        %1091 = vmatpush1.xpose.msra.mxu0 0.0
        %1092 = vmatprep.subr.mxu0 0.0
        %1093 = vmatpush1.xpose.msra.mxu0 0.0
        %1094 = vmatprep.subr.mxu0 0.0
        %1095 = vmatpush1.xpose.msra.mxu0 0.0
        %1096 = vmatprep.subr.mxu0 0.0
        %1097 = vmatpush1.xpose.msra.mxu0 0.0
        %1098 = vmatprep.subr.mxu0 0.0
        %1099 = vmatpush1.xpose.msra.mxu0 0.0
        %1100 = vmatprep.subr.mxu0 0.0
        %1101 = vmatpush1.xpose.msra.mxu0 0.0
        %1102 = vmatprep.subr.mxu0 0.0
        %1103 = vmatpush1.xpose.msra.mxu0 0.0
        %1104 = vmatprep.subr.mxu0 0.0
        %1105 = vmatpush1.xpose.msra.mxu0 0.0
        %1106 = vmatprep.subr.mxu0 0.0
        %1107 = vmatpush1.xpose.msra.mxu0 0.0
        %1108 = vmatprep.subr.mxu0 0.0
        %1109 = vmatpush1.xpose.msra.mxu0 0.0
        %1110 = vmatprep.subr.mxu0 0.0
        %1111 = vmatpush1.xpose.msra.mxu0 0.0
        %1112 = vmatprep.subr.mxu0 0.0
        %1113 = vmatpush1.xpose.msra.mxu0 0.0
        %1114 = vmatprep.subr.mxu0 0.0
        %1115 = vmatpush1.xpose.msra.mxu0 0.0
        %1116 = vmatprep.subr.mxu0 0.0
        %1117 = vmatpush1.xpose.msra.mxu0 0.0
        %1118 = vmatprep.subr.mxu0 0.0
        %1119 = vmatpush1.xpose.msra.mxu0 0.0
        %1120 = vmatprep.subr.mxu0 0.0
        %1121 = vmatpush1.xpose.msra.mxu0 0.0
        %1122 = vmatprep.subr.mxu0 0.0
        %1123 = vmatpush1.xpose.msra.mxu0 0.0
        %1124 = vmatprep.mubr.f32.mxu0 0.0
        %1125 = vmatmul.mubr.f32.gmra.mrb[0].mxu0 %v1055
        %v1126 = vpop.f32.mrb[0].mxu0
        %v1127 = vadd.f32 0.0, %v1126
        %v1128 = vpop.f32.mrb[0].mxu0
        %1129 = vdwg.mxu0
        %v1130 = vsel %vm1054, %v566, 0
        %v1133 = vsel %vm1054, %v528, 0
        %1135 = vmatprep.subr.mxu0 0.0
        %1136 = vmatpush1.xpose.msra.mxu0 %v1133
        %1137 = vmatprep.subr.mxu0 0.0
        %1138 = vmatpush1.xpose.msra.mxu0 0.0
        %1139 = vmatprep.subr.mxu0 0.0
        %1140 = vmatpush1.xpose.msra.mxu0 0.0
        %1141 = vmatprep.subr.mxu0 0.0
        %1142 = vmatpush1.xpose.msra.mxu0 0.0
        %1143 = vmatprep.subr.mxu0 0.0
        %1144 = vmatpush1.xpose.msra.mxu0 0.0
        %1145 = vmatprep.subr.mxu0 0.0
        %1146 = vmatpush1.xpose.msra.mxu0 0.0
        %1147 = vmatprep.subr.mxu0 0.0
        %1148 = vmatpush1.xpose.msra.mxu0 0.0
        %1149 = vmatprep.subr.mxu0 0.0
        %1150 = vmatpush1.xpose.msra.mxu0 0.0
        %1151 = vmatprep.subr.mxu0 0.0
        %1152 = vmatpush1.xpose.msra.mxu0 0.0
        %1153 = vmatprep.subr.mxu0 0.0
        %1154 = vmatpush1.xpose.msra.mxu0 0.0
        %1155 = vmatprep.subr.mxu0 0.0
        %1156 = vmatpush1.xpose.msra.mxu0 0.0
        %1157 = vmatprep.subr.mxu0 0.0
        %1158 = vmatpush1.xpose.msra.mxu0 0.0
        %1159 = vmatprep.subr.mxu0 0.0
        %1160 = vmatpush1.xpose.msra.mxu0 0.0
        %1161 = vmatprep.subr.mxu0 0.0
        %1162 = vmatpush1.xpose.msra.mxu0 0.0
        %1163 = vmatprep.subr.mxu0 0.0
        %1164 = vmatpush1.xpose.msra.mxu0 0.0
        %1165 = vmatprep.subr.mxu0 0.0
        %1166 = vmatpush1.xpose.msra.mxu0 0.0
        %1167 = vmatprep.subr.mxu0 0.0
        %1168 = vmatpush1.xpose.msra.mxu0 0.0
        %1169 = vmatprep.subr.mxu0 0.0
        %1170 = vmatpush1.xpose.msra.mxu0 0.0
        %1171 = vmatprep.subr.mxu0 0.0
        %1172 = vmatpush1.xpose.msra.mxu0 0.0
        %1173 = vmatprep.subr.mxu0 0.0
        %1174 = vmatpush1.xpose.msra.mxu0 0.0
        %1175 = vmatprep.subr.mxu0 0.0
        %1176 = vmatpush1.xpose.msra.mxu0 0.0
        %1177 = vmatprep.subr.mxu0 0.0
        %1178 = vmatpush1.xpose.msra.mxu0 0.0
        %1179 = vmatprep.subr.mxu0 0.0
        %1180 = vmatpush1.xpose.msra.mxu0 0.0
        %1181 = vmatprep.subr.mxu0 0.0
        %1182 = vmatpush1.xpose.msra.mxu0 0.0
        %1183 = vmatprep.subr.mxu0 0.0
        %1184 = vmatpush1.xpose.msra.mxu0 0.0
        %1185 = vmatprep.subr.mxu0 0.0
        %1186 = vmatpush1.xpose.msra.mxu0 0.0
        %1187 = vmatprep.subr.mxu0 0.0
        %1188 = vmatpush1.xpose.msra.mxu0 0.0
        %1189 = vmatprep.subr.mxu0 0.0
        %1190 = vmatpush1.xpose.msra.mxu0 0.0
        %1191 = vmatprep.subr.mxu0 0.0
        %1192 = vmatpush1.xpose.msra.mxu0 0.0
        %1193 = vmatprep.subr.mxu0 0.0
        %1194 = vmatpush1.xpose.msra.mxu0 0.0
        %1195 = vmatprep.subr.mxu0 0.0
        %1196 = vmatpush1.xpose.msra.mxu0 0.0
        %1197 = vmatprep.subr.mxu0 0.0
        %1198 = vmatpush1.xpose.msra.mxu0 0.0
        %1199 = vmatprep.mubr.f32.mxu0 0.0
        %1200 = vmatmul.mubr.f32.gmra.mrb[0].mxu0 %v1130
        %v1201 = vpop.f32.mrb[0].mxu0
        %v1202 = vadd.f32 0.0, %v1201
        %v1203 = vpop.f32.mrb[0].mxu0
        %1204 = vdwg.mxu0
        %v1205 = vsel %vm1054, %v1127, -inf
        %1206 = vmax.xlane.f32.xlu0 %v1205
        %v1207 = vpop.xlane.xlu0 %1206
        %v1208 = vsel %vm1054, %v1202, -inf
        %1209 = vmax.xlane.f32.xlu0 %v1208
        %v1210 = vpop.xlane.xlu0 %1209
        %v1211 = vmax.f32 %v747, %v1207
        %v1212 = vmax.f32 %v750, %v1210
        %v1213 = vsub.f32 %v1127, %v1211
        %v1214 = vsub.f32 %v1202, %v1212
        %v1215 = vmul.f32 %v1213, 1.442695
        %v1216 = vpow.pop %v1215
        %v1217 = vmul.f32 %v1214, 1.442695
        %v1218 = vpow.pop %v1217
        %v1219 = vsub.f32 %v747, %v1211
        %v1220 = vsub.f32 %v750, %v1212
        %v1221 = vmul.f32 %v1219, 1.442695
        %v1222 = vpow.pop %v1221
        %v1223 = vmul.f32 %v1220, 1.442695
        %v1224 = vpow.pop %v1223
        %v1225 = vmul.f32 %v1222, %v759
        %v1226 = vmul.f32 %v1224, %v762
        %v1227 = vsel %vm1054, %v1216, 0.0
        %1228 = vadd.xlane.f32.xlu0 %v1227
        %v1229 = vpop.xlane.xlu0 %1228
        %v1230 = vsel %vm1054, %v1218, 0.0
        %1231 = vadd.xlane.f32.xlu0 %v1230
        %v1232 = vpop.xlane.xlu0 %1231
        %v1233 = vadd.f32 %v1225, %v1229
        %v1234 = vadd.f32 %v1226, %v1232
        %v1236 = vsel %vm1054, %v1216, 0
        %1238 = vmatprep.subr.mxu0 0.0
        %1239 = vmatpush1.msra.mxu0 %v527
        %1240 = vmatprep.subr.mxu0 0.0
        %1241 = vmatpush1.msra.mxu0 0.0
        %1242 = vmatprep.subr.mxu0 0.0
        %1243 = vmatpush1.msra.mxu0 0.0
        %1244 = vmatprep.subr.mxu0 0.0
        %1245 = vmatpush1.msra.mxu0 0.0
        %1246 = vmatprep.subr.mxu0 0.0
        %1247 = vmatpush1.msra.mxu0 0.0
        %1248 = vmatprep.subr.mxu0 0.0
        %1249 = vmatpush1.msra.mxu0 0.0
        %1250 = vmatprep.subr.mxu0 0.0
        %1251 = vmatpush1.msra.mxu0 0.0
        %1252 = vmatprep.subr.mxu0 0.0
        %1253 = vmatpush1.msra.mxu0 0.0
        %1254 = vmatprep.subr.mxu0 0.0
        %1255 = vmatpush1.msra.mxu0 0.0
        %1256 = vmatprep.subr.mxu0 0.0
        %1257 = vmatpush1.msra.mxu0 0.0
        %1258 = vmatprep.subr.mxu0 0.0
        %1259 = vmatpush1.msra.mxu0 0.0
        %1260 = vmatprep.subr.mxu0 0.0
        %1261 = vmatpush1.msra.mxu0 0.0
        %1262 = vmatprep.subr.mxu0 0.0
        %1263 = vmatpush1.msra.mxu0 0.0
        %1264 = vmatprep.subr.mxu0 0.0
        %1265 = vmatpush1.msra.mxu0 0.0
        %1266 = vmatprep.subr.mxu0 0.0
        %1267 = vmatpush1.msra.mxu0 0.0
        %1268 = vmatprep.subr.mxu0 0.0
        %1269 = vmatpush1.msra.mxu0 0.0
        %1270 = vmatprep.subr.mxu0 0.0
        %1271 = vmatpush1.msra.mxu0 0.0
        %1272 = vmatprep.subr.mxu0 0.0
        %1273 = vmatpush1.msra.mxu0 0.0
        %1274 = vmatprep.subr.mxu0 0.0
        %1275 = vmatpush1.msra.mxu0 0.0
        %1276 = vmatprep.subr.mxu0 0.0
        %1277 = vmatpush1.msra.mxu0 0.0
        %1278 = vmatprep.subr.mxu0 0.0
        %1279 = vmatpush1.msra.mxu0 0.0
        %1280 = vmatprep.subr.mxu0 0.0
        %1281 = vmatpush1.msra.mxu0 0.0
        %1282 = vmatprep.subr.mxu0 0.0
        %1283 = vmatpush1.msra.mxu0 0.0
        %1284 = vmatprep.subr.mxu0 0.0
        %1285 = vmatpush1.msra.mxu0 0.0
        %1286 = vmatprep.subr.mxu0 0.0
        %1287 = vmatpush1.msra.mxu0 0.0
        %1288 = vmatprep.subr.mxu0 0.0
        %1289 = vmatpush1.msra.mxu0 0.0
        %1290 = vmatprep.subr.mxu0 0.0
        %1291 = vmatpush1.msra.mxu0 0.0
        %1292 = vmatprep.subr.mxu0 0.0
        %1293 = vmatpush1.msra.mxu0 0.0
        %1294 = vmatprep.subr.mxu0 0.0
        %1295 = vmatpush1.msra.mxu0 0.0
        %1296 = vmatprep.subr.mxu0 0.0
        %1297 = vmatpush1.msra.mxu0 0.0
        %1298 = vmatprep.subr.mxu0 0.0
        %1299 = vmatpush1.msra.mxu0 0.0
        %1300 = vmatprep.subr.mxu0 0.0
        %1301 = vmatpush1.msra.mxu0 0.0
        %1302 = vmatprep.mubr.f32.mxu0 0.0
        %1303 = vmatmul.mubr.f32.gmra.mrb[0].mxu0 %v1236
        %v1304 = vpop.f32.mrb[0].mxu0
        %v1305 = vadd.f32 0.0, %v1304
        %v1306 = vpop.f32.mrb[0].mxu0
        %1307 = vdwg.mxu0
        %v1309 = vsel %vm1054, %v1218, 0
        %1311 = vmatprep.subr.mxu0 0.0
        %1312 = vmatpush1.msra.mxu0 %v528
        %1313 = vmatprep.subr.mxu0 0.0
        %1314 = vmatpush1.msra.mxu0 0.0
        %1315 = vmatprep.subr.mxu0 0.0
        %1316 = vmatpush1.msra.mxu0 0.0
        %1317 = vmatprep.subr.mxu0 0.0
        %1318 = vmatpush1.msra.mxu0 0.0
        %1319 = vmatprep.subr.mxu0 0.0
        %1320 = vmatpush1.msra.mxu0 0.0
        %1321 = vmatprep.subr.mxu0 0.0
        %1322 = vmatpush1.msra.mxu0 0.0
        %1323 = vmatprep.subr.mxu0 0.0
        %1324 = vmatpush1.msra.mxu0 0.0
        %1325 = vmatprep.subr.mxu0 0.0
        %1326 = vmatpush1.msra.mxu0 0.0
        %1327 = vmatprep.subr.mxu0 0.0
        %1328 = vmatpush1.msra.mxu0 0.0
        %1329 = vmatprep.subr.mxu0 0.0
        %1330 = vmatpush1.msra.mxu0 0.0
        %1331 = vmatprep.subr.mxu0 0.0
        %1332 = vmatpush1.msra.mxu0 0.0
        %1333 = vmatprep.subr.mxu0 0.0
        %1334 = vmatpush1.msra.mxu0 0.0
        %1335 = vmatprep.subr.mxu0 0.0
        %1336 = vmatpush1.msra.mxu0 0.0
        %1337 = vmatprep.subr.mxu0 0.0
        %1338 = vmatpush1.msra.mxu0 0.0
        %1339 = vmatprep.subr.mxu0 0.0
        %1340 = vmatpush1.msra.mxu0 0.0
        %1341 = vmatprep.subr.mxu0 0.0
        %1342 = vmatpush1.msra.mxu0 0.0
        %1343 = vmatprep.subr.mxu0 0.0
        %1344 = vmatpush1.msra.mxu0 0.0
        %1345 = vmatprep.subr.mxu0 0.0
        %1346 = vmatpush1.msra.mxu0 0.0
        %1347 = vmatprep.subr.mxu0 0.0
        %1348 = vmatpush1.msra.mxu0 0.0
        %1349 = vmatprep.subr.mxu0 0.0
        %1350 = vmatpush1.msra.mxu0 0.0
        %1351 = vmatprep.subr.mxu0 0.0
        %1352 = vmatpush1.msra.mxu0 0.0
        %1353 = vmatprep.subr.mxu0 0.0
        %1354 = vmatpush1.msra.mxu0 0.0
        %1355 = vmatprep.subr.mxu0 0.0
        %1356 = vmatpush1.msra.mxu0 0.0
        %1357 = vmatprep.subr.mxu0 0.0
        %1358 = vmatpush1.msra.mxu0 0.0
        %1359 = vmatprep.subr.mxu0 0.0
        %1360 = vmatpush1.msra.mxu0 0.0
        %1361 = vmatprep.subr.mxu0 0.0
        %1362 = vmatpush1.msra.mxu0 0.0
        %1363 = vmatprep.subr.mxu0 0.0
        %1364 = vmatpush1.msra.mxu0 0.0
        %1365 = vmatprep.subr.mxu0 0.0
        %1366 = vmatpush1.msra.mxu0 0.0
        %1367 = vmatprep.subr.mxu0 0.0
        %1368 = vmatpush1.msra.mxu0 0.0
        %1369 = vmatprep.subr.mxu0 0.0
        %1370 = vmatpush1.msra.mxu0 0.0
        %1371 = vmatprep.subr.mxu0 0.0
        %1372 = vmatpush1.msra.mxu0 0.0
        %1373 = vmatprep.subr.mxu0 0.0
        %1374 = vmatpush1.msra.mxu0 0.0
        %1375 = vmatprep.mubr.f32.mxu0 0.0
        %1376 = vmatmul.mubr.f32.gmra.mrb[0].mxu0 %v1309
        %v1377 = vpop.f32.mrb[0].mxu0
        %v1378 = vadd.f32 0.0, %v1377
        %v1379 = vpop.f32.mrb[0].mxu0
        %1380 = vdwg.mxu0
        %v1381 = vmul.f32 %v1222, %v1046
        %v1382 = vmul.f32 %v1224, %v1051
        %v1383 = vadd.f32 %v1381, %v1305
        %v1384 = vadd.f32 %v1382, %v1378
        %v1385 = vrcp.pop %v1233
        %v1386 = vmul.f32 %v1383, %v1385
        %v1387 = vrcp.pop %v1234
        %v1388 = vmul.f32 %v1384, %v1387
        %1389 = vst.msk [vmem:[#allocation2] sm:$0xff] %vm1054, %v1386
        %1390 = vst.msk [vmem:[#allocation2 + $0x10] sm:$0xff] %vm1054, %v1388
        %1391 = vrot.lane.b32.xlu0 %v565, 120
        %v1392 = vpop.permute.xlu0 %1391
        %1393 = vrot.lane.b32.xlu0 %v527, 120
        %v1394 = vpop.permute.xlu0 %1393
        %v1395 = vsel %vm1054, %v1392, 0
        %v1397 = vsel %vm1054, %v1394, 0
        %1399 = vmatprep.subr.mxu0 0.0
        %1400 = vmatpush1.xpose.msra.mxu0 %v1397
        %1401 = vmatprep.subr.mxu0 0.0
        %1402 = vmatpush1.xpose.msra.mxu0 0.0
        %1403 = vmatprep.subr.mxu0 0.0
        %1404 = vmatpush1.xpose.msra.mxu0 0.0
        %1405 = vmatprep.subr.mxu0 0.0
        %1406 = vmatpush1.xpose.msra.mxu0 0.0
        %1407 = vmatprep.subr.mxu0 0.0
        %1408 = vmatpush1.xpose.msra.mxu0 0.0
        %1409 = vmatprep.subr.mxu0 0.0
        %1410 = vmatpush1.xpose.msra.mxu0 0.0
        %1411 = vmatprep.subr.mxu0 0.0
        %1412 = vmatpush1.xpose.msra.mxu0 0.0
        %1413 = vmatprep.subr.mxu0 0.0
        %1414 = vmatpush1.xpose.msra.mxu0 0.0
        %1415 = vmatprep.subr.mxu0 0.0
        %1416 = vmatpush1.xpose.msra.mxu0 0.0
        %1417 = vmatprep.subr.mxu0 0.0
        %1418 = vmatpush1.xpose.msra.mxu0 0.0
        %1419 = vmatprep.subr.mxu0 0.0
        %1420 = vmatpush1.xpose.msra.mxu0 0.0
        %1421 = vmatprep.subr.mxu0 0.0
        %1422 = vmatpush1.xpose.msra.mxu0 0.0
        %1423 = vmatprep.subr.mxu0 0.0
        %1424 = vmatpush1.xpose.msra.mxu0 0.0
        %1425 = vmatprep.subr.mxu0 0.0
        %1426 = vmatpush1.xpose.msra.mxu0 0.0
        %1427 = vmatprep.subr.mxu0 0.0
        %1428 = vmatpush1.xpose.msra.mxu0 0.0
        %1429 = vmatprep.subr.mxu0 0.0
        %1430 = vmatpush1.xpose.msra.mxu0 0.0
        %1431 = vmatprep.subr.mxu0 0.0
        %1432 = vmatpush1.xpose.msra.mxu0 0.0
        %1433 = vmatprep.subr.mxu0 0.0
        %1434 = vmatpush1.xpose.msra.mxu0 0.0
        %1435 = vmatprep.subr.mxu0 0.0
        %1436 = vmatpush1.xpose.msra.mxu0 0.0
        %1437 = vmatprep.subr.mxu0 0.0
        %1438 = vmatpush1.xpose.msra.mxu0 0.0
        %1439 = vmatprep.subr.mxu0 0.0
        %1440 = vmatpush1.xpose.msra.mxu0 0.0
        %1441 = vmatprep.subr.mxu0 0.0
        %1442 = vmatpush1.xpose.msra.mxu0 0.0
        %1443 = vmatprep.subr.mxu0 0.0
        %1444 = vmatpush1.xpose.msra.mxu0 0.0
        %1445 = vmatprep.subr.mxu0 0.0
        %1446 = vmatpush1.xpose.msra.mxu0 0.0
        %1447 = vmatprep.subr.mxu0 0.0
        %1448 = vmatpush1.xpose.msra.mxu0 0.0
        %1449 = vmatprep.subr.mxu0 0.0
        %1450 = vmatpush1.xpose.msra.mxu0 0.0
        %1451 = vmatprep.subr.mxu0 0.0
        %1452 = vmatpush1.xpose.msra.mxu0 0.0
        %1453 = vmatprep.subr.mxu0 0.0
        %1454 = vmatpush1.xpose.msra.mxu0 0.0
        %1455 = vmatprep.subr.mxu0 0.0
        %1456 = vmatpush1.xpose.msra.mxu0 0.0
        %1457 = vmatprep.subr.mxu0 0.0
        %1458 = vmatpush1.xpose.msra.mxu0 0.0
        %1459 = vmatprep.subr.mxu0 0.0
        %1460 = vmatpush1.xpose.msra.mxu0 0.0
        %1461 = vmatprep.subr.mxu0 0.0
        %1462 = vmatpush1.xpose.msra.mxu0 0.0
        %1463 = vmatprep.mubr.f32.mxu0 0.0
        %1464 = vmatmul.mubr.f32.gmra.mrb[0].mxu0 %v1395
        %v1465 = vpop.f32.mrb[0].mxu0
        %v1466 = vadd.f32 0.0, %v1465
        %v1467 = vpop.f32.mrb[0].mxu0
        %1468 = vdwg.mxu0
        %1469 = vrot.lane.b32.xlu0 %v566, 120
        %v1470 = vpop.permute.xlu0 %1469
        %1471 = vrot.lane.b32.xlu0 %v528, 120
        %v1472 = vpop.permute.xlu0 %1471
        %v1473 = vsel %vm1054, %v1470, 0
        %v1475 = vsel %vm1054, %v1472, 0
        %1477 = vmatprep.subr.mxu0 0.0
        %1478 = vmatpush1.xpose.msra.mxu0 %v1475
        %1479 = vmatprep.subr.mxu0 0.0
        %1480 = vmatpush1.xpose.msra.mxu0 0.0
        %1481 = vmatprep.subr.mxu0 0.0
        %1482 = vmatpush1.xpose.msra.mxu0 0.0
        %1483 = vmatprep.subr.mxu0 0.0
        %1484 = vmatpush1.xpose.msra.mxu0 0.0
        %1485 = vmatprep.subr.mxu0 0.0
        %1486 = vmatpush1.xpose.msra.mxu0 0.0
        %1487 = vmatprep.subr.mxu0 0.0
        %1488 = vmatpush1.xpose.msra.mxu0 0.0
        %1489 = vmatprep.subr.mxu0 0.0
        %1490 = vmatpush1.xpose.msra.mxu0 0.0
        %1491 = vmatprep.subr.mxu0 0.0
        %1492 = vmatpush1.xpose.msra.mxu0 0.0
        %1493 = vmatprep.subr.mxu0 0.0
        %1494 = vmatpush1.xpose.msra.mxu0 0.0
        %1495 = vmatprep.subr.mxu0 0.0
        %1496 = vmatpush1.xpose.msra.mxu0 0.0
        %1497 = vmatprep.subr.mxu0 0.0
        %1498 = vmatpush1.xpose.msra.mxu0 0.0
        %1499 = vmatprep.subr.mxu0 0.0
        %1500 = vmatpush1.xpose.msra.mxu0 0.0
        %1501 = vmatprep.subr.mxu0 0.0
        %1502 = vmatpush1.xpose.msra.mxu0 0.0
        %1503 = vmatprep.subr.mxu0 0.0
        %1504 = vmatpush1.xpose.msra.mxu0 0.0
        %1505 = vmatprep.subr.mxu0 0.0
        %1506 = vmatpush1.xpose.msra.mxu0 0.0
        %1507 = vmatprep.subr.mxu0 0.0
        %1508 = vmatpush1.xpose.msra.mxu0 0.0
        %1509 = vmatprep.subr.mxu0 0.0
        %1510 = vmatpush1.xpose.msra.mxu0 0.0
        %1511 = vmatprep.subr.mxu0 0.0
        %1512 = vmatpush1.xpose.msra.mxu0 0.0
        %1513 = vmatprep.subr.mxu0 0.0
        %1514 = vmatpush1.xpose.msra.mxu0 0.0
        %1515 = vmatprep.subr.mxu0 0.0
        %1516 = vmatpush1.xpose.msra.mxu0 0.0
        %1517 = vmatprep.subr.mxu0 0.0
        %1518 = vmatpush1.xpose.msra.mxu0 0.0
        %1519 = vmatprep.subr.mxu0 0.0
        %1520 = vmatpush1.xpose.msra.mxu0 0.0
        %1521 = vmatprep.subr.mxu0 0.0
        %1522 = vmatpush1.xpose.msra.mxu0 0.0
        %1523 = vmatprep.subr.mxu0 0.0
        %1524 = vmatpush1.xpose.msra.mxu0 0.0
        %1525 = vmatprep.subr.mxu0 0.0
        %1526 = vmatpush1.xpose.msra.mxu0 0.0
        %1527 = vmatprep.subr.mxu0 0.0
        %1528 = vmatpush1.xpose.msra.mxu0 0.0
        %1529 = vmatprep.subr.mxu0 0.0
        %1530 = vmatpush1.xpose.msra.mxu0 0.0
        %1531 = vmatprep.subr.mxu0 0.0
        %1532 = vmatpush1.xpose.msra.mxu0 0.0
        %1533 = vmatprep.subr.mxu0 0.0
        %1534 = vmatpush1.xpose.msra.mxu0 0.0
        %1535 = vmatprep.subr.mxu0 0.0
        %1536 = vmatpush1.xpose.msra.mxu0 0.0
        %1537 = vmatprep.subr.mxu0 0.0
        %1538 = vmatpush1.xpose.msra.mxu0 0.0
        %1539 = vmatprep.subr.mxu0 0.0
        %1540 = vmatpush1.xpose.msra.mxu0 0.0
        %1541 = vmatprep.mubr.f32.mxu0 0.0
        %1542 = vmatmul.mubr.f32.gmra.mrb[0].mxu0 %v1473
        %v1543 = vpop.f32.mrb[0].mxu0
        %v1544 = vadd.f32 0.0, %v1543
        %v1545 = vpop.f32.mrb[0].mxu0
        %1546 = vdwg.mxu0
        %v1547 = vsel %vm1054, %v1466, -inf
        %1548 = vmax.xlane.f32.xlu0 %v1547
        %v1549 = vpop.xlane.xlu0 %1548
        %v1550 = vsel %vm1054, %v1544, -inf
        %1551 = vmax.xlane.f32.xlu0 %v1550
        %v1552 = vpop.xlane.xlu0 %1551
        %v1553 = vmax.f32 %v766, %v1549
        %v1554 = vmax.f32 %v769, %v1552
        %v1555 = vsub.f32 %v1466, %v1553
        %v1556 = vsub.f32 %v1544, %v1554
        %v1557 = vmul.f32 %v1555, 1.442695
        %v1558 = vpow.pop %v1557
        %v1559 = vmul.f32 %v1556, 1.442695
        %v1560 = vpow.pop %v1559
        %v1561 = vsub.f32 %v766, %v1553
        %v1562 = vsub.f32 %v769, %v1554
        %v1563 = vmul.f32 %v1561, 1.442695
        %v1564 = vpow.pop %v1563
        %v1565 = vmul.f32 %v1562, 1.442695
        %v1566 = vpow.pop %v1565
        %v1567 = vmul.f32 %v1564, %v786
        %v1568 = vmul.f32 %v1566, %v789
        %v1569 = vsel %vm1054, %v1558, 0.0
        %1570 = vadd.xlane.f32.xlu0 %v1569
        %v1571 = vpop.xlane.xlu0 %1570
        %v1572 = vsel %vm1054, %v1560, 0.0
        %1573 = vadd.xlane.f32.xlu0 %v1572
        %v1574 = vpop.xlane.xlu0 %1573
        %v1575 = vadd.f32 %v1567, %v1571
        %v1576 = vadd.f32 %v1568, %v1574
        %v1579 = vsel %vm1054, %v1558, 0
        %1581 = vmatprep.subr.mxu0 0.0
        %1582 = vmatpush1.msra.mxu0 %v1394
        %1583 = vmatprep.subr.mxu0 0.0
        %1584 = vmatpush1.msra.mxu0 0.0
        %1585 = vmatprep.subr.mxu0 0.0
        %1586 = vmatpush1.msra.mxu0 0.0
        %1587 = vmatprep.subr.mxu0 0.0
        %1588 = vmatpush1.msra.mxu0 0.0
        %1589 = vmatprep.subr.mxu0 0.0
        %1590 = vmatpush1.msra.mxu0 0.0
        %1591 = vmatprep.subr.mxu0 0.0
        %1592 = vmatpush1.msra.mxu0 0.0
        %1593 = vmatprep.subr.mxu0 0.0
        %1594 = vmatpush1.msra.mxu0 0.0
        %1595 = vmatprep.subr.mxu0 0.0
        %1596 = vmatpush1.msra.mxu0 0.0
        %1597 = vmatprep.subr.mxu0 0.0
        %1598 = vmatpush1.msra.mxu0 0.0
        %1599 = vmatprep.subr.mxu0 0.0
        %1600 = vmatpush1.msra.mxu0 0.0
        %1601 = vmatprep.subr.mxu0 0.0
        %1602 = vmatpush1.msra.mxu0 0.0
        %1603 = vmatprep.subr.mxu0 0.0
        %1604 = vmatpush1.msra.mxu0 0.0
        %1605 = vmatprep.subr.mxu0 0.0
        %1606 = vmatpush1.msra.mxu0 0.0
        %1607 = vmatprep.subr.mxu0 0.0
        %1608 = vmatpush1.msra.mxu0 0.0
        %1609 = vmatprep.subr.mxu0 0.0
        %1610 = vmatpush1.msra.mxu0 0.0
        %1611 = vmatprep.subr.mxu0 0.0
        %1612 = vmatpush1.msra.mxu0 0.0
        %1613 = vmatprep.subr.mxu0 0.0
        %1614 = vmatpush1.msra.mxu0 0.0
        %1615 = vmatprep.subr.mxu0 0.0
        %1616 = vmatpush1.msra.mxu0 0.0
        %1617 = vmatprep.subr.mxu0 0.0
        %1618 = vmatpush1.msra.mxu0 0.0
        %1619 = vmatprep.subr.mxu0 0.0
        %1620 = vmatpush1.msra.mxu0 0.0
        %1621 = vmatprep.subr.mxu0 0.0
        %1622 = vmatpush1.msra.mxu0 0.0
        %1623 = vmatprep.subr.mxu0 0.0
        %1624 = vmatpush1.msra.mxu0 0.0
        %1625 = vmatprep.subr.mxu0 0.0
        %1626 = vmatpush1.msra.mxu0 0.0
        %1627 = vmatprep.subr.mxu0 0.0
        %1628 = vmatpush1.msra.mxu0 0.0
        %1629 = vmatprep.subr.mxu0 0.0
        %1630 = vmatpush1.msra.mxu0 0.0
        %1631 = vmatprep.subr.mxu0 0.0
        %1632 = vmatpush1.msra.mxu0 0.0
        %1633 = vmatprep.subr.mxu0 0.0
        %1634 = vmatpush1.msra.mxu0 0.0
        %1635 = vmatprep.subr.mxu0 0.0
        %1636 = vmatpush1.msra.mxu0 0.0
        %1637 = vmatprep.subr.mxu0 0.0
        %1638 = vmatpush1.msra.mxu0 0.0
        %1639 = vmatprep.subr.mxu0 0.0
        %1640 = vmatpush1.msra.mxu0 0.0
        %1641 = vmatprep.subr.mxu0 0.0
        %1642 = vmatpush1.msra.mxu0 0.0
        %1643 = vmatprep.subr.mxu0 0.0
        %1644 = vmatpush1.msra.mxu0 0.0
        %1645 = vmatprep.mubr.f32.mxu0 0.0
        %1646 = vmatmul.mubr.f32.gmra.mrb[0].mxu0 %v1579
        %v1647 = vpop.f32.mrb[0].mxu0
        %v1648 = vadd.f32 0.0, %v1647
        %v1649 = vpop.f32.mrb[0].mxu0
        %1650 = vdwg.mxu0
        %v1653 = vsel %vm1054, %v1560, 0
        %1655 = vmatprep.subr.mxu0 0.0
        %1656 = vmatpush1.msra.mxu0 %v1472
        %1657 = vmatprep.subr.mxu0 0.0
        %1658 = vmatpush1.msra.mxu0 0.0
        %1659 = vmatprep.subr.mxu0 0.0
        %1660 = vmatpush1.msra.mxu0 0.0
        %1661 = vmatprep.subr.mxu0 0.0
        %1662 = vmatpush1.msra.mxu0 0.0
        %1663 = vmatprep.subr.mxu0 0.0
        %1664 = vmatpush1.msra.mxu0 0.0
        %1665 = vmatprep.subr.mxu0 0.0
        %1666 = vmatpush1.msra.mxu0 0.0
        %1667 = vmatprep.subr.mxu0 0.0
        %1668 = vmatpush1.msra.mxu0 0.0
        %1669 = vmatprep.subr.mxu0 0.0
        %1670 = vmatpush1.msra.mxu0 0.0
        %1671 = vmatprep.subr.mxu0 0.0
        %1672 = vmatpush1.msra.mxu0 0.0
        %1673 = vmatprep.subr.mxu0 0.0
        %1674 = vmatpush1.msra.mxu0 0.0
        %1675 = vmatprep.subr.mxu0 0.0
        %1676 = vmatpush1.msra.mxu0 0.0
        %1677 = vmatprep.subr.mxu0 0.0
        %1678 = vmatpush1.msra.mxu0 0.0
        %1679 = vmatprep.subr.mxu0 0.0
        %1680 = vmatpush1.msra.mxu0 0.0
        %1681 = vmatprep.subr.mxu0 0.0
        %1682 = vmatpush1.msra.mxu0 0.0
        %1683 = vmatprep.subr.mxu0 0.0
        %1684 = vmatpush1.msra.mxu0 0.0
        %1685 = vmatprep.subr.mxu0 0.0
        %1686 = vmatpush1.msra.mxu0 0.0
        %1687 = vmatprep.subr.mxu0 0.0
        %1688 = vmatpush1.msra.mxu0 0.0
        %1689 = vmatprep.subr.mxu0 0.0
        %1690 = vmatpush1.msra.mxu0 0.0
        %1691 = vmatprep.subr.mxu0 0.0
        %1692 = vmatpush1.msra.mxu0 0.0
        %1693 = vmatprep.subr.mxu0 0.0
        %1694 = vmatpush1.msra.mxu0 0.0
        %1695 = vmatprep.subr.mxu0 0.0
        %1696 = vmatpush1.msra.mxu0 0.0
        %1697 = vmatprep.subr.mxu0 0.0
        %1698 = vmatpush1.msra.mxu0 0.0
        %1699 = vmatprep.subr.mxu0 0.0
        %1700 = vmatpush1.msra.mxu0 0.0
        %1701 = vmatprep.subr.mxu0 0.0
        %1702 = vmatpush1.msra.mxu0 0.0
        %1703 = vmatprep.subr.mxu0 0.0
        %1704 = vmatpush1.msra.mxu0 0.0
        %1705 = vmatprep.subr.mxu0 0.0
        %1706 = vmatpush1.msra.mxu0 0.0
        %1707 = vmatprep.subr.mxu0 0.0
        %1708 = vmatpush1.msra.mxu0 0.0
        %1709 = vmatprep.subr.mxu0 0.0
        %1710 = vmatpush1.msra.mxu0 0.0
        %1711 = vmatprep.subr.mxu0 0.0
        %1712 = vmatpush1.msra.mxu0 0.0
        %1713 = vmatprep.subr.mxu0 0.0
        %1714 = vmatpush1.msra.mxu0 0.0
        %1715 = vmatprep.subr.mxu0 0.0
        %1716 = vmatpush1.msra.mxu0 0.0
        %1717 = vmatprep.subr.mxu0 0.0
        %1718 = vmatpush1.msra.mxu0 0.0
        %1719 = vmatprep.mubr.f32.mxu0 0.0
        %1720 = vmatmul.mubr.f32.gmra.mrb[0].mxu0 %v1653
        %v1721 = vpop.f32.mrb[0].mxu0
        %v1722 = vadd.f32 0.0, %v1721
        %v1723 = vpop.f32.mrb[0].mxu0
        %1724 = vdwg.mxu0
        %v1725 = vmul.f32 %v1564, %v1046
        %v1726 = vmul.f32 %v1566, %v1051
        %1729 = vrot.lane.b32.xlu0 %v1648, 8
        %v1730 = vpop.permute.xlu0 %1729
        %1731 = vrot.lane.b32.xlu0 %v1722, 8
        %v1732 = vpop.permute.xlu0 %1731
        %v1735 = vadd.f32 %v1725, %v1730
        %v1736 = vadd.f32 %v1726, %v1732
        %v1737 = vrcp.pop %v1575
        %v1738 = vmul.f32 %v1735, %v1737
        %v1739 = vrcp.pop %v1576
        %v1740 = vmul.f32 %v1736, %v1739
        %vm1741 = vcmask 130112
        %1742 = vst.msk [vmem:[#allocation2] sm:$0xff] %vm1741, %v1738
        %1743 = vst.msk [vmem:[#allocation2 + $0x10] sm:$0xff] %vm1741, %v1740
        %1744 = vrot.lane.b32.xlu0 %v565, 112
        %v1745 = vpop.permute.xlu0 %1744
        %1746 = vrot.lane.b32.xlu0 %v527, 112
        %v1747 = vpop.permute.xlu0 %1746
        %v1748 = vsel %vm1054, %v1745, 0
        %v1750 = vsel %vm1054, %v1747, 0
        %1752 = vmatprep.subr.mxu0 0.0
        %1753 = vmatpush1.xpose.msra.mxu0 %v1750
        %1754 = vmatprep.subr.mxu0 0.0
        %1755 = vmatpush1.xpose.msra.mxu0 0.0
        %1756 = vmatprep.subr.mxu0 0.0
        %1757 = vmatpush1.xpose.msra.mxu0 0.0
        %1758 = vmatprep.subr.mxu0 0.0
        %1759 = vmatpush1.xpose.msra.mxu0 0.0
        %1760 = vmatprep.subr.mxu0 0.0
        %1761 = vmatpush1.xpose.msra.mxu0 0.0
        %1762 = vmatprep.subr.mxu0 0.0
        %1763 = vmatpush1.xpose.msra.mxu0 0.0
        %1764 = vmatprep.subr.mxu0 0.0
        %1765 = vmatpush1.xpose.msra.mxu0 0.0
        %1766 = vmatprep.subr.mxu0 0.0
        %1767 = vmatpush1.xpose.msra.mxu0 0.0
        %1768 = vmatprep.subr.mxu0 0.0
        %1769 = vmatpush1.xpose.msra.mxu0 0.0
        %1770 = vmatprep.subr.mxu0 0.0
        %1771 = vmatpush1.xpose.msra.mxu0 0.0
        %1772 = vmatprep.subr.mxu0 0.0
        %1773 = vmatpush1.xpose.msra.mxu0 0.0
        %1774 = vmatprep.subr.mxu0 0.0
        %1775 = vmatpush1.xpose.msra.mxu0 0.0
        %1776 = vmatprep.subr.mxu0 0.0
        %1777 = vmatpush1.xpose.msra.mxu0 0.0
        %1778 = vmatprep.subr.mxu0 0.0
        %1779 = vmatpush1.xpose.msra.mxu0 0.0
        %1780 = vmatprep.subr.mxu0 0.0
        %1781 = vmatpush1.xpose.msra.mxu0 0.0
        %1782 = vmatprep.subr.mxu0 0.0
        %1783 = vmatpush1.xpose.msra.mxu0 0.0
        %1784 = vmatprep.subr.mxu0 0.0
        %1785 = vmatpush1.xpose.msra.mxu0 0.0
        %1786 = vmatprep.subr.mxu0 0.0
        %1787 = vmatpush1.xpose.msra.mxu0 0.0
        %1788 = vmatprep.subr.mxu0 0.0
        %1789 = vmatpush1.xpose.msra.mxu0 0.0
        %1790 = vmatprep.subr.mxu0 0.0
        %1791 = vmatpush1.xpose.msra.mxu0 0.0
        %1792 = vmatprep.subr.mxu0 0.0
        %1793 = vmatpush1.xpose.msra.mxu0 0.0
        %1794 = vmatprep.subr.mxu0 0.0
        %1795 = vmatpush1.xpose.msra.mxu0 0.0
        %1796 = vmatprep.subr.mxu0 0.0
        %1797 = vmatpush1.xpose.msra.mxu0 0.0
        %1798 = vmatprep.subr.mxu0 0.0
        %1799 = vmatpush1.xpose.msra.mxu0 0.0
        %1800 = vmatprep.subr.mxu0 0.0
        %1801 = vmatpush1.xpose.msra.mxu0 0.0
        %1802 = vmatprep.subr.mxu0 0.0
        %1803 = vmatpush1.xpose.msra.mxu0 0.0
        %1804 = vmatprep.subr.mxu0 0.0
        %1805 = vmatpush1.xpose.msra.mxu0 0.0
        %1806 = vmatprep.subr.mxu0 0.0
        %1807 = vmatpush1.xpose.msra.mxu0 0.0
        %1808 = vmatprep.subr.mxu0 0.0
        %1809 = vmatpush1.xpose.msra.mxu0 0.0
        %1810 = vmatprep.subr.mxu0 0.0
        %1811 = vmatpush1.xpose.msra.mxu0 0.0
        %1812 = vmatprep.subr.mxu0 0.0
        %1813 = vmatpush1.xpose.msra.mxu0 0.0
        %1814 = vmatprep.subr.mxu0 0.0
        %1815 = vmatpush1.xpose.msra.mxu0 0.0
        %1816 = vmatprep.mubr.f32.mxu0 0.0
        %1817 = vmatmul.mubr.f32.gmra.mrb[0].mxu0 %v1748
        %v1818 = vpop.f32.mrb[0].mxu0
        %v1819 = vadd.f32 0.0, %v1818
        %v1820 = vpop.f32.mrb[0].mxu0
        %1821 = vdwg.mxu0
        %1822 = vrot.lane.b32.xlu0 %v566, 112
        %v1823 = vpop.permute.xlu0 %1822
        %1824 = vrot.lane.b32.xlu0 %v528, 112
        %v1825 = vpop.permute.xlu0 %1824
        %v1826 = vsel %vm1054, %v1823, 0
        %v1828 = vsel %vm1054, %v1825, 0
        %1830 = vmatprep.subr.mxu0 0.0
        %1831 = vmatpush1.xpose.msra.mxu0 %v1828
        %1832 = vmatprep.subr.mxu0 0.0
        %1833 = vmatpush1.xpose.msra.mxu0 0.0
        %1834 = vmatprep.subr.mxu0 0.0
        %1835 = vmatpush1.xpose.msra.mxu0 0.0
        %1836 = vmatprep.subr.mxu0 0.0
        %1837 = vmatpush1.xpose.msra.mxu0 0.0
        %1838 = vmatprep.subr.mxu0 0.0
        %1839 = vmatpush1.xpose.msra.mxu0 0.0
        %1840 = vmatprep.subr.mxu0 0.0
        %1841 = vmatpush1.xpose.msra.mxu0 0.0
        %1842 = vmatprep.subr.mxu0 0.0
        %1843 = vmatpush1.xpose.msra.mxu0 0.0
        %1844 = vmatprep.subr.mxu0 0.0
        %1845 = vmatpush1.xpose.msra.mxu0 0.0
        %1846 = vmatprep.subr.mxu0 0.0
        %1847 = vmatpush1.xpose.msra.mxu0 0.0
        %1848 = vmatprep.subr.mxu0 0.0
        %1849 = vmatpush1.xpose.msra.mxu0 0.0
        %1850 = vmatprep.subr.mxu0 0.0
        %1851 = vmatpush1.xpose.msra.mxu0 0.0
        %1852 = vmatprep.subr.mxu0 0.0
        %1853 = vmatpush1.xpose.msra.mxu0 0.0
        %1854 = vmatprep.subr.mxu0 0.0
        %1855 = vmatpush1.xpose.msra.mxu0 0.0
        %1856 = vmatprep.subr.mxu0 0.0
        %1857 = vmatpush1.xpose.msra.mxu0 0.0
        %1858 = vmatprep.subr.mxu0 0.0
        %1859 = vmatpush1.xpose.msra.mxu0 0.0
        %1860 = vmatprep.subr.mxu0 0.0
        %1861 = vmatpush1.xpose.msra.mxu0 0.0
        %1862 = vmatprep.subr.mxu0 0.0
        %1863 = vmatpush1.xpose.msra.mxu0 0.0
        %1864 = vmatprep.subr.mxu0 0.0
        %1865 = vmatpush1.xpose.msra.mxu0 0.0
        %1866 = vmatprep.subr.mxu0 0.0
        %1867 = vmatpush1.xpose.msra.mxu0 0.0
        %1868 = vmatprep.subr.mxu0 0.0
        %1869 = vmatpush1.xpose.msra.mxu0 0.0
        %1870 = vmatprep.subr.mxu0 0.0
        %1871 = vmatpush1.xpose.msra.mxu0 0.0
        %1872 = vmatprep.subr.mxu0 0.0
        %1873 = vmatpush1.xpose.msra.mxu0 0.0
        %1874 = vmatprep.subr.mxu0 0.0
        %1875 = vmatpush1.xpose.msra.mxu0 0.0
        %1876 = vmatprep.subr.mxu0 0.0
        %1877 = vmatpush1.xpose.msra.mxu0 0.0
        %1878 = vmatprep.subr.mxu0 0.0
        %1879 = vmatpush1.xpose.msra.mxu0 0.0
        %1880 = vmatprep.subr.mxu0 0.0
        %1881 = vmatpush1.xpose.msra.mxu0 0.0
        %1882 = vmatprep.subr.mxu0 0.0
        %1883 = vmatpush1.xpose.msra.mxu0 0.0
        %1884 = vmatprep.subr.mxu0 0.0
        %1885 = vmatpush1.xpose.msra.mxu0 0.0
        %1886 = vmatprep.subr.mxu0 0.0
        %1887 = vmatpush1.xpose.msra.mxu0 0.0
        %1888 = vmatprep.subr.mxu0 0.0
        %1889 = vmatpush1.xpose.msra.mxu0 0.0
        %1890 = vmatprep.subr.mxu0 0.0
        %1891 = vmatpush1.xpose.msra.mxu0 0.0
        %1892 = vmatprep.subr.mxu0 0.0
        %1893 = vmatpush1.xpose.msra.mxu0 0.0
        %1894 = vmatprep.mubr.f32.mxu0 0.0
        %1895 = vmatmul.mubr.f32.gmra.mrb[0].mxu0 %v1826
        %v1896 = vpop.f32.mrb[0].mxu0
        %v1897 = vadd.f32 0.0, %v1896
        %v1898 = vpop.f32.mrb[0].mxu0
        %1899 = vdwg.mxu0
        %v1900 = vsel %vm1054, %v1819, -inf
        %1901 = vmax.xlane.f32.xlu0 %v1900
        %v1902 = vpop.xlane.xlu0 %1901
        %v1903 = vsel %vm1054, %v1897, -inf
        %1904 = vmax.xlane.f32.xlu0 %v1903
        %v1905 = vpop.xlane.xlu0 %1904
        %v1906 = vmax.f32 %v792, %v1902
        %v1907 = vmax.f32 %v795, %v1905
        %v1908 = vsub.f32 %v1819, %v1906
        %v1909 = vsub.f32 %v1897, %v1907
        %v1910 = vmul.f32 %v1908, 1.442695
        %v1911 = vpow.pop %v1910
        %v1912 = vmul.f32 %v1909, 1.442695
        %v1913 = vpow.pop %v1912
        %v1914 = vsub.f32 %v792, %v1906
        %v1915 = vsub.f32 %v795, %v1907
        %v1916 = vmul.f32 %v1914, 1.442695
        %v1917 = vpow.pop %v1916
        %v1918 = vmul.f32 %v1915, 1.442695
        %v1919 = vpow.pop %v1918
        %v1920 = vmul.f32 %v1917, %v804
        %v1921 = vmul.f32 %v1919, %v807
        %v1922 = vsel %vm1054, %v1911, 0.0
        %1923 = vadd.xlane.f32.xlu0 %v1922
        %v1924 = vpop.xlane.xlu0 %1923
        %v1925 = vsel %vm1054, %v1913, 0.0
        %1926 = vadd.xlane.f32.xlu0 %v1925
        %v1927 = vpop.xlane.xlu0 %1926
        %v1928 = vadd.f32 %v1920, %v1924
        %v1929 = vadd.f32 %v1921, %v1927
        %v1932 = vsel %vm1054, %v1911, 0
        %1934 = vmatprep.subr.mxu0 0.0
        %1935 = vmatpush1.msra.mxu0 %v1747
        %1936 = vmatprep.subr.mxu0 0.0
        %1937 = vmatpush1.msra.mxu0 0.0
        %1938 = vmatprep.subr.mxu0 0.0
        %1939 = vmatpush1.msra.mxu0 0.0
        %1940 = vmatprep.subr.mxu0 0.0
        %1941 = vmatpush1.msra.mxu0 0.0
        %1942 = vmatprep.subr.mxu0 0.0
        %1943 = vmatpush1.msra.mxu0 0.0
        %1944 = vmatprep.subr.mxu0 0.0
        %1945 = vmatpush1.msra.mxu0 0.0
        %1946 = vmatprep.subr.mxu0 0.0
        %1947 = vmatpush1.msra.mxu0 0.0
        %1948 = vmatprep.subr.mxu0 0.0
        %1949 = vmatpush1.msra.mxu0 0.0
        %1950 = vmatprep.subr.mxu0 0.0
        %1951 = vmatpush1.msra.mxu0 0.0
        %1952 = vmatprep.subr.mxu0 0.0
        %1953 = vmatpush1.msra.mxu0 0.0
        %1954 = vmatprep.subr.mxu0 0.0
        %1955 = vmatpush1.msra.mxu0 0.0
        %1956 = vmatprep.subr.mxu0 0.0
        %1957 = vmatpush1.msra.mxu0 0.0
        %1958 = vmatprep.subr.mxu0 0.0
        %1959 = vmatpush1.msra.mxu0 0.0
        %1960 = vmatprep.subr.mxu0 0.0
        %1961 = vmatpush1.msra.mxu0 0.0
        %1962 = vmatprep.subr.mxu0 0.0
        %1963 = vmatpush1.msra.mxu0 0.0
        %1964 = vmatprep.subr.mxu0 0.0
        %1965 = vmatpush1.msra.mxu0 0.0
        %1966 = vmatprep.subr.mxu0 0.0
        %1967 = vmatpush1.msra.mxu0 0.0
        %1968 = vmatprep.subr.mxu0 0.0
        %1969 = vmatpush1.msra.mxu0 0.0
        %1970 = vmatprep.subr.mxu0 0.0
        %1971 = vmatpush1.msra.mxu0 0.0
        %1972 = vmatprep.subr.mxu0 0.0
        %1973 = vmatpush1.msra.mxu0 0.0
        %1974 = vmatprep.subr.mxu0 0.0
        %1975 = vmatpush1.msra.mxu0 0.0
        %1976 = vmatprep.subr.mxu0 0.0
        %1977 = vmatpush1.msra.mxu0 0.0
        %1978 = vmatprep.subr.mxu0 0.0
        %1979 = vmatpush1.msra.mxu0 0.0
        %1980 = vmatprep.subr.mxu0 0.0
        %1981 = vmatpush1.msra.mxu0 0.0
        %1982 = vmatprep.subr.mxu0 0.0
        %1983 = vmatpush1.msra.mxu0 0.0
        %1984 = vmatprep.subr.mxu0 0.0
        %1985 = vmatpush1.msra.mxu0 0.0
        %1986 = vmatprep.subr.mxu0 0.0
        %1987 = vmatpush1.msra.mxu0 0.0
        %1988 = vmatprep.subr.mxu0 0.0
        %1989 = vmatpush1.msra.mxu0 0.0
        %1990 = vmatprep.subr.mxu0 0.0
        %1991 = vmatpush1.msra.mxu0 0.0
        %1992 = vmatprep.subr.mxu0 0.0
        %1993 = vmatpush1.msra.mxu0 0.0
        %1994 = vmatprep.subr.mxu0 0.0
        %1995 = vmatpush1.msra.mxu0 0.0
        %1996 = vmatprep.subr.mxu0 0.0
        %1997 = vmatpush1.msra.mxu0 0.0
        %1998 = vmatprep.mubr.f32.mxu0 0.0
        %1999 = vmatmul.mubr.f32.gmra.mrb[0].mxu0 %v1932
        %v2000 = vpop.f32.mrb[0].mxu0
        %v2001 = vadd.f32 0.0, %v2000
        %v2002 = vpop.f32.mrb[0].mxu0
        %2003 = vdwg.mxu0
        %v2006 = vsel %vm1054, %v1913, 0
        %2008 = vmatprep.subr.mxu0 0.0
        %2009 = vmatpush1.msra.mxu0 %v1825
        %2010 = vmatprep.subr.mxu0 0.0
        %2011 = vmatpush1.msra.mxu0 0.0
        %2012 = vmatprep.subr.mxu0 0.0
        %2013 = vmatpush1.msra.mxu0 0.0
        %2014 = vmatprep.subr.mxu0 0.0
        %2015 = vmatpush1.msra.mxu0 0.0
        %2016 = vmatprep.subr.mxu0 0.0
        %2017 = vmatpush1.msra.mxu0 0.0
        %2018 = vmatprep.subr.mxu0 0.0
        %2019 = vmatpush1.msra.mxu0 0.0
        %2020 = vmatprep.subr.mxu0 0.0
        %2021 = vmatpush1.msra.mxu0 0.0
        %2022 = vmatprep.subr.mxu0 0.0
        %2023 = vmatpush1.msra.mxu0 0.0
        %2024 = vmatprep.subr.mxu0 0.0
        %2025 = vmatpush1.msra.mxu0 0.0
        %2026 = vmatprep.subr.mxu0 0.0
        %2027 = vmatpush1.msra.mxu0 0.0
        %2028 = vmatprep.subr.mxu0 0.0
        %2029 = vmatpush1.msra.mxu0 0.0
        %2030 = vmatprep.subr.mxu0 0.0
        %2031 = vmatpush1.msra.mxu0 0.0
        %2032 = vmatprep.subr.mxu0 0.0
        %2033 = vmatpush1.msra.mxu0 0.0
        %2034 = vmatprep.subr.mxu0 0.0
        %2035 = vmatpush1.msra.mxu0 0.0
        %2036 = vmatprep.subr.mxu0 0.0
        %2037 = vmatpush1.msra.mxu0 0.0
        %2038 = vmatprep.subr.mxu0 0.0
        %2039 = vmatpush1.msra.mxu0 0.0
        %2040 = vmatprep.subr.mxu0 0.0
        %2041 = vmatpush1.msra.mxu0 0.0
        %2042 = vmatprep.subr.mxu0 0.0
        %2043 = vmatpush1.msra.mxu0 0.0
        %2044 = vmatprep.subr.mxu0 0.0
        %2045 = vmatpush1.msra.mxu0 0.0
        %2046 = vmatprep.subr.mxu0 0.0
        %2047 = vmatpush1.msra.mxu0 0.0
        %2048 = vmatprep.subr.mxu0 0.0
        %2049 = vmatpush1.msra.mxu0 0.0
        %2050 = vmatprep.subr.mxu0 0.0
        %2051 = vmatpush1.msra.mxu0 0.0
        %2052 = vmatprep.subr.mxu0 0.0
        %2053 = vmatpush1.msra.mxu0 0.0
        %2054 = vmatprep.subr.mxu0 0.0
        %2055 = vmatpush1.msra.mxu0 0.0
        %2056 = vmatprep.subr.mxu0 0.0
        %2057 = vmatpush1.msra.mxu0 0.0
        %2058 = vmatprep.subr.mxu0 0.0
        %2059 = vmatpush1.msra.mxu0 0.0
        %2060 = vmatprep.subr.mxu0 0.0
        %2061 = vmatpush1.msra.mxu0 0.0
        %2062 = vmatprep.subr.mxu0 0.0
        %2063 = vmatpush1.msra.mxu0 0.0
        %2064 = vmatprep.subr.mxu0 0.0
        %2065 = vmatpush1.msra.mxu0 0.0
        %2066 = vmatprep.subr.mxu0 0.0
        %2067 = vmatpush1.msra.mxu0 0.0
        %2068 = vmatprep.subr.mxu0 0.0
        %2069 = vmatpush1.msra.mxu0 0.0
        %2070 = vmatprep.subr.mxu0 0.0
        %2071 = vmatpush1.msra.mxu0 0.0
        %2072 = vmatprep.mubr.f32.mxu0 0.0
        %2073 = vmatmul.mubr.f32.gmra.mrb[0].mxu0 %v2006
        %v2074 = vpop.f32.mrb[0].mxu0
        %v2075 = vadd.f32 0.0, %v2074
        %v2076 = vpop.f32.mrb[0].mxu0
        %2077 = vdwg.mxu0
        %v2078 = vmul.f32 %v1917, %v1046
        %v2079 = vmul.f32 %v1919, %v1051
        %2082 = vrot.lane.b32.xlu0 %v2001, 16
        %v2083 = vpop.permute.xlu0 %2082
        %2084 = vrot.lane.b32.xlu0 %v2075, 16
        %v2085 = vpop.permute.xlu0 %2084
        %v2088 = vadd.f32 %v2078, %v2083
        %v2089 = vadd.f32 %v2079, %v2085
        %v2090 = vrcp.pop %v1928
        %v2091 = vmul.f32 %v2088, %v2090
        %v2092 = vrcp.pop %v1929
        %v2093 = vmul.f32 %v2089, %v2092
        %vm2094 = vcmask 195712
        %2095 = vst.msk [vmem:[#allocation2] sm:$0xff] %vm2094, %v2091
        %2096 = vst.msk [vmem:[#allocation2 + $0x10] sm:$0xff] %vm2094, %v2093
        %2097 = vrot.lane.b32.xlu0 %v565, 104
        %v2098 = vpop.permute.xlu0 %2097
        %2099 = vrot.lane.b32.xlu0 %v527, 104
        %v2100 = vpop.permute.xlu0 %2099
        %v2101 = vsel %vm1054, %v2098, 0
        %v2103 = vsel %vm1054, %v2100, 0
        %2105 = vmatprep.subr.mxu0 0.0
        %2106 = vmatpush1.xpose.msra.mxu0 %v2103
        %2107 = vmatprep.subr.mxu0 0.0
        %2108 = vmatpush1.xpose.msra.mxu0 0.0
        %2109 = vmatprep.subr.mxu0 0.0
        %2110 = vmatpush1.xpose.msra.mxu0 0.0
        %2111 = vmatprep.subr.mxu0 0.0
        %2112 = vmatpush1.xpose.msra.mxu0 0.0
        %2113 = vmatprep.subr.mxu0 0.0
        %2114 = vmatpush1.xpose.msra.mxu0 0.0
        %2115 = vmatprep.subr.mxu0 0.0
        %2116 = vmatpush1.xpose.msra.mxu0 0.0
        %2117 = vmatprep.subr.mxu0 0.0
        %2118 = vmatpush1.xpose.msra.mxu0 0.0
        %2119 = vmatprep.subr.mxu0 0.0
        %2120 = vmatpush1.xpose.msra.mxu0 0.0
        %2121 = vmatprep.subr.mxu0 0.0
        %2122 = vmatpush1.xpose.msra.mxu0 0.0
        %2123 = vmatprep.subr.mxu0 0.0
        %2124 = vmatpush1.xpose.msra.mxu0 0.0
        %2125 = vmatprep.subr.mxu0 0.0
        %2126 = vmatpush1.xpose.msra.mxu0 0.0
        %2127 = vmatprep.subr.mxu0 0.0
        %2128 = vmatpush1.xpose.msra.mxu0 0.0
        %2129 = vmatprep.subr.mxu0 0.0
        %2130 = vmatpush1.xpose.msra.mxu0 0.0
        %2131 = vmatprep.subr.mxu0 0.0
        %2132 = vmatpush1.xpose.msra.mxu0 0.0
        %2133 = vmatprep.subr.mxu0 0.0
        %2134 = vmatpush1.xpose.msra.mxu0 0.0
        %2135 = vmatprep.subr.mxu0 0.0
        %2136 = vmatpush1.xpose.msra.mxu0 0.0
        %2137 = vmatprep.subr.mxu0 0.0
        %2138 = vmatpush1.xpose.msra.mxu0 0.0
        %2139 = vmatprep.subr.mxu0 0.0
        %2140 = vmatpush1.xpose.msra.mxu0 0.0
        %2141 = vmatprep.subr.mxu0 0.0
        %2142 = vmatpush1.xpose.msra.mxu0 0.0
        %2143 = vmatprep.subr.mxu0 0.0
        %2144 = vmatpush1.xpose.msra.mxu0 0.0
        %2145 = vmatprep.subr.mxu0 0.0
        %2146 = vmatpush1.xpose.msra.mxu0 0.0
        %2147 = vmatprep.subr.mxu0 0.0
        %2148 = vmatpush1.xpose.msra.mxu0 0.0
        %2149 = vmatprep.subr.mxu0 0.0
        %2150 = vmatpush1.xpose.msra.mxu0 0.0
        %2151 = vmatprep.subr.mxu0 0.0
        %2152 = vmatpush1.xpose.msra.mxu0 0.0
        %2153 = vmatprep.subr.mxu0 0.0
        %2154 = vmatpush1.xpose.msra.mxu0 0.0
        %2155 = vmatprep.subr.mxu0 0.0
        %2156 = vmatpush1.xpose.msra.mxu0 0.0
        %2157 = vmatprep.subr.mxu0 0.0
        %2158 = vmatpush1.xpose.msra.mxu0 0.0
        %2159 = vmatprep.subr.mxu0 0.0
        %2160 = vmatpush1.xpose.msra.mxu0 0.0
        %2161 = vmatprep.subr.mxu0 0.0
        %2162 = vmatpush1.xpose.msra.mxu0 0.0
        %2163 = vmatprep.subr.mxu0 0.0
        %2164 = vmatpush1.xpose.msra.mxu0 0.0
        %2165 = vmatprep.subr.mxu0 0.0
        %2166 = vmatpush1.xpose.msra.mxu0 0.0
        %2167 = vmatprep.subr.mxu0 0.0
        %2168 = vmatpush1.xpose.msra.mxu0 0.0
        %2169 = vmatprep.mubr.f32.mxu0 0.0
        %2170 = vmatmul.mubr.f32.gmra.mrb[0].mxu0 %v2101
        %v2171 = vpop.f32.mrb[0].mxu0
        %v2172 = vadd.f32 0.0, %v2171
        %v2173 = vpop.f32.mrb[0].mxu0
        %2174 = vdwg.mxu0
        %2175 = vrot.lane.b32.xlu0 %v566, 104
        %v2176 = vpop.permute.xlu0 %2175
        %2177 = vrot.lane.b32.xlu0 %v528, 104
        %v2178 = vpop.permute.xlu0 %2177
        %v2179 = vsel %vm1054, %v2176, 0
        %v2181 = vsel %vm1054, %v2178, 0
        %2183 = vmatprep.subr.mxu0 0.0
        %2184 = vmatpush1.xpose.msra.mxu0 %v2181
        %2185 = vmatprep.subr.mxu0 0.0
        %2186 = vmatpush1.xpose.msra.mxu0 0.0
        %2187 = vmatprep.subr.mxu0 0.0
        %2188 = vmatpush1.xpose.msra.mxu0 0.0
        %2189 = vmatprep.subr.mxu0 0.0
        %2190 = vmatpush1.xpose.msra.mxu0 0.0
        %2191 = vmatprep.subr.mxu0 0.0
        %2192 = vmatpush1.xpose.msra.mxu0 0.0
        %2193 = vmatprep.subr.mxu0 0.0
        %2194 = vmatpush1.xpose.msra.mxu0 0.0
        %2195 = vmatprep.subr.mxu0 0.0
        %2196 = vmatpush1.xpose.msra.mxu0 0.0
        %2197 = vmatprep.subr.mxu0 0.0
        %2198 = vmatpush1.xpose.msra.mxu0 0.0
        %2199 = vmatprep.subr.mxu0 0.0
        %2200 = vmatpush1.xpose.msra.mxu0 0.0
        %2201 = vmatprep.subr.mxu0 0.0
        %2202 = vmatpush1.xpose.msra.mxu0 0.0
        %2203 = vmatprep.subr.mxu0 0.0
        %2204 = vmatpush1.xpose.msra.mxu0 0.0
        %2205 = vmatprep.subr.mxu0 0.0
        %2206 = vmatpush1.xpose.msra.mxu0 0.0
        %2207 = vmatprep.subr.mxu0 0.0
        %2208 = vmatpush1.xpose.msra.mxu0 0.0
        %2209 = vmatprep.subr.mxu0 0.0
        %2210 = vmatpush1.xpose.msra.mxu0 0.0
        %2211 = vmatprep.subr.mxu0 0.0
        %2212 = vmatpush1.xpose.msra.mxu0 0.0
        %2213 = vmatprep.subr.mxu0 0.0
        %2214 = vmatpush1.xpose.msra.mxu0 0.0
        %2215 = vmatprep.subr.mxu0 0.0
        %2216 = vmatpush1.xpose.msra.mxu0 0.0
        %2217 = vmatprep.subr.mxu0 0.0
        %2218 = vmatpush1.xpose.msra.mxu0 0.0
        %2219 = vmatprep.subr.mxu0 0.0
        %2220 = vmatpush1.xpose.msra.mxu0 0.0
        %2221 = vmatprep.subr.mxu0 0.0
        %2222 = vmatpush1.xpose.msra.mxu0 0.0
        %2223 = vmatprep.subr.mxu0 0.0
        %2224 = vmatpush1.xpose.msra.mxu0 0.0
        %2225 = vmatprep.subr.mxu0 0.0
        %2226 = vmatpush1.xpose.msra.mxu0 0.0
        %2227 = vmatprep.subr.mxu0 0.0
        %2228 = vmatpush1.xpose.msra.mxu0 0.0
        %2229 = vmatprep.subr.mxu0 0.0
        %2230 = vmatpush1.xpose.msra.mxu0 0.0
        %2231 = vmatprep.subr.mxu0 0.0
        %2232 = vmatpush1.xpose.msra.mxu0 0.0
        %2233 = vmatprep.subr.mxu0 0.0
        %2234 = vmatpush1.xpose.msra.mxu0 0.0
        %2235 = vmatprep.subr.mxu0 0.0
        %2236 = vmatpush1.xpose.msra.mxu0 0.0
        %2237 = vmatprep.subr.mxu0 0.0
        %2238 = vmatpush1.xpose.msra.mxu0 0.0
        %2239 = vmatprep.subr.mxu0 0.0
        %2240 = vmatpush1.xpose.msra.mxu0 0.0
        %2241 = vmatprep.subr.mxu0 0.0
        %2242 = vmatpush1.xpose.msra.mxu0 0.0
        %2243 = vmatprep.subr.mxu0 0.0
        %2244 = vmatpush1.xpose.msra.mxu0 0.0
        %2245 = vmatprep.subr.mxu0 0.0
        %2246 = vmatpush1.xpose.msra.mxu0 0.0
        %2247 = vmatprep.mubr.f32.mxu0 0.0
        %2248 = vmatmul.mubr.f32.gmra.mrb[0].mxu0 %v2179
        %v2249 = vpop.f32.mrb[0].mxu0
        %v2250 = vadd.f32 0.0, %v2249
        %v2251 = vpop.f32.mrb[0].mxu0
        %2252 = vdwg.mxu0
        %v2253 = vsel %vm1054, %v2172, -inf
        %2254 = vmax.xlane.f32.xlu0 %v2253
        %v2255 = vpop.xlane.xlu0 %2254
        %v2256 = vsel %vm1054, %v2250, -inf
        %2257 = vmax.xlane.f32.xlu0 %v2256
        %v2258 = vpop.xlane.xlu0 %2257
        %v2259 = vmax.f32 %v810, %v2255
        %v2260 = vmax.f32 %v813, %v2258
        %v2261 = vsub.f32 %v2172, %v2259
        %v2262 = vsub.f32 %v2250, %v2260
        %v2263 = vmul.f32 %v2261, 1.442695
        %v2264 = vpow.pop %v2263
        %v2265 = vmul.f32 %v2262, 1.442695
        %v2266 = vpow.pop %v2265
        %v2267 = vsub.f32 %v810, %v2259
        %v2268 = vsub.f32 %v813, %v2260
        %v2269 = vmul.f32 %v2267, 1.442695
        %v2270 = vpow.pop %v2269
        %v2271 = vmul.f32 %v2268, 1.442695
        %v2272 = vpow.pop %v2271
        %v2273 = vmul.f32 %v2270, %v830
        %v2274 = vmul.f32 %v2272, %v833
        %v2275 = vsel %vm1054, %v2264, 0.0
        %2276 = vadd.xlane.f32.xlu0 %v2275
        %v2277 = vpop.xlane.xlu0 %2276
        %v2278 = vsel %vm1054, %v2266, 0.0
        %2279 = vadd.xlane.f32.xlu0 %v2278
        %v2280 = vpop.xlane.xlu0 %2279
        %v2281 = vadd.f32 %v2273, %v2277
        %v2282 = vadd.f32 %v2274, %v2280
        %v2285 = vsel %vm1054, %v2264, 0
        %2287 = vmatprep.subr.mxu0 0.0
        %2288 = vmatpush1.msra.mxu0 %v2100
        %2289 = vmatprep.subr.mxu0 0.0
        %2290 = vmatpush1.msra.mxu0 0.0
        %2291 = vmatprep.subr.mxu0 0.0
        %2292 = vmatpush1.msra.mxu0 0.0
        %2293 = vmatprep.subr.mxu0 0.0
        %2294 = vmatpush1.msra.mxu0 0.0
        %2295 = vmatprep.subr.mxu0 0.0
        %2296 = vmatpush1.msra.mxu0 0.0
        %2297 = vmatprep.subr.mxu0 0.0
        %2298 = vmatpush1.msra.mxu0 0.0
        %2299 = vmatprep.subr.mxu0 0.0
        %2300 = vmatpush1.msra.mxu0 0.0
        %2301 = vmatprep.subr.mxu0 0.0
        %2302 = vmatpush1.msra.mxu0 0.0
        %2303 = vmatprep.subr.mxu0 0.0
        %2304 = vmatpush1.msra.mxu0 0.0
        %2305 = vmatprep.subr.mxu0 0.0
        %2306 = vmatpush1.msra.mxu0 0.0
        %2307 = vmatprep.subr.mxu0 0.0
        %2308 = vmatpush1.msra.mxu0 0.0
        %2309 = vmatprep.subr.mxu0 0.0
        %2310 = vmatpush1.msra.mxu0 0.0
        %2311 = vmatprep.subr.mxu0 0.0
        %2312 = vmatpush1.msra.mxu0 0.0
        %2313 = vmatprep.subr.mxu0 0.0
        %2314 = vmatpush1.msra.mxu0 0.0
        %2315 = vmatprep.subr.mxu0 0.0
        %2316 = vmatpush1.msra.mxu0 0.0
        %2317 = vmatprep.subr.mxu0 0.0
        %2318 = vmatpush1.msra.mxu0 0.0
        %2319 = vmatprep.subr.mxu0 0.0
        %2320 = vmatpush1.msra.mxu0 0.0
        %2321 = vmatprep.subr.mxu0 0.0
        %2322 = vmatpush1.msra.mxu0 0.0
        %2323 = vmatprep.subr.mxu0 0.0
        %2324 = vmatpush1.msra.mxu0 0.0
        %2325 = vmatprep.subr.mxu0 0.0
        %2326 = vmatpush1.msra.mxu0 0.0
        %2327 = vmatprep.subr.mxu0 0.0
        %2328 = vmatpush1.msra.mxu0 0.0
        %2329 = vmatprep.subr.mxu0 0.0
        %2330 = vmatpush1.msra.mxu0 0.0
        %2331 = vmatprep.subr.mxu0 0.0
        %2332 = vmatpush1.msra.mxu0 0.0
        %2333 = vmatprep.subr.mxu0 0.0
        %2334 = vmatpush1.msra.mxu0 0.0
        %2335 = vmatprep.subr.mxu0 0.0
        %2336 = vmatpush1.msra.mxu0 0.0
        %2337 = vmatprep.subr.mxu0 0.0
        %2338 = vmatpush1.msra.mxu0 0.0
        %2339 = vmatprep.subr.mxu0 0.0
        %2340 = vmatpush1.msra.mxu0 0.0
        %2341 = vmatprep.subr.mxu0 0.0
        %2342 = vmatpush1.msra.mxu0 0.0
        %2343 = vmatprep.subr.mxu0 0.0
        %2344 = vmatpush1.msra.mxu0 0.0
        %2345 = vmatprep.subr.mxu0 0.0
        %2346 = vmatpush1.msra.mxu0 0.0
        %2347 = vmatprep.subr.mxu0 0.0
        %2348 = vmatpush1.msra.mxu0 0.0
        %2349 = vmatprep.subr.mxu0 0.0
        %2350 = vmatpush1.msra.mxu0 0.0
        %2351 = vmatprep.mubr.f32.mxu0 0.0
        %2352 = vmatmul.mubr.f32.gmra.mrb[0].mxu0 %v2285
        %v2353 = vpop.f32.mrb[0].mxu0
        %v2354 = vadd.f32 0.0, %v2353
        %v2355 = vpop.f32.mrb[0].mxu0
        %2356 = vdwg.mxu0
        %v2359 = vsel %vm1054, %v2266, 0
        %2361 = vmatprep.subr.mxu0 0.0
        %2362 = vmatpush1.msra.mxu0 %v2178
        %2363 = vmatprep.subr.mxu0 0.0
        %2364 = vmatpush1.msra.mxu0 0.0
        %2365 = vmatprep.subr.mxu0 0.0
        %2366 = vmatpush1.msra.mxu0 0.0
        %2367 = vmatprep.subr.mxu0 0.0
        %2368 = vmatpush1.msra.mxu0 0.0
        %2369 = vmatprep.subr.mxu0 0.0
        %2370 = vmatpush1.msra.mxu0 0.0
        %2371 = vmatprep.subr.mxu0 0.0
        %2372 = vmatpush1.msra.mxu0 0.0
        %2373 = vmatprep.subr.mxu0 0.0
        %2374 = vmatpush1.msra.mxu0 0.0
        %2375 = vmatprep.subr.mxu0 0.0
        %2376 = vmatpush1.msra.mxu0 0.0
        %2377 = vmatprep.subr.mxu0 0.0
        %2378 = vmatpush1.msra.mxu0 0.0
        %2379 = vmatprep.subr.mxu0 0.0
        %2380 = vmatpush1.msra.mxu0 0.0
        %2381 = vmatprep.subr.mxu0 0.0
        %2382 = vmatpush1.msra.mxu0 0.0
        %2383 = vmatprep.subr.mxu0 0.0
        %2384 = vmatpush1.msra.mxu0 0.0
        %2385 = vmatprep.subr.mxu0 0.0
        %2386 = vmatpush1.msra.mxu0 0.0
        %2387 = vmatprep.subr.mxu0 0.0
        %2388 = vmatpush1.msra.mxu0 0.0
        %2389 = vmatprep.subr.mxu0 0.0
        %2390 = vmatpush1.msra.mxu0 0.0
        %2391 = vmatprep.subr.mxu0 0.0
        %2392 = vmatpush1.msra.mxu0 0.0
        %2393 = vmatprep.subr.mxu0 0.0
        %2394 = vmatpush1.msra.mxu0 0.0
        %2395 = vmatprep.subr.mxu0 0.0
        %2396 = vmatpush1.msra.mxu0 0.0
        %2397 = vmatprep.subr.mxu0 0.0
        %2398 = vmatpush1.msra.mxu0 0.0
        %2399 = vmatprep.subr.mxu0 0.0
        %2400 = vmatpush1.msra.mxu0 0.0
        %2401 = vmatprep.subr.mxu0 0.0
        %2402 = vmatpush1.msra.mxu0 0.0
        %2403 = vmatprep.subr.mxu0 0.0
        %2404 = vmatpush1.msra.mxu0 0.0
        %2405 = vmatprep.subr.mxu0 0.0
        %2406 = vmatpush1.msra.mxu0 0.0
        %2407 = vmatprep.subr.mxu0 0.0
        %2408 = vmatpush1.msra.mxu0 0.0
        %2409 = vmatprep.subr.mxu0 0.0
        %2410 = vmatpush1.msra.mxu0 0.0
        %2411 = vmatprep.subr.mxu0 0.0
        %2412 = vmatpush1.msra.mxu0 0.0
        %2413 = vmatprep.subr.mxu0 0.0
        %2414 = vmatpush1.msra.mxu0 0.0
        %2415 = vmatprep.subr.mxu0 0.0
        %2416 = vmatpush1.msra.mxu0 0.0
        %2417 = vmatprep.subr.mxu0 0.0
        %2418 = vmatpush1.msra.mxu0 0.0
        %2419 = vmatprep.subr.mxu0 0.0
        %2420 = vmatpush1.msra.mxu0 0.0
        %2421 = vmatprep.subr.mxu0 0.0
        %2422 = vmatpush1.msra.mxu0 0.0
        %2423 = vmatprep.subr.mxu0 0.0
        %2424 = vmatpush1.msra.mxu0 0.0
        %2425 = vmatprep.mubr.f32.mxu0 0.0
        %2426 = vmatmul.mubr.f32.gmra.mrb[0].mxu0 %v2359
        %v2427 = vpop.f32.mrb[0].mxu0
        %v2428 = vadd.f32 0.0, %v2427
        %v2429 = vpop.f32.mrb[0].mxu0
        %2430 = vdwg.mxu0
        %v2431 = vmul.f32 %v2270, %v1046
        %v2432 = vmul.f32 %v2272, %v1051
        %2435 = vrot.lane.b32.xlu0 %v2354, 24
        %v2436 = vpop.permute.xlu0 %2435
        %2437 = vrot.lane.b32.xlu0 %v2428, 24
        %v2438 = vpop.permute.xlu0 %2437
        %v2441 = vadd.f32 %v2431, %v2436
        %v2442 = vadd.f32 %v2432, %v2438
        %v2443 = vrcp.pop %v2281
        %v2444 = vmul.f32 %v2441, %v2443
        %v2445 = vrcp.pop %v2282
        %v2446 = vmul.f32 %v2442, %v2445
        %vm2447 = vcmask 261312
        %2448 = vst.msk [vmem:[#allocation2] sm:$0xff] %vm2447, %v2444
        %2449 = vst.msk [vmem:[#allocation2 + $0x10] sm:$0xff] %vm2447, %v2446
        %2450 = vrot.lane.b32.xlu0 %v565, 96
        %v2451 = vpop.permute.xlu0 %2450
        %2452 = vrot.lane.b32.xlu0 %v527, 96
        %v2453 = vpop.permute.xlu0 %2452
        %v2454 = vsel %vm1054, %v2451, 0
        %v2456 = vsel %vm1054, %v2453, 0
        %2458 = vmatprep.subr.mxu0 0.0
        %2459 = vmatpush1.xpose.msra.mxu0 %v2456
        %2460 = vmatprep.subr.mxu0 0.0
        %2461 = vmatpush1.xpose.msra.mxu0 0.0
        %2462 = vmatprep.subr.mxu0 0.0
        %2463 = vmatpush1.xpose.msra.mxu0 0.0
        %2464 = vmatprep.subr.mxu0 0.0
        %2465 = vmatpush1.xpose.msra.mxu0 0.0
        %2466 = vmatprep.subr.mxu0 0.0
        %2467 = vmatpush1.xpose.msra.mxu0 0.0
        %2468 = vmatprep.subr.mxu0 0.0
        %2469 = vmatpush1.xpose.msra.mxu0 0.0
        %2470 = vmatprep.subr.mxu0 0.0
        %2471 = vmatpush1.xpose.msra.mxu0 0.0
        %2472 = vmatprep.subr.mxu0 0.0
        %2473 = vmatpush1.xpose.msra.mxu0 0.0
        %2474 = vmatprep.subr.mxu0 0.0
        %2475 = vmatpush1.xpose.msra.mxu0 0.0
        %2476 = vmatprep.subr.mxu0 0.0
        %2477 = vmatpush1.xpose.msra.mxu0 0.0
        %2478 = vmatprep.subr.mxu0 0.0
        %2479 = vmatpush1.xpose.msra.mxu0 0.0
        %2480 = vmatprep.subr.mxu0 0.0
        %2481 = vmatpush1.xpose.msra.mxu0 0.0
        %2482 = vmatprep.subr.mxu0 0.0
        %2483 = vmatpush1.xpose.msra.mxu0 0.0
        %2484 = vmatprep.subr.mxu0 0.0
        %2485 = vmatpush1.xpose.msra.mxu0 0.0
        %2486 = vmatprep.subr.mxu0 0.0
        %2487 = vmatpush1.xpose.msra.mxu0 0.0
        %2488 = vmatprep.subr.mxu0 0.0
        %2489 = vmatpush1.xpose.msra.mxu0 0.0
        %2490 = vmatprep.subr.mxu0 0.0
        %2491 = vmatpush1.xpose.msra.mxu0 0.0
        %2492 = vmatprep.subr.mxu0 0.0
        %2493 = vmatpush1.xpose.msra.mxu0 0.0
        %2494 = vmatprep.subr.mxu0 0.0
        %2495 = vmatpush1.xpose.msra.mxu0 0.0
        %2496 = vmatprep.subr.mxu0 0.0
        %2497 = vmatpush1.xpose.msra.mxu0 0.0
        %2498 = vmatprep.subr.mxu0 0.0
        %2499 = vmatpush1.xpose.msra.mxu0 0.0
        %2500 = vmatprep.subr.mxu0 0.0
        %2501 = vmatpush1.xpose.msra.mxu0 0.0
        %2502 = vmatprep.subr.mxu0 0.0
        %2503 = vmatpush1.xpose.msra.mxu0 0.0
        %2504 = vmatprep.subr.mxu0 0.0
        %2505 = vmatpush1.xpose.msra.mxu0 0.0
        %2506 = vmatprep.subr.mxu0 0.0
        %2507 = vmatpush1.xpose.msra.mxu0 0.0
        %2508 = vmatprep.subr.mxu0 0.0
        %2509 = vmatpush1.xpose.msra.mxu0 0.0
        %2510 = vmatprep.subr.mxu0 0.0
        %2511 = vmatpush1.xpose.msra.mxu0 0.0
        %2512 = vmatprep.subr.mxu0 0.0
        %2513 = vmatpush1.xpose.msra.mxu0 0.0
        %2514 = vmatprep.subr.mxu0 0.0
        %2515 = vmatpush1.xpose.msra.mxu0 0.0
        %2516 = vmatprep.subr.mxu0 0.0
        %2517 = vmatpush1.xpose.msra.mxu0 0.0
        %2518 = vmatprep.subr.mxu0 0.0
        %2519 = vmatpush1.xpose.msra.mxu0 0.0
        %2520 = vmatprep.subr.mxu0 0.0
        %2521 = vmatpush1.xpose.msra.mxu0 0.0
        %2522 = vmatprep.mubr.f32.mxu0 0.0
        %2523 = vmatmul.mubr.f32.gmra.mrb[0].mxu0 %v2454
        %v2524 = vpop.f32.mrb[0].mxu0
        %v2525 = vadd.f32 0.0, %v2524
        %v2526 = vpop.f32.mrb[0].mxu0
        %2527 = vdwg.mxu0
        %2528 = vrot.lane.b32.xlu0 %v566, 96
        %v2529 = vpop.permute.xlu0 %2528
        %2530 = vrot.lane.b32.xlu0 %v528, 96
        %v2531 = vpop.permute.xlu0 %2530
        %v2532 = vsel %vm1054, %v2529, 0
        %v2534 = vsel %vm1054, %v2531, 0
        %2536 = vmatprep.subr.mxu0 0.0
        %2537 = vmatpush1.xpose.msra.mxu0 %v2534
        %2538 = vmatprep.subr.mxu0 0.0
        %2539 = vmatpush1.xpose.msra.mxu0 0.0
        %2540 = vmatprep.subr.mxu0 0.0
        %2541 = vmatpush1.xpose.msra.mxu0 0.0
        %2542 = vmatprep.subr.mxu0 0.0
        %2543 = vmatpush1.xpose.msra.mxu0 0.0
        %2544 = vmatprep.subr.mxu0 0.0
        %2545 = vmatpush1.xpose.msra.mxu0 0.0
        %2546 = vmatprep.subr.mxu0 0.0
        %2547 = vmatpush1.xpose.msra.mxu0 0.0
        %2548 = vmatprep.subr.mxu0 0.0
        %2549 = vmatpush1.xpose.msra.mxu0 0.0
        %2550 = vmatprep.subr.mxu0 0.0
        %2551 = vmatpush1.xpose.msra.mxu0 0.0
        %2552 = vmatprep.subr.mxu0 0.0
        %2553 = vmatpush1.xpose.msra.mxu0 0.0
        %2554 = vmatprep.subr.mxu0 0.0
        %2555 = vmatpush1.xpose.msra.mxu0 0.0
        %2556 = vmatprep.subr.mxu0 0.0
        %2557 = vmatpush1.xpose.msra.mxu0 0.0
        %2558 = vmatprep.subr.mxu0 0.0
        %2559 = vmatpush1.xpose.msra.mxu0 0.0
        %2560 = vmatprep.subr.mxu0 0.0
        %2561 = vmatpush1.xpose.msra.mxu0 0.0
        %2562 = vmatprep.subr.mxu0 0.0
        %2563 = vmatpush1.xpose.msra.mxu0 0.0
        %2564 = vmatprep.subr.mxu0 0.0
        %2565 = vmatpush1.xpose.msra.mxu0 0.0
        %2566 = vmatprep.subr.mxu0 0.0
        %2567 = vmatpush1.xpose.msra.mxu0 0.0
        %2568 = vmatprep.subr.mxu0 0.0
        %2569 = vmatpush1.xpose.msra.mxu0 0.0
        %2570 = vmatprep.subr.mxu0 0.0
        %2571 = vmatpush1.xpose.msra.mxu0 0.0
        %2572 = vmatprep.subr.mxu0 0.0
        %2573 = vmatpush1.xpose.msra.mxu0 0.0
        %2574 = vmatprep.subr.mxu0 0.0
        %2575 = vmatpush1.xpose.msra.mxu0 0.0
        %2576 = vmatprep.subr.mxu0 0.0
        %2577 = vmatpush1.xpose.msra.mxu0 0.0
        %2578 = vmatprep.subr.mxu0 0.0
        %2579 = vmatpush1.xpose.msra.mxu0 0.0
        %2580 = vmatprep.subr.mxu0 0.0
        %2581 = vmatpush1.xpose.msra.mxu0 0.0
        %2582 = vmatprep.subr.mxu0 0.0
        %2583 = vmatpush1.xpose.msra.mxu0 0.0
        %2584 = vmatprep.subr.mxu0 0.0
        %2585 = vmatpush1.xpose.msra.mxu0 0.0
        %2586 = vmatprep.subr.mxu0 0.0
        %2587 = vmatpush1.xpose.msra.mxu0 0.0
        %2588 = vmatprep.subr.mxu0 0.0
        %2589 = vmatpush1.xpose.msra.mxu0 0.0
        %2590 = vmatprep.subr.mxu0 0.0
        %2591 = vmatpush1.xpose.msra.mxu0 0.0
        %2592 = vmatprep.subr.mxu0 0.0
        %2593 = vmatpush1.xpose.msra.mxu0 0.0
        %2594 = vmatprep.subr.mxu0 0.0
        %2595 = vmatpush1.xpose.msra.mxu0 0.0
        %2596 = vmatprep.subr.mxu0 0.0
        %2597 = vmatpush1.xpose.msra.mxu0 0.0
        %2598 = vmatprep.subr.mxu0 0.0
        %2599 = vmatpush1.xpose.msra.mxu0 0.0
        %2600 = vmatprep.mubr.f32.mxu0 0.0
        %2601 = vmatmul.mubr.f32.gmra.mrb[0].mxu0 %v2532
        %v2602 = vpop.f32.mrb[0].mxu0
        %v2603 = vadd.f32 0.0, %v2602
        %v2604 = vpop.f32.mrb[0].mxu0
        %2605 = vdwg.mxu0
        %v2606 = vsel %vm1054, %v2525, -inf
        %2607 = vmax.xlane.f32.xlu0 %v2606
        %v2608 = vpop.xlane.xlu0 %2607
        %v2609 = vsel %vm1054, %v2603, -inf
        %2610 = vmax.xlane.f32.xlu0 %v2609
        %v2611 = vpop.xlane.xlu0 %2610
        %v2612 = vmax.f32 %v836, %v2608
        %v2613 = vmax.f32 %v839, %v2611
        %v2614 = vsub.f32 %v2525, %v2612
        %v2615 = vsub.f32 %v2603, %v2613
        %v2616 = vmul.f32 %v2614, 1.442695
        %v2617 = vpow.pop %v2616
        %v2618 = vmul.f32 %v2615, 1.442695
        %v2619 = vpow.pop %v2618
        %v2620 = vsub.f32 %v836, %v2612
        %v2621 = vsub.f32 %v839, %v2613
        %v2622 = vmul.f32 %v2620, 1.442695
        %v2623 = vpow.pop %v2622
        %v2624 = vmul.f32 %v2621, 1.442695
        %v2625 = vpow.pop %v2624
        %v2626 = vmul.f32 %v2623, %v848
        %v2627 = vmul.f32 %v2625, %v851
        %v2628 = vsel %vm1054, %v2617, 0.0
        %2629 = vadd.xlane.f32.xlu0 %v2628
        %v2630 = vpop.xlane.xlu0 %2629
        %v2631 = vsel %vm1054, %v2619, 0.0
        %2632 = vadd.xlane.f32.xlu0 %v2631
        %v2633 = vpop.xlane.xlu0 %2632
        %v2634 = vadd.f32 %v2626, %v2630
        %v2635 = vadd.f32 %v2627, %v2633
        %v2638 = vsel %vm1054, %v2617, 0
        %2640 = vmatprep.subr.mxu0 0.0
        %2641 = vmatpush1.msra.mxu0 %v2453
        %2642 = vmatprep.subr.mxu0 0.0
        %2643 = vmatpush1.msra.mxu0 0.0
        %2644 = vmatprep.subr.mxu0 0.0
        %2645 = vmatpush1.msra.mxu0 0.0
        %2646 = vmatprep.subr.mxu0 0.0
        %2647 = vmatpush1.msra.mxu0 0.0
        %2648 = vmatprep.subr.mxu0 0.0
        %2649 = vmatpush1.msra.mxu0 0.0
        %2650 = vmatprep.subr.mxu0 0.0
        %2651 = vmatpush1.msra.mxu0 0.0
        %2652 = vmatprep.subr.mxu0 0.0
        %2653 = vmatpush1.msra.mxu0 0.0
        %2654 = vmatprep.subr.mxu0 0.0
        %2655 = vmatpush1.msra.mxu0 0.0
        %2656 = vmatprep.subr.mxu0 0.0
        %2657 = vmatpush1.msra.mxu0 0.0
        %2658 = vmatprep.subr.mxu0 0.0
        %2659 = vmatpush1.msra.mxu0 0.0
        %2660 = vmatprep.subr.mxu0 0.0
        %2661 = vmatpush1.msra.mxu0 0.0
        %2662 = vmatprep.subr.mxu0 0.0
        %2663 = vmatpush1.msra.mxu0 0.0
        %2664 = vmatprep.subr.mxu0 0.0
        %2665 = vmatpush1.msra.mxu0 0.0
        %2666 = vmatprep.subr.mxu0 0.0
        %2667 = vmatpush1.msra.mxu0 0.0
        %2668 = vmatprep.subr.mxu0 0.0
        %2669 = vmatpush1.msra.mxu0 0.0
        %2670 = vmatprep.subr.mxu0 0.0
        %2671 = vmatpush1.msra.mxu0 0.0
        %2672 = vmatprep.subr.mxu0 0.0
        %2673 = vmatpush1.msra.mxu0 0.0
        %2674 = vmatprep.subr.mxu0 0.0
        %2675 = vmatpush1.msra.mxu0 0.0
        %2676 = vmatprep.subr.mxu0 0.0
        %2677 = vmatpush1.msra.mxu0 0.0
        %2678 = vmatprep.subr.mxu0 0.0
        %2679 = vmatpush1.msra.mxu0 0.0
        %2680 = vmatprep.subr.mxu0 0.0
        %2681 = vmatpush1.msra.mxu0 0.0
        %2682 = vmatprep.subr.mxu0 0.0
        %2683 = vmatpush1.msra.mxu0 0.0
        %2684 = vmatprep.subr.mxu0 0.0
        %2685 = vmatpush1.msra.mxu0 0.0
        %2686 = vmatprep.subr.mxu0 0.0
        %2687 = vmatpush1.msra.mxu0 0.0
        %2688 = vmatprep.subr.mxu0 0.0
        %2689 = vmatpush1.msra.mxu0 0.0
        %2690 = vmatprep.subr.mxu0 0.0
        %2691 = vmatpush1.msra.mxu0 0.0
        %2692 = vmatprep.subr.mxu0 0.0
        %2693 = vmatpush1.msra.mxu0 0.0
        %2694 = vmatprep.subr.mxu0 0.0
        %2695 = vmatpush1.msra.mxu0 0.0
        %2696 = vmatprep.subr.mxu0 0.0
        %2697 = vmatpush1.msra.mxu0 0.0
        %2698 = vmatprep.subr.mxu0 0.0
        %2699 = vmatpush1.msra.mxu0 0.0
        %2700 = vmatprep.subr.mxu0 0.0
        %2701 = vmatpush1.msra.mxu0 0.0
        %2702 = vmatprep.subr.mxu0 0.0
        %2703 = vmatpush1.msra.mxu0 0.0
        %2704 = vmatprep.mubr.f32.mxu0 0.0
        %2705 = vmatmul.mubr.f32.gmra.mrb[0].mxu0 %v2638
        %v2706 = vpop.f32.mrb[0].mxu0
        %v2707 = vadd.f32 0.0, %v2706
        %v2708 = vpop.f32.mrb[0].mxu0
        %2709 = vdwg.mxu0
        %v2712 = vsel %vm1054, %v2619, 0
        %2714 = vmatprep.subr.mxu0 0.0
        %2715 = vmatpush1.msra.mxu0 %v2531
        %2716 = vmatprep.subr.mxu0 0.0
        %2717 = vmatpush1.msra.mxu0 0.0
        %2718 = vmatprep.subr.mxu0 0.0
        %2719 = vmatpush1.msra.mxu0 0.0
        %2720 = vmatprep.subr.mxu0 0.0
        %2721 = vmatpush1.msra.mxu0 0.0
        %2722 = vmatprep.subr.mxu0 0.0
        %2723 = vmatpush1.msra.mxu0 0.0
        %2724 = vmatprep.subr.mxu0 0.0
        %2725 = vmatpush1.msra.mxu0 0.0
        %2726 = vmatprep.subr.mxu0 0.0
        %2727 = vmatpush1.msra.mxu0 0.0
        %2728 = vmatprep.subr.mxu0 0.0
        %2729 = vmatpush1.msra.mxu0 0.0
        %2730 = vmatprep.subr.mxu0 0.0
        %2731 = vmatpush1.msra.mxu0 0.0
        %2732 = vmatprep.subr.mxu0 0.0
        %2733 = vmatpush1.msra.mxu0 0.0
        %2734 = vmatprep.subr.mxu0 0.0
        %2735 = vmatpush1.msra.mxu0 0.0
        %2736 = vmatprep.subr.mxu0 0.0
        %2737 = vmatpush1.msra.mxu0 0.0
        %2738 = vmatprep.subr.mxu0 0.0
        %2739 = vmatpush1.msra.mxu0 0.0
        %2740 = vmatprep.subr.mxu0 0.0
        %2741 = vmatpush1.msra.mxu0 0.0
        %2742 = vmatprep.subr.mxu0 0.0
        %2743 = vmatpush1.msra.mxu0 0.0
        %2744 = vmatprep.subr.mxu0 0.0
        %2745 = vmatpush1.msra.mxu0 0.0
        %2746 = vmatprep.subr.mxu0 0.0
        %2747 = vmatpush1.msra.mxu0 0.0
        %2748 = vmatprep.subr.mxu0 0.0
        %2749 = vmatpush1.msra.mxu0 0.0
        %2750 = vmatprep.subr.mxu0 0.0
        %2751 = vmatpush1.msra.mxu0 0.0
        %2752 = vmatprep.subr.mxu0 0.0
        %2753 = vmatpush1.msra.mxu0 0.0
        %2754 = vmatprep.subr.mxu0 0.0
        %2755 = vmatpush1.msra.mxu0 0.0
        %2756 = vmatprep.subr.mxu0 0.0
        %2757 = vmatpush1.msra.mxu0 0.0
        %2758 = vmatprep.subr.mxu0 0.0
        %2759 = vmatpush1.msra.mxu0 0.0
        %2760 = vmatprep.subr.mxu0 0.0
        %2761 = vmatpush1.msra.mxu0 0.0
        %2762 = vmatprep.subr.mxu0 0.0
        %2763 = vmatpush1.msra.mxu0 0.0
        %2764 = vmatprep.subr.mxu0 0.0
        %2765 = vmatpush1.msra.mxu0 0.0
        %2766 = vmatprep.subr.mxu0 0.0
        %2767 = vmatpush1.msra.mxu0 0.0
        %2768 = vmatprep.subr.mxu0 0.0
        %2769 = vmatpush1.msra.mxu0 0.0
        %2770 = vmatprep.subr.mxu0 0.0
        %2771 = vmatpush1.msra.mxu0 0.0
        %2772 = vmatprep.subr.mxu0 0.0
        %2773 = vmatpush1.msra.mxu0 0.0
        %2774 = vmatprep.subr.mxu0 0.0
        %2775 = vmatpush1.msra.mxu0 0.0
        %2776 = vmatprep.subr.mxu0 0.0
        %2777 = vmatpush1.msra.mxu0 0.0
        %2778 = vmatprep.mubr.f32.mxu0 0.0
        %2779 = vmatmul.mubr.f32.gmra.mrb[0].mxu0 %v2712
        %v2780 = vpop.f32.mrb[0].mxu0
        %v2781 = vadd.f32 0.0, %v2780
        %v2782 = vpop.f32.mrb[0].mxu0
        %2783 = vdwg.mxu0
        %v2784 = vmul.f32 %v2623, %v1046
        %v2785 = vmul.f32 %v2625, %v1051
        %2788 = vrot.lane.b32.xlu0 %v2707, 32
        %v2789 = vpop.permute.xlu0 %2788
        %2790 = vrot.lane.b32.xlu0 %v2781, 32
        %v2791 = vpop.permute.xlu0 %2790
        %v2794 = vadd.f32 %v2784, %v2789
        %v2795 = vadd.f32 %v2785, %v2791
        %v2796 = vrcp.pop %v2634
        %v2797 = vmul.f32 %v2794, %v2796
        %v2798 = vrcp.pop %v2635
        %v2799 = vmul.f32 %v2795, %v2798
        %vm2800 = vcmask 326912
        %2801 = vst.msk [vmem:[#allocation2] sm:$0xff] %vm2800, %v2797
        %2802 = vst.msk [vmem:[#allocation2 + $0x10] sm:$0xff] %vm2800, %v2799
        %v2804 = vsel %vm1054, %v529, 0
        %2806 = vmatprep.subr.mxu0 0.0
        %2807 = vmatpush1.xpose.msra.mxu0 %v2804
        %2808 = vmatprep.subr.mxu0 0.0
        %2809 = vmatpush1.xpose.msra.mxu0 0.0
        %2810 = vmatprep.subr.mxu0 0.0
        %2811 = vmatpush1.xpose.msra.mxu0 0.0
        %2812 = vmatprep.subr.mxu0 0.0
        %2813 = vmatpush1.xpose.msra.mxu0 0.0
        %2814 = vmatprep.subr.mxu0 0.0
        %2815 = vmatpush1.xpose.msra.mxu0 0.0
        %2816 = vmatprep.subr.mxu0 0.0
        %2817 = vmatpush1.xpose.msra.mxu0 0.0
        %2818 = vmatprep.subr.mxu0 0.0
        %2819 = vmatpush1.xpose.msra.mxu0 0.0
        %2820 = vmatprep.subr.mxu0 0.0
        %2821 = vmatpush1.xpose.msra.mxu0 0.0
        %2822 = vmatprep.subr.mxu0 0.0
        %2823 = vmatpush1.xpose.msra.mxu0 0.0
        %2824 = vmatprep.subr.mxu0 0.0
        %2825 = vmatpush1.xpose.msra.mxu0 0.0
        %2826 = vmatprep.subr.mxu0 0.0
        %2827 = vmatpush1.xpose.msra.mxu0 0.0
        %2828 = vmatprep.subr.mxu0 0.0
        %2829 = vmatpush1.xpose.msra.mxu0 0.0
        %2830 = vmatprep.subr.mxu0 0.0
        %2831 = vmatpush1.xpose.msra.mxu0 0.0
        %2832 = vmatprep.subr.mxu0 0.0
        %2833 = vmatpush1.xpose.msra.mxu0 0.0
        %2834 = vmatprep.subr.mxu0 0.0
        %2835 = vmatpush1.xpose.msra.mxu0 0.0
        %2836 = vmatprep.subr.mxu0 0.0
        %2837 = vmatpush1.xpose.msra.mxu0 0.0
        %2838 = vmatprep.subr.mxu0 0.0
        %2839 = vmatpush1.xpose.msra.mxu0 0.0
        %2840 = vmatprep.subr.mxu0 0.0
        %2841 = vmatpush1.xpose.msra.mxu0 0.0
        %2842 = vmatprep.subr.mxu0 0.0
        %2843 = vmatpush1.xpose.msra.mxu0 0.0
        %2844 = vmatprep.subr.mxu0 0.0
        %2845 = vmatpush1.xpose.msra.mxu0 0.0
        %2846 = vmatprep.subr.mxu0 0.0
        %2847 = vmatpush1.xpose.msra.mxu0 0.0
        %2848 = vmatprep.subr.mxu0 0.0
        %2849 = vmatpush1.xpose.msra.mxu0 0.0
        %2850 = vmatprep.subr.mxu0 0.0
        %2851 = vmatpush1.xpose.msra.mxu0 0.0
        %2852 = vmatprep.subr.mxu0 0.0
        %2853 = vmatpush1.xpose.msra.mxu0 0.0
        %2854 = vmatprep.subr.mxu0 0.0
        %2855 = vmatpush1.xpose.msra.mxu0 0.0
        %2856 = vmatprep.subr.mxu0 0.0
        %2857 = vmatpush1.xpose.msra.mxu0 0.0
        %2858 = vmatprep.subr.mxu0 0.0
        %2859 = vmatpush1.xpose.msra.mxu0 0.0
        %2860 = vmatprep.subr.mxu0 0.0
        %2861 = vmatpush1.xpose.msra.mxu0 0.0
        %2862 = vmatprep.subr.mxu0 0.0
        %2863 = vmatpush1.xpose.msra.mxu0 0.0
        %2864 = vmatprep.subr.mxu0 0.0
        %2865 = vmatpush1.xpose.msra.mxu0 0.0
        %2866 = vmatprep.subr.mxu0 0.0
        %2867 = vmatpush1.xpose.msra.mxu0 0.0
        %2868 = vmatprep.subr.mxu0 0.0
        %2869 = vmatpush1.xpose.msra.mxu0 0.0
        %2870 = vmatprep.mubr.f32.mxu0 0.0
        %2871 = vmatmul.mubr.f32.gmra.mrb[0].mxu0 %v1055
        %v2872 = vpop.f32.mrb[0].mxu0
        %v2873 = vadd.f32 0.0, %v2872
        %v2874 = vpop.f32.mrb[0].mxu0
        %2875 = vdwg.mxu0
        %v2877 = vsel %vm1054, %v530, 0
        %2879 = vmatprep.subr.mxu0 0.0
        %2880 = vmatpush1.xpose.msra.mxu0 %v2877
        %2881 = vmatprep.subr.mxu0 0.0
        %2882 = vmatpush1.xpose.msra.mxu0 0.0
        %2883 = vmatprep.subr.mxu0 0.0
        %2884 = vmatpush1.xpose.msra.mxu0 0.0
        %2885 = vmatprep.subr.mxu0 0.0
        %2886 = vmatpush1.xpose.msra.mxu0 0.0
        %2887 = vmatprep.subr.mxu0 0.0
        %2888 = vmatpush1.xpose.msra.mxu0 0.0
        %2889 = vmatprep.subr.mxu0 0.0
        %2890 = vmatpush1.xpose.msra.mxu0 0.0
        %2891 = vmatprep.subr.mxu0 0.0
        %2892 = vmatpush1.xpose.msra.mxu0 0.0
        %2893 = vmatprep.subr.mxu0 0.0
        %2894 = vmatpush1.xpose.msra.mxu0 0.0
        %2895 = vmatprep.subr.mxu0 0.0
        %2896 = vmatpush1.xpose.msra.mxu0 0.0
        %2897 = vmatprep.subr.mxu0 0.0
        %2898 = vmatpush1.xpose.msra.mxu0 0.0
        %2899 = vmatprep.subr.mxu0 0.0
        %2900 = vmatpush1.xpose.msra.mxu0 0.0
        %2901 = vmatprep.subr.mxu0 0.0
        %2902 = vmatpush1.xpose.msra.mxu0 0.0
        %2903 = vmatprep.subr.mxu0 0.0
        %2904 = vmatpush1.xpose.msra.mxu0 0.0
        %2905 = vmatprep.subr.mxu0 0.0
        %2906 = vmatpush1.xpose.msra.mxu0 0.0
        %2907 = vmatprep.subr.mxu0 0.0
        %2908 = vmatpush1.xpose.msra.mxu0 0.0
        %2909 = vmatprep.subr.mxu0 0.0
        %2910 = vmatpush1.xpose.msra.mxu0 0.0
        %2911 = vmatprep.subr.mxu0 0.0
        %2912 = vmatpush1.xpose.msra.mxu0 0.0
        %2913 = vmatprep.subr.mxu0 0.0
        %2914 = vmatpush1.xpose.msra.mxu0 0.0
        %2915 = vmatprep.subr.mxu0 0.0
        %2916 = vmatpush1.xpose.msra.mxu0 0.0
        %2917 = vmatprep.subr.mxu0 0.0
        %2918 = vmatpush1.xpose.msra.mxu0 0.0
        %2919 = vmatprep.subr.mxu0 0.0
        %2920 = vmatpush1.xpose.msra.mxu0 0.0
        %2921 = vmatprep.subr.mxu0 0.0
        %2922 = vmatpush1.xpose.msra.mxu0 0.0
        %2923 = vmatprep.subr.mxu0 0.0
        %2924 = vmatpush1.xpose.msra.mxu0 0.0
        %2925 = vmatprep.subr.mxu0 0.0
        %2926 = vmatpush1.xpose.msra.mxu0 0.0
        %2927 = vmatprep.subr.mxu0 0.0
        %2928 = vmatpush1.xpose.msra.mxu0 0.0
        %2929 = vmatprep.subr.mxu0 0.0
        %2930 = vmatpush1.xpose.msra.mxu0 0.0
        %2931 = vmatprep.subr.mxu0 0.0
        %2932 = vmatpush1.xpose.msra.mxu0 0.0
        %2933 = vmatprep.subr.mxu0 0.0
        %2934 = vmatpush1.xpose.msra.mxu0 0.0
        %2935 = vmatprep.subr.mxu0 0.0
        %2936 = vmatpush1.xpose.msra.mxu0 0.0
        %2937 = vmatprep.subr.mxu0 0.0
        %2938 = vmatpush1.xpose.msra.mxu0 0.0
        %2939 = vmatprep.subr.mxu0 0.0
        %2940 = vmatpush1.xpose.msra.mxu0 0.0
        %2941 = vmatprep.subr.mxu0 0.0
        %2942 = vmatpush1.xpose.msra.mxu0 0.0
        %2943 = vmatprep.mubr.f32.mxu0 0.0
        %2944 = vmatmul.mubr.f32.gmra.mrb[0].mxu0 %v1130
        %v2945 = vpop.f32.mrb[0].mxu0
        %v2946 = vadd.f32 0.0, %v2945
        %v2947 = vpop.f32.mrb[0].mxu0
        %2948 = vdwg.mxu0
        %v2949 = vsel %vm1054, %v2873, -inf
        %2950 = vmax.xlane.f32.xlu0 %v2949
        %v2951 = vpop.xlane.xlu0 %2950
        %v2952 = vsel %vm1054, %v2946, -inf
        %2953 = vmax.xlane.f32.xlu0 %v2952
        %v2954 = vpop.xlane.xlu0 %2953
        %v2955 = vmax.f32 %v747, %v2951
        %v2956 = vmax.f32 %v750, %v2954
        %v2957 = vsub.f32 %v2873, %v2955
        %v2958 = vsub.f32 %v2946, %v2956
        %v2959 = vmul.f32 %v2957, 1.442695
        %v2960 = vpow.pop %v2959
        %v2961 = vmul.f32 %v2958, 1.442695
        %v2962 = vpow.pop %v2961
        %v2963 = vsub.f32 %v747, %v2955
        %v2964 = vsub.f32 %v750, %v2956
        %v2965 = vmul.f32 %v2963, 1.442695
        %v2966 = vpow.pop %v2965
        %v2967 = vmul.f32 %v2964, 1.442695
        %v2968 = vpow.pop %v2967
        %v2969 = vmul.f32 %v2966, %v759
        %v2970 = vmul.f32 %v2968, %v762
        %v2971 = vsel %vm1054, %v2960, 0.0
        %2972 = vadd.xlane.f32.xlu0 %v2971
        %v2973 = vpop.xlane.xlu0 %2972
        %v2974 = vsel %vm1054, %v2962, 0.0
        %2975 = vadd.xlane.f32.xlu0 %v2974
        %v2976 = vpop.xlane.xlu0 %2975
        %v2977 = vadd.f32 %v2969, %v2973
        %v2978 = vadd.f32 %v2970, %v2976
        %v2980 = vsel %vm1054, %v2960, 0
        %2982 = vmatprep.subr.mxu0 0.0
        %2983 = vmatpush1.msra.mxu0 %v529
        %2984 = vmatprep.subr.mxu0 0.0
        %2985 = vmatpush1.msra.mxu0 0.0
        %2986 = vmatprep.subr.mxu0 0.0
        %2987 = vmatpush1.msra.mxu0 0.0
        %2988 = vmatprep.subr.mxu0 0.0
        %2989 = vmatpush1.msra.mxu0 0.0
        %2990 = vmatprep.subr.mxu0 0.0
        %2991 = vmatpush1.msra.mxu0 0.0
        %2992 = vmatprep.subr.mxu0 0.0
        %2993 = vmatpush1.msra.mxu0 0.0
        %2994 = vmatprep.subr.mxu0 0.0
        %2995 = vmatpush1.msra.mxu0 0.0
        %2996 = vmatprep.subr.mxu0 0.0
        %2997 = vmatpush1.msra.mxu0 0.0
        %2998 = vmatprep.subr.mxu0 0.0
        %2999 = vmatpush1.msra.mxu0 0.0
        %3000 = vmatprep.subr.mxu0 0.0
        %3001 = vmatpush1.msra.mxu0 0.0
        %3002 = vmatprep.subr.mxu0 0.0
        %3003 = vmatpush1.msra.mxu0 0.0
        %3004 = vmatprep.subr.mxu0 0.0
        %3005 = vmatpush1.msra.mxu0 0.0
        %3006 = vmatprep.subr.mxu0 0.0
        %3007 = vmatpush1.msra.mxu0 0.0
        %3008 = vmatprep.subr.mxu0 0.0
        %3009 = vmatpush1.msra.mxu0 0.0
        %3010 = vmatprep.subr.mxu0 0.0
        %3011 = vmatpush1.msra.mxu0 0.0
        %3012 = vmatprep.subr.mxu0 0.0
        %3013 = vmatpush1.msra.mxu0 0.0
        %3014 = vmatprep.subr.mxu0 0.0
        %3015 = vmatpush1.msra.mxu0 0.0
        %3016 = vmatprep.subr.mxu0 0.0
        %3017 = vmatpush1.msra.mxu0 0.0
        %3018 = vmatprep.subr.mxu0 0.0
        %3019 = vmatpush1.msra.mxu0 0.0
        %3020 = vmatprep.subr.mxu0 0.0
        %3021 = vmatpush1.msra.mxu0 0.0
        %3022 = vmatprep.subr.mxu0 0.0
        %3023 = vmatpush1.msra.mxu0 0.0
        %3024 = vmatprep.subr.mxu0 0.0
        %3025 = vmatpush1.msra.mxu0 0.0
        %3026 = vmatprep.subr.mxu0 0.0
        %3027 = vmatpush1.msra.mxu0 0.0
        %3028 = vmatprep.subr.mxu0 0.0
        %3029 = vmatpush1.msra.mxu0 0.0
        %3030 = vmatprep.subr.mxu0 0.0
        %3031 = vmatpush1.msra.mxu0 0.0
        %3032 = vmatprep.subr.mxu0 0.0
        %3033 = vmatpush1.msra.mxu0 0.0
        %3034 = vmatprep.subr.mxu0 0.0
        %3035 = vmatpush1.msra.mxu0 0.0
        %3036 = vmatprep.subr.mxu0 0.0
        %3037 = vmatpush1.msra.mxu0 0.0
        %3038 = vmatprep.subr.mxu0 0.0
        %3039 = vmatpush1.msra.mxu0 0.0
        %3040 = vmatprep.subr.mxu0 0.0
        %3041 = vmatpush1.msra.mxu0 0.0
        %3042 = vmatprep.subr.mxu0 0.0
        %3043 = vmatpush1.msra.mxu0 0.0
        %3044 = vmatprep.subr.mxu0 0.0
        %3045 = vmatpush1.msra.mxu0 0.0
        %3046 = vmatprep.mubr.f32.mxu0 0.0
        %3047 = vmatmul.mubr.f32.gmra.mrb[0].mxu0 %v2980
        %v3048 = vpop.f32.mrb[0].mxu0
        %v3049 = vadd.f32 0.0, %v3048
        %v3050 = vpop.f32.mrb[0].mxu0
        %3051 = vdwg.mxu0
        %v3053 = vsel %vm1054, %v2962, 0
        %3055 = vmatprep.subr.mxu0 0.0
        %3056 = vmatpush1.msra.mxu0 %v530
        %3057 = vmatprep.subr.mxu0 0.0
        %3058 = vmatpush1.msra.mxu0 0.0
        %3059 = vmatprep.subr.mxu0 0.0
        %3060 = vmatpush1.msra.mxu0 0.0
        %3061 = vmatprep.subr.mxu0 0.0
        %3062 = vmatpush1.msra.mxu0 0.0
        %3063 = vmatprep.subr.mxu0 0.0
        %3064 = vmatpush1.msra.mxu0 0.0
        %3065 = vmatprep.subr.mxu0 0.0
        %3066 = vmatpush1.msra.mxu0 0.0
        %3067 = vmatprep.subr.mxu0 0.0
        %3068 = vmatpush1.msra.mxu0 0.0
        %3069 = vmatprep.subr.mxu0 0.0
        %3070 = vmatpush1.msra.mxu0 0.0
        %3071 = vmatprep.subr.mxu0 0.0
        %3072 = vmatpush1.msra.mxu0 0.0
        %3073 = vmatprep.subr.mxu0 0.0
        %3074 = vmatpush1.msra.mxu0 0.0
        %3075 = vmatprep.subr.mxu0 0.0
        %3076 = vmatpush1.msra.mxu0 0.0
        %3077 = vmatprep.subr.mxu0 0.0
        %3078 = vmatpush1.msra.mxu0 0.0
        %3079 = vmatprep.subr.mxu0 0.0
        %3080 = vmatpush1.msra.mxu0 0.0
        %3081 = vmatprep.subr.mxu0 0.0
        %3082 = vmatpush1.msra.mxu0 0.0
        %3083 = vmatprep.subr.mxu0 0.0
        %3084 = vmatpush1.msra.mxu0 0.0
        %3085 = vmatprep.subr.mxu0 0.0
        %3086 = vmatpush1.msra.mxu0 0.0
        %3087 = vmatprep.subr.mxu0 0.0
        %3088 = vmatpush1.msra.mxu0 0.0
        %3089 = vmatprep.subr.mxu0 0.0
        %3090 = vmatpush1.msra.mxu0 0.0
        %3091 = vmatprep.subr.mxu0 0.0
        %3092 = vmatpush1.msra.mxu0 0.0
        %3093 = vmatprep.subr.mxu0 0.0
        %3094 = vmatpush1.msra.mxu0 0.0
        %3095 = vmatprep.subr.mxu0 0.0
        %3096 = vmatpush1.msra.mxu0 0.0
        %3097 = vmatprep.subr.mxu0 0.0
        %3098 = vmatpush1.msra.mxu0 0.0
        %3099 = vmatprep.subr.mxu0 0.0
        %3100 = vmatpush1.msra.mxu0 0.0
        %3101 = vmatprep.subr.mxu0 0.0
        %3102 = vmatpush1.msra.mxu0 0.0
        %3103 = vmatprep.subr.mxu0 0.0
        %3104 = vmatpush1.msra.mxu0 0.0
        %3105 = vmatprep.subr.mxu0 0.0
        %3106 = vmatpush1.msra.mxu0 0.0
        %3107 = vmatprep.subr.mxu0 0.0
        %3108 = vmatpush1.msra.mxu0 0.0
        %3109 = vmatprep.subr.mxu0 0.0
        %3110 = vmatpush1.msra.mxu0 0.0
        %3111 = vmatprep.subr.mxu0 0.0
        %3112 = vmatpush1.msra.mxu0 0.0
        %3113 = vmatprep.subr.mxu0 0.0
        %3114 = vmatpush1.msra.mxu0 0.0
        %3115 = vmatprep.subr.mxu0 0.0
        %3116 = vmatpush1.msra.mxu0 0.0
        %3117 = vmatprep.subr.mxu0 0.0
        %3118 = vmatpush1.msra.mxu0 0.0
        %3119 = vmatprep.mubr.f32.mxu0 0.0
        %3120 = vmatmul.mubr.f32.gmra.mrb[0].mxu0 %v3053
        %v3121 = vpop.f32.mrb[0].mxu0
        %v3122 = vadd.f32 0.0, %v3121
        %v3123 = vpop.f32.mrb[0].mxu0
        %3124 = vdwg.mxu0
        %v3125 = vmul.f32 %v2966, %v1046
        %v3126 = vmul.f32 %v2968, %v1051
        %v3127 = vadd.f32 %v3125, %v3049
        %v3128 = vadd.f32 %v3126, %v3122
        %v3129 = vrcp.pop %v2977
        %v3130 = vmul.f32 %v3127, %v3129
        %v3131 = vrcp.pop %v2978
        %v3132 = vmul.f32 %v3128, %v3131
        %3135 = vrot.lane.b32.xlu0 %v3130, 40
        %v3136 = vpop.permute.xlu0 %3135
        %3137 = vrot.lane.b32.xlu0 %v3132, 40
        %v3138 = vpop.permute.xlu0 %3137
        %vm3141 = vcmask 392512
        %3142 = vst.msk [vmem:[#allocation2] sm:$0xff] %vm3141, %v3136
        %3143 = vst.msk [vmem:[#allocation2 + $0x10] sm:$0xff] %vm3141, %v3138
        %3144 = vrot.lane.b32.xlu0 %v529, 120
        %v3145 = vpop.permute.xlu0 %3144
        %v3146 = vsel %vm1054, %v3145, 0
        %3148 = vmatprep.subr.mxu0 0.0
        %3149 = vmatpush1.xpose.msra.mxu0 %v3146
        %3150 = vmatprep.subr.mxu0 0.0
        %3151 = vmatpush1.xpose.msra.mxu0 0.0
        %3152 = vmatprep.subr.mxu0 0.0
        %3153 = vmatpush1.xpose.msra.mxu0 0.0
        %3154 = vmatprep.subr.mxu0 0.0
        %3155 = vmatpush1.xpose.msra.mxu0 0.0
        %3156 = vmatprep.subr.mxu0 0.0
        %3157 = vmatpush1.xpose.msra.mxu0 0.0
        %3158 = vmatprep.subr.mxu0 0.0
        %3159 = vmatpush1.xpose.msra.mxu0 0.0
        %3160 = vmatprep.subr.mxu0 0.0
        %3161 = vmatpush1.xpose.msra.mxu0 0.0
        %3162 = vmatprep.subr.mxu0 0.0
        %3163 = vmatpush1.xpose.msra.mxu0 0.0
        %3164 = vmatprep.subr.mxu0 0.0
        %3165 = vmatpush1.xpose.msra.mxu0 0.0
        %3166 = vmatprep.subr.mxu0 0.0
        %3167 = vmatpush1.xpose.msra.mxu0 0.0
        %3168 = vmatprep.subr.mxu0 0.0
        %3169 = vmatpush1.xpose.msra.mxu0 0.0
        %3170 = vmatprep.subr.mxu0 0.0
        %3171 = vmatpush1.xpose.msra.mxu0 0.0
        %3172 = vmatprep.subr.mxu0 0.0
        %3173 = vmatpush1.xpose.msra.mxu0 0.0
        %3174 = vmatprep.subr.mxu0 0.0
        %3175 = vmatpush1.xpose.msra.mxu0 0.0
        %3176 = vmatprep.subr.mxu0 0.0
        %3177 = vmatpush1.xpose.msra.mxu0 0.0
        %3178 = vmatprep.subr.mxu0 0.0
        %3179 = vmatpush1.xpose.msra.mxu0 0.0
        %3180 = vmatprep.subr.mxu0 0.0
        %3181 = vmatpush1.xpose.msra.mxu0 0.0
        %3182 = vmatprep.subr.mxu0 0.0
        %3183 = vmatpush1.xpose.msra.mxu0 0.0
        %3184 = vmatprep.subr.mxu0 0.0
        %3185 = vmatpush1.xpose.msra.mxu0 0.0
        %3186 = vmatprep.subr.mxu0 0.0
        %3187 = vmatpush1.xpose.msra.mxu0 0.0
        %3188 = vmatprep.subr.mxu0 0.0
        %3189 = vmatpush1.xpose.msra.mxu0 0.0
        %3190 = vmatprep.subr.mxu0 0.0
        %3191 = vmatpush1.xpose.msra.mxu0 0.0
        %3192 = vmatprep.subr.mxu0 0.0
        %3193 = vmatpush1.xpose.msra.mxu0 0.0
        %3194 = vmatprep.subr.mxu0 0.0
        %3195 = vmatpush1.xpose.msra.mxu0 0.0
        %3196 = vmatprep.subr.mxu0 0.0
        %3197 = vmatpush1.xpose.msra.mxu0 0.0
        %3198 = vmatprep.subr.mxu0 0.0
        %3199 = vmatpush1.xpose.msra.mxu0 0.0
        %3200 = vmatprep.subr.mxu0 0.0
        %3201 = vmatpush1.xpose.msra.mxu0 0.0
        %3202 = vmatprep.subr.mxu0 0.0
        %3203 = vmatpush1.xpose.msra.mxu0 0.0
        %3204 = vmatprep.subr.mxu0 0.0
        %3205 = vmatpush1.xpose.msra.mxu0 0.0
        %3206 = vmatprep.subr.mxu0 0.0
        %3207 = vmatpush1.xpose.msra.mxu0 0.0
        %3208 = vmatprep.subr.mxu0 0.0
        %3209 = vmatpush1.xpose.msra.mxu0 0.0
        %3210 = vmatprep.subr.mxu0 0.0
        %3211 = vmatpush1.xpose.msra.mxu0 0.0
        %3212 = vmatprep.mubr.f32.mxu0 0.0
        %3213 = vmatmul.mubr.f32.gmra.mrb[0].mxu0 %v1395
        %v3214 = vpop.f32.mrb[0].mxu0
        %v3215 = vadd.f32 0.0, %v3214
        %v3216 = vpop.f32.mrb[0].mxu0
        %3217 = vdwg.mxu0
        %3218 = vrot.lane.b32.xlu0 %v530, 120
        %v3219 = vpop.permute.xlu0 %3218
        %v3220 = vsel %vm1054, %v3219, 0
        %3222 = vmatprep.subr.mxu0 0.0
        %3223 = vmatpush1.xpose.msra.mxu0 %v3220
        %3224 = vmatprep.subr.mxu0 0.0
        %3225 = vmatpush1.xpose.msra.mxu0 0.0
        %3226 = vmatprep.subr.mxu0 0.0
        %3227 = vmatpush1.xpose.msra.mxu0 0.0
        %3228 = vmatprep.subr.mxu0 0.0
        %3229 = vmatpush1.xpose.msra.mxu0 0.0
        %3230 = vmatprep.subr.mxu0 0.0
        %3231 = vmatpush1.xpose.msra.mxu0 0.0
        %3232 = vmatprep.subr.mxu0 0.0
        %3233 = vmatpush1.xpose.msra.mxu0 0.0
        %3234 = vmatprep.subr.mxu0 0.0
        %3235 = vmatpush1.xpose.msra.mxu0 0.0
        %3236 = vmatprep.subr.mxu0 0.0
        %3237 = vmatpush1.xpose.msra.mxu0 0.0
        %3238 = vmatprep.subr.mxu0 0.0
        %3239 = vmatpush1.xpose.msra.mxu0 0.0
        %3240 = vmatprep.subr.mxu0 0.0
        %3241 = vmatpush1.xpose.msra.mxu0 0.0
        %3242 = vmatprep.subr.mxu0 0.0
        %3243 = vmatpush1.xpose.msra.mxu0 0.0
        %3244 = vmatprep.subr.mxu0 0.0
        %3245 = vmatpush1.xpose.msra.mxu0 0.0
        %3246 = vmatprep.subr.mxu0 0.0
        %3247 = vmatpush1.xpose.msra.mxu0 0.0
        %3248 = vmatprep.subr.mxu0 0.0
        %3249 = vmatpush1.xpose.msra.mxu0 0.0
        %3250 = vmatprep.subr.mxu0 0.0
        %3251 = vmatpush1.xpose.msra.mxu0 0.0
        %3252 = vmatprep.subr.mxu0 0.0
        %3253 = vmatpush1.xpose.msra.mxu0 0.0
        %3254 = vmatprep.subr.mxu0 0.0
        %3255 = vmatpush1.xpose.msra.mxu0 0.0
        %3256 = vmatprep.subr.mxu0 0.0
        %3257 = vmatpush1.xpose.msra.mxu0 0.0
        %3258 = vmatprep.subr.mxu0 0.0
        %3259 = vmatpush1.xpose.msra.mxu0 0.0
        %3260 = vmatprep.subr.mxu0 0.0
        %3261 = vmatpush1.xpose.msra.mxu0 0.0
        %3262 = vmatprep.subr.mxu0 0.0
        %3263 = vmatpush1.xpose.msra.mxu0 0.0
        %3264 = vmatprep.subr.mxu0 0.0
        %3265 = vmatpush1.xpose.msra.mxu0 0.0
        %3266 = vmatprep.subr.mxu0 0.0
        %3267 = vmatpush1.xpose.msra.mxu0 0.0
        %3268 = vmatprep.subr.mxu0 0.0
        %3269 = vmatpush1.xpose.msra.mxu0 0.0
        %3270 = vmatprep.subr.mxu0 0.0
        %3271 = vmatpush1.xpose.msra.mxu0 0.0
        %3272 = vmatprep.subr.mxu0 0.0
        %3273 = vmatpush1.xpose.msra.mxu0 0.0
        %3274 = vmatprep.subr.mxu0 0.0
        %3275 = vmatpush1.xpose.msra.mxu0 0.0
        %3276 = vmatprep.subr.mxu0 0.0
        %3277 = vmatpush1.xpose.msra.mxu0 0.0
        %3278 = vmatprep.subr.mxu0 0.0
        %3279 = vmatpush1.xpose.msra.mxu0 0.0
        %3280 = vmatprep.subr.mxu0 0.0
        %3281 = vmatpush1.xpose.msra.mxu0 0.0
        %3282 = vmatprep.subr.mxu0 0.0
        %3283 = vmatpush1.xpose.msra.mxu0 0.0
        %3284 = vmatprep.subr.mxu0 0.0
        %3285 = vmatpush1.xpose.msra.mxu0 0.0
        %3286 = vmatprep.mubr.f32.mxu0 0.0
        %3287 = vmatmul.mubr.f32.gmra.mrb[0].mxu0 %v1473
        %v3288 = vpop.f32.mrb[0].mxu0
        %v3289 = vadd.f32 0.0, %v3288
        %v3290 = vpop.f32.mrb[0].mxu0
        %3291 = vdwg.mxu0
        %v3292 = vsel %vm1054, %v3215, -inf
        %3293 = vmax.xlane.f32.xlu0 %v3292
        %v3294 = vpop.xlane.xlu0 %3293
        %v3295 = vsel %vm1054, %v3289, -inf
        %3296 = vmax.xlane.f32.xlu0 %v3295
        %v3297 = vpop.xlane.xlu0 %3296
        %v3298 = vmax.f32 %v766, %v3294
        %v3299 = vmax.f32 %v769, %v3297
        %v3300 = vsub.f32 %v3215, %v3298
        %v3301 = vsub.f32 %v3289, %v3299
        %v3302 = vmul.f32 %v3300, 1.442695
        %v3303 = vpow.pop %v3302
        %v3304 = vmul.f32 %v3301, 1.442695
        %v3305 = vpow.pop %v3304
        %v3306 = vsub.f32 %v766, %v3298
        %v3307 = vsub.f32 %v769, %v3299
        %v3308 = vmul.f32 %v3306, 1.442695
        %v3309 = vpow.pop %v3308
        %v3310 = vmul.f32 %v3307, 1.442695
        %v3311 = vpow.pop %v3310
        %v3312 = vmul.f32 %v3309, %v786
        %v3313 = vmul.f32 %v3311, %v789
        %v3314 = vsel %vm1054, %v3303, 0.0
        %3315 = vadd.xlane.f32.xlu0 %v3314
        %v3316 = vpop.xlane.xlu0 %3315
        %v3317 = vsel %vm1054, %v3305, 0.0
        %3318 = vadd.xlane.f32.xlu0 %v3317
        %v3319 = vpop.xlane.xlu0 %3318
        %v3320 = vadd.f32 %v3312, %v3316
        %v3321 = vadd.f32 %v3313, %v3319
        %v3324 = vsel %vm1054, %v3303, 0
        %3326 = vmatprep.subr.mxu0 0.0
        %3327 = vmatpush1.msra.mxu0 %v3145
        %3328 = vmatprep.subr.mxu0 0.0
        %3329 = vmatpush1.msra.mxu0 0.0
        %3330 = vmatprep.subr.mxu0 0.0
        %3331 = vmatpush1.msra.mxu0 0.0
        %3332 = vmatprep.subr.mxu0 0.0
        %3333 = vmatpush1.msra.mxu0 0.0
        %3334 = vmatprep.subr.mxu0 0.0
        %3335 = vmatpush1.msra.mxu0 0.0
        %3336 = vmatprep.subr.mxu0 0.0
        %3337 = vmatpush1.msra.mxu0 0.0
        %3338 = vmatprep.subr.mxu0 0.0
        %3339 = vmatpush1.msra.mxu0 0.0
        %3340 = vmatprep.subr.mxu0 0.0
        %3341 = vmatpush1.msra.mxu0 0.0
        %3342 = vmatprep.subr.mxu0 0.0
        %3343 = vmatpush1.msra.mxu0 0.0
        %3344 = vmatprep.subr.mxu0 0.0
        %3345 = vmatpush1.msra.mxu0 0.0
        %3346 = vmatprep.subr.mxu0 0.0
        %3347 = vmatpush1.msra.mxu0 0.0
        %3348 = vmatprep.subr.mxu0 0.0
        %3349 = vmatpush1.msra.mxu0 0.0
        %3350 = vmatprep.subr.mxu0 0.0
        %3351 = vmatpush1.msra.mxu0 0.0
        %3352 = vmatprep.subr.mxu0 0.0
        %3353 = vmatpush1.msra.mxu0 0.0
        %3354 = vmatprep.subr.mxu0 0.0
        %3355 = vmatpush1.msra.mxu0 0.0
        %3356 = vmatprep.subr.mxu0 0.0
        %3357 = vmatpush1.msra.mxu0 0.0
        %3358 = vmatprep.subr.mxu0 0.0
        %3359 = vmatpush1.msra.mxu0 0.0
        %3360 = vmatprep.subr.mxu0 0.0
        %3361 = vmatpush1.msra.mxu0 0.0
        %3362 = vmatprep.subr.mxu0 0.0
        %3363 = vmatpush1.msra.mxu0 0.0
        %3364 = vmatprep.subr.mxu0 0.0
        %3365 = vmatpush1.msra.mxu0 0.0
        %3366 = vmatprep.subr.mxu0 0.0
        %3367 = vmatpush1.msra.mxu0 0.0
        %3368 = vmatprep.subr.mxu0 0.0
        %3369 = vmatpush1.msra.mxu0 0.0
        %3370 = vmatprep.subr.mxu0 0.0
        %3371 = vmatpush1.msra.mxu0 0.0
        %3372 = vmatprep.subr.mxu0 0.0
        %3373 = vmatpush1.msra.mxu0 0.0
        %3374 = vmatprep.subr.mxu0 0.0
        %3375 = vmatpush1.msra.mxu0 0.0
        %3376 = vmatprep.subr.mxu0 0.0
        %3377 = vmatpush1.msra.mxu0 0.0
        %3378 = vmatprep.subr.mxu0 0.0
        %3379 = vmatpush1.msra.mxu0 0.0
        %3380 = vmatprep.subr.mxu0 0.0
        %3381 = vmatpush1.msra.mxu0 0.0
        %3382 = vmatprep.subr.mxu0 0.0
        %3383 = vmatpush1.msra.mxu0 0.0
        %3384 = vmatprep.subr.mxu0 0.0
        %3385 = vmatpush1.msra.mxu0 0.0
        %3386 = vmatprep.subr.mxu0 0.0
        %3387 = vmatpush1.msra.mxu0 0.0
        %3388 = vmatprep.subr.mxu0 0.0
        %3389 = vmatpush1.msra.mxu0 0.0
        %3390 = vmatprep.mubr.f32.mxu0 0.0
        %3391 = vmatmul.mubr.f32.gmra.mrb[0].mxu0 %v3324
        %v3392 = vpop.f32.mrb[0].mxu0
        %v3393 = vadd.f32 0.0, %v3392
        %v3394 = vpop.f32.mrb[0].mxu0
        %3395 = vdwg.mxu0
        %v3398 = vsel %vm1054, %v3305, 0
        %3400 = vmatprep.subr.mxu0 0.0
        %3401 = vmatpush1.msra.mxu0 %v3219
        %3402 = vmatprep.subr.mxu0 0.0
        %3403 = vmatpush1.msra.mxu0 0.0
        %3404 = vmatprep.subr.mxu0 0.0
        %3405 = vmatpush1.msra.mxu0 0.0
        %3406 = vmatprep.subr.mxu0 0.0
        %3407 = vmatpush1.msra.mxu0 0.0
        %3408 = vmatprep.subr.mxu0 0.0
        %3409 = vmatpush1.msra.mxu0 0.0
        %3410 = vmatprep.subr.mxu0 0.0
        %3411 = vmatpush1.msra.mxu0 0.0
        %3412 = vmatprep.subr.mxu0 0.0
        %3413 = vmatpush1.msra.mxu0 0.0
        %3414 = vmatprep.subr.mxu0 0.0
        %3415 = vmatpush1.msra.mxu0 0.0
        %3416 = vmatprep.subr.mxu0 0.0
        %3417 = vmatpush1.msra.mxu0 0.0
        %3418 = vmatprep.subr.mxu0 0.0
        %3419 = vmatpush1.msra.mxu0 0.0
        %3420 = vmatprep.subr.mxu0 0.0
        %3421 = vmatpush1.msra.mxu0 0.0
        %3422 = vmatprep.subr.mxu0 0.0
        %3423 = vmatpush1.msra.mxu0 0.0
        %3424 = vmatprep.subr.mxu0 0.0
        %3425 = vmatpush1.msra.mxu0 0.0
        %3426 = vmatprep.subr.mxu0 0.0
        %3427 = vmatpush1.msra.mxu0 0.0
        %3428 = vmatprep.subr.mxu0 0.0
        %3429 = vmatpush1.msra.mxu0 0.0
        %3430 = vmatprep.subr.mxu0 0.0
        %3431 = vmatpush1.msra.mxu0 0.0
        %3432 = vmatprep.subr.mxu0 0.0
        %3433 = vmatpush1.msra.mxu0 0.0
        %3434 = vmatprep.subr.mxu0 0.0
        %3435 = vmatpush1.msra.mxu0 0.0
        %3436 = vmatprep.subr.mxu0 0.0
        %3437 = vmatpush1.msra.mxu0 0.0
        %3438 = vmatprep.subr.mxu0 0.0
        %3439 = vmatpush1.msra.mxu0 0.0
        %3440 = vmatprep.subr.mxu0 0.0
        %3441 = vmatpush1.msra.mxu0 0.0
        %3442 = vmatprep.subr.mxu0 0.0
        %3443 = vmatpush1.msra.mxu0 0.0
        %3444 = vmatprep.subr.mxu0 0.0
        %3445 = vmatpush1.msra.mxu0 0.0
        %3446 = vmatprep.subr.mxu0 0.0
        %3447 = vmatpush1.msra.mxu0 0.0
        %3448 = vmatprep.subr.mxu0 0.0
        %3449 = vmatpush1.msra.mxu0 0.0
        %3450 = vmatprep.subr.mxu0 0.0
        %3451 = vmatpush1.msra.mxu0 0.0
        %3452 = vmatprep.subr.mxu0 0.0
        %3453 = vmatpush1.msra.mxu0 0.0
        %3454 = vmatprep.subr.mxu0 0.0
        %3455 = vmatpush1.msra.mxu0 0.0
        %3456 = vmatprep.subr.mxu0 0.0
        %3457 = vmatpush1.msra.mxu0 0.0
        %3458 = vmatprep.subr.mxu0 0.0
        %3459 = vmatpush1.msra.mxu0 0.0
        %3460 = vmatprep.subr.mxu0 0.0
        %3461 = vmatpush1.msra.mxu0 0.0
        %3462 = vmatprep.subr.mxu0 0.0
        %3463 = vmatpush1.msra.mxu0 0.0
        %3464 = vmatprep.mubr.f32.mxu0 0.0
        %3465 = vmatmul.mubr.f32.gmra.mrb[0].mxu0 %v3398
        %v3466 = vpop.f32.mrb[0].mxu0
        %v3467 = vadd.f32 0.0, %v3466
        %v3468 = vpop.f32.mrb[0].mxu0
        %3469 = vdwg.mxu0
        %v3470 = vmul.f32 %v3309, %v1046
        %v3471 = vmul.f32 %v3311, %v1051
        %3474 = vrot.lane.b32.xlu0 %v3393, 8
        %v3475 = vpop.permute.xlu0 %3474
        %3476 = vrot.lane.b32.xlu0 %v3467, 8
        %v3477 = vpop.permute.xlu0 %3476
        %v3480 = vadd.f32 %v3470, %v3475
        %v3481 = vadd.f32 %v3471, %v3477
        %v3482 = vrcp.pop %v3320
        %v3483 = vmul.f32 %v3480, %v3482
        %v3484 = vrcp.pop %v3321
        %v3485 = vmul.f32 %v3481, %v3484
        %3488 = vrot.lane.b32.xlu0 %v3483, 40
        %v3489 = vpop.permute.xlu0 %3488
        %3490 = vrot.lane.b32.xlu0 %v3485, 40
        %v3491 = vpop.permute.xlu0 %3490
        %vm3494 = vcmask 458112
        %3495 = vst.msk [vmem:[#allocation2] sm:$0xff] %vm3494, %v3489
        %3496 = vst.msk [vmem:[#allocation2 + $0x10] sm:$0xff] %vm3494, %v3491
        %3497 = vrot.lane.b32.xlu0 %v529, 112
        %v3498 = vpop.permute.xlu0 %3497
        %v3499 = vsel %vm1054, %v3498, 0
        %3501 = vmatprep.subr.mxu0 0.0
        %3502 = vmatpush1.xpose.msra.mxu0 %v3499
        %3503 = vmatprep.subr.mxu0 0.0
        %3504 = vmatpush1.xpose.msra.mxu0 0.0
        %3505 = vmatprep.subr.mxu0 0.0
        %3506 = vmatpush1.xpose.msra.mxu0 0.0
        %3507 = vmatprep.subr.mxu0 0.0
        %3508 = vmatpush1.xpose.msra.mxu0 0.0
        %3509 = vmatprep.subr.mxu0 0.0
        %3510 = vmatpush1.xpose.msra.mxu0 0.0
        %3511 = vmatprep.subr.mxu0 0.0
        %3512 = vmatpush1.xpose.msra.mxu0 0.0
        %3513 = vmatprep.subr.mxu0 0.0
        %3514 = vmatpush1.xpose.msra.mxu0 0.0
        %3515 = vmatprep.subr.mxu0 0.0
        %3516 = vmatpush1.xpose.msra.mxu0 0.0
        %3517 = vmatprep.subr.mxu0 0.0
        %3518 = vmatpush1.xpose.msra.mxu0 0.0
        %3519 = vmatprep.subr.mxu0 0.0
        %3520 = vmatpush1.xpose.msra.mxu0 0.0
        %3521 = vmatprep.subr.mxu0 0.0
        %3522 = vmatpush1.xpose.msra.mxu0 0.0
        %3523 = vmatprep.subr.mxu0 0.0
        %3524 = vmatpush1.xpose.msra.mxu0 0.0
        %3525 = vmatprep.subr.mxu0 0.0
        %3526 = vmatpush1.xpose.msra.mxu0 0.0
        %3527 = vmatprep.subr.mxu0 0.0
        %3528 = vmatpush1.xpose.msra.mxu0 0.0
        %3529 = vmatprep.subr.mxu0 0.0
        %3530 = vmatpush1.xpose.msra.mxu0 0.0
        %3531 = vmatprep.subr.mxu0 0.0
        %3532 = vmatpush1.xpose.msra.mxu0 0.0
        %3533 = vmatprep.subr.mxu0 0.0
        %3534 = vmatpush1.xpose.msra.mxu0 0.0
        %3535 = vmatprep.subr.mxu0 0.0
        %3536 = vmatpush1.xpose.msra.mxu0 0.0
        %3537 = vmatprep.subr.mxu0 0.0
        %3538 = vmatpush1.xpose.msra.mxu0 0.0
        %3539 = vmatprep.subr.mxu0 0.0
        %3540 = vmatpush1.xpose.msra.mxu0 0.0
        %3541 = vmatprep.subr.mxu0 0.0
        %3542 = vmatpush1.xpose.msra.mxu0 0.0
        %3543 = vmatprep.subr.mxu0 0.0
        %3544 = vmatpush1.xpose.msra.mxu0 0.0
        %3545 = vmatprep.subr.mxu0 0.0
        %3546 = vmatpush1.xpose.msra.mxu0 0.0
        %3547 = vmatprep.subr.mxu0 0.0
        %3548 = vmatpush1.xpose.msra.mxu0 0.0
        %3549 = vmatprep.subr.mxu0 0.0
        %3550 = vmatpush1.xpose.msra.mxu0 0.0
        %3551 = vmatprep.subr.mxu0 0.0
        %3552 = vmatpush1.xpose.msra.mxu0 0.0
        %3553 = vmatprep.subr.mxu0 0.0
        %3554 = vmatpush1.xpose.msra.mxu0 0.0
        %3555 = vmatprep.subr.mxu0 0.0
        %3556 = vmatpush1.xpose.msra.mxu0 0.0
        %3557 = vmatprep.subr.mxu0 0.0
        %3558 = vmatpush1.xpose.msra.mxu0 0.0
        %3559 = vmatprep.subr.mxu0 0.0
        %3560 = vmatpush1.xpose.msra.mxu0 0.0
        %3561 = vmatprep.subr.mxu0 0.0
        %3562 = vmatpush1.xpose.msra.mxu0 0.0
        %3563 = vmatprep.subr.mxu0 0.0
        %3564 = vmatpush1.xpose.msra.mxu0 0.0
        %3565 = vmatprep.mubr.f32.mxu0 0.0
        %3566 = vmatmul.mubr.f32.gmra.mrb[0].mxu0 %v1748
        %v3567 = vpop.f32.mrb[0].mxu0
        %v3568 = vadd.f32 0.0, %v3567
        %v3569 = vpop.f32.mrb[0].mxu0
        %3570 = vdwg.mxu0
        %3571 = vrot.lane.b32.xlu0 %v530, 112
        %v3572 = vpop.permute.xlu0 %3571
        %v3573 = vsel %vm1054, %v3572, 0
        %3575 = vmatprep.subr.mxu0 0.0
        %3576 = vmatpush1.xpose.msra.mxu0 %v3573
        %3577 = vmatprep.subr.mxu0 0.0
        %3578 = vmatpush1.xpose.msra.mxu0 0.0
        %3579 = vmatprep.subr.mxu0 0.0
        %3580 = vmatpush1.xpose.msra.mxu0 0.0
        %3581 = vmatprep.subr.mxu0 0.0
        %3582 = vmatpush1.xpose.msra.mxu0 0.0
        %3583 = vmatprep.subr.mxu0 0.0
        %3584 = vmatpush1.xpose.msra.mxu0 0.0
        %3585 = vmatprep.subr.mxu0 0.0
        %3586 = vmatpush1.xpose.msra.mxu0 0.0
        %3587 = vmatprep.subr.mxu0 0.0
        %3588 = vmatpush1.xpose.msra.mxu0 0.0
        %3589 = vmatprep.subr.mxu0 0.0
        %3590 = vmatpush1.xpose.msra.mxu0 0.0
        %3591 = vmatprep.subr.mxu0 0.0
        %3592 = vmatpush1.xpose.msra.mxu0 0.0
        %3593 = vmatprep.subr.mxu0 0.0
        %3594 = vmatpush1.xpose.msra.mxu0 0.0
        %3595 = vmatprep.subr.mxu0 0.0
        %3596 = vmatpush1.xpose.msra.mxu0 0.0
        %3597 = vmatprep.subr.mxu0 0.0
        %3598 = vmatpush1.xpose.msra.mxu0 0.0
        %3599 = vmatprep.subr.mxu0 0.0
        %3600 = vmatpush1.xpose.msra.mxu0 0.0
        %3601 = vmatprep.subr.mxu0 0.0
        %3602 = vmatpush1.xpose.msra.mxu0 0.0
        %3603 = vmatprep.subr.mxu0 0.0
        %3604 = vmatpush1.xpose.msra.mxu0 0.0
        %3605 = vmatprep.subr.mxu0 0.0
        %3606 = vmatpush1.xpose.msra.mxu0 0.0
        %3607 = vmatprep.subr.mxu0 0.0
        %3608 = vmatpush1.xpose.msra.mxu0 0.0
        %3609 = vmatprep.subr.mxu0 0.0
        %3610 = vmatpush1.xpose.msra.mxu0 0.0
        %3611 = vmatprep.subr.mxu0 0.0
        %3612 = vmatpush1.xpose.msra.mxu0 0.0
        %3613 = vmatprep.subr.mxu0 0.0
        %3614 = vmatpush1.xpose.msra.mxu0 0.0
        %3615 = vmatprep.subr.mxu0 0.0
        %3616 = vmatpush1.xpose.msra.mxu0 0.0
        %3617 = vmatprep.subr.mxu0 0.0
        %3618 = vmatpush1.xpose.msra.mxu0 0.0
        %3619 = vmatprep.subr.mxu0 0.0
        %3620 = vmatpush1.xpose.msra.mxu0 0.0
        %3621 = vmatprep.subr.mxu0 0.0
        %3622 = vmatpush1.xpose.msra.mxu0 0.0
        %3623 = vmatprep.subr.mxu0 0.0
        %3624 = vmatpush1.xpose.msra.mxu0 0.0
        %3625 = vmatprep.subr.mxu0 0.0
        %3626 = vmatpush1.xpose.msra.mxu0 0.0
        %3627 = vmatprep.subr.mxu0 0.0
        %3628 = vmatpush1.xpose.msra.mxu0 0.0
        %3629 = vmatprep.subr.mxu0 0.0
        %3630 = vmatpush1.xpose.msra.mxu0 0.0
        %3631 = vmatprep.subr.mxu0 0.0
        %3632 = vmatpush1.xpose.msra.mxu0 0.0
        %3633 = vmatprep.subr.mxu0 0.0
        %3634 = vmatpush1.xpose.msra.mxu0 0.0
        %3635 = vmatprep.subr.mxu0 0.0
        %3636 = vmatpush1.xpose.msra.mxu0 0.0
        %3637 = vmatprep.subr.mxu0 0.0
        %3638 = vmatpush1.xpose.msra.mxu0 0.0
        %3639 = vmatprep.mubr.f32.mxu0 0.0
        %3640 = vmatmul.mubr.f32.gmra.mrb[0].mxu0 %v1826
        %v3641 = vpop.f32.mrb[0].mxu0
        %v3642 = vadd.f32 0.0, %v3641
        %v3643 = vpop.f32.mrb[0].mxu0
        %3644 = vdwg.mxu0
        %v3645 = vsel %vm1054, %v3568, -inf
        %3646 = vmax.xlane.f32.xlu0 %v3645
        %v3647 = vpop.xlane.xlu0 %3646
        %v3648 = vsel %vm1054, %v3642, -inf
        %3649 = vmax.xlane.f32.xlu0 %v3648
        %v3650 = vpop.xlane.xlu0 %3649
        %v3651 = vmax.f32 %v792, %v3647
        %v3652 = vmax.f32 %v795, %v3650
        %v3653 = vsub.f32 %v3568, %v3651
        %v3654 = vsub.f32 %v3642, %v3652
        %v3655 = vmul.f32 %v3653, 1.442695
        %v3656 = vpow.pop %v3655
        %v3657 = vmul.f32 %v3654, 1.442695
        %v3658 = vpow.pop %v3657
        %v3659 = vsub.f32 %v792, %v3651
        %v3660 = vsub.f32 %v795, %v3652
        %v3661 = vmul.f32 %v3659, 1.442695
        %v3662 = vpow.pop %v3661
        %v3663 = vmul.f32 %v3660, 1.442695
        %v3664 = vpow.pop %v3663
        %v3665 = vmul.f32 %v3662, %v804
        %v3666 = vmul.f32 %v3664, %v807
        %v3667 = vsel %vm1054, %v3656, 0.0
        %3668 = vadd.xlane.f32.xlu0 %v3667
        %v3669 = vpop.xlane.xlu0 %3668
        %v3670 = vsel %vm1054, %v3658, 0.0
        %3671 = vadd.xlane.f32.xlu0 %v3670
        %v3672 = vpop.xlane.xlu0 %3671
        %v3673 = vadd.f32 %v3665, %v3669
        %v3674 = vadd.f32 %v3666, %v3672
        %v3677 = vsel %vm1054, %v3656, 0
        %3679 = vmatprep.subr.mxu0 0.0
        %3680 = vmatpush1.msra.mxu0 %v3498
        %3681 = vmatprep.subr.mxu0 0.0
        %3682 = vmatpush1.msra.mxu0 0.0
        %3683 = vmatprep.subr.mxu0 0.0
        %3684 = vmatpush1.msra.mxu0 0.0
        %3685 = vmatprep.subr.mxu0 0.0
        %3686 = vmatpush1.msra.mxu0 0.0
        %3687 = vmatprep.subr.mxu0 0.0
        %3688 = vmatpush1.msra.mxu0 0.0
        %3689 = vmatprep.subr.mxu0 0.0
        %3690 = vmatpush1.msra.mxu0 0.0
        %3691 = vmatprep.subr.mxu0 0.0
        %3692 = vmatpush1.msra.mxu0 0.0
        %3693 = vmatprep.subr.mxu0 0.0
        %3694 = vmatpush1.msra.mxu0 0.0
        %3695 = vmatprep.subr.mxu0 0.0
        %3696 = vmatpush1.msra.mxu0 0.0
        %3697 = vmatprep.subr.mxu0 0.0
        %3698 = vmatpush1.msra.mxu0 0.0
        %3699 = vmatprep.subr.mxu0 0.0
        %3700 = vmatpush1.msra.mxu0 0.0
        %3701 = vmatprep.subr.mxu0 0.0
        %3702 = vmatpush1.msra.mxu0 0.0
        %3703 = vmatprep.subr.mxu0 0.0
        %3704 = vmatpush1.msra.mxu0 0.0
        %3705 = vmatprep.subr.mxu0 0.0
        %3706 = vmatpush1.msra.mxu0 0.0
        %3707 = vmatprep.subr.mxu0 0.0
        %3708 = vmatpush1.msra.mxu0 0.0
        %3709 = vmatprep.subr.mxu0 0.0
        %3710 = vmatpush1.msra.mxu0 0.0
        %3711 = vmatprep.subr.mxu0 0.0
        %3712 = vmatpush1.msra.mxu0 0.0
        %3713 = vmatprep.subr.mxu0 0.0
        %3714 = vmatpush1.msra.mxu0 0.0
        %3715 = vmatprep.subr.mxu0 0.0
        %3716 = vmatpush1.msra.mxu0 0.0
        %3717 = vmatprep.subr.mxu0 0.0
        %3718 = vmatpush1.msra.mxu0 0.0
        %3719 = vmatprep.subr.mxu0 0.0
        %3720 = vmatpush1.msra.mxu0 0.0
        %3721 = vmatprep.subr.mxu0 0.0
        %3722 = vmatpush1.msra.mxu0 0.0
        %3723 = vmatprep.subr.mxu0 0.0
        %3724 = vmatpush1.msra.mxu0 0.0
        %3725 = vmatprep.subr.mxu0 0.0
        %3726 = vmatpush1.msra.mxu0 0.0
        %3727 = vmatprep.subr.mxu0 0.0
        %3728 = vmatpush1.msra.mxu0 0.0
        %3729 = vmatprep.subr.mxu0 0.0
        %3730 = vmatpush1.msra.mxu0 0.0
        %3731 = vmatprep.subr.mxu0 0.0
        %3732 = vmatpush1.msra.mxu0 0.0
        %3733 = vmatprep.subr.mxu0 0.0
        %3734 = vmatpush1.msra.mxu0 0.0
        %3735 = vmatprep.subr.mxu0 0.0
        %3736 = vmatpush1.msra.mxu0 0.0
        %3737 = vmatprep.subr.mxu0 0.0
        %3738 = vmatpush1.msra.mxu0 0.0
        %3739 = vmatprep.subr.mxu0 0.0
        %3740 = vmatpush1.msra.mxu0 0.0
        %3741 = vmatprep.subr.mxu0 0.0
        %3742 = vmatpush1.msra.mxu0 0.0
        %3743 = vmatprep.mubr.f32.mxu0 0.0
        %3744 = vmatmul.mubr.f32.gmra.mrb[0].mxu0 %v3677
        %v3745 = vpop.f32.mrb[0].mxu0
        %v3746 = vadd.f32 0.0, %v3745
        %v3747 = vpop.f32.mrb[0].mxu0
        %3748 = vdwg.mxu0
        %v3751 = vsel %vm1054, %v3658, 0
        %3753 = vmatprep.subr.mxu0 0.0
        %3754 = vmatpush1.msra.mxu0 %v3572
        %3755 = vmatprep.subr.mxu0 0.0
        %3756 = vmatpush1.msra.mxu0 0.0
        %3757 = vmatprep.subr.mxu0 0.0
        %3758 = vmatpush1.msra.mxu0 0.0
        %3759 = vmatprep.subr.mxu0 0.0
        %3760 = vmatpush1.msra.mxu0 0.0
        %3761 = vmatprep.subr.mxu0 0.0
        %3762 = vmatpush1.msra.mxu0 0.0
        %3763 = vmatprep.subr.mxu0 0.0
        %3764 = vmatpush1.msra.mxu0 0.0
        %3765 = vmatprep.subr.mxu0 0.0
        %3766 = vmatpush1.msra.mxu0 0.0
        %3767 = vmatprep.subr.mxu0 0.0
        %3768 = vmatpush1.msra.mxu0 0.0
        %3769 = vmatprep.subr.mxu0 0.0
        %3770 = vmatpush1.msra.mxu0 0.0
        %3771 = vmatprep.subr.mxu0 0.0
        %3772 = vmatpush1.msra.mxu0 0.0
        %3773 = vmatprep.subr.mxu0 0.0
        %3774 = vmatpush1.msra.mxu0 0.0
        %3775 = vmatprep.subr.mxu0 0.0
        %3776 = vmatpush1.msra.mxu0 0.0
        %3777 = vmatprep.subr.mxu0 0.0
        %3778 = vmatpush1.msra.mxu0 0.0
        %3779 = vmatprep.subr.mxu0 0.0
        %3780 = vmatpush1.msra.mxu0 0.0
        %3781 = vmatprep.subr.mxu0 0.0
        %3782 = vmatpush1.msra.mxu0 0.0
        %3783 = vmatprep.subr.mxu0 0.0
        %3784 = vmatpush1.msra.mxu0 0.0
        %3785 = vmatprep.subr.mxu0 0.0
        %3786 = vmatpush1.msra.mxu0 0.0
        %3787 = vmatprep.subr.mxu0 0.0
        %3788 = vmatpush1.msra.mxu0 0.0
        %3789 = vmatprep.subr.mxu0 0.0
        %3790 = vmatpush1.msra.mxu0 0.0
        %3791 = vmatprep.subr.mxu0 0.0
        %3792 = vmatpush1.msra.mxu0 0.0
        %3793 = vmatprep.subr.mxu0 0.0
        %3794 = vmatpush1.msra.mxu0 0.0
        %3795 = vmatprep.subr.mxu0 0.0
        %3796 = vmatpush1.msra.mxu0 0.0
        %3797 = vmatprep.subr.mxu0 0.0
        %3798 = vmatpush1.msra.mxu0 0.0
        %3799 = vmatprep.subr.mxu0 0.0
        %3800 = vmatpush1.msra.mxu0 0.0
        %3801 = vmatprep.subr.mxu0 0.0
        %3802 = vmatpush1.msra.mxu0 0.0
        %3803 = vmatprep.subr.mxu0 0.0
        %3804 = vmatpush1.msra.mxu0 0.0
        %3805 = vmatprep.subr.mxu0 0.0
        %3806 = vmatpush1.msra.mxu0 0.0
        %3807 = vmatprep.subr.mxu0 0.0
        %3808 = vmatpush1.msra.mxu0 0.0
        %3809 = vmatprep.subr.mxu0 0.0
        %3810 = vmatpush1.msra.mxu0 0.0
        %3811 = vmatprep.subr.mxu0 0.0
        %3812 = vmatpush1.msra.mxu0 0.0
        %3813 = vmatprep.subr.mxu0 0.0
        %3814 = vmatpush1.msra.mxu0 0.0
        %3815 = vmatprep.subr.mxu0 0.0
        %3816 = vmatpush1.msra.mxu0 0.0
        %3817 = vmatprep.mubr.f32.mxu0 0.0
        %3818 = vmatmul.mubr.f32.gmra.mrb[0].mxu0 %v3751
        %v3819 = vpop.f32.mrb[0].mxu0
        %v3820 = vadd.f32 0.0, %v3819
        %v3821 = vpop.f32.mrb[0].mxu0
        %3822 = vdwg.mxu0
        %v3823 = vmul.f32 %v3662, %v1046
        %v3824 = vmul.f32 %v3664, %v1051
        %3827 = vrot.lane.b32.xlu0 %v3746, 16
        %v3828 = vpop.permute.xlu0 %3827
        %3829 = vrot.lane.b32.xlu0 %v3820, 16
        %v3830 = vpop.permute.xlu0 %3829
        %v3833 = vadd.f32 %v3823, %v3828
        %v3834 = vadd.f32 %v3824, %v3830
        %v3835 = vrcp.pop %v3673
        %v3836 = vmul.f32 %v3833, %v3835
        %v3837 = vrcp.pop %v3674
        %v3838 = vmul.f32 %v3834, %v3837
        %3841 = vrot.lane.b32.xlu0 %v3836, 40
        %v3842 = vpop.permute.xlu0 %3841
        %3843 = vrot.lane.b32.xlu0 %v3838, 40
        %v3844 = vpop.permute.xlu0 %3843
        %vm3847 = vcmask 523712
        %3848 = vst.msk [vmem:[#allocation2] sm:$0xff] %vm3847, %v3842
        %3849 = vst.msk [vmem:[#allocation2 + $0x10] sm:$0xff] %vm3847, %v3844
        %3850 = vrot.lane.b32.xlu0 %v529, 104
        %v3851 = vpop.permute.xlu0 %3850
        %v3852 = vsel %vm1054, %v3851, 0
        %3854 = vmatprep.subr.mxu0 0.0
        %3855 = vmatpush1.xpose.msra.mxu0 %v3852
        %3856 = vmatprep.subr.mxu0 0.0
        %3857 = vmatpush1.xpose.msra.mxu0 0.0
        %3858 = vmatprep.subr.mxu0 0.0
        %3859 = vmatpush1.xpose.msra.mxu0 0.0
        %3860 = vmatprep.subr.mxu0 0.0
        %3861 = vmatpush1.xpose.msra.mxu0 0.0
        %3862 = vmatprep.subr.mxu0 0.0
        %3863 = vmatpush1.xpose.msra.mxu0 0.0
        %3864 = vmatprep.subr.mxu0 0.0
        %3865 = vmatpush1.xpose.msra.mxu0 0.0
        %3866 = vmatprep.subr.mxu0 0.0
        %3867 = vmatpush1.xpose.msra.mxu0 0.0
        %3868 = vmatprep.subr.mxu0 0.0
        %3869 = vmatpush1.xpose.msra.mxu0 0.0
        %3870 = vmatprep.subr.mxu0 0.0
        %3871 = vmatpush1.xpose.msra.mxu0 0.0
        %3872 = vmatprep.subr.mxu0 0.0
        %3873 = vmatpush1.xpose.msra.mxu0 0.0
        %3874 = vmatprep.subr.mxu0 0.0
        %3875 = vmatpush1.xpose.msra.mxu0 0.0
        %3876 = vmatprep.subr.mxu0 0.0
        %3877 = vmatpush1.xpose.msra.mxu0 0.0
        %3878 = vmatprep.subr.mxu0 0.0
        %3879 = vmatpush1.xpose.msra.mxu0 0.0
        %3880 = vmatprep.subr.mxu0 0.0
        %3881 = vmatpush1.xpose.msra.mxu0 0.0
        %3882 = vmatprep.subr.mxu0 0.0
        %3883 = vmatpush1.xpose.msra.mxu0 0.0
        %3884 = vmatprep.subr.mxu0 0.0
        %3885 = vmatpush1.xpose.msra.mxu0 0.0
        %3886 = vmatprep.subr.mxu0 0.0
        %3887 = vmatpush1.xpose.msra.mxu0 0.0
        %3888 = vmatprep.subr.mxu0 0.0
        %3889 = vmatpush1.xpose.msra.mxu0 0.0
        %3890 = vmatprep.subr.mxu0 0.0
        %3891 = vmatpush1.xpose.msra.mxu0 0.0
        %3892 = vmatprep.subr.mxu0 0.0
        %3893 = vmatpush1.xpose.msra.mxu0 0.0
        %3894 = vmatprep.subr.mxu0 0.0
        %3895 = vmatpush1.xpose.msra.mxu0 0.0
        %3896 = vmatprep.subr.mxu0 0.0
        %3897 = vmatpush1.xpose.msra.mxu0 0.0
        %3898 = vmatprep.subr.mxu0 0.0
        %3899 = vmatpush1.xpose.msra.mxu0 0.0
        %3900 = vmatprep.subr.mxu0 0.0
        %3901 = vmatpush1.xpose.msra.mxu0 0.0
        %3902 = vmatprep.subr.mxu0 0.0
        %3903 = vmatpush1.xpose.msra.mxu0 0.0
        %3904 = vmatprep.subr.mxu0 0.0
        %3905 = vmatpush1.xpose.msra.mxu0 0.0
        %3906 = vmatprep.subr.mxu0 0.0
        %3907 = vmatpush1.xpose.msra.mxu0 0.0
        %3908 = vmatprep.subr.mxu0 0.0
        %3909 = vmatpush1.xpose.msra.mxu0 0.0
        %3910 = vmatprep.subr.mxu0 0.0
        %3911 = vmatpush1.xpose.msra.mxu0 0.0
        %3912 = vmatprep.subr.mxu0 0.0
        %3913 = vmatpush1.xpose.msra.mxu0 0.0
        %3914 = vmatprep.subr.mxu0 0.0
        %3915 = vmatpush1.xpose.msra.mxu0 0.0
        %3916 = vmatprep.subr.mxu0 0.0
        %3917 = vmatpush1.xpose.msra.mxu0 0.0
        %3918 = vmatprep.mubr.f32.mxu0 0.0
        %3919 = vmatmul.mubr.f32.gmra.mrb[0].mxu0 %v2101
        %v3920 = vpop.f32.mrb[0].mxu0
        %v3921 = vadd.f32 0.0, %v3920
        %v3922 = vpop.f32.mrb[0].mxu0
        %3923 = vdwg.mxu0
        %3924 = vrot.lane.b32.xlu0 %v530, 104
        %v3925 = vpop.permute.xlu0 %3924
        %v3926 = vsel %vm1054, %v3925, 0
        %3928 = vmatprep.subr.mxu0 0.0
        %3929 = vmatpush1.xpose.msra.mxu0 %v3926
        %3930 = vmatprep.subr.mxu0 0.0
        %3931 = vmatpush1.xpose.msra.mxu0 0.0
        %3932 = vmatprep.subr.mxu0 0.0
        %3933 = vmatpush1.xpose.msra.mxu0 0.0
        %3934 = vmatprep.subr.mxu0 0.0
        %3935 = vmatpush1.xpose.msra.mxu0 0.0
        %3936 = vmatprep.subr.mxu0 0.0
        %3937 = vmatpush1.xpose.msra.mxu0 0.0
        %3938 = vmatprep.subr.mxu0 0.0
        %3939 = vmatpush1.xpose.msra.mxu0 0.0
        %3940 = vmatprep.subr.mxu0 0.0
        %3941 = vmatpush1.xpose.msra.mxu0 0.0
        %3942 = vmatprep.subr.mxu0 0.0
        %3943 = vmatpush1.xpose.msra.mxu0 0.0
        %3944 = vmatprep.subr.mxu0 0.0
        %3945 = vmatpush1.xpose.msra.mxu0 0.0
        %3946 = vmatprep.subr.mxu0 0.0
        %3947 = vmatpush1.xpose.msra.mxu0 0.0
        %3948 = vmatprep.subr.mxu0 0.0
        %3949 = vmatpush1.xpose.msra.mxu0 0.0
        %3950 = vmatprep.subr.mxu0 0.0
        %3951 = vmatpush1.xpose.msra.mxu0 0.0
        %3952 = vmatprep.subr.mxu0 0.0
        %3953 = vmatpush1.xpose.msra.mxu0 0.0
        %3954 = vmatprep.subr.mxu0 0.0
        %3955 = vmatpush1.xpose.msra.mxu0 0.0
        %3956 = vmatprep.subr.mxu0 0.0
        %3957 = vmatpush1.xpose.msra.mxu0 0.0
        %3958 = vmatprep.subr.mxu0 0.0
        %3959 = vmatpush1.xpose.msra.mxu0 0.0
        %3960 = vmatprep.subr.mxu0 0.0
        %3961 = vmatpush1.xpose.msra.mxu0 0.0
        %3962 = vmatprep.subr.mxu0 0.0
        %3963 = vmatpush1.xpose.msra.mxu0 0.0
        %3964 = vmatprep.subr.mxu0 0.0
        %3965 = vmatpush1.xpose.msra.mxu0 0.0
        %3966 = vmatprep.subr.mxu0 0.0
        %3967 = vmatpush1.xpose.msra.mxu0 0.0
        %3968 = vmatprep.subr.mxu0 0.0
        %3969 = vmatpush1.xpose.msra.mxu0 0.0
        %3970 = vmatprep.subr.mxu0 0.0
        %3971 = vmatpush1.xpose.msra.mxu0 0.0
        %3972 = vmatprep.subr.mxu0 0.0
        %3973 = vmatpush1.xpose.msra.mxu0 0.0
        %3974 = vmatprep.subr.mxu0 0.0
        %3975 = vmatpush1.xpose.msra.mxu0 0.0
        %3976 = vmatprep.subr.mxu0 0.0
        %3977 = vmatpush1.xpose.msra.mxu0 0.0
        %3978 = vmatprep.subr.mxu0 0.0
        %3979 = vmatpush1.xpose.msra.mxu0 0.0
        %3980 = vmatprep.subr.mxu0 0.0
        %3981 = vmatpush1.xpose.msra.mxu0 0.0
        %3982 = vmatprep.subr.mxu0 0.0
        %3983 = vmatpush1.xpose.msra.mxu0 0.0
        %3984 = vmatprep.subr.mxu0 0.0
        %3985 = vmatpush1.xpose.msra.mxu0 0.0
        %3986 = vmatprep.subr.mxu0 0.0
        %3987 = vmatpush1.xpose.msra.mxu0 0.0
        %3988 = vmatprep.subr.mxu0 0.0
        %3989 = vmatpush1.xpose.msra.mxu0 0.0
        %3990 = vmatprep.subr.mxu0 0.0
        %3991 = vmatpush1.xpose.msra.mxu0 0.0
        %3992 = vmatprep.mubr.f32.mxu0 0.0
        %3993 = vmatmul.mubr.f32.gmra.mrb[0].mxu0 %v2179
        %v3994 = vpop.f32.mrb[0].mxu0
        %v3995 = vadd.f32 0.0, %v3994
        %v3996 = vpop.f32.mrb[0].mxu0
        %3997 = vdwg.mxu0
        %v3998 = vsel %vm1054, %v3921, -inf
        %3999 = vmax.xlane.f32.xlu0 %v3998
        %v4000 = vpop.xlane.xlu0 %3999
        %v4001 = vsel %vm1054, %v3995, -inf
        %4002 = vmax.xlane.f32.xlu0 %v4001
        %v4003 = vpop.xlane.xlu0 %4002
        %v4004 = vmax.f32 %v810, %v4000
        %v4005 = vmax.f32 %v813, %v4003
        %v4006 = vsub.f32 %v3921, %v4004
        %v4007 = vsub.f32 %v3995, %v4005
        %v4008 = vmul.f32 %v4006, 1.442695
        %v4009 = vpow.pop %v4008
        %v4010 = vmul.f32 %v4007, 1.442695
        %v4011 = vpow.pop %v4010
        %v4012 = vsub.f32 %v810, %v4004
        %v4013 = vsub.f32 %v813, %v4005
        %v4014 = vmul.f32 %v4012, 1.442695
        %v4015 = vpow.pop %v4014
        %v4016 = vmul.f32 %v4013, 1.442695
        %v4017 = vpow.pop %v4016
        %v4018 = vmul.f32 %v4015, %v830
        %v4019 = vmul.f32 %v4017, %v833
        %v4020 = vsel %vm1054, %v4009, 0.0
        %4021 = vadd.xlane.f32.xlu0 %v4020
        %v4022 = vpop.xlane.xlu0 %4021
        %v4023 = vsel %vm1054, %v4011, 0.0
        %4024 = vadd.xlane.f32.xlu0 %v4023
        %v4025 = vpop.xlane.xlu0 %4024
        %v4026 = vadd.f32 %v4018, %v4022
        %v4027 = vadd.f32 %v4019, %v4025
        %v4030 = vsel %vm1054, %v4009, 0
        %4032 = vmatprep.subr.mxu0 0.0
        %4033 = vmatpush1.msra.mxu0 %v3851
        %4034 = vmatprep.subr.mxu0 0.0
        %4035 = vmatpush1.msra.mxu0 0.0
        %4036 = vmatprep.subr.mxu0 0.0
        %4037 = vmatpush1.msra.mxu0 0.0
        %4038 = vmatprep.subr.mxu0 0.0
        %4039 = vmatpush1.msra.mxu0 0.0
        %4040 = vmatprep.subr.mxu0 0.0
        %4041 = vmatpush1.msra.mxu0 0.0
        %4042 = vmatprep.subr.mxu0 0.0
        %4043 = vmatpush1.msra.mxu0 0.0
        %4044 = vmatprep.subr.mxu0 0.0
        %4045 = vmatpush1.msra.mxu0 0.0
        %4046 = vmatprep.subr.mxu0 0.0
        %4047 = vmatpush1.msra.mxu0 0.0
        %4048 = vmatprep.subr.mxu0 0.0
        %4049 = vmatpush1.msra.mxu0 0.0
        %4050 = vmatprep.subr.mxu0 0.0
        %4051 = vmatpush1.msra.mxu0 0.0
        %4052 = vmatprep.subr.mxu0 0.0
        %4053 = vmatpush1.msra.mxu0 0.0
        %4054 = vmatprep.subr.mxu0 0.0
        %4055 = vmatpush1.msra.mxu0 0.0
        %4056 = vmatprep.subr.mxu0 0.0
        %4057 = vmatpush1.msra.mxu0 0.0
        %4058 = vmatprep.subr.mxu0 0.0
        %4059 = vmatpush1.msra.mxu0 0.0
        %4060 = vmatprep.subr.mxu0 0.0
        %4061 = vmatpush1.msra.mxu0 0.0
        %4062 = vmatprep.subr.mxu0 0.0
        %4063 = vmatpush1.msra.mxu0 0.0
        %4064 = vmatprep.subr.mxu0 0.0
        %4065 = vmatpush1.msra.mxu0 0.0
        %4066 = vmatprep.subr.mxu0 0.0
        %4067 = vmatpush1.msra.mxu0 0.0
        %4068 = vmatprep.subr.mxu0 0.0
        %4069 = vmatpush1.msra.mxu0 0.0
        %4070 = vmatprep.subr.mxu0 0.0
        %4071 = vmatpush1.msra.mxu0 0.0
        %4072 = vmatprep.subr.mxu0 0.0
        %4073 = vmatpush1.msra.mxu0 0.0
        %4074 = vmatprep.subr.mxu0 0.0
        %4075 = vmatpush1.msra.mxu0 0.0
        %4076 = vmatprep.subr.mxu0 0.0
        %4077 = vmatpush1.msra.mxu0 0.0
        %4078 = vmatprep.subr.mxu0 0.0
        %4079 = vmatpush1.msra.mxu0 0.0
        %4080 = vmatprep.subr.mxu0 0.0
        %4081 = vmatpush1.msra.mxu0 0.0
        %4082 = vmatprep.subr.mxu0 0.0
        %4083 = vmatpush1.msra.mxu0 0.0
        %4084 = vmatprep.subr.mxu0 0.0
        %4085 = vmatpush1.msra.mxu0 0.0
        %4086 = vmatprep.subr.mxu0 0.0
        %4087 = vmatpush1.msra.mxu0 0.0
        %4088 = vmatprep.subr.mxu0 0.0
        %4089 = vmatpush1.msra.mxu0 0.0
        %4090 = vmatprep.subr.mxu0 0.0
        %4091 = vmatpush1.msra.mxu0 0.0
        %4092 = vmatprep.subr.mxu0 0.0
        %4093 = vmatpush1.msra.mxu0 0.0
        %4094 = vmatprep.subr.mxu0 0.0
        %4095 = vmatpush1.msra.mxu0 0.0
        %4096 = vmatprep.mubr.f32.mxu0 0.0
        %4097 = vmatmul.mubr.f32.gmra.mrb[0].mxu0 %v4030
        %v4098 = vpop.f32.mrb[0].mxu0
        %v4099 = vadd.f32 0.0, %v4098
        %v4100 = vpop.f32.mrb[0].mxu0
        %4101 = vdwg.mxu0
        %v4104 = vsel %vm1054, %v4011, 0
        %4106 = vmatprep.subr.mxu0 0.0
        %4107 = vmatpush1.msra.mxu0 %v3925
        %4108 = vmatprep.subr.mxu0 0.0
        %4109 = vmatpush1.msra.mxu0 0.0
        %4110 = vmatprep.subr.mxu0 0.0
        %4111 = vmatpush1.msra.mxu0 0.0
        %4112 = vmatprep.subr.mxu0 0.0
        %4113 = vmatpush1.msra.mxu0 0.0
        %4114 = vmatprep.subr.mxu0 0.0
        %4115 = vmatpush1.msra.mxu0 0.0
        %4116 = vmatprep.subr.mxu0 0.0
        %4117 = vmatpush1.msra.mxu0 0.0
        %4118 = vmatprep.subr.mxu0 0.0
        %4119 = vmatpush1.msra.mxu0 0.0
        %4120 = vmatprep.subr.mxu0 0.0
        %4121 = vmatpush1.msra.mxu0 0.0
        %4122 = vmatprep.subr.mxu0 0.0
        %4123 = vmatpush1.msra.mxu0 0.0
        %4124 = vmatprep.subr.mxu0 0.0
        %4125 = vmatpush1.msra.mxu0 0.0
        %4126 = vmatprep.subr.mxu0 0.0
        %4127 = vmatpush1.msra.mxu0 0.0
        %4128 = vmatprep.subr.mxu0 0.0
        %4129 = vmatpush1.msra.mxu0 0.0
        %4130 = vmatprep.subr.mxu0 0.0
        %4131 = vmatpush1.msra.mxu0 0.0
        %4132 = vmatprep.subr.mxu0 0.0
        %4133 = vmatpush1.msra.mxu0 0.0
        %4134 = vmatprep.subr.mxu0 0.0
        %4135 = vmatpush1.msra.mxu0 0.0
        %4136 = vmatprep.subr.mxu0 0.0
        %4137 = vmatpush1.msra.mxu0 0.0
        %4138 = vmatprep.subr.mxu0 0.0
        %4139 = vmatpush1.msra.mxu0 0.0
        %4140 = vmatprep.subr.mxu0 0.0
        %4141 = vmatpush1.msra.mxu0 0.0
        %4142 = vmatprep.subr.mxu0 0.0
        %4143 = vmatpush1.msra.mxu0 0.0
        %4144 = vmatprep.subr.mxu0 0.0
        %4145 = vmatpush1.msra.mxu0 0.0
        %4146 = vmatprep.subr.mxu0 0.0
        %4147 = vmatpush1.msra.mxu0 0.0
        %4148 = vmatprep.subr.mxu0 0.0
        %4149 = vmatpush1.msra.mxu0 0.0
        %4150 = vmatprep.subr.mxu0 0.0
        %4151 = vmatpush1.msra.mxu0 0.0
        %4152 = vmatprep.subr.mxu0 0.0
        %4153 = vmatpush1.msra.mxu0 0.0
        %4154 = vmatprep.subr.mxu0 0.0
        %4155 = vmatpush1.msra.mxu0 0.0
        %4156 = vmatprep.subr.mxu0 0.0
        %4157 = vmatpush1.msra.mxu0 0.0
        %4158 = vmatprep.subr.mxu0 0.0
        %4159 = vmatpush1.msra.mxu0 0.0
        %4160 = vmatprep.subr.mxu0 0.0
        %4161 = vmatpush1.msra.mxu0 0.0
        %4162 = vmatprep.subr.mxu0 0.0
        %4163 = vmatpush1.msra.mxu0 0.0
        %4164 = vmatprep.subr.mxu0 0.0
        %4165 = vmatpush1.msra.mxu0 0.0
        %4166 = vmatprep.subr.mxu0 0.0
        %4167 = vmatpush1.msra.mxu0 0.0
        %4168 = vmatprep.subr.mxu0 0.0
        %4169 = vmatpush1.msra.mxu0 0.0
        %4170 = vmatprep.mubr.f32.mxu0 0.0
        %4171 = vmatmul.mubr.f32.gmra.mrb[0].mxu0 %v4104
        %v4172 = vpop.f32.mrb[0].mxu0
        %v4173 = vadd.f32 0.0, %v4172
        %v4174 = vpop.f32.mrb[0].mxu0
        %4175 = vdwg.mxu0
        %v4176 = vmul.f32 %v4015, %v1046
        %v4177 = vmul.f32 %v4017, %v1051
        %4180 = vrot.lane.b32.xlu0 %v4099, 24
        %v4181 = vpop.permute.xlu0 %4180
        %4182 = vrot.lane.b32.xlu0 %v4173, 24
        %v4183 = vpop.permute.xlu0 %4182
        %v4186 = vadd.f32 %v4176, %v4181
        %v4187 = vadd.f32 %v4177, %v4183
        %v4188 = vrcp.pop %v4026
        %v4189 = vmul.f32 %v4186, %v4188
        %v4190 = vrcp.pop %v4027
        %v4191 = vmul.f32 %v4187, %v4190
        %4194 = vrot.lane.b32.xlu0 %v4189, 40
        %v4195 = vpop.permute.xlu0 %4194
        %4196 = vrot.lane.b32.xlu0 %v4191, 40
        %v4197 = vpop.permute.xlu0 %4196
        %vm4200 = vcmask 589312
        %4201 = vst.msk [vmem:[#allocation2] sm:$0xff] %vm4200, %v4195
        %4202 = vst.msk [vmem:[#allocation2 + $0x10] sm:$0xff] %vm4200, %v4197
        %4203 = vrot.lane.b32.xlu0 %v529, 96
        %v4204 = vpop.permute.xlu0 %4203
        %v4205 = vsel %vm1054, %v4204, 0
        %4207 = vmatprep.subr.mxu0 0.0
        %4208 = vmatpush1.xpose.msra.mxu0 %v4205
        %4209 = vmatprep.subr.mxu0 0.0
        %4210 = vmatpush1.xpose.msra.mxu0 0.0
        %4211 = vmatprep.subr.mxu0 0.0
        %4212 = vmatpush1.xpose.msra.mxu0 0.0
        %4213 = vmatprep.subr.mxu0 0.0
        %4214 = vmatpush1.xpose.msra.mxu0 0.0
        %4215 = vmatprep.subr.mxu0 0.0
        %4216 = vmatpush1.xpose.msra.mxu0 0.0
        %4217 = vmatprep.subr.mxu0 0.0
        %4218 = vmatpush1.xpose.msra.mxu0 0.0
        %4219 = vmatprep.subr.mxu0 0.0
        %4220 = vmatpush1.xpose.msra.mxu0 0.0
        %4221 = vmatprep.subr.mxu0 0.0
        %4222 = vmatpush1.xpose.msra.mxu0 0.0
        %4223 = vmatprep.subr.mxu0 0.0
        %4224 = vmatpush1.xpose.msra.mxu0 0.0
        %4225 = vmatprep.subr.mxu0 0.0
        %4226 = vmatpush1.xpose.msra.mxu0 0.0
        %4227 = vmatprep.subr.mxu0 0.0
        %4228 = vmatpush1.xpose.msra.mxu0 0.0
        %4229 = vmatprep.subr.mxu0 0.0
        %4230 = vmatpush1.xpose.msra.mxu0 0.0
        %4231 = vmatprep.subr.mxu0 0.0
        %4232 = vmatpush1.xpose.msra.mxu0 0.0
        %4233 = vmatprep.subr.mxu0 0.0
        %4234 = vmatpush1.xpose.msra.mxu0 0.0
        %4235 = vmatprep.subr.mxu0 0.0
        %4236 = vmatpush1.xpose.msra.mxu0 0.0
        %4237 = vmatprep.subr.mxu0 0.0
        %4238 = vmatpush1.xpose.msra.mxu0 0.0
        %4239 = vmatprep.subr.mxu0 0.0
        %4240 = vmatpush1.xpose.msra.mxu0 0.0
        %4241 = vmatprep.subr.mxu0 0.0
        %4242 = vmatpush1.xpose.msra.mxu0 0.0
        %4243 = vmatprep.subr.mxu0 0.0
        %4244 = vmatpush1.xpose.msra.mxu0 0.0
        %4245 = vmatprep.subr.mxu0 0.0
        %4246 = vmatpush1.xpose.msra.mxu0 0.0
        %4247 = vmatprep.subr.mxu0 0.0
        %4248 = vmatpush1.xpose.msra.mxu0 0.0
        %4249 = vmatprep.subr.mxu0 0.0
        %4250 = vmatpush1.xpose.msra.mxu0 0.0
        %4251 = vmatprep.subr.mxu0 0.0
        %4252 = vmatpush1.xpose.msra.mxu0 0.0
        %4253 = vmatprep.subr.mxu0 0.0
        %4254 = vmatpush1.xpose.msra.mxu0 0.0
        %4255 = vmatprep.subr.mxu0 0.0
        %4256 = vmatpush1.xpose.msra.mxu0 0.0
        %4257 = vmatprep.subr.mxu0 0.0
        %4258 = vmatpush1.xpose.msra.mxu0 0.0
        %4259 = vmatprep.subr.mxu0 0.0
        %4260 = vmatpush1.xpose.msra.mxu0 0.0
        %4261 = vmatprep.subr.mxu0 0.0
        %4262 = vmatpush1.xpose.msra.mxu0 0.0
        %4263 = vmatprep.subr.mxu0 0.0
        %4264 = vmatpush1.xpose.msra.mxu0 0.0
        %4265 = vmatprep.subr.mxu0 0.0
        %4266 = vmatpush1.xpose.msra.mxu0 0.0
        %4267 = vmatprep.subr.mxu0 0.0
        %4268 = vmatpush1.xpose.msra.mxu0 0.0
        %4269 = vmatprep.subr.mxu0 0.0
        %4270 = vmatpush1.xpose.msra.mxu0 0.0
        %4271 = vmatprep.mubr.f32.mxu0 0.0
        %4272 = vmatmul.mubr.f32.gmra.mrb[0].mxu0 %v2454
        %v4273 = vpop.f32.mrb[0].mxu0
        %v4274 = vadd.f32 0.0, %v4273
        %v4275 = vpop.f32.mrb[0].mxu0
        %4276 = vdwg.mxu0
        %4277 = vrot.lane.b32.xlu0 %v530, 96
        %v4278 = vpop.permute.xlu0 %4277
        %v4279 = vsel %vm1054, %v4278, 0
        %4281 = vmatprep.subr.mxu0 0.0
        %4282 = vmatpush1.xpose.msra.mxu0 %v4279
        %4283 = vmatprep.subr.mxu0 0.0
        %4284 = vmatpush1.xpose.msra.mxu0 0.0
        %4285 = vmatprep.subr.mxu0 0.0
        %4286 = vmatpush1.xpose.msra.mxu0 0.0
        %4287 = vmatprep.subr.mxu0 0.0
        %4288 = vmatpush1.xpose.msra.mxu0 0.0
        %4289 = vmatprep.subr.mxu0 0.0
        %4290 = vmatpush1.xpose.msra.mxu0 0.0
        %4291 = vmatprep.subr.mxu0 0.0
        %4292 = vmatpush1.xpose.msra.mxu0 0.0
        %4293 = vmatprep.subr.mxu0 0.0
        %4294 = vmatpush1.xpose.msra.mxu0 0.0
        %4295 = vmatprep.subr.mxu0 0.0
        %4296 = vmatpush1.xpose.msra.mxu0 0.0
        %4297 = vmatprep.subr.mxu0 0.0
        %4298 = vmatpush1.xpose.msra.mxu0 0.0
        %4299 = vmatprep.subr.mxu0 0.0
        %4300 = vmatpush1.xpose.msra.mxu0 0.0
        %4301 = vmatprep.subr.mxu0 0.0
        %4302 = vmatpush1.xpose.msra.mxu0 0.0
        %4303 = vmatprep.subr.mxu0 0.0
        %4304 = vmatpush1.xpose.msra.mxu0 0.0
        %4305 = vmatprep.subr.mxu0 0.0
        %4306 = vmatpush1.xpose.msra.mxu0 0.0
        %4307 = vmatprep.subr.mxu0 0.0
        %4308 = vmatpush1.xpose.msra.mxu0 0.0
        %4309 = vmatprep.subr.mxu0 0.0
        %4310 = vmatpush1.xpose.msra.mxu0 0.0
        %4311 = vmatprep.subr.mxu0 0.0
        %4312 = vmatpush1.xpose.msra.mxu0 0.0
        %4313 = vmatprep.subr.mxu0 0.0
        %4314 = vmatpush1.xpose.msra.mxu0 0.0
        %4315 = vmatprep.subr.mxu0 0.0
        %4316 = vmatpush1.xpose.msra.mxu0 0.0
        %4317 = vmatprep.subr.mxu0 0.0
        %4318 = vmatpush1.xpose.msra.mxu0 0.0
        %4319 = vmatprep.subr.mxu0 0.0
        %4320 = vmatpush1.xpose.msra.mxu0 0.0
        %4321 = vmatprep.subr.mxu0 0.0
        %4322 = vmatpush1.xpose.msra.mxu0 0.0
        %4323 = vmatprep.subr.mxu0 0.0
        %4324 = vmatpush1.xpose.msra.mxu0 0.0
        %4325 = vmatprep.subr.mxu0 0.0
        %4326 = vmatpush1.xpose.msra.mxu0 0.0
        %4327 = vmatprep.subr.mxu0 0.0
        %4328 = vmatpush1.xpose.msra.mxu0 0.0
        %4329 = vmatprep.subr.mxu0 0.0
        %4330 = vmatpush1.xpose.msra.mxu0 0.0
        %4331 = vmatprep.subr.mxu0 0.0
        %4332 = vmatpush1.xpose.msra.mxu0 0.0
        %4333 = vmatprep.subr.mxu0 0.0
        %4334 = vmatpush1.xpose.msra.mxu0 0.0
        %4335 = vmatprep.subr.mxu0 0.0
        %4336 = vmatpush1.xpose.msra.mxu0 0.0
        %4337 = vmatprep.subr.mxu0 0.0
        %4338 = vmatpush1.xpose.msra.mxu0 0.0
        %4339 = vmatprep.subr.mxu0 0.0
        %4340 = vmatpush1.xpose.msra.mxu0 0.0
        %4341 = vmatprep.subr.mxu0 0.0
        %4342 = vmatpush1.xpose.msra.mxu0 0.0
        %4343 = vmatprep.subr.mxu0 0.0
        %4344 = vmatpush1.xpose.msra.mxu0 0.0
        %4345 = vmatprep.mubr.f32.mxu0 0.0
        %4346 = vmatmul.mubr.f32.gmra.mrb[0].mxu0 %v2532
        %v4347 = vpop.f32.mrb[0].mxu0
        %v4348 = vadd.f32 0.0, %v4347
        %v4349 = vpop.f32.mrb[0].mxu0
        %4350 = vdwg.mxu0
        %v4351 = vsel %vm1054, %v4274, -inf
        %4352 = vmax.xlane.f32.xlu0 %v4351
        %v4353 = vpop.xlane.xlu0 %4352
        %v4354 = vsel %vm1054, %v4348, -inf
        %4355 = vmax.xlane.f32.xlu0 %v4354
        %v4356 = vpop.xlane.xlu0 %4355
        %v4357 = vmax.f32 %v836, %v4353
        %v4358 = vmax.f32 %v839, %v4356
        %v4359 = vsub.f32 %v4274, %v4357
        %v4360 = vsub.f32 %v4348, %v4358
        %v4361 = vmul.f32 %v4359, 1.442695
        %v4362 = vpow.pop %v4361
        %v4363 = vmul.f32 %v4360, 1.442695
        %v4364 = vpow.pop %v4363
        %v4365 = vsub.f32 %v836, %v4357
        %v4366 = vsub.f32 %v839, %v4358
        %v4367 = vmul.f32 %v4365, 1.442695
        %v4368 = vpow.pop %v4367
        %v4369 = vmul.f32 %v4366, 1.442695
        %v4370 = vpow.pop %v4369
        %v4371 = vmul.f32 %v4368, %v848
        %v4372 = vmul.f32 %v4370, %v851
        %v4373 = vsel %vm1054, %v4362, 0.0
        %4374 = vadd.xlane.f32.xlu0 %v4373
        %v4375 = vpop.xlane.xlu0 %4374
        %v4376 = vsel %vm1054, %v4364, 0.0
        %4377 = vadd.xlane.f32.xlu0 %v4376
        %v4378 = vpop.xlane.xlu0 %4377
        %v4379 = vadd.f32 %v4371, %v4375
        %v4380 = vadd.f32 %v4372, %v4378
        %v4383 = vsel %vm1054, %v4362, 0
        %4385 = vmatprep.subr.mxu0 0.0
        %4386 = vmatpush1.msra.mxu0 %v4204
        %4387 = vmatprep.subr.mxu0 0.0
        %4388 = vmatpush1.msra.mxu0 0.0
        %4389 = vmatprep.subr.mxu0 0.0
        %4390 = vmatpush1.msra.mxu0 0.0
        %4391 = vmatprep.subr.mxu0 0.0
        %4392 = vmatpush1.msra.mxu0 0.0
        %4393 = vmatprep.subr.mxu0 0.0
        %4394 = vmatpush1.msra.mxu0 0.0
        %4395 = vmatprep.subr.mxu0 0.0
        %4396 = vmatpush1.msra.mxu0 0.0
        %4397 = vmatprep.subr.mxu0 0.0
        %4398 = vmatpush1.msra.mxu0 0.0
        %4399 = vmatprep.subr.mxu0 0.0
        %4400 = vmatpush1.msra.mxu0 0.0
        %4401 = vmatprep.subr.mxu0 0.0
        %4402 = vmatpush1.msra.mxu0 0.0
        %4403 = vmatprep.subr.mxu0 0.0
        %4404 = vmatpush1.msra.mxu0 0.0
        %4405 = vmatprep.subr.mxu0 0.0
        %4406 = vmatpush1.msra.mxu0 0.0
        %4407 = vmatprep.subr.mxu0 0.0
        %4408 = vmatpush1.msra.mxu0 0.0
        %4409 = vmatprep.subr.mxu0 0.0
        %4410 = vmatpush1.msra.mxu0 0.0
        %4411 = vmatprep.subr.mxu0 0.0
        %4412 = vmatpush1.msra.mxu0 0.0
        %4413 = vmatprep.subr.mxu0 0.0
        %4414 = vmatpush1.msra.mxu0 0.0
        %4415 = vmatprep.subr.mxu0 0.0
        %4416 = vmatpush1.msra.mxu0 0.0
        %4417 = vmatprep.subr.mxu0 0.0
        %4418 = vmatpush1.msra.mxu0 0.0
        %4419 = vmatprep.subr.mxu0 0.0
        %4420 = vmatpush1.msra.mxu0 0.0
        %4421 = vmatprep.subr.mxu0 0.0
        %4422 = vmatpush1.msra.mxu0 0.0
        %4423 = vmatprep.subr.mxu0 0.0
        %4424 = vmatpush1.msra.mxu0 0.0
        %4425 = vmatprep.subr.mxu0 0.0
        %4426 = vmatpush1.msra.mxu0 0.0
        %4427 = vmatprep.subr.mxu0 0.0
        %4428 = vmatpush1.msra.mxu0 0.0
        %4429 = vmatprep.subr.mxu0 0.0
        %4430 = vmatpush1.msra.mxu0 0.0
        %4431 = vmatprep.subr.mxu0 0.0
        %4432 = vmatpush1.msra.mxu0 0.0
        %4433 = vmatprep.subr.mxu0 0.0
        %4434 = vmatpush1.msra.mxu0 0.0
        %4435 = vmatprep.subr.mxu0 0.0
        %4436 = vmatpush1.msra.mxu0 0.0
        %4437 = vmatprep.subr.mxu0 0.0
        %4438 = vmatpush1.msra.mxu0 0.0
        %4439 = vmatprep.subr.mxu0 0.0
        %4440 = vmatpush1.msra.mxu0 0.0
        %4441 = vmatprep.subr.mxu0 0.0
        %4442 = vmatpush1.msra.mxu0 0.0
        %4443 = vmatprep.subr.mxu0 0.0
        %4444 = vmatpush1.msra.mxu0 0.0
        %4445 = vmatprep.subr.mxu0 0.0
        %4446 = vmatpush1.msra.mxu0 0.0
        %4447 = vmatprep.subr.mxu0 0.0
        %4448 = vmatpush1.msra.mxu0 0.0
        %4449 = vmatprep.mubr.f32.mxu0 0.0
        %4450 = vmatmul.mubr.f32.gmra.mrb[0].mxu0 %v4383
        %v4451 = vpop.f32.mrb[0].mxu0
        %v4452 = vadd.f32 0.0, %v4451
        %v4453 = vpop.f32.mrb[0].mxu0
        %4454 = vdwg.mxu0
        %v4457 = vsel %vm1054, %v4364, 0
        %4459 = vmatprep.subr.mxu0 0.0
        %4460 = vmatpush1.msra.mxu0 %v4278
        %4461 = vmatprep.subr.mxu0 0.0
        %4462 = vmatpush1.msra.mxu0 0.0
        %4463 = vmatprep.subr.mxu0 0.0
        %4464 = vmatpush1.msra.mxu0 0.0
        %4465 = vmatprep.subr.mxu0 0.0
        %4466 = vmatpush1.msra.mxu0 0.0
        %4467 = vmatprep.subr.mxu0 0.0
        %4468 = vmatpush1.msra.mxu0 0.0
        %4469 = vmatprep.subr.mxu0 0.0
        %4470 = vmatpush1.msra.mxu0 0.0
        %4471 = vmatprep.subr.mxu0 0.0
        %4472 = vmatpush1.msra.mxu0 0.0
        %4473 = vmatprep.subr.mxu0 0.0
        %4474 = vmatpush1.msra.mxu0 0.0
        %4475 = vmatprep.subr.mxu0 0.0
        %4476 = vmatpush1.msra.mxu0 0.0
        %4477 = vmatprep.subr.mxu0 0.0
        %4478 = vmatpush1.msra.mxu0 0.0
        %4479 = vmatprep.subr.mxu0 0.0
        %4480 = vmatpush1.msra.mxu0 0.0
        %4481 = vmatprep.subr.mxu0 0.0
        %4482 = vmatpush1.msra.mxu0 0.0
        %4483 = vmatprep.subr.mxu0 0.0
        %4484 = vmatpush1.msra.mxu0 0.0
        %4485 = vmatprep.subr.mxu0 0.0
        %4486 = vmatpush1.msra.mxu0 0.0
        %4487 = vmatprep.subr.mxu0 0.0
        %4488 = vmatpush1.msra.mxu0 0.0
        %4489 = vmatprep.subr.mxu0 0.0
        %4490 = vmatpush1.msra.mxu0 0.0
        %4491 = vmatprep.subr.mxu0 0.0
        %4492 = vmatpush1.msra.mxu0 0.0
        %4493 = vmatprep.subr.mxu0 0.0
        %4494 = vmatpush1.msra.mxu0 0.0
        %4495 = vmatprep.subr.mxu0 0.0
        %4496 = vmatpush1.msra.mxu0 0.0
        %4497 = vmatprep.subr.mxu0 0.0
        %4498 = vmatpush1.msra.mxu0 0.0
        %4499 = vmatprep.subr.mxu0 0.0
        %4500 = vmatpush1.msra.mxu0 0.0
        %4501 = vmatprep.subr.mxu0 0.0
        %4502 = vmatpush1.msra.mxu0 0.0
        %4503 = vmatprep.subr.mxu0 0.0
        %4504 = vmatpush1.msra.mxu0 0.0
        %4505 = vmatprep.subr.mxu0 0.0
        %4506 = vmatpush1.msra.mxu0 0.0
        %4507 = vmatprep.subr.mxu0 0.0
        %4508 = vmatpush1.msra.mxu0 0.0
        %4509 = vmatprep.subr.mxu0 0.0
        %4510 = vmatpush1.msra.mxu0 0.0
        %4511 = vmatprep.subr.mxu0 0.0
        %4512 = vmatpush1.msra.mxu0 0.0
        %4513 = vmatprep.subr.mxu0 0.0
        %4514 = vmatpush1.msra.mxu0 0.0
        %4515 = vmatprep.subr.mxu0 0.0
        %4516 = vmatpush1.msra.mxu0 0.0
        %4517 = vmatprep.subr.mxu0 0.0
        %4518 = vmatpush1.msra.mxu0 0.0
        %4519 = vmatprep.subr.mxu0 0.0
        %4520 = vmatpush1.msra.mxu0 0.0
        %4521 = vmatprep.subr.mxu0 0.0
        %4522 = vmatpush1.msra.mxu0 0.0
        %4523 = vmatprep.mubr.f32.mxu0 0.0
        %4524 = vmatmul.mubr.f32.gmra.mrb[0].mxu0 %v4457
        %v4525 = vpop.f32.mrb[0].mxu0
        %v4526 = vadd.f32 0.0, %v4525
        %v4527 = vpop.f32.mrb[0].mxu0
        %4528 = vdwg.mxu0
        %v4529 = vmul.f32 %v4368, %v1046
        %v4530 = vmul.f32 %v4370, %v1051
        %4533 = vrot.lane.b32.xlu0 %v4452, 32
        %v4534 = vpop.permute.xlu0 %4533
        %4535 = vrot.lane.b32.xlu0 %v4526, 32
        %v4536 = vpop.permute.xlu0 %4535
        %v4539 = vadd.f32 %v4529, %v4534
        %v4540 = vadd.f32 %v4530, %v4536
        %v4541 = vrcp.pop %v4379
        %v4542 = vmul.f32 %v4539, %v4541
        %v4543 = vrcp.pop %v4380
        %v4544 = vmul.f32 %v4540, %v4543
        %4547 = vrot.lane.b32.xlu0 %v4542, 40
        %v4548 = vpop.permute.xlu0 %4547
        %4549 = vrot.lane.b32.xlu0 %v4544, 40
        %v4550 = vpop.permute.xlu0 %4549
        %vm4553 = vcmask 654912
        %4554 = vst.msk [vmem:[#allocation2] sm:$0xff] %vm4553, %v4548
        %4555 = vst.msk [vmem:[#allocation2 + $0x10] sm:$0xff] %vm4553, %v4550
        %v4557 = vsel %vm1054, %v531, 0
        %4559 = vmatprep.subr.mxu0 0.0
        %4560 = vmatpush1.xpose.msra.mxu0 %v4557
        %4561 = vmatprep.subr.mxu0 0.0
        %4562 = vmatpush1.xpose.msra.mxu0 0.0
        %4563 = vmatprep.subr.mxu0 0.0
        %4564 = vmatpush1.xpose.msra.mxu0 0.0
        %4565 = vmatprep.subr.mxu0 0.0
        %4566 = vmatpush1.xpose.msra.mxu0 0.0
        %4567 = vmatprep.subr.mxu0 0.0
        %4568 = vmatpush1.xpose.msra.mxu0 0.0
        %4569 = vmatprep.subr.mxu0 0.0
        %4570 = vmatpush1.xpose.msra.mxu0 0.0
        %4571 = vmatprep.subr.mxu0 0.0
        %4572 = vmatpush1.xpose.msra.mxu0 0.0
        %4573 = vmatprep.subr.mxu0 0.0
        %4574 = vmatpush1.xpose.msra.mxu0 0.0
        %4575 = vmatprep.subr.mxu0 0.0
        %4576 = vmatpush1.xpose.msra.mxu0 0.0
        %4577 = vmatprep.subr.mxu0 0.0
        %4578 = vmatpush1.xpose.msra.mxu0 0.0
        %4579 = vmatprep.subr.mxu0 0.0
        %4580 = vmatpush1.xpose.msra.mxu0 0.0
        %4581 = vmatprep.subr.mxu0 0.0
        %4582 = vmatpush1.xpose.msra.mxu0 0.0
        %4583 = vmatprep.subr.mxu0 0.0
        %4584 = vmatpush1.xpose.msra.mxu0 0.0
        %4585 = vmatprep.subr.mxu0 0.0
        %4586 = vmatpush1.xpose.msra.mxu0 0.0
        %4587 = vmatprep.subr.mxu0 0.0
        %4588 = vmatpush1.xpose.msra.mxu0 0.0
        %4589 = vmatprep.subr.mxu0 0.0
        %4590 = vmatpush1.xpose.msra.mxu0 0.0
        %4591 = vmatprep.subr.mxu0 0.0
        %4592 = vmatpush1.xpose.msra.mxu0 0.0
        %4593 = vmatprep.subr.mxu0 0.0
        %4594 = vmatpush1.xpose.msra.mxu0 0.0
        %4595 = vmatprep.subr.mxu0 0.0
        %4596 = vmatpush1.xpose.msra.mxu0 0.0
        %4597 = vmatprep.subr.mxu0 0.0
        %4598 = vmatpush1.xpose.msra.mxu0 0.0
        %4599 = vmatprep.subr.mxu0 0.0
        %4600 = vmatpush1.xpose.msra.mxu0 0.0
        %4601 = vmatprep.subr.mxu0 0.0
        %4602 = vmatpush1.xpose.msra.mxu0 0.0
        %4603 = vmatprep.subr.mxu0 0.0
        %4604 = vmatpush1.xpose.msra.mxu0 0.0
        %4605 = vmatprep.subr.mxu0 0.0
        %4606 = vmatpush1.xpose.msra.mxu0 0.0
        %4607 = vmatprep.subr.mxu0 0.0
        %4608 = vmatpush1.xpose.msra.mxu0 0.0
        %4609 = vmatprep.subr.mxu0 0.0
        %4610 = vmatpush1.xpose.msra.mxu0 0.0
        %4611 = vmatprep.subr.mxu0 0.0
        %4612 = vmatpush1.xpose.msra.mxu0 0.0
        %4613 = vmatprep.subr.mxu0 0.0
        %4614 = vmatpush1.xpose.msra.mxu0 0.0
        %4615 = vmatprep.subr.mxu0 0.0
        %4616 = vmatpush1.xpose.msra.mxu0 0.0
        %4617 = vmatprep.subr.mxu0 0.0
        %4618 = vmatpush1.xpose.msra.mxu0 0.0
        %4619 = vmatprep.subr.mxu0 0.0
        %4620 = vmatpush1.xpose.msra.mxu0 0.0
        %4621 = vmatprep.subr.mxu0 0.0
        %4622 = vmatpush1.xpose.msra.mxu0 0.0
        %4623 = vmatprep.mubr.f32.mxu0 0.0
        %4624 = vmatmul.mubr.f32.gmra.mrb[0].mxu0 %v1055
        %v4625 = vpop.f32.mrb[0].mxu0
        %v4626 = vadd.f32 0.0, %v4625
        %v4627 = vpop.f32.mrb[0].mxu0
        %4628 = vdwg.mxu0
        %v4630 = vsel %vm1054, %v532, 0
        %4632 = vmatprep.subr.mxu0 0.0
        %4633 = vmatpush1.xpose.msra.mxu0 %v4630
        %4634 = vmatprep.subr.mxu0 0.0
        %4635 = vmatpush1.xpose.msra.mxu0 0.0
        %4636 = vmatprep.subr.mxu0 0.0
        %4637 = vmatpush1.xpose.msra.mxu0 0.0
        %4638 = vmatprep.subr.mxu0 0.0
        %4639 = vmatpush1.xpose.msra.mxu0 0.0
        %4640 = vmatprep.subr.mxu0 0.0
        %4641 = vmatpush1.xpose.msra.mxu0 0.0
        %4642 = vmatprep.subr.mxu0 0.0
        %4643 = vmatpush1.xpose.msra.mxu0 0.0
        %4644 = vmatprep.subr.mxu0 0.0
        %4645 = vmatpush1.xpose.msra.mxu0 0.0
        %4646 = vmatprep.subr.mxu0 0.0
        %4647 = vmatpush1.xpose.msra.mxu0 0.0
        %4648 = vmatprep.subr.mxu0 0.0
        %4649 = vmatpush1.xpose.msra.mxu0 0.0
        %4650 = vmatprep.subr.mxu0 0.0
        %4651 = vmatpush1.xpose.msra.mxu0 0.0
        %4652 = vmatprep.subr.mxu0 0.0
        %4653 = vmatpush1.xpose.msra.mxu0 0.0
        %4654 = vmatprep.subr.mxu0 0.0
        %4655 = vmatpush1.xpose.msra.mxu0 0.0
        %4656 = vmatprep.subr.mxu0 0.0
        %4657 = vmatpush1.xpose.msra.mxu0 0.0
        %4658 = vmatprep.subr.mxu0 0.0
        %4659 = vmatpush1.xpose.msra.mxu0 0.0
        %4660 = vmatprep.subr.mxu0 0.0
        %4661 = vmatpush1.xpose.msra.mxu0 0.0
        %4662 = vmatprep.subr.mxu0 0.0
        %4663 = vmatpush1.xpose.msra.mxu0 0.0
        %4664 = vmatprep.subr.mxu0 0.0
        %4665 = vmatpush1.xpose.msra.mxu0 0.0
        %4666 = vmatprep.subr.mxu0 0.0
        %4667 = vmatpush1.xpose.msra.mxu0 0.0
        %4668 = vmatprep.subr.mxu0 0.0
        %4669 = vmatpush1.xpose.msra.mxu0 0.0
        %4670 = vmatprep.subr.mxu0 0.0
        %4671 = vmatpush1.xpose.msra.mxu0 0.0
        %4672 = vmatprep.subr.mxu0 0.0
        %4673 = vmatpush1.xpose.msra.mxu0 0.0
        %4674 = vmatprep.subr.mxu0 0.0
        %4675 = vmatpush1.xpose.msra.mxu0 0.0
        %4676 = vmatprep.subr.mxu0 0.0
        %4677 = vmatpush1.xpose.msra.mxu0 0.0
        %4678 = vmatprep.subr.mxu0 0.0
        %4679 = vmatpush1.xpose.msra.mxu0 0.0
        %4680 = vmatprep.subr.mxu0 0.0
        %4681 = vmatpush1.xpose.msra.mxu0 0.0
        %4682 = vmatprep.subr.mxu0 0.0
        %4683 = vmatpush1.xpose.msra.mxu0 0.0
        %4684 = vmatprep.subr.mxu0 0.0
        %4685 = vmatpush1.xpose.msra.mxu0 0.0
        %4686 = vmatprep.subr.mxu0 0.0
        %4687 = vmatpush1.xpose.msra.mxu0 0.0
        %4688 = vmatprep.subr.mxu0 0.0
        %4689 = vmatpush1.xpose.msra.mxu0 0.0
        %4690 = vmatprep.subr.mxu0 0.0
        %4691 = vmatpush1.xpose.msra.mxu0 0.0
        %4692 = vmatprep.subr.mxu0 0.0
        %4693 = vmatpush1.xpose.msra.mxu0 0.0
        %4694 = vmatprep.subr.mxu0 0.0
        %4695 = vmatpush1.xpose.msra.mxu0 0.0
        %4696 = vmatprep.mubr.f32.mxu0 0.0
        %4697 = vmatmul.mubr.f32.gmra.mrb[0].mxu0 %v1130
        %v4698 = vpop.f32.mrb[0].mxu0
        %v4699 = vadd.f32 0.0, %v4698
        %v4700 = vpop.f32.mrb[0].mxu0
        %4701 = vdwg.mxu0
        %v4702 = vsel %vm1054, %v4626, -inf
        %4703 = vmax.xlane.f32.xlu0 %v4702
        %v4704 = vpop.xlane.xlu0 %4703
        %v4705 = vsel %vm1054, %v4699, -inf
        %4706 = vmax.xlane.f32.xlu0 %v4705
        %v4707 = vpop.xlane.xlu0 %4706
        %v4708 = vmax.f32 %v747, %v4704
        %v4709 = vmax.f32 %v750, %v4707
        %v4710 = vsub.f32 %v4626, %v4708
        %v4711 = vsub.f32 %v4699, %v4709
        %v4712 = vmul.f32 %v4710, 1.442695
        %v4713 = vpow.pop %v4712
        %v4714 = vmul.f32 %v4711, 1.442695
        %v4715 = vpow.pop %v4714
        %v4716 = vsub.f32 %v747, %v4708
        %v4717 = vsub.f32 %v750, %v4709
        %v4718 = vmul.f32 %v4716, 1.442695
        %v4719 = vpow.pop %v4718
        %v4720 = vmul.f32 %v4717, 1.442695
        %v4721 = vpow.pop %v4720
        %v4722 = vmul.f32 %v4719, %v759
        %v4723 = vmul.f32 %v4721, %v762
        %v4724 = vsel %vm1054, %v4713, 0.0
        %4725 = vadd.xlane.f32.xlu0 %v4724
        %v4726 = vpop.xlane.xlu0 %4725
        %v4727 = vsel %vm1054, %v4715, 0.0
        %4728 = vadd.xlane.f32.xlu0 %v4727
        %v4729 = vpop.xlane.xlu0 %4728
        %v4730 = vadd.f32 %v4722, %v4726
        %v4731 = vadd.f32 %v4723, %v4729
        %v4733 = vsel %vm1054, %v4713, 0
        %4735 = vmatprep.subr.mxu0 0.0
        %4736 = vmatpush1.msra.mxu0 %v531
        %4737 = vmatprep.subr.mxu0 0.0
        %4738 = vmatpush1.msra.mxu0 0.0
        %4739 = vmatprep.subr.mxu0 0.0
        %4740 = vmatpush1.msra.mxu0 0.0
        %4741 = vmatprep.subr.mxu0 0.0
        %4742 = vmatpush1.msra.mxu0 0.0
        %4743 = vmatprep.subr.mxu0 0.0
        %4744 = vmatpush1.msra.mxu0 0.0
        %4745 = vmatprep.subr.mxu0 0.0
        %4746 = vmatpush1.msra.mxu0 0.0
        %4747 = vmatprep.subr.mxu0 0.0
        %4748 = vmatpush1.msra.mxu0 0.0
        %4749 = vmatprep.subr.mxu0 0.0
        %4750 = vmatpush1.msra.mxu0 0.0
        %4751 = vmatprep.subr.mxu0 0.0
        %4752 = vmatpush1.msra.mxu0 0.0
        %4753 = vmatprep.subr.mxu0 0.0
        %4754 = vmatpush1.msra.mxu0 0.0
        %4755 = vmatprep.subr.mxu0 0.0
        %4756 = vmatpush1.msra.mxu0 0.0
        %4757 = vmatprep.subr.mxu0 0.0
        %4758 = vmatpush1.msra.mxu0 0.0
        %4759 = vmatprep.subr.mxu0 0.0
        %4760 = vmatpush1.msra.mxu0 0.0
        %4761 = vmatprep.subr.mxu0 0.0
        %4762 = vmatpush1.msra.mxu0 0.0
        %4763 = vmatprep.subr.mxu0 0.0
        %4764 = vmatpush1.msra.mxu0 0.0
        %4765 = vmatprep.subr.mxu0 0.0
        %4766 = vmatpush1.msra.mxu0 0.0
        %4767 = vmatprep.subr.mxu0 0.0
        %4768 = vmatpush1.msra.mxu0 0.0
        %4769 = vmatprep.subr.mxu0 0.0
        %4770 = vmatpush1.msra.mxu0 0.0
        %4771 = vmatprep.subr.mxu0 0.0
        %4772 = vmatpush1.msra.mxu0 0.0
        %4773 = vmatprep.subr.mxu0 0.0
        %4774 = vmatpush1.msra.mxu0 0.0
        %4775 = vmatprep.subr.mxu0 0.0
        %4776 = vmatpush1.msra.mxu0 0.0
        %4777 = vmatprep.subr.mxu0 0.0
        %4778 = vmatpush1.msra.mxu0 0.0
        %4779 = vmatprep.subr.mxu0 0.0
        %4780 = vmatpush1.msra.mxu0 0.0
        %4781 = vmatprep.subr.mxu0 0.0
        %4782 = vmatpush1.msra.mxu0 0.0
        %4783 = vmatprep.subr.mxu0 0.0
        %4784 = vmatpush1.msra.mxu0 0.0
        %4785 = vmatprep.subr.mxu0 0.0
        %4786 = vmatpush1.msra.mxu0 0.0
        %4787 = vmatprep.subr.mxu0 0.0
        %4788 = vmatpush1.msra.mxu0 0.0
        %4789 = vmatprep.subr.mxu0 0.0
        %4790 = vmatpush1.msra.mxu0 0.0
        %4791 = vmatprep.subr.mxu0 0.0
        %4792 = vmatpush1.msra.mxu0 0.0
        %4793 = vmatprep.subr.mxu0 0.0
        %4794 = vmatpush1.msra.mxu0 0.0
        %4795 = vmatprep.subr.mxu0 0.0
        %4796 = vmatpush1.msra.mxu0 0.0
        %4797 = vmatprep.subr.mxu0 0.0
        %4798 = vmatpush1.msra.mxu0 0.0
        %4799 = vmatprep.mubr.f32.mxu0 0.0
        %4800 = vmatmul.mubr.f32.gmra.mrb[0].mxu0 %v4733
        %v4801 = vpop.f32.mrb[0].mxu0
        %v4802 = vadd.f32 0.0, %v4801
        %v4803 = vpop.f32.mrb[0].mxu0
        %4804 = vdwg.mxu0
        %v4806 = vsel %vm1054, %v4715, 0
        %4808 = vmatprep.subr.mxu0 0.0
        %4809 = vmatpush1.msra.mxu0 %v532
        %4810 = vmatprep.subr.mxu0 0.0
        %4811 = vmatpush1.msra.mxu0 0.0
        %4812 = vmatprep.subr.mxu0 0.0
        %4813 = vmatpush1.msra.mxu0 0.0
        %4814 = vmatprep.subr.mxu0 0.0
        %4815 = vmatpush1.msra.mxu0 0.0
        %4816 = vmatprep.subr.mxu0 0.0
        %4817 = vmatpush1.msra.mxu0 0.0
        %4818 = vmatprep.subr.mxu0 0.0
        %4819 = vmatpush1.msra.mxu0 0.0
        %4820 = vmatprep.subr.mxu0 0.0
        %4821 = vmatpush1.msra.mxu0 0.0
        %4822 = vmatprep.subr.mxu0 0.0
        %4823 = vmatpush1.msra.mxu0 0.0
        %4824 = vmatprep.subr.mxu0 0.0
        %4825 = vmatpush1.msra.mxu0 0.0
        %4826 = vmatprep.subr.mxu0 0.0
        %4827 = vmatpush1.msra.mxu0 0.0
        %4828 = vmatprep.subr.mxu0 0.0
        %4829 = vmatpush1.msra.mxu0 0.0
        %4830 = vmatprep.subr.mxu0 0.0
        %4831 = vmatpush1.msra.mxu0 0.0
        %4832 = vmatprep.subr.mxu0 0.0
        %4833 = vmatpush1.msra.mxu0 0.0
        %4834 = vmatprep.subr.mxu0 0.0
        %4835 = vmatpush1.msra.mxu0 0.0
        %4836 = vmatprep.subr.mxu0 0.0
        %4837 = vmatpush1.msra.mxu0 0.0
        %4838 = vmatprep.subr.mxu0 0.0
        %4839 = vmatpush1.msra.mxu0 0.0
        %4840 = vmatprep.subr.mxu0 0.0
        %4841 = vmatpush1.msra.mxu0 0.0
        %4842 = vmatprep.subr.mxu0 0.0
        %4843 = vmatpush1.msra.mxu0 0.0
        %4844 = vmatprep.subr.mxu0 0.0
        %4845 = vmatpush1.msra.mxu0 0.0
        %4846 = vmatprep.subr.mxu0 0.0
        %4847 = vmatpush1.msra.mxu0 0.0
        %4848 = vmatprep.subr.mxu0 0.0
        %4849 = vmatpush1.msra.mxu0 0.0
        %4850 = vmatprep.subr.mxu0 0.0
        %4851 = vmatpush1.msra.mxu0 0.0
        %4852 = vmatprep.subr.mxu0 0.0
        %4853 = vmatpush1.msra.mxu0 0.0
        %4854 = vmatprep.subr.mxu0 0.0
        %4855 = vmatpush1.msra.mxu0 0.0
        %4856 = vmatprep.subr.mxu0 0.0
        %4857 = vmatpush1.msra.mxu0 0.0
        %4858 = vmatprep.subr.mxu0 0.0
        %4859 = vmatpush1.msra.mxu0 0.0
        %4860 = vmatprep.subr.mxu0 0.0
        %4861 = vmatpush1.msra.mxu0 0.0
        %4862 = vmatprep.subr.mxu0 0.0
        %4863 = vmatpush1.msra.mxu0 0.0
        %4864 = vmatprep.subr.mxu0 0.0
        %4865 = vmatpush1.msra.mxu0 0.0
        %4866 = vmatprep.subr.mxu0 0.0
        %4867 = vmatpush1.msra.mxu0 0.0
        %4868 = vmatprep.subr.mxu0 0.0
        %4869 = vmatpush1.msra.mxu0 0.0
        %4870 = vmatprep.subr.mxu0 0.0
        %4871 = vmatpush1.msra.mxu0 0.0
        %4872 = vmatprep.mubr.f32.mxu0 0.0
        %4873 = vmatmul.mubr.f32.gmra.mrb[0].mxu0 %v4806
        %v4874 = vpop.f32.mrb[0].mxu0
        %v4875 = vadd.f32 0.0, %v4874
        %v4876 = vpop.f32.mrb[0].mxu0
        %4877 = vdwg.mxu0
        %v4878 = vmul.f32 %v4719, %v1046
        %v4879 = vmul.f32 %v4721, %v1051
        %v4880 = vadd.f32 %v4878, %v4802
        %v4881 = vadd.f32 %v4879, %v4875
        %v4882 = vrcp.pop %v4730
        %v4883 = vmul.f32 %v4880, %v4882
        %v4884 = vrcp.pop %v4731
        %v4885 = vmul.f32 %v4881, %v4884
        %4888 = vrot.lane.b32.xlu0 %v4883, 80
        %v4889 = vpop.permute.xlu0 %4888
        %4890 = vrot.lane.b32.xlu0 %v4885, 80
        %v4891 = vpop.permute.xlu0 %4890
        %vm4894 = vcmask 720512
        %4895 = vst.msk [vmem:[#allocation2] sm:$0xff] %vm4894, %v4889
        %4896 = vst.msk [vmem:[#allocation2 + $0x10] sm:$0xff] %vm4894, %v4891
        %4897 = vrot.lane.b32.xlu0 %v531, 120
        %v4898 = vpop.permute.xlu0 %4897
        %v4899 = vsel %vm1054, %v4898, 0
        %4901 = vmatprep.subr.mxu0 0.0
        %4902 = vmatpush1.xpose.msra.mxu0 %v4899
        %4903 = vmatprep.subr.mxu0 0.0
        %4904 = vmatpush1.xpose.msra.mxu0 0.0
        %4905 = vmatprep.subr.mxu0 0.0
        %4906 = vmatpush1.xpose.msra.mxu0 0.0
        %4907 = vmatprep.subr.mxu0 0.0
        %4908 = vmatpush1.xpose.msra.mxu0 0.0
        %4909 = vmatprep.subr.mxu0 0.0
        %4910 = vmatpush1.xpose.msra.mxu0 0.0
        %4911 = vmatprep.subr.mxu0 0.0
        %4912 = vmatpush1.xpose.msra.mxu0 0.0
        %4913 = vmatprep.subr.mxu0 0.0
        %4914 = vmatpush1.xpose.msra.mxu0 0.0
        %4915 = vmatprep.subr.mxu0 0.0
        %4916 = vmatpush1.xpose.msra.mxu0 0.0
        %4917 = vmatprep.subr.mxu0 0.0
        %4918 = vmatpush1.xpose.msra.mxu0 0.0
        %4919 = vmatprep.subr.mxu0 0.0
        %4920 = vmatpush1.xpose.msra.mxu0 0.0
        %4921 = vmatprep.subr.mxu0 0.0
        %4922 = vmatpush1.xpose.msra.mxu0 0.0
        %4923 = vmatprep.subr.mxu0 0.0
        %4924 = vmatpush1.xpose.msra.mxu0 0.0
        %4925 = vmatprep.subr.mxu0 0.0
        %4926 = vmatpush1.xpose.msra.mxu0 0.0
        %4927 = vmatprep.subr.mxu0 0.0
        %4928 = vmatpush1.xpose.msra.mxu0 0.0
        %4929 = vmatprep.subr.mxu0 0.0
        %4930 = vmatpush1.xpose.msra.mxu0 0.0
        %4931 = vmatprep.subr.mxu0 0.0
        %4932 = vmatpush1.xpose.msra.mxu0 0.0
        %4933 = vmatprep.subr.mxu0 0.0
        %4934 = vmatpush1.xpose.msra.mxu0 0.0
        %4935 = vmatprep.subr.mxu0 0.0
        %4936 = vmatpush1.xpose.msra.mxu0 0.0
        %4937 = vmatprep.subr.mxu0 0.0
        %4938 = vmatpush1.xpose.msra.mxu0 0.0
        %4939 = vmatprep.subr.mxu0 0.0
        %4940 = vmatpush1.xpose.msra.mxu0 0.0
        %4941 = vmatprep.subr.mxu0 0.0
        %4942 = vmatpush1.xpose.msra.mxu0 0.0
        %4943 = vmatprep.subr.mxu0 0.0
        %4944 = vmatpush1.xpose.msra.mxu0 0.0
        %4945 = vmatprep.subr.mxu0 0.0
        %4946 = vmatpush1.xpose.msra.mxu0 0.0
        %4947 = vmatprep.subr.mxu0 0.0
        %4948 = vmatpush1.xpose.msra.mxu0 0.0
        %4949 = vmatprep.subr.mxu0 0.0
        %4950 = vmatpush1.xpose.msra.mxu0 0.0
        %4951 = vmatprep.subr.mxu0 0.0
        %4952 = vmatpush1.xpose.msra.mxu0 0.0
        %4953 = vmatprep.subr.mxu0 0.0
        %4954 = vmatpush1.xpose.msra.mxu0 0.0
        %4955 = vmatprep.subr.mxu0 0.0
        %4956 = vmatpush1.xpose.msra.mxu0 0.0
        %4957 = vmatprep.subr.mxu0 0.0
        %4958 = vmatpush1.xpose.msra.mxu0 0.0
        %4959 = vmatprep.subr.mxu0 0.0
        %4960 = vmatpush1.xpose.msra.mxu0 0.0
        %4961 = vmatprep.subr.mxu0 0.0
        %4962 = vmatpush1.xpose.msra.mxu0 0.0
        %4963 = vmatprep.subr.mxu0 0.0
        %4964 = vmatpush1.xpose.msra.mxu0 0.0
        %4965 = vmatprep.mubr.f32.mxu0 0.0
        %4966 = vmatmul.mubr.f32.gmra.mrb[0].mxu0 %v1395
        %v4967 = vpop.f32.mrb[0].mxu0
        %v4968 = vadd.f32 0.0, %v4967
        %v4969 = vpop.f32.mrb[0].mxu0
        %4970 = vdwg.mxu0
        %4971 = vrot.lane.b32.xlu0 %v532, 120
        %v4972 = vpop.permute.xlu0 %4971
        %v4973 = vsel %vm1054, %v4972, 0
        %4975 = vmatprep.subr.mxu0 0.0
        %4976 = vmatpush1.xpose.msra.mxu0 %v4973
        %4977 = vmatprep.subr.mxu0 0.0
        %4978 = vmatpush1.xpose.msra.mxu0 0.0
        %4979 = vmatprep.subr.mxu0 0.0
        %4980 = vmatpush1.xpose.msra.mxu0 0.0
        %4981 = vmatprep.subr.mxu0 0.0
        %4982 = vmatpush1.xpose.msra.mxu0 0.0
        %4983 = vmatprep.subr.mxu0 0.0
        %4984 = vmatpush1.xpose.msra.mxu0 0.0
        %4985 = vmatprep.subr.mxu0 0.0
        %4986 = vmatpush1.xpose.msra.mxu0 0.0
        %4987 = vmatprep.subr.mxu0 0.0
        %4988 = vmatpush1.xpose.msra.mxu0 0.0
        %4989 = vmatprep.subr.mxu0 0.0
        %4990 = vmatpush1.xpose.msra.mxu0 0.0
        %4991 = vmatprep.subr.mxu0 0.0
        %4992 = vmatpush1.xpose.msra.mxu0 0.0
        %4993 = vmatprep.subr.mxu0 0.0
        %4994 = vmatpush1.xpose.msra.mxu0 0.0
        %4995 = vmatprep.subr.mxu0 0.0
        %4996 = vmatpush1.xpose.msra.mxu0 0.0
        %4997 = vmatprep.subr.mxu0 0.0
        %4998 = vmatpush1.xpose.msra.mxu0 0.0
        %4999 = vmatprep.subr.mxu0 0.0
        %5000 = vmatpush1.xpose.msra.mxu0 0.0
        %5001 = vmatprep.subr.mxu0 0.0
        %5002 = vmatpush1.xpose.msra.mxu0 0.0
        %5003 = vmatprep.subr.mxu0 0.0
        %5004 = vmatpush1.xpose.msra.mxu0 0.0
        %5005 = vmatprep.subr.mxu0 0.0
        %5006 = vmatpush1.xpose.msra.mxu0 0.0
        %5007 = vmatprep.subr.mxu0 0.0
        %5008 = vmatpush1.xpose.msra.mxu0 0.0
        %5009 = vmatprep.subr.mxu0 0.0
        %5010 = vmatpush1.xpose.msra.mxu0 0.0
        %5011 = vmatprep.subr.mxu0 0.0
        %5012 = vmatpush1.xpose.msra.mxu0 0.0
        %5013 = vmatprep.subr.mxu0 0.0
        %5014 = vmatpush1.xpose.msra.mxu0 0.0
        %5015 = vmatprep.subr.mxu0 0.0
        %5016 = vmatpush1.xpose.msra.mxu0 0.0
        %5017 = vmatprep.subr.mxu0 0.0
        %5018 = vmatpush1.xpose.msra.mxu0 0.0
        %5019 = vmatprep.subr.mxu0 0.0
        %5020 = vmatpush1.xpose.msra.mxu0 0.0
        %5021 = vmatprep.subr.mxu0 0.0
        %5022 = vmatpush1.xpose.msra.mxu0 0.0
        %5023 = vmatprep.subr.mxu0 0.0
        %5024 = vmatpush1.xpose.msra.mxu0 0.0
        %5025 = vmatprep.subr.mxu0 0.0
        %5026 = vmatpush1.xpose.msra.mxu0 0.0
        %5027 = vmatprep.subr.mxu0 0.0
        %5028 = vmatpush1.xpose.msra.mxu0 0.0
        %5029 = vmatprep.subr.mxu0 0.0
        %5030 = vmatpush1.xpose.msra.mxu0 0.0
        %5031 = vmatprep.subr.mxu0 0.0
        %5032 = vmatpush1.xpose.msra.mxu0 0.0
        %5033 = vmatprep.subr.mxu0 0.0
        %5034 = vmatpush1.xpose.msra.mxu0 0.0
        %5035 = vmatprep.subr.mxu0 0.0
        %5036 = vmatpush1.xpose.msra.mxu0 0.0
        %5037 = vmatprep.subr.mxu0 0.0
        %5038 = vmatpush1.xpose.msra.mxu0 0.0
        %5039 = vmatprep.mubr.f32.mxu0 0.0
        %5040 = vmatmul.mubr.f32.gmra.mrb[0].mxu0 %v1473
        %v5041 = vpop.f32.mrb[0].mxu0
        %v5042 = vadd.f32 0.0, %v5041
        %v5043 = vpop.f32.mrb[0].mxu0
        %5044 = vdwg.mxu0
        %v5045 = vsel %vm1054, %v4968, -inf
        %5046 = vmax.xlane.f32.xlu0 %v5045
        %v5047 = vpop.xlane.xlu0 %5046
        %v5048 = vsel %vm1054, %v5042, -inf
        %5049 = vmax.xlane.f32.xlu0 %v5048
        %v5050 = vpop.xlane.xlu0 %5049
        %v5051 = vmax.f32 %v766, %v5047
        %v5052 = vmax.f32 %v769, %v5050
        %v5053 = vsub.f32 %v4968, %v5051
        %v5054 = vsub.f32 %v5042, %v5052
        %v5055 = vmul.f32 %v5053, 1.442695
        %v5056 = vpow.pop %v5055
        %v5057 = vmul.f32 %v5054, 1.442695
        %v5058 = vpow.pop %v5057
        %v5059 = vsub.f32 %v766, %v5051
        %v5060 = vsub.f32 %v769, %v5052
        %v5061 = vmul.f32 %v5059, 1.442695
        %v5062 = vpow.pop %v5061
        %v5063 = vmul.f32 %v5060, 1.442695
        %v5064 = vpow.pop %v5063
        %v5065 = vmul.f32 %v5062, %v786
        %v5066 = vmul.f32 %v5064, %v789
        %v5067 = vsel %vm1054, %v5056, 0.0
        %5068 = vadd.xlane.f32.xlu0 %v5067
        %v5069 = vpop.xlane.xlu0 %5068
        %v5070 = vsel %vm1054, %v5058, 0.0
        %5071 = vadd.xlane.f32.xlu0 %v5070
        %v5072 = vpop.xlane.xlu0 %5071
        %v5073 = vadd.f32 %v5065, %v5069
        %v5074 = vadd.f32 %v5066, %v5072
        %v5077 = vsel %vm1054, %v5056, 0
        %5079 = vmatprep.subr.mxu0 0.0
        %5080 = vmatpush1.msra.mxu0 %v4898
        %5081 = vmatprep.subr.mxu0 0.0
        %5082 = vmatpush1.msra.mxu0 0.0
        %5083 = vmatprep.subr.mxu0 0.0
        %5084 = vmatpush1.msra.mxu0 0.0
        %5085 = vmatprep.subr.mxu0 0.0
        %5086 = vmatpush1.msra.mxu0 0.0
        %5087 = vmatprep.subr.mxu0 0.0
        %5088 = vmatpush1.msra.mxu0 0.0
        %5089 = vmatprep.subr.mxu0 0.0
        %5090 = vmatpush1.msra.mxu0 0.0
        %5091 = vmatprep.subr.mxu0 0.0
        %5092 = vmatpush1.msra.mxu0 0.0
        %5093 = vmatprep.subr.mxu0 0.0
        %5094 = vmatpush1.msra.mxu0 0.0
        %5095 = vmatprep.subr.mxu0 0.0
        %5096 = vmatpush1.msra.mxu0 0.0
        %5097 = vmatprep.subr.mxu0 0.0
        %5098 = vmatpush1.msra.mxu0 0.0
        %5099 = vmatprep.subr.mxu0 0.0
        %5100 = vmatpush1.msra.mxu0 0.0
        %5101 = vmatprep.subr.mxu0 0.0
        %5102 = vmatpush1.msra.mxu0 0.0
        %5103 = vmatprep.subr.mxu0 0.0
        %5104 = vmatpush1.msra.mxu0 0.0
        %5105 = vmatprep.subr.mxu0 0.0
        %5106 = vmatpush1.msra.mxu0 0.0
        %5107 = vmatprep.subr.mxu0 0.0
        %5108 = vmatpush1.msra.mxu0 0.0
        %5109 = vmatprep.subr.mxu0 0.0
        %5110 = vmatpush1.msra.mxu0 0.0
        %5111 = vmatprep.subr.mxu0 0.0
        %5112 = vmatpush1.msra.mxu0 0.0
        %5113 = vmatprep.subr.mxu0 0.0
        %5114 = vmatpush1.msra.mxu0 0.0
        %5115 = vmatprep.subr.mxu0 0.0
        %5116 = vmatpush1.msra.mxu0 0.0
        %5117 = vmatprep.subr.mxu0 0.0
        %5118 = vmatpush1.msra.mxu0 0.0
        %5119 = vmatprep.subr.mxu0 0.0
        %5120 = vmatpush1.msra.mxu0 0.0
        %5121 = vmatprep.subr.mxu0 0.0
        %5122 = vmatpush1.msra.mxu0 0.0
        %5123 = vmatprep.subr.mxu0 0.0
        %5124 = vmatpush1.msra.mxu0 0.0
        %5125 = vmatprep.subr.mxu0 0.0
        %5126 = vmatpush1.msra.mxu0 0.0
        %5127 = vmatprep.subr.mxu0 0.0
        %5128 = vmatpush1.msra.mxu0 0.0
        %5129 = vmatprep.subr.mxu0 0.0
        %5130 = vmatpush1.msra.mxu0 0.0
        %5131 = vmatprep.subr.mxu0 0.0
        %5132 = vmatpush1.msra.mxu0 0.0
        %5133 = vmatprep.subr.mxu0 0.0
        %5134 = vmatpush1.msra.mxu0 0.0
        %5135 = vmatprep.subr.mxu0 0.0
        %5136 = vmatpush1.msra.mxu0 0.0
        %5137 = vmatprep.subr.mxu0 0.0
        %5138 = vmatpush1.msra.mxu0 0.0
        %5139 = vmatprep.subr.mxu0 0.0
        %5140 = vmatpush1.msra.mxu0 0.0
        %5141 = vmatprep.subr.mxu0 0.0
        %5142 = vmatpush1.msra.mxu0 0.0
        %5143 = vmatprep.mubr.f32.mxu0 0.0
        %5144 = vmatmul.mubr.f32.gmra.mrb[0].mxu0 %v5077
        %v5145 = vpop.f32.mrb[0].mxu0
        %v5146 = vadd.f32 0.0, %v5145
        %v5147 = vpop.f32.mrb[0].mxu0
        %5148 = vdwg.mxu0
        %v5151 = vsel %vm1054, %v5058, 0
        %5153 = vmatprep.subr.mxu0 0.0
        %5154 = vmatpush1.msra.mxu0 %v4972
        %5155 = vmatprep.subr.mxu0 0.0
        %5156 = vmatpush1.msra.mxu0 0.0
        %5157 = vmatprep.subr.mxu0 0.0
        %5158 = vmatpush1.msra.mxu0 0.0
        %5159 = vmatprep.subr.mxu0 0.0
        %5160 = vmatpush1.msra.mxu0 0.0
        %5161 = vmatprep.subr.mxu0 0.0
        %5162 = vmatpush1.msra.mxu0 0.0
        %5163 = vmatprep.subr.mxu0 0.0
        %5164 = vmatpush1.msra.mxu0 0.0
        %5165 = vmatprep.subr.mxu0 0.0
        %5166 = vmatpush1.msra.mxu0 0.0
        %5167 = vmatprep.subr.mxu0 0.0
        %5168 = vmatpush1.msra.mxu0 0.0
        %5169 = vmatprep.subr.mxu0 0.0
        %5170 = vmatpush1.msra.mxu0 0.0
        %5171 = vmatprep.subr.mxu0 0.0
        %5172 = vmatpush1.msra.mxu0 0.0
        %5173 = vmatprep.subr.mxu0 0.0
        %5174 = vmatpush1.msra.mxu0 0.0
        %5175 = vmatprep.subr.mxu0 0.0
        %5176 = vmatpush1.msra.mxu0 0.0
        %5177 = vmatprep.subr.mxu0 0.0
        %5178 = vmatpush1.msra.mxu0 0.0
        %5179 = vmatprep.subr.mxu0 0.0
        %5180 = vmatpush1.msra.mxu0 0.0
        %5181 = vmatprep.subr.mxu0 0.0
        %5182 = vmatpush1.msra.mxu0 0.0
        %5183 = vmatprep.subr.mxu0 0.0
        %5184 = vmatpush1.msra.mxu0 0.0
        %5185 = vmatprep.subr.mxu0 0.0
        %5186 = vmatpush1.msra.mxu0 0.0
        %5187 = vmatprep.subr.mxu0 0.0
        %5188 = vmatpush1.msra.mxu0 0.0
        %5189 = vmatprep.subr.mxu0 0.0
        %5190 = vmatpush1.msra.mxu0 0.0
        %5191 = vmatprep.subr.mxu0 0.0
        %5192 = vmatpush1.msra.mxu0 0.0
        %5193 = vmatprep.subr.mxu0 0.0
        %5194 = vmatpush1.msra.mxu0 0.0
        %5195 = vmatprep.subr.mxu0 0.0
        %5196 = vmatpush1.msra.mxu0 0.0
        %5197 = vmatprep.subr.mxu0 0.0
        %5198 = vmatpush1.msra.mxu0 0.0
        %5199 = vmatprep.subr.mxu0 0.0
        %5200 = vmatpush1.msra.mxu0 0.0
        %5201 = vmatprep.subr.mxu0 0.0
        %5202 = vmatpush1.msra.mxu0 0.0
        %5203 = vmatprep.subr.mxu0 0.0
        %5204 = vmatpush1.msra.mxu0 0.0
        %5205 = vmatprep.subr.mxu0 0.0
        %5206 = vmatpush1.msra.mxu0 0.0
        %5207 = vmatprep.subr.mxu0 0.0
        %5208 = vmatpush1.msra.mxu0 0.0
        %5209 = vmatprep.subr.mxu0 0.0
        %5210 = vmatpush1.msra.mxu0 0.0
        %5211 = vmatprep.subr.mxu0 0.0
        %5212 = vmatpush1.msra.mxu0 0.0
        %5213 = vmatprep.subr.mxu0 0.0
        %5214 = vmatpush1.msra.mxu0 0.0
        %5215 = vmatprep.subr.mxu0 0.0
        %5216 = vmatpush1.msra.mxu0 0.0
        %5217 = vmatprep.mubr.f32.mxu0 0.0
        %5218 = vmatmul.mubr.f32.gmra.mrb[0].mxu0 %v5151
        %v5219 = vpop.f32.mrb[0].mxu0
        %v5220 = vadd.f32 0.0, %v5219
        %v5221 = vpop.f32.mrb[0].mxu0
        %5222 = vdwg.mxu0
        %v5223 = vmul.f32 %v5062, %v1046
        %v5224 = vmul.f32 %v5064, %v1051
        %5227 = vrot.lane.b32.xlu0 %v5146, 8
        %v5228 = vpop.permute.xlu0 %5227
        %5229 = vrot.lane.b32.xlu0 %v5220, 8
        %v5230 = vpop.permute.xlu0 %5229
        %v5233 = vadd.f32 %v5223, %v5228
        %v5234 = vadd.f32 %v5224, %v5230
        %v5235 = vrcp.pop %v5073
        %v5236 = vmul.f32 %v5233, %v5235
        %v5237 = vrcp.pop %v5074
        %v5238 = vmul.f32 %v5234, %v5237
        %5241 = vrot.lane.b32.xlu0 %v5236, 80
        %v5242 = vpop.permute.xlu0 %5241
        %5243 = vrot.lane.b32.xlu0 %v5238, 80
        %v5244 = vpop.permute.xlu0 %5243
        %vm5247 = vcmask 786112
        %5248 = vst.msk [vmem:[#allocation2] sm:$0xff] %vm5247, %v5242
        %5249 = vst.msk [vmem:[#allocation2 + $0x10] sm:$0xff] %vm5247, %v5244
        %5250 = vrot.lane.b32.xlu0 %v531, 112
        %v5251 = vpop.permute.xlu0 %5250
        %v5252 = vsel %vm1054, %v5251, 0
        %5254 = vmatprep.subr.mxu0 0.0
        %5255 = vmatpush1.xpose.msra.mxu0 %v5252
        %5256 = vmatprep.subr.mxu0 0.0
        %5257 = vmatpush1.xpose.msra.mxu0 0.0
        %5258 = vmatprep.subr.mxu0 0.0
        %5259 = vmatpush1.xpose.msra.mxu0 0.0
        %5260 = vmatprep.subr.mxu0 0.0
        %5261 = vmatpush1.xpose.msra.mxu0 0.0
        %5262 = vmatprep.subr.mxu0 0.0
        %5263 = vmatpush1.xpose.msra.mxu0 0.0
        %5264 = vmatprep.subr.mxu0 0.0
        %5265 = vmatpush1.xpose.msra.mxu0 0.0
        %5266 = vmatprep.subr.mxu0 0.0
        %5267 = vmatpush1.xpose.msra.mxu0 0.0
        %5268 = vmatprep.subr.mxu0 0.0
        %5269 = vmatpush1.xpose.msra.mxu0 0.0
        %5270 = vmatprep.subr.mxu0 0.0
        %5271 = vmatpush1.xpose.msra.mxu0 0.0
        %5272 = vmatprep.subr.mxu0 0.0
        %5273 = vmatpush1.xpose.msra.mxu0 0.0
        %5274 = vmatprep.subr.mxu0 0.0
        %5275 = vmatpush1.xpose.msra.mxu0 0.0
        %5276 = vmatprep.subr.mxu0 0.0
        %5277 = vmatpush1.xpose.msra.mxu0 0.0
        %5278 = vmatprep.subr.mxu0 0.0
        %5279 = vmatpush1.xpose.msra.mxu0 0.0
        %5280 = vmatprep.subr.mxu0 0.0
        %5281 = vmatpush1.xpose.msra.mxu0 0.0
        %5282 = vmatprep.subr.mxu0 0.0
        %5283 = vmatpush1.xpose.msra.mxu0 0.0
        %5284 = vmatprep.subr.mxu0 0.0
        %5285 = vmatpush1.xpose.msra.mxu0 0.0
        %5286 = vmatprep.subr.mxu0 0.0
        %5287 = vmatpush1.xpose.msra.mxu0 0.0
        %5288 = vmatprep.subr.mxu0 0.0
        %5289 = vmatpush1.xpose.msra.mxu0 0.0
        %5290 = vmatprep.subr.mxu0 0.0
        %5291 = vmatpush1.xpose.msra.mxu0 0.0
        %5292 = vmatprep.subr.mxu0 0.0
        %5293 = vmatpush1.xpose.msra.mxu0 0.0
        %5294 = vmatprep.subr.mxu0 0.0
        %5295 = vmatpush1.xpose.msra.mxu0 0.0
        %5296 = vmatprep.subr.mxu0 0.0
        %5297 = vmatpush1.xpose.msra.mxu0 0.0
        %5298 = vmatprep.subr.mxu0 0.0
        %5299 = vmatpush1.xpose.msra.mxu0 0.0
        %5300 = vmatprep.subr.mxu0 0.0
        %5301 = vmatpush1.xpose.msra.mxu0 0.0
        %5302 = vmatprep.subr.mxu0 0.0
        %5303 = vmatpush1.xpose.msra.mxu0 0.0
        %5304 = vmatprep.subr.mxu0 0.0
        %5305 = vmatpush1.xpose.msra.mxu0 0.0
        %5306 = vmatprep.subr.mxu0 0.0
        %5307 = vmatpush1.xpose.msra.mxu0 0.0
        %5308 = vmatprep.subr.mxu0 0.0
        %5309 = vmatpush1.xpose.msra.mxu0 0.0
        %5310 = vmatprep.subr.mxu0 0.0
        %5311 = vmatpush1.xpose.msra.mxu0 0.0
        %5312 = vmatprep.subr.mxu0 0.0
        %5313 = vmatpush1.xpose.msra.mxu0 0.0
        %5314 = vmatprep.subr.mxu0 0.0
        %5315 = vmatpush1.xpose.msra.mxu0 0.0
        %5316 = vmatprep.subr.mxu0 0.0
        %5317 = vmatpush1.xpose.msra.mxu0 0.0
        %5318 = vmatprep.mubr.f32.mxu0 0.0
        %5319 = vmatmul.mubr.f32.gmra.mrb[0].mxu0 %v1748
        %v5320 = vpop.f32.mrb[0].mxu0
        %v5321 = vadd.f32 0.0, %v5320
        %v5322 = vpop.f32.mrb[0].mxu0
        %5323 = vdwg.mxu0
        %5324 = vrot.lane.b32.xlu0 %v532, 112
        %v5325 = vpop.permute.xlu0 %5324
        %v5326 = vsel %vm1054, %v5325, 0
        %5328 = vmatprep.subr.mxu0 0.0
        %5329 = vmatpush1.xpose.msra.mxu0 %v5326
        %5330 = vmatprep.subr.mxu0 0.0
        %5331 = vmatpush1.xpose.msra.mxu0 0.0
        %5332 = vmatprep.subr.mxu0 0.0
        %5333 = vmatpush1.xpose.msra.mxu0 0.0
        %5334 = vmatprep.subr.mxu0 0.0
        %5335 = vmatpush1.xpose.msra.mxu0 0.0
        %5336 = vmatprep.subr.mxu0 0.0
        %5337 = vmatpush1.xpose.msra.mxu0 0.0
        %5338 = vmatprep.subr.mxu0 0.0
        %5339 = vmatpush1.xpose.msra.mxu0 0.0
        %5340 = vmatprep.subr.mxu0 0.0
        %5341 = vmatpush1.xpose.msra.mxu0 0.0
        %5342 = vmatprep.subr.mxu0 0.0
        %5343 = vmatpush1.xpose.msra.mxu0 0.0
        %5344 = vmatprep.subr.mxu0 0.0
        %5345 = vmatpush1.xpose.msra.mxu0 0.0
        %5346 = vmatprep.subr.mxu0 0.0
        %5347 = vmatpush1.xpose.msra.mxu0 0.0
        %5348 = vmatprep.subr.mxu0 0.0
        %5349 = vmatpush1.xpose.msra.mxu0 0.0
        %5350 = vmatprep.subr.mxu0 0.0
        %5351 = vmatpush1.xpose.msra.mxu0 0.0
        %5352 = vmatprep.subr.mxu0 0.0
        %5353 = vmatpush1.xpose.msra.mxu0 0.0
        %5354 = vmatprep.subr.mxu0 0.0
        %5355 = vmatpush1.xpose.msra.mxu0 0.0
        %5356 = vmatprep.subr.mxu0 0.0
        %5357 = vmatpush1.xpose.msra.mxu0 0.0
        %5358 = vmatprep.subr.mxu0 0.0
        %5359 = vmatpush1.xpose.msra.mxu0 0.0
        %5360 = vmatprep.subr.mxu0 0.0
        %5361 = vmatpush1.xpose.msra.mxu0 0.0
        %5362 = vmatprep.subr.mxu0 0.0
        %5363 = vmatpush1.xpose.msra.mxu0 0.0
        %5364 = vmatprep.subr.mxu0 0.0
        %5365 = vmatpush1.xpose.msra.mxu0 0.0
        %5366 = vmatprep.subr.mxu0 0.0
        %5367 = vmatpush1.xpose.msra.mxu0 0.0
        %5368 = vmatprep.subr.mxu0 0.0
        %5369 = vmatpush1.xpose.msra.mxu0 0.0
        %5370 = vmatprep.subr.mxu0 0.0
        %5371 = vmatpush1.xpose.msra.mxu0 0.0
        %5372 = vmatprep.subr.mxu0 0.0
        %5373 = vmatpush1.xpose.msra.mxu0 0.0
        %5374 = vmatprep.subr.mxu0 0.0
        %5375 = vmatpush1.xpose.msra.mxu0 0.0
        %5376 = vmatprep.subr.mxu0 0.0
        %5377 = vmatpush1.xpose.msra.mxu0 0.0
        %5378 = vmatprep.subr.mxu0 0.0
        %5379 = vmatpush1.xpose.msra.mxu0 0.0
        %5380 = vmatprep.subr.mxu0 0.0
        %5381 = vmatpush1.xpose.msra.mxu0 0.0
        %5382 = vmatprep.subr.mxu0 0.0
        %5383 = vmatpush1.xpose.msra.mxu0 0.0
        %5384 = vmatprep.subr.mxu0 0.0
        %5385 = vmatpush1.xpose.msra.mxu0 0.0
        %5386 = vmatprep.subr.mxu0 0.0
        %5387 = vmatpush1.xpose.msra.mxu0 0.0
        %5388 = vmatprep.subr.mxu0 0.0
        %5389 = vmatpush1.xpose.msra.mxu0 0.0
        %5390 = vmatprep.subr.mxu0 0.0
        %5391 = vmatpush1.xpose.msra.mxu0 0.0
        %5392 = vmatprep.mubr.f32.mxu0 0.0
        %5393 = vmatmul.mubr.f32.gmra.mrb[0].mxu0 %v1826
        %v5394 = vpop.f32.mrb[0].mxu0
        %v5395 = vadd.f32 0.0, %v5394
        %v5396 = vpop.f32.mrb[0].mxu0
        %5397 = vdwg.mxu0
        %v5398 = vsel %vm1054, %v5321, -inf
        %5399 = vmax.xlane.f32.xlu0 %v5398
        %v5400 = vpop.xlane.xlu0 %5399
        %v5401 = vsel %vm1054, %v5395, -inf
        %5402 = vmax.xlane.f32.xlu0 %v5401
        %v5403 = vpop.xlane.xlu0 %5402
        %v5404 = vmax.f32 %v792, %v5400
        %v5405 = vmax.f32 %v795, %v5403
        %v5406 = vsub.f32 %v5321, %v5404
        %v5407 = vsub.f32 %v5395, %v5405
        %v5408 = vmul.f32 %v5406, 1.442695
        %v5409 = vpow.pop %v5408
        %v5410 = vmul.f32 %v5407, 1.442695
        %v5411 = vpow.pop %v5410
        %v5412 = vsub.f32 %v792, %v5404
        %v5413 = vsub.f32 %v795, %v5405
        %v5414 = vmul.f32 %v5412, 1.442695
        %v5415 = vpow.pop %v5414
        %v5416 = vmul.f32 %v5413, 1.442695
        %v5417 = vpow.pop %v5416
        %v5418 = vmul.f32 %v5415, %v804
        %v5419 = vmul.f32 %v5417, %v807
        %v5420 = vsel %vm1054, %v5409, 0.0
        %5421 = vadd.xlane.f32.xlu0 %v5420
        %v5422 = vpop.xlane.xlu0 %5421
        %v5423 = vsel %vm1054, %v5411, 0.0
        %5424 = vadd.xlane.f32.xlu0 %v5423
        %v5425 = vpop.xlane.xlu0 %5424
        %v5426 = vadd.f32 %v5418, %v5422
        %v5427 = vadd.f32 %v5419, %v5425
        %v5430 = vsel %vm1054, %v5409, 0
        %5432 = vmatprep.subr.mxu0 0.0
        %5433 = vmatpush1.msra.mxu0 %v5251
        %5434 = vmatprep.subr.mxu0 0.0
        %5435 = vmatpush1.msra.mxu0 0.0
        %5436 = vmatprep.subr.mxu0 0.0
        %5437 = vmatpush1.msra.mxu0 0.0
        %5438 = vmatprep.subr.mxu0 0.0
        %5439 = vmatpush1.msra.mxu0 0.0
        %5440 = vmatprep.subr.mxu0 0.0
        %5441 = vmatpush1.msra.mxu0 0.0
        %5442 = vmatprep.subr.mxu0 0.0
        %5443 = vmatpush1.msra.mxu0 0.0
        %5444 = vmatprep.subr.mxu0 0.0
        %5445 = vmatpush1.msra.mxu0 0.0
        %5446 = vmatprep.subr.mxu0 0.0
        %5447 = vmatpush1.msra.mxu0 0.0
        %5448 = vmatprep.subr.mxu0 0.0
        %5449 = vmatpush1.msra.mxu0 0.0
        %5450 = vmatprep.subr.mxu0 0.0
        %5451 = vmatpush1.msra.mxu0 0.0
        %5452 = vmatprep.subr.mxu0 0.0
        %5453 = vmatpush1.msra.mxu0 0.0
        %5454 = vmatprep.subr.mxu0 0.0
        %5455 = vmatpush1.msra.mxu0 0.0
        %5456 = vmatprep.subr.mxu0 0.0
        %5457 = vmatpush1.msra.mxu0 0.0
        %5458 = vmatprep.subr.mxu0 0.0
        %5459 = vmatpush1.msra.mxu0 0.0
        %5460 = vmatprep.subr.mxu0 0.0
        %5461 = vmatpush1.msra.mxu0 0.0
        %5462 = vmatprep.subr.mxu0 0.0
        %5463 = vmatpush1.msra.mxu0 0.0
        %5464 = vmatprep.subr.mxu0 0.0
        %5465 = vmatpush1.msra.mxu0 0.0
        %5466 = vmatprep.subr.mxu0 0.0
        %5467 = vmatpush1.msra.mxu0 0.0
        %5468 = vmatprep.subr.mxu0 0.0
        %5469 = vmatpush1.msra.mxu0 0.0
        %5470 = vmatprep.subr.mxu0 0.0
        %5471 = vmatpush1.msra.mxu0 0.0
        %5472 = vmatprep.subr.mxu0 0.0
        %5473 = vmatpush1.msra.mxu0 0.0
        %5474 = vmatprep.subr.mxu0 0.0
        %5475 = vmatpush1.msra.mxu0 0.0
        %5476 = vmatprep.subr.mxu0 0.0
        %5477 = vmatpush1.msra.mxu0 0.0
        %5478 = vmatprep.subr.mxu0 0.0
        %5479 = vmatpush1.msra.mxu0 0.0
        %5480 = vmatprep.subr.mxu0 0.0
        %5481 = vmatpush1.msra.mxu0 0.0
        %5482 = vmatprep.subr.mxu0 0.0
        %5483 = vmatpush1.msra.mxu0 0.0
        %5484 = vmatprep.subr.mxu0 0.0
        %5485 = vmatpush1.msra.mxu0 0.0
        %5486 = vmatprep.subr.mxu0 0.0
        %5487 = vmatpush1.msra.mxu0 0.0
        %5488 = vmatprep.subr.mxu0 0.0
        %5489 = vmatpush1.msra.mxu0 0.0
        %5490 = vmatprep.subr.mxu0 0.0
        %5491 = vmatpush1.msra.mxu0 0.0
        %5492 = vmatprep.subr.mxu0 0.0
        %5493 = vmatpush1.msra.mxu0 0.0
        %5494 = vmatprep.subr.mxu0 0.0
        %5495 = vmatpush1.msra.mxu0 0.0
        %5496 = vmatprep.mubr.f32.mxu0 0.0
        %5497 = vmatmul.mubr.f32.gmra.mrb[0].mxu0 %v5430
        %v5498 = vpop.f32.mrb[0].mxu0
        %v5499 = vadd.f32 0.0, %v5498
        %v5500 = vpop.f32.mrb[0].mxu0
        %5501 = vdwg.mxu0
        %v5504 = vsel %vm1054, %v5411, 0
        %5506 = vmatprep.subr.mxu0 0.0
        %5507 = vmatpush1.msra.mxu0 %v5325
        %5508 = vmatprep.subr.mxu0 0.0
        %5509 = vmatpush1.msra.mxu0 0.0
        %5510 = vmatprep.subr.mxu0 0.0
        %5511 = vmatpush1.msra.mxu0 0.0
        %5512 = vmatprep.subr.mxu0 0.0
        %5513 = vmatpush1.msra.mxu0 0.0
        %5514 = vmatprep.subr.mxu0 0.0
        %5515 = vmatpush1.msra.mxu0 0.0
        %5516 = vmatprep.subr.mxu0 0.0
        %5517 = vmatpush1.msra.mxu0 0.0
        %5518 = vmatprep.subr.mxu0 0.0
        %5519 = vmatpush1.msra.mxu0 0.0
        %5520 = vmatprep.subr.mxu0 0.0
        %5521 = vmatpush1.msra.mxu0 0.0
        %5522 = vmatprep.subr.mxu0 0.0
        %5523 = vmatpush1.msra.mxu0 0.0
        %5524 = vmatprep.subr.mxu0 0.0
        %5525 = vmatpush1.msra.mxu0 0.0
        %5526 = vmatprep.subr.mxu0 0.0
        %5527 = vmatpush1.msra.mxu0 0.0
        %5528 = vmatprep.subr.mxu0 0.0
        %5529 = vmatpush1.msra.mxu0 0.0
        %5530 = vmatprep.subr.mxu0 0.0
        %5531 = vmatpush1.msra.mxu0 0.0
        %5532 = vmatprep.subr.mxu0 0.0
        %5533 = vmatpush1.msra.mxu0 0.0
        %5534 = vmatprep.subr.mxu0 0.0
        %5535 = vmatpush1.msra.mxu0 0.0
        %5536 = vmatprep.subr.mxu0 0.0
        %5537 = vmatpush1.msra.mxu0 0.0
        %5538 = vmatprep.subr.mxu0 0.0
        %5539 = vmatpush1.msra.mxu0 0.0
        %5540 = vmatprep.subr.mxu0 0.0
        %5541 = vmatpush1.msra.mxu0 0.0
        %5542 = vmatprep.subr.mxu0 0.0
        %5543 = vmatpush1.msra.mxu0 0.0
        %5544 = vmatprep.subr.mxu0 0.0
        %5545 = vmatpush1.msra.mxu0 0.0
        %5546 = vmatprep.subr.mxu0 0.0
        %5547 = vmatpush1.msra.mxu0 0.0
        %5548 = vmatprep.subr.mxu0 0.0
        %5549 = vmatpush1.msra.mxu0 0.0
        %5550 = vmatprep.subr.mxu0 0.0
        %5551 = vmatpush1.msra.mxu0 0.0
        %5552 = vmatprep.subr.mxu0 0.0
        %5553 = vmatpush1.msra.mxu0 0.0
        %5554 = vmatprep.subr.mxu0 0.0
        %5555 = vmatpush1.msra.mxu0 0.0
        %5556 = vmatprep.subr.mxu0 0.0
        %5557 = vmatpush1.msra.mxu0 0.0
        %5558 = vmatprep.subr.mxu0 0.0
        %5559 = vmatpush1.msra.mxu0 0.0
        %5560 = vmatprep.subr.mxu0 0.0
        %5561 = vmatpush1.msra.mxu0 0.0
        %5562 = vmatprep.subr.mxu0 0.0
        %5563 = vmatpush1.msra.mxu0 0.0
        %5564 = vmatprep.subr.mxu0 0.0
        %5565 = vmatpush1.msra.mxu0 0.0
        %5566 = vmatprep.subr.mxu0 0.0
        %5567 = vmatpush1.msra.mxu0 0.0
        %5568 = vmatprep.subr.mxu0 0.0
        %5569 = vmatpush1.msra.mxu0 0.0
        %5570 = vmatprep.mubr.f32.mxu0 0.0
        %5571 = vmatmul.mubr.f32.gmra.mrb[0].mxu0 %v5504
        %v5572 = vpop.f32.mrb[0].mxu0
        %v5573 = vadd.f32 0.0, %v5572
        %v5574 = vpop.f32.mrb[0].mxu0
        %5575 = vdwg.mxu0
        %v5576 = vmul.f32 %v5415, %v1046
        %v5577 = vmul.f32 %v5417, %v1051
        %5580 = vrot.lane.b32.xlu0 %v5499, 16
        %v5581 = vpop.permute.xlu0 %5580
        %5582 = vrot.lane.b32.xlu0 %v5573, 16
        %v5583 = vpop.permute.xlu0 %5582
        %v5586 = vadd.f32 %v5576, %v5581
        %v5587 = vadd.f32 %v5577, %v5583
        %v5588 = vrcp.pop %v5426
        %v5589 = vmul.f32 %v5586, %v5588
        %v5590 = vrcp.pop %v5427
        %v5591 = vmul.f32 %v5587, %v5590
        %5594 = vrot.lane.b32.xlu0 %v5589, 80
        %v5595 = vpop.permute.xlu0 %5594
        %5596 = vrot.lane.b32.xlu0 %v5591, 80
        %v5597 = vpop.permute.xlu0 %5596
        %vm5600 = vcmask 851712
        %5601 = vst.msk [vmem:[#allocation2] sm:$0xff] %vm5600, %v5595
        %5602 = vst.msk [vmem:[#allocation2 + $0x10] sm:$0xff] %vm5600, %v5597
        %5603 = vrot.lane.b32.xlu0 %v531, 104
        %v5604 = vpop.permute.xlu0 %5603
        %v5605 = vsel %vm1054, %v5604, 0
        %5607 = vmatprep.subr.mxu0 0.0
        %5608 = vmatpush1.xpose.msra.mxu0 %v5605
        %5609 = vmatprep.subr.mxu0 0.0
        %5610 = vmatpush1.xpose.msra.mxu0 0.0
        %5611 = vmatprep.subr.mxu0 0.0
        %5612 = vmatpush1.xpose.msra.mxu0 0.0
        %5613 = vmatprep.subr.mxu0 0.0
        %5614 = vmatpush1.xpose.msra.mxu0 0.0
        %5615 = vmatprep.subr.mxu0 0.0
        %5616 = vmatpush1.xpose.msra.mxu0 0.0
        %5617 = vmatprep.subr.mxu0 0.0
        %5618 = vmatpush1.xpose.msra.mxu0 0.0
        %5619 = vmatprep.subr.mxu0 0.0
        %5620 = vmatpush1.xpose.msra.mxu0 0.0
        %5621 = vmatprep.subr.mxu0 0.0
        %5622 = vmatpush1.xpose.msra.mxu0 0.0
        %5623 = vmatprep.subr.mxu0 0.0
        %5624 = vmatpush1.xpose.msra.mxu0 0.0
        %5625 = vmatprep.subr.mxu0 0.0
        %5626 = vmatpush1.xpose.msra.mxu0 0.0
        %5627 = vmatprep.subr.mxu0 0.0
        %5628 = vmatpush1.xpose.msra.mxu0 0.0
        %5629 = vmatprep.subr.mxu0 0.0
        %5630 = vmatpush1.xpose.msra.mxu0 0.0
        %5631 = vmatprep.subr.mxu0 0.0
        %5632 = vmatpush1.xpose.msra.mxu0 0.0
        %5633 = vmatprep.subr.mxu0 0.0
        %5634 = vmatpush1.xpose.msra.mxu0 0.0
        %5635 = vmatprep.subr.mxu0 0.0
        %5636 = vmatpush1.xpose.msra.mxu0 0.0
        %5637 = vmatprep.subr.mxu0 0.0
        %5638 = vmatpush1.xpose.msra.mxu0 0.0
        %5639 = vmatprep.subr.mxu0 0.0
        %5640 = vmatpush1.xpose.msra.mxu0 0.0
        %5641 = vmatprep.subr.mxu0 0.0
        %5642 = vmatpush1.xpose.msra.mxu0 0.0
        %5643 = vmatprep.subr.mxu0 0.0
        %5644 = vmatpush1.xpose.msra.mxu0 0.0
        %5645 = vmatprep.subr.mxu0 0.0
        %5646 = vmatpush1.xpose.msra.mxu0 0.0
        %5647 = vmatprep.subr.mxu0 0.0
        %5648 = vmatpush1.xpose.msra.mxu0 0.0
        %5649 = vmatprep.subr.mxu0 0.0
        %5650 = vmatpush1.xpose.msra.mxu0 0.0
        %5651 = vmatprep.subr.mxu0 0.0
        %5652 = vmatpush1.xpose.msra.mxu0 0.0
        %5653 = vmatprep.subr.mxu0 0.0
        %5654 = vmatpush1.xpose.msra.mxu0 0.0
        %5655 = vmatprep.subr.mxu0 0.0
        %5656 = vmatpush1.xpose.msra.mxu0 0.0
        %5657 = vmatprep.subr.mxu0 0.0
        %5658 = vmatpush1.xpose.msra.mxu0 0.0
        %5659 = vmatprep.subr.mxu0 0.0
        %5660 = vmatpush1.xpose.msra.mxu0 0.0
        %5661 = vmatprep.subr.mxu0 0.0
        %5662 = vmatpush1.xpose.msra.mxu0 0.0
        %5663 = vmatprep.subr.mxu0 0.0
        %5664 = vmatpush1.xpose.msra.mxu0 0.0
        %5665 = vmatprep.subr.mxu0 0.0
        %5666 = vmatpush1.xpose.msra.mxu0 0.0
        %5667 = vmatprep.subr.mxu0 0.0
        %5668 = vmatpush1.xpose.msra.mxu0 0.0
        %5669 = vmatprep.subr.mxu0 0.0
        %5670 = vmatpush1.xpose.msra.mxu0 0.0
        %5671 = vmatprep.mubr.f32.mxu0 0.0
        %5672 = vmatmul.mubr.f32.gmra.mrb[0].mxu0 %v2101
        %v5673 = vpop.f32.mrb[0].mxu0
        %v5674 = vadd.f32 0.0, %v5673
        %v5675 = vpop.f32.mrb[0].mxu0
        %5676 = vdwg.mxu0
        %5677 = vrot.lane.b32.xlu0 %v532, 104
        %v5678 = vpop.permute.xlu0 %5677
        %v5679 = vsel %vm1054, %v5678, 0
        %5681 = vmatprep.subr.mxu0 0.0
        %5682 = vmatpush1.xpose.msra.mxu0 %v5679
        %5683 = vmatprep.subr.mxu0 0.0
        %5684 = vmatpush1.xpose.msra.mxu0 0.0
        %5685 = vmatprep.subr.mxu0 0.0
        %5686 = vmatpush1.xpose.msra.mxu0 0.0
        %5687 = vmatprep.subr.mxu0 0.0
        %5688 = vmatpush1.xpose.msra.mxu0 0.0
        %5689 = vmatprep.subr.mxu0 0.0
        %5690 = vmatpush1.xpose.msra.mxu0 0.0
        %5691 = vmatprep.subr.mxu0 0.0
        %5692 = vmatpush1.xpose.msra.mxu0 0.0
        %5693 = vmatprep.subr.mxu0 0.0
        %5694 = vmatpush1.xpose.msra.mxu0 0.0
        %5695 = vmatprep.subr.mxu0 0.0
        %5696 = vmatpush1.xpose.msra.mxu0 0.0
        %5697 = vmatprep.subr.mxu0 0.0
        %5698 = vmatpush1.xpose.msra.mxu0 0.0
        %5699 = vmatprep.subr.mxu0 0.0
        %5700 = vmatpush1.xpose.msra.mxu0 0.0
        %5701 = vmatprep.subr.mxu0 0.0
        %5702 = vmatpush1.xpose.msra.mxu0 0.0
        %5703 = vmatprep.subr.mxu0 0.0
        %5704 = vmatpush1.xpose.msra.mxu0 0.0
        %5705 = vmatprep.subr.mxu0 0.0
        %5706 = vmatpush1.xpose.msra.mxu0 0.0
        %5707 = vmatprep.subr.mxu0 0.0
        %5708 = vmatpush1.xpose.msra.mxu0 0.0
        %5709 = vmatprep.subr.mxu0 0.0
        %5710 = vmatpush1.xpose.msra.mxu0 0.0
        %5711 = vmatprep.subr.mxu0 0.0
        %5712 = vmatpush1.xpose.msra.mxu0 0.0
        %5713 = vmatprep.subr.mxu0 0.0
        %5714 = vmatpush1.xpose.msra.mxu0 0.0
        %5715 = vmatprep.subr.mxu0 0.0
        %5716 = vmatpush1.xpose.msra.mxu0 0.0
        %5717 = vmatprep.subr.mxu0 0.0
        %5718 = vmatpush1.xpose.msra.mxu0 0.0
        %5719 = vmatprep.subr.mxu0 0.0
        %5720 = vmatpush1.xpose.msra.mxu0 0.0
        %5721 = vmatprep.subr.mxu0 0.0
        %5722 = vmatpush1.xpose.msra.mxu0 0.0
        %5723 = vmatprep.subr.mxu0 0.0
        %5724 = vmatpush1.xpose.msra.mxu0 0.0
        %5725 = vmatprep.subr.mxu0 0.0
        %5726 = vmatpush1.xpose.msra.mxu0 0.0
        %5727 = vmatprep.subr.mxu0 0.0
        %5728 = vmatpush1.xpose.msra.mxu0 0.0
        %5729 = vmatprep.subr.mxu0 0.0
        %5730 = vmatpush1.xpose.msra.mxu0 0.0
        %5731 = vmatprep.subr.mxu0 0.0
        %5732 = vmatpush1.xpose.msra.mxu0 0.0
        %5733 = vmatprep.subr.mxu0 0.0
        %5734 = vmatpush1.xpose.msra.mxu0 0.0
        %5735 = vmatprep.subr.mxu0 0.0
        %5736 = vmatpush1.xpose.msra.mxu0 0.0
        %5737 = vmatprep.subr.mxu0 0.0
        %5738 = vmatpush1.xpose.msra.mxu0 0.0
        %5739 = vmatprep.subr.mxu0 0.0
        %5740 = vmatpush1.xpose.msra.mxu0 0.0
        %5741 = vmatprep.subr.mxu0 0.0
        %5742 = vmatpush1.xpose.msra.mxu0 0.0
        %5743 = vmatprep.subr.mxu0 0.0
        %5744 = vmatpush1.xpose.msra.mxu0 0.0
        %5745 = vmatprep.mubr.f32.mxu0 0.0
        %5746 = vmatmul.mubr.f32.gmra.mrb[0].mxu0 %v2179
        %v5747 = vpop.f32.mrb[0].mxu0
        %v5748 = vadd.f32 0.0, %v5747
        %v5749 = vpop.f32.mrb[0].mxu0
        %5750 = vdwg.mxu0
        %v5751 = vsel %vm1054, %v5674, -inf
        %5752 = vmax.xlane.f32.xlu0 %v5751
        %v5753 = vpop.xlane.xlu0 %5752
        %v5754 = vsel %vm1054, %v5748, -inf
        %5755 = vmax.xlane.f32.xlu0 %v5754
        %v5756 = vpop.xlane.xlu0 %5755
        %v5757 = vmax.f32 %v810, %v5753
        %v5758 = vmax.f32 %v813, %v5756
        %v5759 = vsub.f32 %v5674, %v5757
        %v5760 = vsub.f32 %v5748, %v5758
        %v5761 = vmul.f32 %v5759, 1.442695
        %v5762 = vpow.pop %v5761
        %v5763 = vmul.f32 %v5760, 1.442695
        %v5764 = vpow.pop %v5763
        %v5765 = vsub.f32 %v810, %v5757
        %v5766 = vsub.f32 %v813, %v5758
        %v5767 = vmul.f32 %v5765, 1.442695
        %v5768 = vpow.pop %v5767
        %v5769 = vmul.f32 %v5766, 1.442695
        %v5770 = vpow.pop %v5769
        %v5771 = vmul.f32 %v5768, %v830
        %v5772 = vmul.f32 %v5770, %v833
        %v5773 = vsel %vm1054, %v5762, 0.0
        %5774 = vadd.xlane.f32.xlu0 %v5773
        %v5775 = vpop.xlane.xlu0 %5774
        %v5776 = vsel %vm1054, %v5764, 0.0
        %5777 = vadd.xlane.f32.xlu0 %v5776
        %v5778 = vpop.xlane.xlu0 %5777
        %v5779 = vadd.f32 %v5771, %v5775
        %v5780 = vadd.f32 %v5772, %v5778
        %v5783 = vsel %vm1054, %v5762, 0
        %5785 = vmatprep.subr.mxu0 0.0
        %5786 = vmatpush1.msra.mxu0 %v5604
        %5787 = vmatprep.subr.mxu0 0.0
        %5788 = vmatpush1.msra.mxu0 0.0
        %5789 = vmatprep.subr.mxu0 0.0
        %5790 = vmatpush1.msra.mxu0 0.0
        %5791 = vmatprep.subr.mxu0 0.0
        %5792 = vmatpush1.msra.mxu0 0.0
        %5793 = vmatprep.subr.mxu0 0.0
        %5794 = vmatpush1.msra.mxu0 0.0
        %5795 = vmatprep.subr.mxu0 0.0
        %5796 = vmatpush1.msra.mxu0 0.0
        %5797 = vmatprep.subr.mxu0 0.0
        %5798 = vmatpush1.msra.mxu0 0.0
        %5799 = vmatprep.subr.mxu0 0.0
        %5800 = vmatpush1.msra.mxu0 0.0
        %5801 = vmatprep.subr.mxu0 0.0
        %5802 = vmatpush1.msra.mxu0 0.0
        %5803 = vmatprep.subr.mxu0 0.0
        %5804 = vmatpush1.msra.mxu0 0.0
        %5805 = vmatprep.subr.mxu0 0.0
        %5806 = vmatpush1.msra.mxu0 0.0
        %5807 = vmatprep.subr.mxu0 0.0
        %5808 = vmatpush1.msra.mxu0 0.0
        %5809 = vmatprep.subr.mxu0 0.0
        %5810 = vmatpush1.msra.mxu0 0.0
        %5811 = vmatprep.subr.mxu0 0.0
        %5812 = vmatpush1.msra.mxu0 0.0
        %5813 = vmatprep.subr.mxu0 0.0
        %5814 = vmatpush1.msra.mxu0 0.0
        %5815 = vmatprep.subr.mxu0 0.0
        %5816 = vmatpush1.msra.mxu0 0.0
        %5817 = vmatprep.subr.mxu0 0.0
        %5818 = vmatpush1.msra.mxu0 0.0
        %5819 = vmatprep.subr.mxu0 0.0
        %5820 = vmatpush1.msra.mxu0 0.0
        %5821 = vmatprep.subr.mxu0 0.0
        %5822 = vmatpush1.msra.mxu0 0.0
        %5823 = vmatprep.subr.mxu0 0.0
        %5824 = vmatpush1.msra.mxu0 0.0
        %5825 = vmatprep.subr.mxu0 0.0
        %5826 = vmatpush1.msra.mxu0 0.0
        %5827 = vmatprep.subr.mxu0 0.0
        %5828 = vmatpush1.msra.mxu0 0.0
        %5829 = vmatprep.subr.mxu0 0.0
        %5830 = vmatpush1.msra.mxu0 0.0
        %5831 = vmatprep.subr.mxu0 0.0
        %5832 = vmatpush1.msra.mxu0 0.0
        %5833 = vmatprep.subr.mxu0 0.0
        %5834 = vmatpush1.msra.mxu0 0.0
        %5835 = vmatprep.subr.mxu0 0.0
        %5836 = vmatpush1.msra.mxu0 0.0
        %5837 = vmatprep.subr.mxu0 0.0
        %5838 = vmatpush1.msra.mxu0 0.0
        %5839 = vmatprep.subr.mxu0 0.0
        %5840 = vmatpush1.msra.mxu0 0.0
        %5841 = vmatprep.subr.mxu0 0.0
        %5842 = vmatpush1.msra.mxu0 0.0
        %5843 = vmatprep.subr.mxu0 0.0
        %5844 = vmatpush1.msra.mxu0 0.0
        %5845 = vmatprep.subr.mxu0 0.0
        %5846 = vmatpush1.msra.mxu0 0.0
        %5847 = vmatprep.subr.mxu0 0.0
        %5848 = vmatpush1.msra.mxu0 0.0
        %5849 = vmatprep.mubr.f32.mxu0 0.0
        %5850 = vmatmul.mubr.f32.gmra.mrb[0].mxu0 %v5783
        %v5851 = vpop.f32.mrb[0].mxu0
        %v5852 = vadd.f32 0.0, %v5851
        %v5853 = vpop.f32.mrb[0].mxu0
        %5854 = vdwg.mxu0
        %v5857 = vsel %vm1054, %v5764, 0
        %5859 = vmatprep.subr.mxu0 0.0
        %5860 = vmatpush1.msra.mxu0 %v5678
        %5861 = vmatprep.subr.mxu0 0.0
        %5862 = vmatpush1.msra.mxu0 0.0
        %5863 = vmatprep.subr.mxu0 0.0
        %5864 = vmatpush1.msra.mxu0 0.0
        %5865 = vmatprep.subr.mxu0 0.0
        %5866 = vmatpush1.msra.mxu0 0.0
        %5867 = vmatprep.subr.mxu0 0.0
        %5868 = vmatpush1.msra.mxu0 0.0
        %5869 = vmatprep.subr.mxu0 0.0
        %5870 = vmatpush1.msra.mxu0 0.0
        %5871 = vmatprep.subr.mxu0 0.0
        %5872 = vmatpush1.msra.mxu0 0.0
        %5873 = vmatprep.subr.mxu0 0.0
        %5874 = vmatpush1.msra.mxu0 0.0
        %5875 = vmatprep.subr.mxu0 0.0
        %5876 = vmatpush1.msra.mxu0 0.0
        %5877 = vmatprep.subr.mxu0 0.0
        %5878 = vmatpush1.msra.mxu0 0.0
        %5879 = vmatprep.subr.mxu0 0.0
        %5880 = vmatpush1.msra.mxu0 0.0
        %5881 = vmatprep.subr.mxu0 0.0
        %5882 = vmatpush1.msra.mxu0 0.0
        %5883 = vmatprep.subr.mxu0 0.0
        %5884 = vmatpush1.msra.mxu0 0.0
        %5885 = vmatprep.subr.mxu0 0.0
        %5886 = vmatpush1.msra.mxu0 0.0
        %5887 = vmatprep.subr.mxu0 0.0
        %5888 = vmatpush1.msra.mxu0 0.0
        %5889 = vmatprep.subr.mxu0 0.0
        %5890 = vmatpush1.msra.mxu0 0.0
        %5891 = vmatprep.subr.mxu0 0.0
        %5892 = vmatpush1.msra.mxu0 0.0
        %5893 = vmatprep.subr.mxu0 0.0
        %5894 = vmatpush1.msra.mxu0 0.0
        %5895 = vmatprep.subr.mxu0 0.0
        %5896 = vmatpush1.msra.mxu0 0.0
        %5897 = vmatprep.subr.mxu0 0.0
        %5898 = vmatpush1.msra.mxu0 0.0
        %5899 = vmatprep.subr.mxu0 0.0
        %5900 = vmatpush1.msra.mxu0 0.0
        %5901 = vmatprep.subr.mxu0 0.0
        %5902 = vmatpush1.msra.mxu0 0.0
        %5903 = vmatprep.subr.mxu0 0.0
        %5904 = vmatpush1.msra.mxu0 0.0
        %5905 = vmatprep.subr.mxu0 0.0
        %5906 = vmatpush1.msra.mxu0 0.0
        %5907 = vmatprep.subr.mxu0 0.0
        %5908 = vmatpush1.msra.mxu0 0.0
        %5909 = vmatprep.subr.mxu0 0.0
        %5910 = vmatpush1.msra.mxu0 0.0
        %5911 = vmatprep.subr.mxu0 0.0
        %5912 = vmatpush1.msra.mxu0 0.0
        %5913 = vmatprep.subr.mxu0 0.0
        %5914 = vmatpush1.msra.mxu0 0.0
        %5915 = vmatprep.subr.mxu0 0.0
        %5916 = vmatpush1.msra.mxu0 0.0
        %5917 = vmatprep.subr.mxu0 0.0
        %5918 = vmatpush1.msra.mxu0 0.0
        %5919 = vmatprep.subr.mxu0 0.0
        %5920 = vmatpush1.msra.mxu0 0.0
        %5921 = vmatprep.subr.mxu0 0.0
        %5922 = vmatpush1.msra.mxu0 0.0
        %5923 = vmatprep.mubr.f32.mxu0 0.0
        %5924 = vmatmul.mubr.f32.gmra.mrb[0].mxu0 %v5857
        %v5925 = vpop.f32.mrb[0].mxu0
        %v5926 = vadd.f32 0.0, %v5925
        %v5927 = vpop.f32.mrb[0].mxu0
        %5928 = vdwg.mxu0
        %v5929 = vmul.f32 %v5768, %v1046
        %v5930 = vmul.f32 %v5770, %v1051
        %5933 = vrot.lane.b32.xlu0 %v5852, 24
        %v5934 = vpop.permute.xlu0 %5933
        %5935 = vrot.lane.b32.xlu0 %v5926, 24
        %v5936 = vpop.permute.xlu0 %5935
        %v5939 = vadd.f32 %v5929, %v5934
        %v5940 = vadd.f32 %v5930, %v5936
        %v5941 = vrcp.pop %v5779
        %v5942 = vmul.f32 %v5939, %v5941
        %v5943 = vrcp.pop %v5780
        %v5944 = vmul.f32 %v5940, %v5943
        %5947 = vrot.lane.b32.xlu0 %v5942, 80
        %v5948 = vpop.permute.xlu0 %5947
        %5949 = vrot.lane.b32.xlu0 %v5944, 80
        %v5950 = vpop.permute.xlu0 %5949
        %vm5953 = vcmask 917312
        %5954 = vst.msk [vmem:[#allocation2] sm:$0xff] %vm5953, %v5948
        %5955 = vst.msk [vmem:[#allocation2 + $0x10] sm:$0xff] %vm5953, %v5950
        %5956 = vrot.lane.b32.xlu0 %v531, 96
        %v5957 = vpop.permute.xlu0 %5956
        %v5958 = vsel %vm1054, %v5957, 0
        %5960 = vmatprep.subr.mxu0 0.0
        %5961 = vmatpush1.xpose.msra.mxu0 %v5958
        %5962 = vmatprep.subr.mxu0 0.0
        %5963 = vmatpush1.xpose.msra.mxu0 0.0
        %5964 = vmatprep.subr.mxu0 0.0
        %5965 = vmatpush1.xpose.msra.mxu0 0.0
        %5966 = vmatprep.subr.mxu0 0.0
        %5967 = vmatpush1.xpose.msra.mxu0 0.0
        %5968 = vmatprep.subr.mxu0 0.0
        %5969 = vmatpush1.xpose.msra.mxu0 0.0
        %5970 = vmatprep.subr.mxu0 0.0
        %5971 = vmatpush1.xpose.msra.mxu0 0.0
        %5972 = vmatprep.subr.mxu0 0.0
        %5973 = vmatpush1.xpose.msra.mxu0 0.0
        %5974 = vmatprep.subr.mxu0 0.0
        %5975 = vmatpush1.xpose.msra.mxu0 0.0
        %5976 = vmatprep.subr.mxu0 0.0
        %5977 = vmatpush1.xpose.msra.mxu0 0.0
        %5978 = vmatprep.subr.mxu0 0.0
        %5979 = vmatpush1.xpose.msra.mxu0 0.0
        %5980 = vmatprep.subr.mxu0 0.0
        %5981 = vmatpush1.xpose.msra.mxu0 0.0
        %5982 = vmatprep.subr.mxu0 0.0
        %5983 = vmatpush1.xpose.msra.mxu0 0.0
        %5984 = vmatprep.subr.mxu0 0.0
        %5985 = vmatpush1.xpose.msra.mxu0 0.0
        %5986 = vmatprep.subr.mxu0 0.0
        %5987 = vmatpush1.xpose.msra.mxu0 0.0
        %5988 = vmatprep.subr.mxu0 0.0
        %5989 = vmatpush1.xpose.msra.mxu0 0.0
        %5990 = vmatprep.subr.mxu0 0.0
        %5991 = vmatpush1.xpose.msra.mxu0 0.0
        %5992 = vmatprep.subr.mxu0 0.0
        %5993 = vmatpush1.xpose.msra.mxu0 0.0
        %5994 = vmatprep.subr.mxu0 0.0
        %5995 = vmatpush1.xpose.msra.mxu0 0.0
        %5996 = vmatprep.subr.mxu0 0.0
        %5997 = vmatpush1.xpose.msra.mxu0 0.0
        %5998 = vmatprep.subr.mxu0 0.0
        %5999 = vmatpush1.xpose.msra.mxu0 0.0
        %6000 = vmatprep.subr.mxu0 0.0
        %6001 = vmatpush1.xpose.msra.mxu0 0.0
        %6002 = vmatprep.subr.mxu0 0.0
        %6003 = vmatpush1.xpose.msra.mxu0 0.0
        %6004 = vmatprep.subr.mxu0 0.0
        %6005 = vmatpush1.xpose.msra.mxu0 0.0
        %6006 = vmatprep.subr.mxu0 0.0
        %6007 = vmatpush1.xpose.msra.mxu0 0.0
        %6008 = vmatprep.subr.mxu0 0.0
        %6009 = vmatpush1.xpose.msra.mxu0 0.0
        %6010 = vmatprep.subr.mxu0 0.0
        %6011 = vmatpush1.xpose.msra.mxu0 0.0
        %6012 = vmatprep.subr.mxu0 0.0
        %6013 = vmatpush1.xpose.msra.mxu0 0.0
        %6014 = vmatprep.subr.mxu0 0.0
        %6015 = vmatpush1.xpose.msra.mxu0 0.0
        %6016 = vmatprep.subr.mxu0 0.0
        %6017 = vmatpush1.xpose.msra.mxu0 0.0
        %6018 = vmatprep.subr.mxu0 0.0
        %6019 = vmatpush1.xpose.msra.mxu0 0.0
        %6020 = vmatprep.subr.mxu0 0.0
        %6021 = vmatpush1.xpose.msra.mxu0 0.0
        %6022 = vmatprep.subr.mxu0 0.0
        %6023 = vmatpush1.xpose.msra.mxu0 0.0
        %6024 = vmatprep.mubr.f32.mxu0 0.0
        %6025 = vmatmul.mubr.f32.gmra.mrb[0].mxu0 %v2454
        %v6026 = vpop.f32.mrb[0].mxu0
        %v6027 = vadd.f32 0.0, %v6026
        %v6028 = vpop.f32.mrb[0].mxu0
        %6029 = vdwg.mxu0
        %6030 = vrot.lane.b32.xlu0 %v532, 96
        %v6031 = vpop.permute.xlu0 %6030
        %v6032 = vsel %vm1054, %v6031, 0
        %6034 = vmatprep.subr.mxu0 0.0
        %6035 = vmatpush1.xpose.msra.mxu0 %v6032
        %6036 = vmatprep.subr.mxu0 0.0
        %6037 = vmatpush1.xpose.msra.mxu0 0.0
        %6038 = vmatprep.subr.mxu0 0.0
        %6039 = vmatpush1.xpose.msra.mxu0 0.0
        %6040 = vmatprep.subr.mxu0 0.0
        %6041 = vmatpush1.xpose.msra.mxu0 0.0
        %6042 = vmatprep.subr.mxu0 0.0
        %6043 = vmatpush1.xpose.msra.mxu0 0.0
        %6044 = vmatprep.subr.mxu0 0.0
        %6045 = vmatpush1.xpose.msra.mxu0 0.0
        %6046 = vmatprep.subr.mxu0 0.0
        %6047 = vmatpush1.xpose.msra.mxu0 0.0
        %6048 = vmatprep.subr.mxu0 0.0
        %6049 = vmatpush1.xpose.msra.mxu0 0.0
        %6050 = vmatprep.subr.mxu0 0.0
        %6051 = vmatpush1.xpose.msra.mxu0 0.0
        %6052 = vmatprep.subr.mxu0 0.0
        %6053 = vmatpush1.xpose.msra.mxu0 0.0
        %6054 = vmatprep.subr.mxu0 0.0
        %6055 = vmatpush1.xpose.msra.mxu0 0.0
        %6056 = vmatprep.subr.mxu0 0.0
        %6057 = vmatpush1.xpose.msra.mxu0 0.0
        %6058 = vmatprep.subr.mxu0 0.0
        %6059 = vmatpush1.xpose.msra.mxu0 0.0
        %6060 = vmatprep.subr.mxu0 0.0
        %6061 = vmatpush1.xpose.msra.mxu0 0.0
        %6062 = vmatprep.subr.mxu0 0.0
        %6063 = vmatpush1.xpose.msra.mxu0 0.0
        %6064 = vmatprep.subr.mxu0 0.0
        %6065 = vmatpush1.xpose.msra.mxu0 0.0
        %6066 = vmatprep.subr.mxu0 0.0
        %6067 = vmatpush1.xpose.msra.mxu0 0.0
        %6068 = vmatprep.subr.mxu0 0.0
        %6069 = vmatpush1.xpose.msra.mxu0 0.0
        %6070 = vmatprep.subr.mxu0 0.0
        %6071 = vmatpush1.xpose.msra.mxu0 0.0
        %6072 = vmatprep.subr.mxu0 0.0
        %6073 = vmatpush1.xpose.msra.mxu0 0.0
        %6074 = vmatprep.subr.mxu0 0.0
        %6075 = vmatpush1.xpose.msra.mxu0 0.0
        %6076 = vmatprep.subr.mxu0 0.0
        %6077 = vmatpush1.xpose.msra.mxu0 0.0
        %6078 = vmatprep.subr.mxu0 0.0
        %6079 = vmatpush1.xpose.msra.mxu0 0.0
        %6080 = vmatprep.subr.mxu0 0.0
        %6081 = vmatpush1.xpose.msra.mxu0 0.0
        %6082 = vmatprep.subr.mxu0 0.0
        %6083 = vmatpush1.xpose.msra.mxu0 0.0
        %6084 = vmatprep.subr.mxu0 0.0
        %6085 = vmatpush1.xpose.msra.mxu0 0.0
        %6086 = vmatprep.subr.mxu0 0.0
        %6087 = vmatpush1.xpose.msra.mxu0 0.0
        %6088 = vmatprep.subr.mxu0 0.0
        %6089 = vmatpush1.xpose.msra.mxu0 0.0
        %6090 = vmatprep.subr.mxu0 0.0
        %6091 = vmatpush1.xpose.msra.mxu0 0.0
        %6092 = vmatprep.subr.mxu0 0.0
        %6093 = vmatpush1.xpose.msra.mxu0 0.0
        %6094 = vmatprep.subr.mxu0 0.0
        %6095 = vmatpush1.xpose.msra.mxu0 0.0
        %6096 = vmatprep.subr.mxu0 0.0
        %6097 = vmatpush1.xpose.msra.mxu0 0.0
        %6098 = vmatprep.mubr.f32.mxu0 0.0
        %6099 = vmatmul.mubr.f32.gmra.mrb[0].mxu0 %v2532
        %v6100 = vpop.f32.mrb[0].mxu0
        %v6101 = vadd.f32 0.0, %v6100
        %v6102 = vpop.f32.mrb[0].mxu0
        %6103 = vdwg.mxu0
        %v6104 = vsel %vm1054, %v6027, -inf
        %6105 = vmax.xlane.f32.xlu0 %v6104
        %v6106 = vpop.xlane.xlu0 %6105
        %v6107 = vsel %vm1054, %v6101, -inf
        %6108 = vmax.xlane.f32.xlu0 %v6107
        %v6109 = vpop.xlane.xlu0 %6108
        %v6110 = vmax.f32 %v836, %v6106
        %v6111 = vmax.f32 %v839, %v6109
        %v6112 = vsub.f32 %v6027, %v6110
        %v6113 = vsub.f32 %v6101, %v6111
        %v6114 = vmul.f32 %v6112, 1.442695
        %v6115 = vpow.pop %v6114
        %v6116 = vmul.f32 %v6113, 1.442695
        %v6117 = vpow.pop %v6116
        %v6118 = vsub.f32 %v836, %v6110
        %v6119 = vsub.f32 %v839, %v6111
        %v6120 = vmul.f32 %v6118, 1.442695
        %v6121 = vpow.pop %v6120
        %v6122 = vmul.f32 %v6119, 1.442695
        %v6123 = vpow.pop %v6122
        %v6124 = vmul.f32 %v6121, %v848
        %v6125 = vmul.f32 %v6123, %v851
        %v6126 = vsel %vm1054, %v6115, 0.0
        %6127 = vadd.xlane.f32.xlu0 %v6126
        %v6128 = vpop.xlane.xlu0 %6127
        %v6129 = vsel %vm1054, %v6117, 0.0
        %6130 = vadd.xlane.f32.xlu0 %v6129
        %v6131 = vpop.xlane.xlu0 %6130
        %v6132 = vadd.f32 %v6124, %v6128
        %v6133 = vadd.f32 %v6125, %v6131
        %v6136 = vsel %vm1054, %v6115, 0
        %6138 = vmatprep.subr.mxu0 0.0
        %6139 = vmatpush1.msra.mxu0 %v5957
        %6140 = vmatprep.subr.mxu0 0.0
        %6141 = vmatpush1.msra.mxu0 0.0
        %6142 = vmatprep.subr.mxu0 0.0
        %6143 = vmatpush1.msra.mxu0 0.0
        %6144 = vmatprep.subr.mxu0 0.0
        %6145 = vmatpush1.msra.mxu0 0.0
        %6146 = vmatprep.subr.mxu0 0.0
        %6147 = vmatpush1.msra.mxu0 0.0
        %6148 = vmatprep.subr.mxu0 0.0
        %6149 = vmatpush1.msra.mxu0 0.0
        %6150 = vmatprep.subr.mxu0 0.0
        %6151 = vmatpush1.msra.mxu0 0.0
        %6152 = vmatprep.subr.mxu0 0.0
        %6153 = vmatpush1.msra.mxu0 0.0
        %6154 = vmatprep.subr.mxu0 0.0
        %6155 = vmatpush1.msra.mxu0 0.0
        %6156 = vmatprep.subr.mxu0 0.0
        %6157 = vmatpush1.msra.mxu0 0.0
        %6158 = vmatprep.subr.mxu0 0.0
        %6159 = vmatpush1.msra.mxu0 0.0
        %6160 = vmatprep.subr.mxu0 0.0
        %6161 = vmatpush1.msra.mxu0 0.0
        %6162 = vmatprep.subr.mxu0 0.0
        %6163 = vmatpush1.msra.mxu0 0.0
        %6164 = vmatprep.subr.mxu0 0.0
        %6165 = vmatpush1.msra.mxu0 0.0
        %6166 = vmatprep.subr.mxu0 0.0
        %6167 = vmatpush1.msra.mxu0 0.0
        %6168 = vmatprep.subr.mxu0 0.0
        %6169 = vmatpush1.msra.mxu0 0.0
        %6170 = vmatprep.subr.mxu0 0.0
        %6171 = vmatpush1.msra.mxu0 0.0
        %6172 = vmatprep.subr.mxu0 0.0
        %6173 = vmatpush1.msra.mxu0 0.0
        %6174 = vmatprep.subr.mxu0 0.0
        %6175 = vmatpush1.msra.mxu0 0.0
        %6176 = vmatprep.subr.mxu0 0.0
        %6177 = vmatpush1.msra.mxu0 0.0
        %6178 = vmatprep.subr.mxu0 0.0
        %6179 = vmatpush1.msra.mxu0 0.0
        %6180 = vmatprep.subr.mxu0 0.0
        %6181 = vmatpush1.msra.mxu0 0.0
        %6182 = vmatprep.subr.mxu0 0.0
        %6183 = vmatpush1.msra.mxu0 0.0
        %6184 = vmatprep.subr.mxu0 0.0
        %6185 = vmatpush1.msra.mxu0 0.0
        %6186 = vmatprep.subr.mxu0 0.0
        %6187 = vmatpush1.msra.mxu0 0.0
        %6188 = vmatprep.subr.mxu0 0.0
        %6189 = vmatpush1.msra.mxu0 0.0
        %6190 = vmatprep.subr.mxu0 0.0
        %6191 = vmatpush1.msra.mxu0 0.0
        %6192 = vmatprep.subr.mxu0 0.0
        %6193 = vmatpush1.msra.mxu0 0.0
        %6194 = vmatprep.subr.mxu0 0.0
        %6195 = vmatpush1.msra.mxu0 0.0
        %6196 = vmatprep.subr.mxu0 0.0
        %6197 = vmatpush1.msra.mxu0 0.0
        %6198 = vmatprep.subr.mxu0 0.0
        %6199 = vmatpush1.msra.mxu0 0.0
        %6200 = vmatprep.subr.mxu0 0.0
        %6201 = vmatpush1.msra.mxu0 0.0
        %6202 = vmatprep.mubr.f32.mxu0 0.0
        %6203 = vmatmul.mubr.f32.gmra.mrb[0].mxu0 %v6136
        %v6204 = vpop.f32.mrb[0].mxu0
        %v6205 = vadd.f32 0.0, %v6204
        %v6206 = vpop.f32.mrb[0].mxu0
        %6207 = vdwg.mxu0
        %v6210 = vsel %vm1054, %v6117, 0
        %6212 = vmatprep.subr.mxu0 0.0
        %6213 = vmatpush1.msra.mxu0 %v6031
        %6214 = vmatprep.subr.mxu0 0.0
        %6215 = vmatpush1.msra.mxu0 0.0
        %6216 = vmatprep.subr.mxu0 0.0
        %6217 = vmatpush1.msra.mxu0 0.0
        %6218 = vmatprep.subr.mxu0 0.0
        %6219 = vmatpush1.msra.mxu0 0.0
        %6220 = vmatprep.subr.mxu0 0.0
        %6221 = vmatpush1.msra.mxu0 0.0
        %6222 = vmatprep.subr.mxu0 0.0
        %6223 = vmatpush1.msra.mxu0 0.0
        %6224 = vmatprep.subr.mxu0 0.0
        %6225 = vmatpush1.msra.mxu0 0.0
        %6226 = vmatprep.subr.mxu0 0.0
        %6227 = vmatpush1.msra.mxu0 0.0
        %6228 = vmatprep.subr.mxu0 0.0
        %6229 = vmatpush1.msra.mxu0 0.0
        %6230 = vmatprep.subr.mxu0 0.0
        %6231 = vmatpush1.msra.mxu0 0.0
        %6232 = vmatprep.subr.mxu0 0.0
        %6233 = vmatpush1.msra.mxu0 0.0
        %6234 = vmatprep.subr.mxu0 0.0
        %6235 = vmatpush1.msra.mxu0 0.0
        %6236 = vmatprep.subr.mxu0 0.0
        %6237 = vmatpush1.msra.mxu0 0.0
        %6238 = vmatprep.subr.mxu0 0.0
        %6239 = vmatpush1.msra.mxu0 0.0
        %6240 = vmatprep.subr.mxu0 0.0
        %6241 = vmatpush1.msra.mxu0 0.0
        %6242 = vmatprep.subr.mxu0 0.0
        %6243 = vmatpush1.msra.mxu0 0.0
        %6244 = vmatprep.subr.mxu0 0.0
        %6245 = vmatpush1.msra.mxu0 0.0
        %6246 = vmatprep.subr.mxu0 0.0
        %6247 = vmatpush1.msra.mxu0 0.0
        %6248 = vmatprep.subr.mxu0 0.0
        %6249 = vmatpush1.msra.mxu0 0.0
        %6250 = vmatprep.subr.mxu0 0.0
        %6251 = vmatpush1.msra.mxu0 0.0
        %6252 = vmatprep.subr.mxu0 0.0
        %6253 = vmatpush1.msra.mxu0 0.0
        %6254 = vmatprep.subr.mxu0 0.0
        %6255 = vmatpush1.msra.mxu0 0.0
        %6256 = vmatprep.subr.mxu0 0.0
        %6257 = vmatpush1.msra.mxu0 0.0
        %6258 = vmatprep.subr.mxu0 0.0
        %6259 = vmatpush1.msra.mxu0 0.0
        %6260 = vmatprep.subr.mxu0 0.0
        %6261 = vmatpush1.msra.mxu0 0.0
        %6262 = vmatprep.subr.mxu0 0.0
        %6263 = vmatpush1.msra.mxu0 0.0
        %6264 = vmatprep.subr.mxu0 0.0
        %6265 = vmatpush1.msra.mxu0 0.0
        %6266 = vmatprep.subr.mxu0 0.0
        %6267 = vmatpush1.msra.mxu0 0.0
        %6268 = vmatprep.subr.mxu0 0.0
        %6269 = vmatpush1.msra.mxu0 0.0
        %6270 = vmatprep.subr.mxu0 0.0
        %6271 = vmatpush1.msra.mxu0 0.0
        %6272 = vmatprep.subr.mxu0 0.0
        %6273 = vmatpush1.msra.mxu0 0.0
        %6274 = vmatprep.subr.mxu0 0.0
        %6275 = vmatpush1.msra.mxu0 0.0
        %6276 = vmatprep.mubr.f32.mxu0 0.0
        %6277 = vmatmul.mubr.f32.gmra.mrb[0].mxu0 %v6210
        %v6278 = vpop.f32.mrb[0].mxu0
        %v6279 = vadd.f32 0.0, %v6278
        %v6280 = vpop.f32.mrb[0].mxu0
        %6281 = vdwg.mxu0
        %v6282 = vmul.f32 %v6121, %v1046
        %v6283 = vmul.f32 %v6123, %v1051
        %6286 = vrot.lane.b32.xlu0 %v6205, 32
        %v6287 = vpop.permute.xlu0 %6286
        %6288 = vrot.lane.b32.xlu0 %v6279, 32
        %v6289 = vpop.permute.xlu0 %6288
        %v6292 = vadd.f32 %v6282, %v6287
        %v6293 = vadd.f32 %v6283, %v6289
        %v6294 = vrcp.pop %v6132
        %v6295 = vmul.f32 %v6292, %v6294
        %v6296 = vrcp.pop %v6133
        %v6297 = vmul.f32 %v6293, %v6296
        %6300 = vrot.lane.b32.xlu0 %v6295, 80
        %v6301 = vpop.permute.xlu0 %6300
        %6302 = vrot.lane.b32.xlu0 %v6297, 80
        %v6303 = vpop.permute.xlu0 %6302
        %vm6306 = vcmask 982912
        %6307 = vst.msk [vmem:[#allocation2] sm:$0xff] %vm6306, %v6301
        %6308 = vst.msk [vmem:[#allocation2 + $0x10] sm:$0xff] %vm6306, %v6303
        %v6310 = vsel %vm1054, %v533, 0
        %6312 = vmatprep.subr.mxu0 0.0
        %6313 = vmatpush1.xpose.msra.mxu0 %v6310
        %6314 = vmatprep.subr.mxu0 0.0
        %6315 = vmatpush1.xpose.msra.mxu0 0.0
        %6316 = vmatprep.subr.mxu0 0.0
        %6317 = vmatpush1.xpose.msra.mxu0 0.0
        %6318 = vmatprep.subr.mxu0 0.0
        %6319 = vmatpush1.xpose.msra.mxu0 0.0
        %6320 = vmatprep.subr.mxu0 0.0
        %6321 = vmatpush1.xpose.msra.mxu0 0.0
        %6322 = vmatprep.subr.mxu0 0.0
        %6323 = vmatpush1.xpose.msra.mxu0 0.0
        %6324 = vmatprep.subr.mxu0 0.0
        %6325 = vmatpush1.xpose.msra.mxu0 0.0
        %6326 = vmatprep.subr.mxu0 0.0
        %6327 = vmatpush1.xpose.msra.mxu0 0.0
        %6328 = vmatprep.subr.mxu0 0.0
        %6329 = vmatpush1.xpose.msra.mxu0 0.0
        %6330 = vmatprep.subr.mxu0 0.0
        %6331 = vmatpush1.xpose.msra.mxu0 0.0
        %6332 = vmatprep.subr.mxu0 0.0
        %6333 = vmatpush1.xpose.msra.mxu0 0.0
        %6334 = vmatprep.subr.mxu0 0.0
        %6335 = vmatpush1.xpose.msra.mxu0 0.0
        %6336 = vmatprep.subr.mxu0 0.0
        %6337 = vmatpush1.xpose.msra.mxu0 0.0
        %6338 = vmatprep.subr.mxu0 0.0
        %6339 = vmatpush1.xpose.msra.mxu0 0.0
        %6340 = vmatprep.subr.mxu0 0.0
        %6341 = vmatpush1.xpose.msra.mxu0 0.0
        %6342 = vmatprep.subr.mxu0 0.0
        %6343 = vmatpush1.xpose.msra.mxu0 0.0
        %6344 = vmatprep.subr.mxu0 0.0
        %6345 = vmatpush1.xpose.msra.mxu0 0.0
        %6346 = vmatprep.subr.mxu0 0.0
        %6347 = vmatpush1.xpose.msra.mxu0 0.0
        %6348 = vmatprep.subr.mxu0 0.0
        %6349 = vmatpush1.xpose.msra.mxu0 0.0
        %6350 = vmatprep.subr.mxu0 0.0
        %6351 = vmatpush1.xpose.msra.mxu0 0.0
        %6352 = vmatprep.subr.mxu0 0.0
        %6353 = vmatpush1.xpose.msra.mxu0 0.0
        %6354 = vmatprep.subr.mxu0 0.0
        %6355 = vmatpush1.xpose.msra.mxu0 0.0
        %6356 = vmatprep.subr.mxu0 0.0
        %6357 = vmatpush1.xpose.msra.mxu0 0.0
        %6358 = vmatprep.subr.mxu0 0.0
        %6359 = vmatpush1.xpose.msra.mxu0 0.0
        %6360 = vmatprep.subr.mxu0 0.0
        %6361 = vmatpush1.xpose.msra.mxu0 0.0
        %6362 = vmatprep.subr.mxu0 0.0
        %6363 = vmatpush1.xpose.msra.mxu0 0.0
        %6364 = vmatprep.subr.mxu0 0.0
        %6365 = vmatpush1.xpose.msra.mxu0 0.0
        %6366 = vmatprep.subr.mxu0 0.0
        %6367 = vmatpush1.xpose.msra.mxu0 0.0
        %6368 = vmatprep.subr.mxu0 0.0
        %6369 = vmatpush1.xpose.msra.mxu0 0.0
        %6370 = vmatprep.subr.mxu0 0.0
        %6371 = vmatpush1.xpose.msra.mxu0 0.0
        %6372 = vmatprep.subr.mxu0 0.0
        %6373 = vmatpush1.xpose.msra.mxu0 0.0
        %6374 = vmatprep.subr.mxu0 0.0
        %6375 = vmatpush1.xpose.msra.mxu0 0.0
        %6376 = vmatprep.mubr.f32.mxu0 0.0
        %6377 = vmatmul.mubr.f32.gmra.mrb[0].mxu0 %v1055
        %v6378 = vpop.f32.mrb[0].mxu0
        %v6379 = vadd.f32 0.0, %v6378
        %v6380 = vpop.f32.mrb[0].mxu0
        %6381 = vdwg.mxu0
        %v6383 = vsel %vm1054, %v534, 0
        %6385 = vmatprep.subr.mxu0 0.0
        %6386 = vmatpush1.xpose.msra.mxu0 %v6383
        %6387 = vmatprep.subr.mxu0 0.0
        %6388 = vmatpush1.xpose.msra.mxu0 0.0
        %6389 = vmatprep.subr.mxu0 0.0
        %6390 = vmatpush1.xpose.msra.mxu0 0.0
        %6391 = vmatprep.subr.mxu0 0.0
        %6392 = vmatpush1.xpose.msra.mxu0 0.0
        %6393 = vmatprep.subr.mxu0 0.0
        %6394 = vmatpush1.xpose.msra.mxu0 0.0
        %6395 = vmatprep.subr.mxu0 0.0
        %6396 = vmatpush1.xpose.msra.mxu0 0.0
        %6397 = vmatprep.subr.mxu0 0.0
        %6398 = vmatpush1.xpose.msra.mxu0 0.0
        %6399 = vmatprep.subr.mxu0 0.0
        %6400 = vmatpush1.xpose.msra.mxu0 0.0
        %6401 = vmatprep.subr.mxu0 0.0
        %6402 = vmatpush1.xpose.msra.mxu0 0.0
        %6403 = vmatprep.subr.mxu0 0.0
        %6404 = vmatpush1.xpose.msra.mxu0 0.0
        %6405 = vmatprep.subr.mxu0 0.0
        %6406 = vmatpush1.xpose.msra.mxu0 0.0
        %6407 = vmatprep.subr.mxu0 0.0
        %6408 = vmatpush1.xpose.msra.mxu0 0.0
        %6409 = vmatprep.subr.mxu0 0.0
        %6410 = vmatpush1.xpose.msra.mxu0 0.0
        %6411 = vmatprep.subr.mxu0 0.0
        %6412 = vmatpush1.xpose.msra.mxu0 0.0
        %6413 = vmatprep.subr.mxu0 0.0
        %6414 = vmatpush1.xpose.msra.mxu0 0.0
        %6415 = vmatprep.subr.mxu0 0.0
        %6416 = vmatpush1.xpose.msra.mxu0 0.0
        %6417 = vmatprep.subr.mxu0 0.0
        %6418 = vmatpush1.xpose.msra.mxu0 0.0
        %6419 = vmatprep.subr.mxu0 0.0
        %6420 = vmatpush1.xpose.msra.mxu0 0.0
        %6421 = vmatprep.subr.mxu0 0.0
        %6422 = vmatpush1.xpose.msra.mxu0 0.0
        %6423 = vmatprep.subr.mxu0 0.0
        %6424 = vmatpush1.xpose.msra.mxu0 0.0
        %6425 = vmatprep.subr.mxu0 0.0
        %6426 = vmatpush1.xpose.msra.mxu0 0.0
        %6427 = vmatprep.subr.mxu0 0.0
        %6428 = vmatpush1.xpose.msra.mxu0 0.0
        %6429 = vmatprep.subr.mxu0 0.0
        %6430 = vmatpush1.xpose.msra.mxu0 0.0
        %6431 = vmatprep.subr.mxu0 0.0
        %6432 = vmatpush1.xpose.msra.mxu0 0.0
        %6433 = vmatprep.subr.mxu0 0.0
        %6434 = vmatpush1.xpose.msra.mxu0 0.0
        %6435 = vmatprep.subr.mxu0 0.0
        %6436 = vmatpush1.xpose.msra.mxu0 0.0
        %6437 = vmatprep.subr.mxu0 0.0
        %6438 = vmatpush1.xpose.msra.mxu0 0.0
        %6439 = vmatprep.subr.mxu0 0.0
        %6440 = vmatpush1.xpose.msra.mxu0 0.0
        %6441 = vmatprep.subr.mxu0 0.0
        %6442 = vmatpush1.xpose.msra.mxu0 0.0
        %6443 = vmatprep.subr.mxu0 0.0
        %6444 = vmatpush1.xpose.msra.mxu0 0.0
        %6445 = vmatprep.subr.mxu0 0.0
        %6446 = vmatpush1.xpose.msra.mxu0 0.0
        %6447 = vmatprep.subr.mxu0 0.0
        %6448 = vmatpush1.xpose.msra.mxu0 0.0
        %6449 = vmatprep.mubr.f32.mxu0 0.0
        %6450 = vmatmul.mubr.f32.gmra.mrb[0].mxu0 %v1130
        %v6451 = vpop.f32.mrb[0].mxu0
        %v6452 = vadd.f32 0.0, %v6451
        %v6453 = vpop.f32.mrb[0].mxu0
        %6454 = vdwg.mxu0
        %v6455 = vsel %vm1054, %v6379, -inf
        %6456 = vmax.xlane.f32.xlu0 %v6455
        %v6457 = vpop.xlane.xlu0 %6456
        %v6458 = vsel %vm1054, %v6452, -inf
        %6459 = vmax.xlane.f32.xlu0 %v6458
        %v6460 = vpop.xlane.xlu0 %6459
        %v6461 = vmax.f32 %v747, %v6457
        %v6462 = vmax.f32 %v750, %v6460
        %v6463 = vsub.f32 %v6379, %v6461
        %v6464 = vsub.f32 %v6452, %v6462
        %v6465 = vmul.f32 %v6463, 1.442695
        %v6466 = vpow.pop %v6465
        %v6467 = vmul.f32 %v6464, 1.442695
        %v6468 = vpow.pop %v6467
        %v6469 = vsub.f32 %v747, %v6461
        %v6470 = vsub.f32 %v750, %v6462
        %v6471 = vmul.f32 %v6469, 1.442695
        %v6472 = vpow.pop %v6471
        %v6473 = vmul.f32 %v6470, 1.442695
        %v6474 = vpow.pop %v6473
        %v6475 = vmul.f32 %v6472, %v759
        %v6476 = vmul.f32 %v6474, %v762
        %v6477 = vsel %vm1054, %v6466, 0.0
        %6478 = vadd.xlane.f32.xlu0 %v6477
        %v6479 = vpop.xlane.xlu0 %6478
        %v6480 = vsel %vm1054, %v6468, 0.0
        %6481 = vadd.xlane.f32.xlu0 %v6480
        %v6482 = vpop.xlane.xlu0 %6481
        %v6483 = vadd.f32 %v6475, %v6479
        %v6484 = vadd.f32 %v6476, %v6482
        %v6486 = vsel %vm1054, %v6466, 0
        %6488 = vmatprep.subr.mxu0 0.0
        %6489 = vmatpush1.msra.mxu0 %v533
        %6490 = vmatprep.subr.mxu0 0.0
        %6491 = vmatpush1.msra.mxu0 0.0
        %6492 = vmatprep.subr.mxu0 0.0
        %6493 = vmatpush1.msra.mxu0 0.0
        %6494 = vmatprep.subr.mxu0 0.0
        %6495 = vmatpush1.msra.mxu0 0.0
        %6496 = vmatprep.subr.mxu0 0.0
        %6497 = vmatpush1.msra.mxu0 0.0
        %6498 = vmatprep.subr.mxu0 0.0
        %6499 = vmatpush1.msra.mxu0 0.0
        %6500 = vmatprep.subr.mxu0 0.0
        %6501 = vmatpush1.msra.mxu0 0.0
        %6502 = vmatprep.subr.mxu0 0.0
        %6503 = vmatpush1.msra.mxu0 0.0
        %6504 = vmatprep.subr.mxu0 0.0
        %6505 = vmatpush1.msra.mxu0 0.0
        %6506 = vmatprep.subr.mxu0 0.0
        %6507 = vmatpush1.msra.mxu0 0.0
        %6508 = vmatprep.subr.mxu0 0.0
        %6509 = vmatpush1.msra.mxu0 0.0
        %6510 = vmatprep.subr.mxu0 0.0
        %6511 = vmatpush1.msra.mxu0 0.0
        %6512 = vmatprep.subr.mxu0 0.0
        %6513 = vmatpush1.msra.mxu0 0.0
        %6514 = vmatprep.subr.mxu0 0.0
        %6515 = vmatpush1.msra.mxu0 0.0
        %6516 = vmatprep.subr.mxu0 0.0
        %6517 = vmatpush1.msra.mxu0 0.0
        %6518 = vmatprep.subr.mxu0 0.0
        %6519 = vmatpush1.msra.mxu0 0.0
        %6520 = vmatprep.subr.mxu0 0.0
        %6521 = vmatpush1.msra.mxu0 0.0
        %6522 = vmatprep.subr.mxu0 0.0
        %6523 = vmatpush1.msra.mxu0 0.0
        %6524 = vmatprep.subr.mxu0 0.0
        %6525 = vmatpush1.msra.mxu0 0.0
        %6526 = vmatprep.subr.mxu0 0.0
        %6527 = vmatpush1.msra.mxu0 0.0
        %6528 = vmatprep.subr.mxu0 0.0
        %6529 = vmatpush1.msra.mxu0 0.0
        %6530 = vmatprep.subr.mxu0 0.0
        %6531 = vmatpush1.msra.mxu0 0.0
        %6532 = vmatprep.subr.mxu0 0.0
        %6533 = vmatpush1.msra.mxu0 0.0
        %6534 = vmatprep.subr.mxu0 0.0
        %6535 = vmatpush1.msra.mxu0 0.0
        %6536 = vmatprep.subr.mxu0 0.0
        %6537 = vmatpush1.msra.mxu0 0.0
        %6538 = vmatprep.subr.mxu0 0.0
        %6539 = vmatpush1.msra.mxu0 0.0
        %6540 = vmatprep.subr.mxu0 0.0
        %6541 = vmatpush1.msra.mxu0 0.0
        %6542 = vmatprep.subr.mxu0 0.0
        %6543 = vmatpush1.msra.mxu0 0.0
        %6544 = vmatprep.subr.mxu0 0.0
        %6545 = vmatpush1.msra.mxu0 0.0
        %6546 = vmatprep.subr.mxu0 0.0
        %6547 = vmatpush1.msra.mxu0 0.0
        %6548 = vmatprep.subr.mxu0 0.0
        %6549 = vmatpush1.msra.mxu0 0.0
        %6550 = vmatprep.subr.mxu0 0.0
        %6551 = vmatpush1.msra.mxu0 0.0
        %6552 = vmatprep.mubr.f32.mxu0 0.0
        %6553 = vmatmul.mubr.f32.gmra.mrb[0].mxu0 %v6486
        %v6554 = vpop.f32.mrb[0].mxu0
        %v6555 = vadd.f32 0.0, %v6554
        %v6556 = vpop.f32.mrb[0].mxu0
        %6557 = vdwg.mxu0
        %v6559 = vsel %vm1054, %v6468, 0
        %6561 = vmatprep.subr.mxu0 0.0
        %6562 = vmatpush1.msra.mxu0 %v534
        %6563 = vmatprep.subr.mxu0 0.0
        %6564 = vmatpush1.msra.mxu0 0.0
        %6565 = vmatprep.subr.mxu0 0.0
        %6566 = vmatpush1.msra.mxu0 0.0
        %6567 = vmatprep.subr.mxu0 0.0
        %6568 = vmatpush1.msra.mxu0 0.0
        %6569 = vmatprep.subr.mxu0 0.0
        %6570 = vmatpush1.msra.mxu0 0.0
        %6571 = vmatprep.subr.mxu0 0.0
        %6572 = vmatpush1.msra.mxu0 0.0
        %6573 = vmatprep.subr.mxu0 0.0
        %6574 = vmatpush1.msra.mxu0 0.0
        %6575 = vmatprep.subr.mxu0 0.0
        %6576 = vmatpush1.msra.mxu0 0.0
        %6577 = vmatprep.subr.mxu0 0.0
        %6578 = vmatpush1.msra.mxu0 0.0
        %6579 = vmatprep.subr.mxu0 0.0
        %6580 = vmatpush1.msra.mxu0 0.0
        %6581 = vmatprep.subr.mxu0 0.0
        %6582 = vmatpush1.msra.mxu0 0.0
        %6583 = vmatprep.subr.mxu0 0.0
        %6584 = vmatpush1.msra.mxu0 0.0
        %6585 = vmatprep.subr.mxu0 0.0
        %6586 = vmatpush1.msra.mxu0 0.0
        %6587 = vmatprep.subr.mxu0 0.0
        %6588 = vmatpush1.msra.mxu0 0.0
        %6589 = vmatprep.subr.mxu0 0.0
        %6590 = vmatpush1.msra.mxu0 0.0
        %6591 = vmatprep.subr.mxu0 0.0
        %6592 = vmatpush1.msra.mxu0 0.0
        %6593 = vmatprep.subr.mxu0 0.0
        %6594 = vmatpush1.msra.mxu0 0.0
        %6595 = vmatprep.subr.mxu0 0.0
        %6596 = vmatpush1.msra.mxu0 0.0
        %6597 = vmatprep.subr.mxu0 0.0
        %6598 = vmatpush1.msra.mxu0 0.0
        %6599 = vmatprep.subr.mxu0 0.0
        %6600 = vmatpush1.msra.mxu0 0.0
        %6601 = vmatprep.subr.mxu0 0.0
        %6602 = vmatpush1.msra.mxu0 0.0
        %6603 = vmatprep.subr.mxu0 0.0
        %6604 = vmatpush1.msra.mxu0 0.0
        %6605 = vmatprep.subr.mxu0 0.0
        %6606 = vmatpush1.msra.mxu0 0.0
        %6607 = vmatprep.subr.mxu0 0.0
        %6608 = vmatpush1.msra.mxu0 0.0
        %6609 = vmatprep.subr.mxu0 0.0
        %6610 = vmatpush1.msra.mxu0 0.0
        %6611 = vmatprep.subr.mxu0 0.0
        %6612 = vmatpush1.msra.mxu0 0.0
        %6613 = vmatprep.subr.mxu0 0.0
        %6614 = vmatpush1.msra.mxu0 0.0
        %6615 = vmatprep.subr.mxu0 0.0
        %6616 = vmatpush1.msra.mxu0 0.0
        %6617 = vmatprep.subr.mxu0 0.0
        %6618 = vmatpush1.msra.mxu0 0.0
        %6619 = vmatprep.subr.mxu0 0.0
        %6620 = vmatpush1.msra.mxu0 0.0
        %6621 = vmatprep.subr.mxu0 0.0
        %6622 = vmatpush1.msra.mxu0 0.0
        %6623 = vmatprep.subr.mxu0 0.0
        %6624 = vmatpush1.msra.mxu0 0.0
        %6625 = vmatprep.mubr.f32.mxu0 0.0
        %6626 = vmatmul.mubr.f32.gmra.mrb[0].mxu0 %v6559
        %v6627 = vpop.f32.mrb[0].mxu0
        %v6628 = vadd.f32 0.0, %v6627
        %v6629 = vpop.f32.mrb[0].mxu0
        %6630 = vdwg.mxu0
        %v6631 = vmul.f32 %v6472, %v1046
        %v6632 = vmul.f32 %v6474, %v1051
        %v6633 = vadd.f32 %v6631, %v6555
        %v6634 = vadd.f32 %v6632, %v6628
        %v6635 = vrcp.pop %v6483
        %v6636 = vmul.f32 %v6633, %v6635
        %v6637 = vrcp.pop %v6484
        %v6638 = vmul.f32 %v6634, %v6637
        %6641 = vrot.lane.b32.xlu0 %v6636, 120
        %v6642 = vpop.permute.xlu0 %6641
        %6643 = vrot.lane.b32.xlu0 %v6638, 120
        %v6644 = vpop.permute.xlu0 %6643
        %vm6647 = vcmask 1048512
        %6648 = vst.msk [vmem:[#allocation2] sm:$0xff] %vm6647, %v6642
        %6649 = vst.msk [vmem:[#allocation2 + $0x10] sm:$0xff] %vm6647, %v6644
        %6650 = vrot.lane.b32.xlu0 %v533, 120
        %v6651 = vpop.permute.xlu0 %6650
        %v6652 = vsel %vm1054, %v6651, 0
        %6654 = vmatprep.subr.mxu0 0.0
        %6655 = vmatpush1.xpose.msra.mxu0 %v6652
        %6656 = vmatprep.subr.mxu0 0.0
        %6657 = vmatpush1.xpose.msra.mxu0 0.0
        %6658 = vmatprep.subr.mxu0 0.0
        %6659 = vmatpush1.xpose.msra.mxu0 0.0
        %6660 = vmatprep.subr.mxu0 0.0
        %6661 = vmatpush1.xpose.msra.mxu0 0.0
        %6662 = vmatprep.subr.mxu0 0.0
        %6663 = vmatpush1.xpose.msra.mxu0 0.0
        %6664 = vmatprep.subr.mxu0 0.0
        %6665 = vmatpush1.xpose.msra.mxu0 0.0
        %6666 = vmatprep.subr.mxu0 0.0
        %6667 = vmatpush1.xpose.msra.mxu0 0.0
        %6668 = vmatprep.subr.mxu0 0.0
        %6669 = vmatpush1.xpose.msra.mxu0 0.0
        %6670 = vmatprep.subr.mxu0 0.0
        %6671 = vmatpush1.xpose.msra.mxu0 0.0
        %6672 = vmatprep.subr.mxu0 0.0
        %6673 = vmatpush1.xpose.msra.mxu0 0.0
        %6674 = vmatprep.subr.mxu0 0.0
        %6675 = vmatpush1.xpose.msra.mxu0 0.0
        %6676 = vmatprep.subr.mxu0 0.0
        %6677 = vmatpush1.xpose.msra.mxu0 0.0
        %6678 = vmatprep.subr.mxu0 0.0
        %6679 = vmatpush1.xpose.msra.mxu0 0.0
        %6680 = vmatprep.subr.mxu0 0.0
        %6681 = vmatpush1.xpose.msra.mxu0 0.0
        %6682 = vmatprep.subr.mxu0 0.0
        %6683 = vmatpush1.xpose.msra.mxu0 0.0
        %6684 = vmatprep.subr.mxu0 0.0
        %6685 = vmatpush1.xpose.msra.mxu0 0.0
        %6686 = vmatprep.subr.mxu0 0.0
        %6687 = vmatpush1.xpose.msra.mxu0 0.0
        %6688 = vmatprep.subr.mxu0 0.0
        %6689 = vmatpush1.xpose.msra.mxu0 0.0
        %6690 = vmatprep.subr.mxu0 0.0
        %6691 = vmatpush1.xpose.msra.mxu0 0.0
        %6692 = vmatprep.subr.mxu0 0.0
        %6693 = vmatpush1.xpose.msra.mxu0 0.0
        %6694 = vmatprep.subr.mxu0 0.0
        %6695 = vmatpush1.xpose.msra.mxu0 0.0
        %6696 = vmatprep.subr.mxu0 0.0
        %6697 = vmatpush1.xpose.msra.mxu0 0.0
        %6698 = vmatprep.subr.mxu0 0.0
        %6699 = vmatpush1.xpose.msra.mxu0 0.0
        %6700 = vmatprep.subr.mxu0 0.0
        %6701 = vmatpush1.xpose.msra.mxu0 0.0
        %6702 = vmatprep.subr.mxu0 0.0
        %6703 = vmatpush1.xpose.msra.mxu0 0.0
        %6704 = vmatprep.subr.mxu0 0.0
        %6705 = vmatpush1.xpose.msra.mxu0 0.0
        %6706 = vmatprep.subr.mxu0 0.0
        %6707 = vmatpush1.xpose.msra.mxu0 0.0
        %6708 = vmatprep.subr.mxu0 0.0
        %6709 = vmatpush1.xpose.msra.mxu0 0.0
        %6710 = vmatprep.subr.mxu0 0.0
        %6711 = vmatpush1.xpose.msra.mxu0 0.0
        %6712 = vmatprep.subr.mxu0 0.0
        %6713 = vmatpush1.xpose.msra.mxu0 0.0
        %6714 = vmatprep.subr.mxu0 0.0
        %6715 = vmatpush1.xpose.msra.mxu0 0.0
        %6716 = vmatprep.subr.mxu0 0.0
        %6717 = vmatpush1.xpose.msra.mxu0 0.0
        %6718 = vmatprep.mubr.f32.mxu0 0.0
        %6719 = vmatmul.mubr.f32.gmra.mrb[0].mxu0 %v1395
        %v6720 = vpop.f32.mrb[0].mxu0
        %v6721 = vadd.f32 0.0, %v6720
        %v6722 = vpop.f32.mrb[0].mxu0
        %6723 = vdwg.mxu0
        %6724 = vrot.lane.b32.xlu0 %v534, 120
        %v6725 = vpop.permute.xlu0 %6724
        %v6726 = vsel %vm1054, %v6725, 0
        %6728 = vmatprep.subr.mxu0 0.0
        %6729 = vmatpush1.xpose.msra.mxu0 %v6726
        %6730 = vmatprep.subr.mxu0 0.0
        %6731 = vmatpush1.xpose.msra.mxu0 0.0
        %6732 = vmatprep.subr.mxu0 0.0
        %6733 = vmatpush1.xpose.msra.mxu0 0.0
        %6734 = vmatprep.subr.mxu0 0.0
        %6735 = vmatpush1.xpose.msra.mxu0 0.0
        %6736 = vmatprep.subr.mxu0 0.0
        %6737 = vmatpush1.xpose.msra.mxu0 0.0
        %6738 = vmatprep.subr.mxu0 0.0
        %6739 = vmatpush1.xpose.msra.mxu0 0.0
        %6740 = vmatprep.subr.mxu0 0.0
        %6741 = vmatpush1.xpose.msra.mxu0 0.0
        %6742 = vmatprep.subr.mxu0 0.0
        %6743 = vmatpush1.xpose.msra.mxu0 0.0
        %6744 = vmatprep.subr.mxu0 0.0
        %6745 = vmatpush1.xpose.msra.mxu0 0.0
        %6746 = vmatprep.subr.mxu0 0.0
        %6747 = vmatpush1.xpose.msra.mxu0 0.0
        %6748 = vmatprep.subr.mxu0 0.0
        %6749 = vmatpush1.xpose.msra.mxu0 0.0
        %6750 = vmatprep.subr.mxu0 0.0
        %6751 = vmatpush1.xpose.msra.mxu0 0.0
        %6752 = vmatprep.subr.mxu0 0.0
        %6753 = vmatpush1.xpose.msra.mxu0 0.0
        %6754 = vmatprep.subr.mxu0 0.0
        %6755 = vmatpush1.xpose.msra.mxu0 0.0
        %6756 = vmatprep.subr.mxu0 0.0
        %6757 = vmatpush1.xpose.msra.mxu0 0.0
        %6758 = vmatprep.subr.mxu0 0.0
        %6759 = vmatpush1.xpose.msra.mxu0 0.0
        %6760 = vmatprep.subr.mxu0 0.0
        %6761 = vmatpush1.xpose.msra.mxu0 0.0
        %6762 = vmatprep.subr.mxu0 0.0
        %6763 = vmatpush1.xpose.msra.mxu0 0.0
        %6764 = vmatprep.subr.mxu0 0.0
        %6765 = vmatpush1.xpose.msra.mxu0 0.0
        %6766 = vmatprep.subr.mxu0 0.0
        %6767 = vmatpush1.xpose.msra.mxu0 0.0
        %6768 = vmatprep.subr.mxu0 0.0
        %6769 = vmatpush1.xpose.msra.mxu0 0.0
        %6770 = vmatprep.subr.mxu0 0.0
        %6771 = vmatpush1.xpose.msra.mxu0 0.0
        %6772 = vmatprep.subr.mxu0 0.0
        %6773 = vmatpush1.xpose.msra.mxu0 0.0
        %6774 = vmatprep.subr.mxu0 0.0
        %6775 = vmatpush1.xpose.msra.mxu0 0.0
        %6776 = vmatprep.subr.mxu0 0.0
        %6777 = vmatpush1.xpose.msra.mxu0 0.0
        %6778 = vmatprep.subr.mxu0 0.0
        %6779 = vmatpush1.xpose.msra.mxu0 0.0
        %6780 = vmatprep.subr.mxu0 0.0
        %6781 = vmatpush1.xpose.msra.mxu0 0.0
        %6782 = vmatprep.subr.mxu0 0.0
        %6783 = vmatpush1.xpose.msra.mxu0 0.0
        %6784 = vmatprep.subr.mxu0 0.0
        %6785 = vmatpush1.xpose.msra.mxu0 0.0
        %6786 = vmatprep.subr.mxu0 0.0
        %6787 = vmatpush1.xpose.msra.mxu0 0.0
        %6788 = vmatprep.subr.mxu0 0.0
        %6789 = vmatpush1.xpose.msra.mxu0 0.0
        %6790 = vmatprep.subr.mxu0 0.0
        %6791 = vmatpush1.xpose.msra.mxu0 0.0
        %6792 = vmatprep.mubr.f32.mxu0 0.0
        %6793 = vmatmul.mubr.f32.gmra.mrb[0].mxu0 %v1473
        %v6794 = vpop.f32.mrb[0].mxu0
        %v6795 = vadd.f32 0.0, %v6794
        %v6796 = vpop.f32.mrb[0].mxu0
        %6797 = vdwg.mxu0
        %v6798 = vsel %vm1054, %v6721, -inf
        %6799 = vmax.xlane.f32.xlu0 %v6798
        %v6800 = vpop.xlane.xlu0 %6799
        %v6801 = vsel %vm1054, %v6795, -inf
        %6802 = vmax.xlane.f32.xlu0 %v6801
        %v6803 = vpop.xlane.xlu0 %6802
        %v6804 = vmax.f32 %v766, %v6800
        %v6805 = vmax.f32 %v769, %v6803
        %v6806 = vsub.f32 %v6721, %v6804
        %v6807 = vsub.f32 %v6795, %v6805
        %v6808 = vmul.f32 %v6806, 1.442695
        %v6809 = vpow.pop %v6808
        %v6810 = vmul.f32 %v6807, 1.442695
        %v6811 = vpow.pop %v6810
        %v6812 = vsub.f32 %v766, %v6804
        %v6813 = vsub.f32 %v769, %v6805
        %v6814 = vmul.f32 %v6812, 1.442695
        %v6815 = vpow.pop %v6814
        %v6816 = vmul.f32 %v6813, 1.442695
        %v6817 = vpow.pop %v6816
        %v6818 = vmul.f32 %v6815, %v786
        %v6819 = vmul.f32 %v6817, %v789
        %v6820 = vsel %vm1054, %v6809, 0.0
        %6821 = vadd.xlane.f32.xlu0 %v6820
        %v6822 = vpop.xlane.xlu0 %6821
        %v6823 = vsel %vm1054, %v6811, 0.0
        %6824 = vadd.xlane.f32.xlu0 %v6823
        %v6825 = vpop.xlane.xlu0 %6824
        %v6826 = vadd.f32 %v6818, %v6822
        %v6827 = vadd.f32 %v6819, %v6825
        %v6830 = vsel %vm1054, %v6809, 0
        %6832 = vmatprep.subr.mxu0 0.0
        %6833 = vmatpush1.msra.mxu0 %v6651
        %6834 = vmatprep.subr.mxu0 0.0
        %6835 = vmatpush1.msra.mxu0 0.0
        %6836 = vmatprep.subr.mxu0 0.0
        %6837 = vmatpush1.msra.mxu0 0.0
        %6838 = vmatprep.subr.mxu0 0.0
        %6839 = vmatpush1.msra.mxu0 0.0
        %6840 = vmatprep.subr.mxu0 0.0
        %6841 = vmatpush1.msra.mxu0 0.0
        %6842 = vmatprep.subr.mxu0 0.0
        %6843 = vmatpush1.msra.mxu0 0.0
        %6844 = vmatprep.subr.mxu0 0.0
        %6845 = vmatpush1.msra.mxu0 0.0
        %6846 = vmatprep.subr.mxu0 0.0
        %6847 = vmatpush1.msra.mxu0 0.0
        %6848 = vmatprep.subr.mxu0 0.0
        %6849 = vmatpush1.msra.mxu0 0.0
        %6850 = vmatprep.subr.mxu0 0.0
        %6851 = vmatpush1.msra.mxu0 0.0
        %6852 = vmatprep.subr.mxu0 0.0
        %6853 = vmatpush1.msra.mxu0 0.0
        %6854 = vmatprep.subr.mxu0 0.0
        %6855 = vmatpush1.msra.mxu0 0.0
        %6856 = vmatprep.subr.mxu0 0.0
        %6857 = vmatpush1.msra.mxu0 0.0
        %6858 = vmatprep.subr.mxu0 0.0
        %6859 = vmatpush1.msra.mxu0 0.0
        %6860 = vmatprep.subr.mxu0 0.0
        %6861 = vmatpush1.msra.mxu0 0.0
        %6862 = vmatprep.subr.mxu0 0.0
        %6863 = vmatpush1.msra.mxu0 0.0
        %6864 = vmatprep.subr.mxu0 0.0
        %6865 = vmatpush1.msra.mxu0 0.0
        %6866 = vmatprep.subr.mxu0 0.0
        %6867 = vmatpush1.msra.mxu0 0.0
        %6868 = vmatprep.subr.mxu0 0.0
        %6869 = vmatpush1.msra.mxu0 0.0
        %6870 = vmatprep.subr.mxu0 0.0
        %6871 = vmatpush1.msra.mxu0 0.0
        %6872 = vmatprep.subr.mxu0 0.0
        %6873 = vmatpush1.msra.mxu0 0.0
        %6874 = vmatprep.subr.mxu0 0.0
        %6875 = vmatpush1.msra.mxu0 0.0
        %6876 = vmatprep.subr.mxu0 0.0
        %6877 = vmatpush1.msra.mxu0 0.0
        %6878 = vmatprep.subr.mxu0 0.0
        %6879 = vmatpush1.msra.mxu0 0.0
        %6880 = vmatprep.subr.mxu0 0.0
        %6881 = vmatpush1.msra.mxu0 0.0
        %6882 = vmatprep.subr.mxu0 0.0
        %6883 = vmatpush1.msra.mxu0 0.0
        %6884 = vmatprep.subr.mxu0 0.0
        %6885 = vmatpush1.msra.mxu0 0.0
        %6886 = vmatprep.subr.mxu0 0.0
        %6887 = vmatpush1.msra.mxu0 0.0
        %6888 = vmatprep.subr.mxu0 0.0
        %6889 = vmatpush1.msra.mxu0 0.0
        %6890 = vmatprep.subr.mxu0 0.0
        %6891 = vmatpush1.msra.mxu0 0.0
        %6892 = vmatprep.subr.mxu0 0.0
        %6893 = vmatpush1.msra.mxu0 0.0
        %6894 = vmatprep.subr.mxu0 0.0
        %6895 = vmatpush1.msra.mxu0 0.0
        %6896 = vmatprep.mubr.f32.mxu0 0.0
        %6897 = vmatmul.mubr.f32.gmra.mrb[0].mxu0 %v6830
        %v6898 = vpop.f32.mrb[0].mxu0
        %v6899 = vadd.f32 0.0, %v6898
        %v6900 = vpop.f32.mrb[0].mxu0
        %6901 = vdwg.mxu0
        %v6904 = vsel %vm1054, %v6811, 0
        %6906 = vmatprep.subr.mxu0 0.0
        %6907 = vmatpush1.msra.mxu0 %v6725
        %6908 = vmatprep.subr.mxu0 0.0
        %6909 = vmatpush1.msra.mxu0 0.0
        %6910 = vmatprep.subr.mxu0 0.0
        %6911 = vmatpush1.msra.mxu0 0.0
        %6912 = vmatprep.subr.mxu0 0.0
        %6913 = vmatpush1.msra.mxu0 0.0
        %6914 = vmatprep.subr.mxu0 0.0
        %6915 = vmatpush1.msra.mxu0 0.0
        %6916 = vmatprep.subr.mxu0 0.0
        %6917 = vmatpush1.msra.mxu0 0.0
        %6918 = vmatprep.subr.mxu0 0.0
        %6919 = vmatpush1.msra.mxu0 0.0
        %6920 = vmatprep.subr.mxu0 0.0
        %6921 = vmatpush1.msra.mxu0 0.0
        %6922 = vmatprep.subr.mxu0 0.0
        %6923 = vmatpush1.msra.mxu0 0.0
        %6924 = vmatprep.subr.mxu0 0.0
        %6925 = vmatpush1.msra.mxu0 0.0
        %6926 = vmatprep.subr.mxu0 0.0
        %6927 = vmatpush1.msra.mxu0 0.0
        %6928 = vmatprep.subr.mxu0 0.0
        %6929 = vmatpush1.msra.mxu0 0.0
        %6930 = vmatprep.subr.mxu0 0.0
        %6931 = vmatpush1.msra.mxu0 0.0
        %6932 = vmatprep.subr.mxu0 0.0
        %6933 = vmatpush1.msra.mxu0 0.0
        %6934 = vmatprep.subr.mxu0 0.0
        %6935 = vmatpush1.msra.mxu0 0.0
        %6936 = vmatprep.subr.mxu0 0.0
        %6937 = vmatpush1.msra.mxu0 0.0
        %6938 = vmatprep.subr.mxu0 0.0
        %6939 = vmatpush1.msra.mxu0 0.0
        %6940 = vmatprep.subr.mxu0 0.0
        %6941 = vmatpush1.msra.mxu0 0.0
        %6942 = vmatprep.subr.mxu0 0.0
        %6943 = vmatpush1.msra.mxu0 0.0
        %6944 = vmatprep.subr.mxu0 0.0
        %6945 = vmatpush1.msra.mxu0 0.0
        %6946 = vmatprep.subr.mxu0 0.0
        %6947 = vmatpush1.msra.mxu0 0.0
        %6948 = vmatprep.subr.mxu0 0.0
        %6949 = vmatpush1.msra.mxu0 0.0
        %6950 = vmatprep.subr.mxu0 0.0
        %6951 = vmatpush1.msra.mxu0 0.0
        %6952 = vmatprep.subr.mxu0 0.0
        %6953 = vmatpush1.msra.mxu0 0.0
        %6954 = vmatprep.subr.mxu0 0.0
        %6955 = vmatpush1.msra.mxu0 0.0
        %6956 = vmatprep.subr.mxu0 0.0
        %6957 = vmatpush1.msra.mxu0 0.0
        %6958 = vmatprep.subr.mxu0 0.0
        %6959 = vmatpush1.msra.mxu0 0.0
        %6960 = vmatprep.subr.mxu0 0.0
        %6961 = vmatpush1.msra.mxu0 0.0
        %6962 = vmatprep.subr.mxu0 0.0
        %6963 = vmatpush1.msra.mxu0 0.0
        %6964 = vmatprep.subr.mxu0 0.0
        %6965 = vmatpush1.msra.mxu0 0.0
        %6966 = vmatprep.subr.mxu0 0.0
        %6967 = vmatpush1.msra.mxu0 0.0
        %6968 = vmatprep.subr.mxu0 0.0
        %6969 = vmatpush1.msra.mxu0 0.0
        %6970 = vmatprep.mubr.f32.mxu0 0.0
        %6971 = vmatmul.mubr.f32.gmra.mrb[0].mxu0 %v6904
        %v6972 = vpop.f32.mrb[0].mxu0
        %v6973 = vadd.f32 0.0, %v6972
        %v6974 = vpop.f32.mrb[0].mxu0
        %6975 = vdwg.mxu0
        %v6976 = vmul.f32 %v6815, %v1046
        %v6977 = vmul.f32 %v6817, %v1051
        %6980 = vrot.lane.b32.xlu0 %v6899, 8
        %v6981 = vpop.permute.xlu0 %6980
        %6982 = vrot.lane.b32.xlu0 %v6973, 8
        %v6983 = vpop.permute.xlu0 %6982
        %v6986 = vadd.f32 %v6976, %v6981
        %v6987 = vadd.f32 %v6977, %v6983
        %v6988 = vrcp.pop %v6826
        %v6989 = vmul.f32 %v6986, %v6988
        %v6990 = vrcp.pop %v6827
        %v6991 = vmul.f32 %v6987, %v6990
        %6994 = vrot.lane.b32.xlu0 %v6989, 120
        %v6995 = vpop.permute.xlu0 %6994
        %6996 = vrot.lane.b32.xlu0 %v6991, 120
        %v6997 = vpop.permute.xlu0 %6996
        %7000 = vst.msk [vmem:[#allocation2 + $0x8] sm:$0xff] %vm1054, %v6995
        %7001 = vst.msk [vmem:[#allocation2 + $0x18] sm:$0xff] %vm1054, %v6997
        %7002 = vrot.lane.b32.xlu0 %v533, 112
        %v7003 = vpop.permute.xlu0 %7002
        %v7004 = vsel %vm1054, %v7003, 0
        %7006 = vmatprep.subr.mxu0 0.0
        %7007 = vmatpush1.xpose.msra.mxu0 %v7004
        %7008 = vmatprep.subr.mxu0 0.0
        %7009 = vmatpush1.xpose.msra.mxu0 0.0
        %7010 = vmatprep.subr.mxu0 0.0
        %7011 = vmatpush1.xpose.msra.mxu0 0.0
        %7012 = vmatprep.subr.mxu0 0.0
        %7013 = vmatpush1.xpose.msra.mxu0 0.0
        %7014 = vmatprep.subr.mxu0 0.0
        %7015 = vmatpush1.xpose.msra.mxu0 0.0
        %7016 = vmatprep.subr.mxu0 0.0
        %7017 = vmatpush1.xpose.msra.mxu0 0.0
        %7018 = vmatprep.subr.mxu0 0.0
        %7019 = vmatpush1.xpose.msra.mxu0 0.0
        %7020 = vmatprep.subr.mxu0 0.0
        %7021 = vmatpush1.xpose.msra.mxu0 0.0
        %7022 = vmatprep.subr.mxu0 0.0
        %7023 = vmatpush1.xpose.msra.mxu0 0.0
        %7024 = vmatprep.subr.mxu0 0.0
        %7025 = vmatpush1.xpose.msra.mxu0 0.0
        %7026 = vmatprep.subr.mxu0 0.0
        %7027 = vmatpush1.xpose.msra.mxu0 0.0
        %7028 = vmatprep.subr.mxu0 0.0
        %7029 = vmatpush1.xpose.msra.mxu0 0.0
        %7030 = vmatprep.subr.mxu0 0.0
        %7031 = vmatpush1.xpose.msra.mxu0 0.0
        %7032 = vmatprep.subr.mxu0 0.0
        %7033 = vmatpush1.xpose.msra.mxu0 0.0
        %7034 = vmatprep.subr.mxu0 0.0
        %7035 = vmatpush1.xpose.msra.mxu0 0.0
        %7036 = vmatprep.subr.mxu0 0.0
        %7037 = vmatpush1.xpose.msra.mxu0 0.0
        %7038 = vmatprep.subr.mxu0 0.0
        %7039 = vmatpush1.xpose.msra.mxu0 0.0
        %7040 = vmatprep.subr.mxu0 0.0
        %7041 = vmatpush1.xpose.msra.mxu0 0.0
        %7042 = vmatprep.subr.mxu0 0.0
        %7043 = vmatpush1.xpose.msra.mxu0 0.0
        %7044 = vmatprep.subr.mxu0 0.0
        %7045 = vmatpush1.xpose.msra.mxu0 0.0
        %7046 = vmatprep.subr.mxu0 0.0
        %7047 = vmatpush1.xpose.msra.mxu0 0.0
        %7048 = vmatprep.subr.mxu0 0.0
        %7049 = vmatpush1.xpose.msra.mxu0 0.0
        %7050 = vmatprep.subr.mxu0 0.0
        %7051 = vmatpush1.xpose.msra.mxu0 0.0
        %7052 = vmatprep.subr.mxu0 0.0
        %7053 = vmatpush1.xpose.msra.mxu0 0.0
        %7054 = vmatprep.subr.mxu0 0.0
        %7055 = vmatpush1.xpose.msra.mxu0 0.0
        %7056 = vmatprep.subr.mxu0 0.0
        %7057 = vmatpush1.xpose.msra.mxu0 0.0
        %7058 = vmatprep.subr.mxu0 0.0
        %7059 = vmatpush1.xpose.msra.mxu0 0.0
        %7060 = vmatprep.subr.mxu0 0.0
        %7061 = vmatpush1.xpose.msra.mxu0 0.0
        %7062 = vmatprep.subr.mxu0 0.0
        %7063 = vmatpush1.xpose.msra.mxu0 0.0
        %7064 = vmatprep.subr.mxu0 0.0
        %7065 = vmatpush1.xpose.msra.mxu0 0.0
        %7066 = vmatprep.subr.mxu0 0.0
        %7067 = vmatpush1.xpose.msra.mxu0 0.0
        %7068 = vmatprep.subr.mxu0 0.0
        %7069 = vmatpush1.xpose.msra.mxu0 0.0
        %7070 = vmatprep.mubr.f32.mxu0 0.0
        %7071 = vmatmul.mubr.f32.gmra.mrb[0].mxu0 %v1748
        %v7072 = vpop.f32.mrb[0].mxu0
        %v7073 = vadd.f32 0.0, %v7072
        %v7074 = vpop.f32.mrb[0].mxu0
        %7075 = vdwg.mxu0
        %7076 = vrot.lane.b32.xlu0 %v534, 112
        %v7077 = vpop.permute.xlu0 %7076
        %v7078 = vsel %vm1054, %v7077, 0
        %7080 = vmatprep.subr.mxu0 0.0
        %7081 = vmatpush1.xpose.msra.mxu0 %v7078
        %7082 = vmatprep.subr.mxu0 0.0
        %7083 = vmatpush1.xpose.msra.mxu0 0.0
        %7084 = vmatprep.subr.mxu0 0.0
        %7085 = vmatpush1.xpose.msra.mxu0 0.0
        %7086 = vmatprep.subr.mxu0 0.0
        %7087 = vmatpush1.xpose.msra.mxu0 0.0
        %7088 = vmatprep.subr.mxu0 0.0
        %7089 = vmatpush1.xpose.msra.mxu0 0.0
        %7090 = vmatprep.subr.mxu0 0.0
        %7091 = vmatpush1.xpose.msra.mxu0 0.0
        %7092 = vmatprep.subr.mxu0 0.0
        %7093 = vmatpush1.xpose.msra.mxu0 0.0
        %7094 = vmatprep.subr.mxu0 0.0
        %7095 = vmatpush1.xpose.msra.mxu0 0.0
        %7096 = vmatprep.subr.mxu0 0.0
        %7097 = vmatpush1.xpose.msra.mxu0 0.0
        %7098 = vmatprep.subr.mxu0 0.0
        %7099 = vmatpush1.xpose.msra.mxu0 0.0
        %7100 = vmatprep.subr.mxu0 0.0
        %7101 = vmatpush1.xpose.msra.mxu0 0.0
        %7102 = vmatprep.subr.mxu0 0.0
        %7103 = vmatpush1.xpose.msra.mxu0 0.0
        %7104 = vmatprep.subr.mxu0 0.0
        %7105 = vmatpush1.xpose.msra.mxu0 0.0
        %7106 = vmatprep.subr.mxu0 0.0
        %7107 = vmatpush1.xpose.msra.mxu0 0.0
        %7108 = vmatprep.subr.mxu0 0.0
        %7109 = vmatpush1.xpose.msra.mxu0 0.0
        %7110 = vmatprep.subr.mxu0 0.0
        %7111 = vmatpush1.xpose.msra.mxu0 0.0
        %7112 = vmatprep.subr.mxu0 0.0
        %7113 = vmatpush1.xpose.msra.mxu0 0.0
        %7114 = vmatprep.subr.mxu0 0.0
        %7115 = vmatpush1.xpose.msra.mxu0 0.0
        %7116 = vmatprep.subr.mxu0 0.0
        %7117 = vmatpush1.xpose.msra.mxu0 0.0
        %7118 = vmatprep.subr.mxu0 0.0
        %7119 = vmatpush1.xpose.msra.mxu0 0.0
        %7120 = vmatprep.subr.mxu0 0.0
        %7121 = vmatpush1.xpose.msra.mxu0 0.0
        %7122 = vmatprep.subr.mxu0 0.0
        %7123 = vmatpush1.xpose.msra.mxu0 0.0
        %7124 = vmatprep.subr.mxu0 0.0
        %7125 = vmatpush1.xpose.msra.mxu0 0.0
        %7126 = vmatprep.subr.mxu0 0.0
        %7127 = vmatpush1.xpose.msra.mxu0 0.0
        %7128 = vmatprep.subr.mxu0 0.0
        %7129 = vmatpush1.xpose.msra.mxu0 0.0
        %7130 = vmatprep.subr.mxu0 0.0
        %7131 = vmatpush1.xpose.msra.mxu0 0.0
        %7132 = vmatprep.subr.mxu0 0.0
        %7133 = vmatpush1.xpose.msra.mxu0 0.0
        %7134 = vmatprep.subr.mxu0 0.0
        %7135 = vmatpush1.xpose.msra.mxu0 0.0
        %7136 = vmatprep.subr.mxu0 0.0
        %7137 = vmatpush1.xpose.msra.mxu0 0.0
        %7138 = vmatprep.subr.mxu0 0.0
        %7139 = vmatpush1.xpose.msra.mxu0 0.0
        %7140 = vmatprep.subr.mxu0 0.0
        %7141 = vmatpush1.xpose.msra.mxu0 0.0
        %7142 = vmatprep.subr.mxu0 0.0
        %7143 = vmatpush1.xpose.msra.mxu0 0.0
        %7144 = vmatprep.mubr.f32.mxu0 0.0
        %7145 = vmatmul.mubr.f32.gmra.mrb[0].mxu0 %v1826
        %v7146 = vpop.f32.mrb[0].mxu0
        %v7147 = vadd.f32 0.0, %v7146
        %v7148 = vpop.f32.mrb[0].mxu0
        %7149 = vdwg.mxu0
        %v7150 = vsel %vm1054, %v7073, -inf
        %7151 = vmax.xlane.f32.xlu0 %v7150
        %v7152 = vpop.xlane.xlu0 %7151
        %v7153 = vsel %vm1054, %v7147, -inf
        %7154 = vmax.xlane.f32.xlu0 %v7153
        %v7155 = vpop.xlane.xlu0 %7154
        %v7156 = vmax.f32 %v792, %v7152
        %v7157 = vmax.f32 %v795, %v7155
        %v7158 = vsub.f32 %v7073, %v7156
        %v7159 = vsub.f32 %v7147, %v7157
        %v7160 = vmul.f32 %v7158, 1.442695
        %v7161 = vpow.pop %v7160
        %v7162 = vmul.f32 %v7159, 1.442695
        %v7163 = vpow.pop %v7162
        %v7164 = vsub.f32 %v792, %v7156
        %v7165 = vsub.f32 %v795, %v7157
        %v7166 = vmul.f32 %v7164, 1.442695
        %v7167 = vpow.pop %v7166
        %v7168 = vmul.f32 %v7165, 1.442695
        %v7169 = vpow.pop %v7168
        %v7170 = vmul.f32 %v7167, %v804
        %v7171 = vmul.f32 %v7169, %v807
        %v7172 = vsel %vm1054, %v7161, 0.0
        %7173 = vadd.xlane.f32.xlu0 %v7172
        %v7174 = vpop.xlane.xlu0 %7173
        %v7175 = vsel %vm1054, %v7163, 0.0
        %7176 = vadd.xlane.f32.xlu0 %v7175
        %v7177 = vpop.xlane.xlu0 %7176
        %v7178 = vadd.f32 %v7170, %v7174
        %v7179 = vadd.f32 %v7171, %v7177
        %v7182 = vsel %vm1054, %v7161, 0
        %7184 = vmatprep.subr.mxu0 0.0
        %7185 = vmatpush1.msra.mxu0 %v7003
        %7186 = vmatprep.subr.mxu0 0.0
        %7187 = vmatpush1.msra.mxu0 0.0
        %7188 = vmatprep.subr.mxu0 0.0
        %7189 = vmatpush1.msra.mxu0 0.0
        %7190 = vmatprep.subr.mxu0 0.0
        %7191 = vmatpush1.msra.mxu0 0.0
        %7192 = vmatprep.subr.mxu0 0.0
        %7193 = vmatpush1.msra.mxu0 0.0
        %7194 = vmatprep.subr.mxu0 0.0
        %7195 = vmatpush1.msra.mxu0 0.0
        %7196 = vmatprep.subr.mxu0 0.0
        %7197 = vmatpush1.msra.mxu0 0.0
        %7198 = vmatprep.subr.mxu0 0.0
        %7199 = vmatpush1.msra.mxu0 0.0
        %7200 = vmatprep.subr.mxu0 0.0
        %7201 = vmatpush1.msra.mxu0 0.0
        %7202 = vmatprep.subr.mxu0 0.0
        %7203 = vmatpush1.msra.mxu0 0.0
        %7204 = vmatprep.subr.mxu0 0.0
        %7205 = vmatpush1.msra.mxu0 0.0
        %7206 = vmatprep.subr.mxu0 0.0
        %7207 = vmatpush1.msra.mxu0 0.0
        %7208 = vmatprep.subr.mxu0 0.0
        %7209 = vmatpush1.msra.mxu0 0.0
        %7210 = vmatprep.subr.mxu0 0.0
        %7211 = vmatpush1.msra.mxu0 0.0
        %7212 = vmatprep.subr.mxu0 0.0
        %7213 = vmatpush1.msra.mxu0 0.0
        %7214 = vmatprep.subr.mxu0 0.0
        %7215 = vmatpush1.msra.mxu0 0.0
        %7216 = vmatprep.subr.mxu0 0.0
        %7217 = vmatpush1.msra.mxu0 0.0
        %7218 = vmatprep.subr.mxu0 0.0
        %7219 = vmatpush1.msra.mxu0 0.0
        %7220 = vmatprep.subr.mxu0 0.0
        %7221 = vmatpush1.msra.mxu0 0.0
        %7222 = vmatprep.subr.mxu0 0.0
        %7223 = vmatpush1.msra.mxu0 0.0
        %7224 = vmatprep.subr.mxu0 0.0
        %7225 = vmatpush1.msra.mxu0 0.0
        %7226 = vmatprep.subr.mxu0 0.0
        %7227 = vmatpush1.msra.mxu0 0.0
        %7228 = vmatprep.subr.mxu0 0.0
        %7229 = vmatpush1.msra.mxu0 0.0
        %7230 = vmatprep.subr.mxu0 0.0
        %7231 = vmatpush1.msra.mxu0 0.0
        %7232 = vmatprep.subr.mxu0 0.0
        %7233 = vmatpush1.msra.mxu0 0.0
        %7234 = vmatprep.subr.mxu0 0.0
        %7235 = vmatpush1.msra.mxu0 0.0
        %7236 = vmatprep.subr.mxu0 0.0
        %7237 = vmatpush1.msra.mxu0 0.0
        %7238 = vmatprep.subr.mxu0 0.0
        %7239 = vmatpush1.msra.mxu0 0.0
        %7240 = vmatprep.subr.mxu0 0.0
        %7241 = vmatpush1.msra.mxu0 0.0
        %7242 = vmatprep.subr.mxu0 0.0
        %7243 = vmatpush1.msra.mxu0 0.0
        %7244 = vmatprep.subr.mxu0 0.0
        %7245 = vmatpush1.msra.mxu0 0.0
        %7246 = vmatprep.subr.mxu0 0.0
        %7247 = vmatpush1.msra.mxu0 0.0
        %7248 = vmatprep.mubr.f32.mxu0 0.0
        %7249 = vmatmul.mubr.f32.gmra.mrb[0].mxu0 %v7182
        %v7250 = vpop.f32.mrb[0].mxu0
        %v7251 = vadd.f32 0.0, %v7250
        %v7252 = vpop.f32.mrb[0].mxu0
        %7253 = vdwg.mxu0
        %v7256 = vsel %vm1054, %v7163, 0
        %7258 = vmatprep.subr.mxu0 0.0
        %7259 = vmatpush1.msra.mxu0 %v7077
        %7260 = vmatprep.subr.mxu0 0.0
        %7261 = vmatpush1.msra.mxu0 0.0
        %7262 = vmatprep.subr.mxu0 0.0
        %7263 = vmatpush1.msra.mxu0 0.0
        %7264 = vmatprep.subr.mxu0 0.0
        %7265 = vmatpush1.msra.mxu0 0.0
        %7266 = vmatprep.subr.mxu0 0.0
        %7267 = vmatpush1.msra.mxu0 0.0
        %7268 = vmatprep.subr.mxu0 0.0
        %7269 = vmatpush1.msra.mxu0 0.0
        %7270 = vmatprep.subr.mxu0 0.0
        %7271 = vmatpush1.msra.mxu0 0.0
        %7272 = vmatprep.subr.mxu0 0.0
        %7273 = vmatpush1.msra.mxu0 0.0
        %7274 = vmatprep.subr.mxu0 0.0
        %7275 = vmatpush1.msra.mxu0 0.0
        %7276 = vmatprep.subr.mxu0 0.0
        %7277 = vmatpush1.msra.mxu0 0.0
        %7278 = vmatprep.subr.mxu0 0.0
        %7279 = vmatpush1.msra.mxu0 0.0
        %7280 = vmatprep.subr.mxu0 0.0
        %7281 = vmatpush1.msra.mxu0 0.0
        %7282 = vmatprep.subr.mxu0 0.0
        %7283 = vmatpush1.msra.mxu0 0.0
        %7284 = vmatprep.subr.mxu0 0.0
        %7285 = vmatpush1.msra.mxu0 0.0
        %7286 = vmatprep.subr.mxu0 0.0
        %7287 = vmatpush1.msra.mxu0 0.0
        %7288 = vmatprep.subr.mxu0 0.0
        %7289 = vmatpush1.msra.mxu0 0.0
        %7290 = vmatprep.subr.mxu0 0.0
        %7291 = vmatpush1.msra.mxu0 0.0
        %7292 = vmatprep.subr.mxu0 0.0
        %7293 = vmatpush1.msra.mxu0 0.0
        %7294 = vmatprep.subr.mxu0 0.0
        %7295 = vmatpush1.msra.mxu0 0.0
        %7296 = vmatprep.subr.mxu0 0.0
        %7297 = vmatpush1.msra.mxu0 0.0
        %7298 = vmatprep.subr.mxu0 0.0
        %7299 = vmatpush1.msra.mxu0 0.0
        %7300 = vmatprep.subr.mxu0 0.0
        %7301 = vmatpush1.msra.mxu0 0.0
        %7302 = vmatprep.subr.mxu0 0.0
        %7303 = vmatpush1.msra.mxu0 0.0
        %7304 = vmatprep.subr.mxu0 0.0
        %7305 = vmatpush1.msra.mxu0 0.0
        %7306 = vmatprep.subr.mxu0 0.0
        %7307 = vmatpush1.msra.mxu0 0.0
        %7308 = vmatprep.subr.mxu0 0.0
        %7309 = vmatpush1.msra.mxu0 0.0
        %7310 = vmatprep.subr.mxu0 0.0
        %7311 = vmatpush1.msra.mxu0 0.0
        %7312 = vmatprep.subr.mxu0 0.0
        %7313 = vmatpush1.msra.mxu0 0.0
        %7314 = vmatprep.subr.mxu0 0.0
        %7315 = vmatpush1.msra.mxu0 0.0
        %7316 = vmatprep.subr.mxu0 0.0
        %7317 = vmatpush1.msra.mxu0 0.0
        %7318 = vmatprep.subr.mxu0 0.0
        %7319 = vmatpush1.msra.mxu0 0.0
        %7320 = vmatprep.subr.mxu0 0.0
        %7321 = vmatpush1.msra.mxu0 0.0
        %7322 = vmatprep.mubr.f32.mxu0 0.0
        %7323 = vmatmul.mubr.f32.gmra.mrb[0].mxu0 %v7256
        %v7324 = vpop.f32.mrb[0].mxu0
        %v7325 = vadd.f32 0.0, %v7324
        %v7326 = vpop.f32.mrb[0].mxu0
        %7327 = vdwg.mxu0
        %v7328 = vmul.f32 %v7167, %v1046
        %v7329 = vmul.f32 %v7169, %v1051
        %7332 = vrot.lane.b32.xlu0 %v7251, 16
        %v7333 = vpop.permute.xlu0 %7332
        %7334 = vrot.lane.b32.xlu0 %v7325, 16
        %v7335 = vpop.permute.xlu0 %7334
        %v7338 = vadd.f32 %v7328, %v7333
        %v7339 = vadd.f32 %v7329, %v7335
        %v7340 = vrcp.pop %v7178
        %v7341 = vmul.f32 %v7338, %v7340
        %v7342 = vrcp.pop %v7179
        %v7343 = vmul.f32 %v7339, %v7342
        %7346 = vrot.lane.b32.xlu0 %v7341, 120
        %v7347 = vpop.permute.xlu0 %7346
        %7348 = vrot.lane.b32.xlu0 %v7343, 120
        %v7349 = vpop.permute.xlu0 %7348
        %7352 = vst.msk [vmem:[#allocation2 + $0x8] sm:$0xff] %vm1741, %v7347
        %7353 = vst.msk [vmem:[#allocation2 + $0x18] sm:$0xff] %vm1741, %v7349
        %7354 = vrot.lane.b32.xlu0 %v533, 104
        %v7355 = vpop.permute.xlu0 %7354
        %v7356 = vsel %vm1054, %v7355, 0
        %7358 = vmatprep.subr.mxu0 0.0
        %7359 = vmatpush1.xpose.msra.mxu0 %v7356
        %7360 = vmatprep.subr.mxu0 0.0
        %7361 = vmatpush1.xpose.msra.mxu0 0.0
        %7362 = vmatprep.subr.mxu0 0.0
        %7363 = vmatpush1.xpose.msra.mxu0 0.0
        %7364 = vmatprep.subr.mxu0 0.0
        %7365 = vmatpush1.xpose.msra.mxu0 0.0
        %7366 = vmatprep.subr.mxu0 0.0
        %7367 = vmatpush1.xpose.msra.mxu0 0.0
        %7368 = vmatprep.subr.mxu0 0.0
        %7369 = vmatpush1.xpose.msra.mxu0 0.0
        %7370 = vmatprep.subr.mxu0 0.0
        %7371 = vmatpush1.xpose.msra.mxu0 0.0
        %7372 = vmatprep.subr.mxu0 0.0
        %7373 = vmatpush1.xpose.msra.mxu0 0.0
        %7374 = vmatprep.subr.mxu0 0.0
        %7375 = vmatpush1.xpose.msra.mxu0 0.0
        %7376 = vmatprep.subr.mxu0 0.0
        %7377 = vmatpush1.xpose.msra.mxu0 0.0
        %7378 = vmatprep.subr.mxu0 0.0
        %7379 = vmatpush1.xpose.msra.mxu0 0.0
        %7380 = vmatprep.subr.mxu0 0.0
        %7381 = vmatpush1.xpose.msra.mxu0 0.0
        %7382 = vmatprep.subr.mxu0 0.0
        %7383 = vmatpush1.xpose.msra.mxu0 0.0
        %7384 = vmatprep.subr.mxu0 0.0
        %7385 = vmatpush1.xpose.msra.mxu0 0.0
        %7386 = vmatprep.subr.mxu0 0.0
        %7387 = vmatpush1.xpose.msra.mxu0 0.0
        %7388 = vmatprep.subr.mxu0 0.0
        %7389 = vmatpush1.xpose.msra.mxu0 0.0
        %7390 = vmatprep.subr.mxu0 0.0
        %7391 = vmatpush1.xpose.msra.mxu0 0.0
        %7392 = vmatprep.subr.mxu0 0.0
        %7393 = vmatpush1.xpose.msra.mxu0 0.0
        %7394 = vmatprep.subr.mxu0 0.0
        %7395 = vmatpush1.xpose.msra.mxu0 0.0
        %7396 = vmatprep.subr.mxu0 0.0
        %7397 = vmatpush1.xpose.msra.mxu0 0.0
        %7398 = vmatprep.subr.mxu0 0.0
        %7399 = vmatpush1.xpose.msra.mxu0 0.0
        %7400 = vmatprep.subr.mxu0 0.0
        %7401 = vmatpush1.xpose.msra.mxu0 0.0
        %7402 = vmatprep.subr.mxu0 0.0
        %7403 = vmatpush1.xpose.msra.mxu0 0.0
        %7404 = vmatprep.subr.mxu0 0.0
        %7405 = vmatpush1.xpose.msra.mxu0 0.0
        %7406 = vmatprep.subr.mxu0 0.0
        %7407 = vmatpush1.xpose.msra.mxu0 0.0
        %7408 = vmatprep.subr.mxu0 0.0
        %7409 = vmatpush1.xpose.msra.mxu0 0.0
        %7410 = vmatprep.subr.mxu0 0.0
        %7411 = vmatpush1.xpose.msra.mxu0 0.0
        %7412 = vmatprep.subr.mxu0 0.0
        %7413 = vmatpush1.xpose.msra.mxu0 0.0
        %7414 = vmatprep.subr.mxu0 0.0
        %7415 = vmatpush1.xpose.msra.mxu0 0.0
        %7416 = vmatprep.subr.mxu0 0.0
        %7417 = vmatpush1.xpose.msra.mxu0 0.0
        %7418 = vmatprep.subr.mxu0 0.0
        %7419 = vmatpush1.xpose.msra.mxu0 0.0
        %7420 = vmatprep.subr.mxu0 0.0
        %7421 = vmatpush1.xpose.msra.mxu0 0.0
        %7422 = vmatprep.mubr.f32.mxu0 0.0
        %7423 = vmatmul.mubr.f32.gmra.mrb[0].mxu0 %v2101
        %v7424 = vpop.f32.mrb[0].mxu0
        %v7425 = vadd.f32 0.0, %v7424
        %v7426 = vpop.f32.mrb[0].mxu0
        %7427 = vdwg.mxu0
        %7428 = vrot.lane.b32.xlu0 %v534, 104
        %v7429 = vpop.permute.xlu0 %7428
        %v7430 = vsel %vm1054, %v7429, 0
        %7432 = vmatprep.subr.mxu0 0.0
        %7433 = vmatpush1.xpose.msra.mxu0 %v7430
        %7434 = vmatprep.subr.mxu0 0.0
        %7435 = vmatpush1.xpose.msra.mxu0 0.0
        %7436 = vmatprep.subr.mxu0 0.0
        %7437 = vmatpush1.xpose.msra.mxu0 0.0
        %7438 = vmatprep.subr.mxu0 0.0
        %7439 = vmatpush1.xpose.msra.mxu0 0.0
        %7440 = vmatprep.subr.mxu0 0.0
        %7441 = vmatpush1.xpose.msra.mxu0 0.0
        %7442 = vmatprep.subr.mxu0 0.0
        %7443 = vmatpush1.xpose.msra.mxu0 0.0
        %7444 = vmatprep.subr.mxu0 0.0
        %7445 = vmatpush1.xpose.msra.mxu0 0.0
        %7446 = vmatprep.subr.mxu0 0.0
        %7447 = vmatpush1.xpose.msra.mxu0 0.0
        %7448 = vmatprep.subr.mxu0 0.0
        %7449 = vmatpush1.xpose.msra.mxu0 0.0
        %7450 = vmatprep.subr.mxu0 0.0
        %7451 = vmatpush1.xpose.msra.mxu0 0.0
        %7452 = vmatprep.subr.mxu0 0.0
        %7453 = vmatpush1.xpose.msra.mxu0 0.0
        %7454 = vmatprep.subr.mxu0 0.0
        %7455 = vmatpush1.xpose.msra.mxu0 0.0
        %7456 = vmatprep.subr.mxu0 0.0
        %7457 = vmatpush1.xpose.msra.mxu0 0.0
        %7458 = vmatprep.subr.mxu0 0.0
        %7459 = vmatpush1.xpose.msra.mxu0 0.0
        %7460 = vmatprep.subr.mxu0 0.0
        %7461 = vmatpush1.xpose.msra.mxu0 0.0
        %7462 = vmatprep.subr.mxu0 0.0
        %7463 = vmatpush1.xpose.msra.mxu0 0.0
        %7464 = vmatprep.subr.mxu0 0.0
        %7465 = vmatpush1.xpose.msra.mxu0 0.0
        %7466 = vmatprep.subr.mxu0 0.0
        %7467 = vmatpush1.xpose.msra.mxu0 0.0
        %7468 = vmatprep.subr.mxu0 0.0
        %7469 = vmatpush1.xpose.msra.mxu0 0.0
        %7470 = vmatprep.subr.mxu0 0.0
        %7471 = vmatpush1.xpose.msra.mxu0 0.0
        %7472 = vmatprep.subr.mxu0 0.0
        %7473 = vmatpush1.xpose.msra.mxu0 0.0
        %7474 = vmatprep.subr.mxu0 0.0
        %7475 = vmatpush1.xpose.msra.mxu0 0.0
        %7476 = vmatprep.subr.mxu0 0.0
        %7477 = vmatpush1.xpose.msra.mxu0 0.0
        %7478 = vmatprep.subr.mxu0 0.0
        %7479 = vmatpush1.xpose.msra.mxu0 0.0
        %7480 = vmatprep.subr.mxu0 0.0
        %7481 = vmatpush1.xpose.msra.mxu0 0.0
        %7482 = vmatprep.subr.mxu0 0.0
        %7483 = vmatpush1.xpose.msra.mxu0 0.0
        %7484 = vmatprep.subr.mxu0 0.0
        %7485 = vmatpush1.xpose.msra.mxu0 0.0
        %7486 = vmatprep.subr.mxu0 0.0
        %7487 = vmatpush1.xpose.msra.mxu0 0.0
        %7488 = vmatprep.subr.mxu0 0.0
        %7489 = vmatpush1.xpose.msra.mxu0 0.0
        %7490 = vmatprep.subr.mxu0 0.0
        %7491 = vmatpush1.xpose.msra.mxu0 0.0
        %7492 = vmatprep.subr.mxu0 0.0
        %7493 = vmatpush1.xpose.msra.mxu0 0.0
        %7494 = vmatprep.subr.mxu0 0.0
        %7495 = vmatpush1.xpose.msra.mxu0 0.0
        %7496 = vmatprep.mubr.f32.mxu0 0.0
        %7497 = vmatmul.mubr.f32.gmra.mrb[0].mxu0 %v2179
        %v7498 = vpop.f32.mrb[0].mxu0
        %v7499 = vadd.f32 0.0, %v7498
        %v7500 = vpop.f32.mrb[0].mxu0
        %7501 = vdwg.mxu0
        %v7502 = vsel %vm1054, %v7425, -inf
        %7503 = vmax.xlane.f32.xlu0 %v7502
        %v7504 = vpop.xlane.xlu0 %7503
        %v7505 = vsel %vm1054, %v7499, -inf
        %7506 = vmax.xlane.f32.xlu0 %v7505
        %v7507 = vpop.xlane.xlu0 %7506
        %v7508 = vmax.f32 %v810, %v7504
        %v7509 = vmax.f32 %v813, %v7507
        %v7510 = vsub.f32 %v7425, %v7508
        %v7511 = vsub.f32 %v7499, %v7509
        %v7512 = vmul.f32 %v7510, 1.442695
        %v7513 = vpow.pop %v7512
        %v7514 = vmul.f32 %v7511, 1.442695
        %v7515 = vpow.pop %v7514
        %v7516 = vsub.f32 %v810, %v7508
        %v7517 = vsub.f32 %v813, %v7509
        %v7518 = vmul.f32 %v7516, 1.442695
        %v7519 = vpow.pop %v7518
        %v7520 = vmul.f32 %v7517, 1.442695
        %v7521 = vpow.pop %v7520
        %v7522 = vmul.f32 %v7519, %v830
        %v7523 = vmul.f32 %v7521, %v833
        %v7524 = vsel %vm1054, %v7513, 0.0
        %7525 = vadd.xlane.f32.xlu0 %v7524
        %v7526 = vpop.xlane.xlu0 %7525
        %v7527 = vsel %vm1054, %v7515, 0.0
        %7528 = vadd.xlane.f32.xlu0 %v7527
        %v7529 = vpop.xlane.xlu0 %7528
        %v7530 = vadd.f32 %v7522, %v7526
        %v7531 = vadd.f32 %v7523, %v7529
        %v7534 = vsel %vm1054, %v7513, 0
        %7536 = vmatprep.subr.mxu0 0.0
        %7537 = vmatpush1.msra.mxu0 %v7355
        %7538 = vmatprep.subr.mxu0 0.0
        %7539 = vmatpush1.msra.mxu0 0.0
        %7540 = vmatprep.subr.mxu0 0.0
        %7541 = vmatpush1.msra.mxu0 0.0
        %7542 = vmatprep.subr.mxu0 0.0
        %7543 = vmatpush1.msra.mxu0 0.0
        %7544 = vmatprep.subr.mxu0 0.0
        %7545 = vmatpush1.msra.mxu0 0.0
        %7546 = vmatprep.subr.mxu0 0.0
        %7547 = vmatpush1.msra.mxu0 0.0
        %7548 = vmatprep.subr.mxu0 0.0
        %7549 = vmatpush1.msra.mxu0 0.0
        %7550 = vmatprep.subr.mxu0 0.0
        %7551 = vmatpush1.msra.mxu0 0.0
        %7552 = vmatprep.subr.mxu0 0.0
        %7553 = vmatpush1.msra.mxu0 0.0
        %7554 = vmatprep.subr.mxu0 0.0
        %7555 = vmatpush1.msra.mxu0 0.0
        %7556 = vmatprep.subr.mxu0 0.0
        %7557 = vmatpush1.msra.mxu0 0.0
        %7558 = vmatprep.subr.mxu0 0.0
        %7559 = vmatpush1.msra.mxu0 0.0
        %7560 = vmatprep.subr.mxu0 0.0
        %7561 = vmatpush1.msra.mxu0 0.0
        %7562 = vmatprep.subr.mxu0 0.0
        %7563 = vmatpush1.msra.mxu0 0.0
        %7564 = vmatprep.subr.mxu0 0.0
        %7565 = vmatpush1.msra.mxu0 0.0
        %7566 = vmatprep.subr.mxu0 0.0
        %7567 = vmatpush1.msra.mxu0 0.0
        %7568 = vmatprep.subr.mxu0 0.0
        %7569 = vmatpush1.msra.mxu0 0.0
        %7570 = vmatprep.subr.mxu0 0.0
        %7571 = vmatpush1.msra.mxu0 0.0
        %7572 = vmatprep.subr.mxu0 0.0
        %7573 = vmatpush1.msra.mxu0 0.0
        %7574 = vmatprep.subr.mxu0 0.0
        %7575 = vmatpush1.msra.mxu0 0.0
        %7576 = vmatprep.subr.mxu0 0.0
        %7577 = vmatpush1.msra.mxu0 0.0
        %7578 = vmatprep.subr.mxu0 0.0
        %7579 = vmatpush1.msra.mxu0 0.0
        %7580 = vmatprep.subr.mxu0 0.0
        %7581 = vmatpush1.msra.mxu0 0.0
        %7582 = vmatprep.subr.mxu0 0.0
        %7583 = vmatpush1.msra.mxu0 0.0
        %7584 = vmatprep.subr.mxu0 0.0
        %7585 = vmatpush1.msra.mxu0 0.0
        %7586 = vmatprep.subr.mxu0 0.0
        %7587 = vmatpush1.msra.mxu0 0.0
        %7588 = vmatprep.subr.mxu0 0.0
        %7589 = vmatpush1.msra.mxu0 0.0
        %7590 = vmatprep.subr.mxu0 0.0
        %7591 = vmatpush1.msra.mxu0 0.0
        %7592 = vmatprep.subr.mxu0 0.0
        %7593 = vmatpush1.msra.mxu0 0.0
        %7594 = vmatprep.subr.mxu0 0.0
        %7595 = vmatpush1.msra.mxu0 0.0
        %7596 = vmatprep.subr.mxu0 0.0
        %7597 = vmatpush1.msra.mxu0 0.0
        %7598 = vmatprep.subr.mxu0 0.0
        %7599 = vmatpush1.msra.mxu0 0.0
        %7600 = vmatprep.mubr.f32.mxu0 0.0
        %7601 = vmatmul.mubr.f32.gmra.mrb[0].mxu0 %v7534
        %v7602 = vpop.f32.mrb[0].mxu0
        %v7603 = vadd.f32 0.0, %v7602
        %v7604 = vpop.f32.mrb[0].mxu0
        %7605 = vdwg.mxu0
        %v7608 = vsel %vm1054, %v7515, 0
        %7610 = vmatprep.subr.mxu0 0.0
        %7611 = vmatpush1.msra.mxu0 %v7429
        %7612 = vmatprep.subr.mxu0 0.0
        %7613 = vmatpush1.msra.mxu0 0.0
        %7614 = vmatprep.subr.mxu0 0.0
        %7615 = vmatpush1.msra.mxu0 0.0
        %7616 = vmatprep.subr.mxu0 0.0
        %7617 = vmatpush1.msra.mxu0 0.0
        %7618 = vmatprep.subr.mxu0 0.0
        %7619 = vmatpush1.msra.mxu0 0.0
        %7620 = vmatprep.subr.mxu0 0.0
        %7621 = vmatpush1.msra.mxu0 0.0
        %7622 = vmatprep.subr.mxu0 0.0
        %7623 = vmatpush1.msra.mxu0 0.0
        %7624 = vmatprep.subr.mxu0 0.0
        %7625 = vmatpush1.msra.mxu0 0.0
        %7626 = vmatprep.subr.mxu0 0.0
        %7627 = vmatpush1.msra.mxu0 0.0
        %7628 = vmatprep.subr.mxu0 0.0
        %7629 = vmatpush1.msra.mxu0 0.0
        %7630 = vmatprep.subr.mxu0 0.0
        %7631 = vmatpush1.msra.mxu0 0.0
        %7632 = vmatprep.subr.mxu0 0.0
        %7633 = vmatpush1.msra.mxu0 0.0
        %7634 = vmatprep.subr.mxu0 0.0
        %7635 = vmatpush1.msra.mxu0 0.0
        %7636 = vmatprep.subr.mxu0 0.0
        %7637 = vmatpush1.msra.mxu0 0.0
        %7638 = vmatprep.subr.mxu0 0.0
        %7639 = vmatpush1.msra.mxu0 0.0
        %7640 = vmatprep.subr.mxu0 0.0
        %7641 = vmatpush1.msra.mxu0 0.0
        %7642 = vmatprep.subr.mxu0 0.0
        %7643 = vmatpush1.msra.mxu0 0.0
        %7644 = vmatprep.subr.mxu0 0.0
        %7645 = vmatpush1.msra.mxu0 0.0
        %7646 = vmatprep.subr.mxu0 0.0
        %7647 = vmatpush1.msra.mxu0 0.0
        %7648 = vmatprep.subr.mxu0 0.0
        %7649 = vmatpush1.msra.mxu0 0.0
        %7650 = vmatprep.subr.mxu0 0.0
        %7651 = vmatpush1.msra.mxu0 0.0
        %7652 = vmatprep.subr.mxu0 0.0
        %7653 = vmatpush1.msra.mxu0 0.0
        %7654 = vmatprep.subr.mxu0 0.0
        %7655 = vmatpush1.msra.mxu0 0.0
        %7656 = vmatprep.subr.mxu0 0.0
        %7657 = vmatpush1.msra.mxu0 0.0
        %7658 = vmatprep.subr.mxu0 0.0
        %7659 = vmatpush1.msra.mxu0 0.0
        %7660 = vmatprep.subr.mxu0 0.0
        %7661 = vmatpush1.msra.mxu0 0.0
        %7662 = vmatprep.subr.mxu0 0.0
        %7663 = vmatpush1.msra.mxu0 0.0
        %7664 = vmatprep.subr.mxu0 0.0
        %7665 = vmatpush1.msra.mxu0 0.0
        %7666 = vmatprep.subr.mxu0 0.0
        %7667 = vmatpush1.msra.mxu0 0.0
        %7668 = vmatprep.subr.mxu0 0.0
        %7669 = vmatpush1.msra.mxu0 0.0
        %7670 = vmatprep.subr.mxu0 0.0
        %7671 = vmatpush1.msra.mxu0 0.0
        %7672 = vmatprep.subr.mxu0 0.0
        %7673 = vmatpush1.msra.mxu0 0.0
        %7674 = vmatprep.mubr.f32.mxu0 0.0
        %7675 = vmatmul.mubr.f32.gmra.mrb[0].mxu0 %v7608
        %v7676 = vpop.f32.mrb[0].mxu0
        %v7677 = vadd.f32 0.0, %v7676
        %v7678 = vpop.f32.mrb[0].mxu0
        %7679 = vdwg.mxu0
        %v7680 = vmul.f32 %v7519, %v1046
        %v7681 = vmul.f32 %v7521, %v1051
        %7684 = vrot.lane.b32.xlu0 %v7603, 24
        %v7685 = vpop.permute.xlu0 %7684
        %7686 = vrot.lane.b32.xlu0 %v7677, 24
        %v7687 = vpop.permute.xlu0 %7686
        %v7690 = vadd.f32 %v7680, %v7685
        %v7691 = vadd.f32 %v7681, %v7687
        %v7692 = vrcp.pop %v7530
        %v7693 = vmul.f32 %v7690, %v7692
        %v7694 = vrcp.pop %v7531
        %v7695 = vmul.f32 %v7691, %v7694
        %7698 = vrot.lane.b32.xlu0 %v7693, 120
        %v7699 = vpop.permute.xlu0 %7698
        %7700 = vrot.lane.b32.xlu0 %v7695, 120
        %v7701 = vpop.permute.xlu0 %7700
        %7704 = vst.msk [vmem:[#allocation2 + $0x8] sm:$0xff] %vm2094, %v7699
        %7705 = vst.msk [vmem:[#allocation2 + $0x18] sm:$0xff] %vm2094, %v7701
        %7706 = vrot.lane.b32.xlu0 %v533, 96
        %v7707 = vpop.permute.xlu0 %7706
        %v7708 = vsel %vm1054, %v7707, 0
        %7710 = vmatprep.subr.mxu0 0.0
        %7711 = vmatpush1.xpose.msra.mxu0 %v7708
        %7712 = vmatprep.subr.mxu0 0.0
        %7713 = vmatpush1.xpose.msra.mxu0 0.0
        %7714 = vmatprep.subr.mxu0 0.0
        %7715 = vmatpush1.xpose.msra.mxu0 0.0
        %7716 = vmatprep.subr.mxu0 0.0
        %7717 = vmatpush1.xpose.msra.mxu0 0.0
        %7718 = vmatprep.subr.mxu0 0.0
        %7719 = vmatpush1.xpose.msra.mxu0 0.0
        %7720 = vmatprep.subr.mxu0 0.0
        %7721 = vmatpush1.xpose.msra.mxu0 0.0
        %7722 = vmatprep.subr.mxu0 0.0
        %7723 = vmatpush1.xpose.msra.mxu0 0.0
        %7724 = vmatprep.subr.mxu0 0.0
        %7725 = vmatpush1.xpose.msra.mxu0 0.0
        %7726 = vmatprep.subr.mxu0 0.0
        %7727 = vmatpush1.xpose.msra.mxu0 0.0
        %7728 = vmatprep.subr.mxu0 0.0
        %7729 = vmatpush1.xpose.msra.mxu0 0.0
        %7730 = vmatprep.subr.mxu0 0.0
        %7731 = vmatpush1.xpose.msra.mxu0 0.0
        %7732 = vmatprep.subr.mxu0 0.0
        %7733 = vmatpush1.xpose.msra.mxu0 0.0
        %7734 = vmatprep.subr.mxu0 0.0
        %7735 = vmatpush1.xpose.msra.mxu0 0.0
        %7736 = vmatprep.subr.mxu0 0.0
        %7737 = vmatpush1.xpose.msra.mxu0 0.0
        %7738 = vmatprep.subr.mxu0 0.0
        %7739 = vmatpush1.xpose.msra.mxu0 0.0
        %7740 = vmatprep.subr.mxu0 0.0
        %7741 = vmatpush1.xpose.msra.mxu0 0.0
        %7742 = vmatprep.subr.mxu0 0.0
        %7743 = vmatpush1.xpose.msra.mxu0 0.0
        %7744 = vmatprep.subr.mxu0 0.0
        %7745 = vmatpush1.xpose.msra.mxu0 0.0
        %7746 = vmatprep.subr.mxu0 0.0
        %7747 = vmatpush1.xpose.msra.mxu0 0.0
        %7748 = vmatprep.subr.mxu0 0.0
        %7749 = vmatpush1.xpose.msra.mxu0 0.0
        %7750 = vmatprep.subr.mxu0 0.0
        %7751 = vmatpush1.xpose.msra.mxu0 0.0
        %7752 = vmatprep.subr.mxu0 0.0
        %7753 = vmatpush1.xpose.msra.mxu0 0.0
        %7754 = vmatprep.subr.mxu0 0.0
        %7755 = vmatpush1.xpose.msra.mxu0 0.0
        %7756 = vmatprep.subr.mxu0 0.0
        %7757 = vmatpush1.xpose.msra.mxu0 0.0
        %7758 = vmatprep.subr.mxu0 0.0
        %7759 = vmatpush1.xpose.msra.mxu0 0.0
        %7760 = vmatprep.subr.mxu0 0.0
        %7761 = vmatpush1.xpose.msra.mxu0 0.0
        %7762 = vmatprep.subr.mxu0 0.0
        %7763 = vmatpush1.xpose.msra.mxu0 0.0
        %7764 = vmatprep.subr.mxu0 0.0
        %7765 = vmatpush1.xpose.msra.mxu0 0.0
        %7766 = vmatprep.subr.mxu0 0.0
        %7767 = vmatpush1.xpose.msra.mxu0 0.0
        %7768 = vmatprep.subr.mxu0 0.0
        %7769 = vmatpush1.xpose.msra.mxu0 0.0
        %7770 = vmatprep.subr.mxu0 0.0
        %7771 = vmatpush1.xpose.msra.mxu0 0.0
        %7772 = vmatprep.subr.mxu0 0.0
        %7773 = vmatpush1.xpose.msra.mxu0 0.0
        %7774 = vmatprep.mubr.f32.mxu0 0.0
        %7775 = vmatmul.mubr.f32.gmra.mrb[0].mxu0 %v2454
        %v7776 = vpop.f32.mrb[0].mxu0
        %v7777 = vadd.f32 0.0, %v7776
        %v7778 = vpop.f32.mrb[0].mxu0
        %7779 = vdwg.mxu0
        %7780 = vrot.lane.b32.xlu0 %v534, 96
        %v7781 = vpop.permute.xlu0 %7780
        %v7782 = vsel %vm1054, %v7781, 0
        %7784 = vmatprep.subr.mxu0 0.0
        %7785 = vmatpush1.xpose.msra.mxu0 %v7782
        %7786 = vmatprep.subr.mxu0 0.0
        %7787 = vmatpush1.xpose.msra.mxu0 0.0
        %7788 = vmatprep.subr.mxu0 0.0
        %7789 = vmatpush1.xpose.msra.mxu0 0.0
        %7790 = vmatprep.subr.mxu0 0.0
        %7791 = vmatpush1.xpose.msra.mxu0 0.0
        %7792 = vmatprep.subr.mxu0 0.0
        %7793 = vmatpush1.xpose.msra.mxu0 0.0
        %7794 = vmatprep.subr.mxu0 0.0
        %7795 = vmatpush1.xpose.msra.mxu0 0.0
        %7796 = vmatprep.subr.mxu0 0.0
        %7797 = vmatpush1.xpose.msra.mxu0 0.0
        %7798 = vmatprep.subr.mxu0 0.0
        %7799 = vmatpush1.xpose.msra.mxu0 0.0
        %7800 = vmatprep.subr.mxu0 0.0
        %7801 = vmatpush1.xpose.msra.mxu0 0.0
        %7802 = vmatprep.subr.mxu0 0.0
        %7803 = vmatpush1.xpose.msra.mxu0 0.0
        %7804 = vmatprep.subr.mxu0 0.0
        %7805 = vmatpush1.xpose.msra.mxu0 0.0
        %7806 = vmatprep.subr.mxu0 0.0
        %7807 = vmatpush1.xpose.msra.mxu0 0.0
        %7808 = vmatprep.subr.mxu0 0.0
        %7809 = vmatpush1.xpose.msra.mxu0 0.0
        %7810 = vmatprep.subr.mxu0 0.0
        %7811 = vmatpush1.xpose.msra.mxu0 0.0
        %7812 = vmatprep.subr.mxu0 0.0
        %7813 = vmatpush1.xpose.msra.mxu0 0.0
        %7814 = vmatprep.subr.mxu0 0.0
        %7815 = vmatpush1.xpose.msra.mxu0 0.0
        %7816 = vmatprep.subr.mxu0 0.0
        %7817 = vmatpush1.xpose.msra.mxu0 0.0
        %7818 = vmatprep.subr.mxu0 0.0
        %7819 = vmatpush1.xpose.msra.mxu0 0.0
        %7820 = vmatprep.subr.mxu0 0.0
        %7821 = vmatpush1.xpose.msra.mxu0 0.0
        %7822 = vmatprep.subr.mxu0 0.0
        %7823 = vmatpush1.xpose.msra.mxu0 0.0
        %7824 = vmatprep.subr.mxu0 0.0
        %7825 = vmatpush1.xpose.msra.mxu0 0.0
        %7826 = vmatprep.subr.mxu0 0.0
        %7827 = vmatpush1.xpose.msra.mxu0 0.0
        %7828 = vmatprep.subr.mxu0 0.0
        %7829 = vmatpush1.xpose.msra.mxu0 0.0
        %7830 = vmatprep.subr.mxu0 0.0
        %7831 = vmatpush1.xpose.msra.mxu0 0.0
        %7832 = vmatprep.subr.mxu0 0.0
        %7833 = vmatpush1.xpose.msra.mxu0 0.0
        %7834 = vmatprep.subr.mxu0 0.0
        %7835 = vmatpush1.xpose.msra.mxu0 0.0
        %7836 = vmatprep.subr.mxu0 0.0
        %7837 = vmatpush1.xpose.msra.mxu0 0.0
        %7838 = vmatprep.subr.mxu0 0.0
        %7839 = vmatpush1.xpose.msra.mxu0 0.0
        %7840 = vmatprep.subr.mxu0 0.0
        %7841 = vmatpush1.xpose.msra.mxu0 0.0
        %7842 = vmatprep.subr.mxu0 0.0
        %7843 = vmatpush1.xpose.msra.mxu0 0.0
        %7844 = vmatprep.subr.mxu0 0.0
        %7845 = vmatpush1.xpose.msra.mxu0 0.0
        %7846 = vmatprep.subr.mxu0 0.0
        %7847 = vmatpush1.xpose.msra.mxu0 0.0
        %7848 = vmatprep.mubr.f32.mxu0 0.0
        %7849 = vmatmul.mubr.f32.gmra.mrb[0].mxu0 %v2532
        %v7850 = vpop.f32.mrb[0].mxu0
        %v7851 = vadd.f32 0.0, %v7850
        %v7852 = vpop.f32.mrb[0].mxu0
        %7853 = vdwg.mxu0
        %v7854 = vsel %vm1054, %v7777, -inf
        %7855 = vmax.xlane.f32.xlu0 %v7854
        %v7856 = vpop.xlane.xlu0 %7855
        %v7857 = vsel %vm1054, %v7851, -inf
        %7858 = vmax.xlane.f32.xlu0 %v7857
        %v7859 = vpop.xlane.xlu0 %7858
        %v7860 = vmax.f32 %v836, %v7856
        %v7861 = vmax.f32 %v839, %v7859
        %v7862 = vsub.f32 %v7777, %v7860
        %v7863 = vsub.f32 %v7851, %v7861
        %v7864 = vmul.f32 %v7862, 1.442695
        %v7865 = vpow.pop %v7864
        %v7866 = vmul.f32 %v7863, 1.442695
        %v7867 = vpow.pop %v7866
        %v7868 = vsub.f32 %v836, %v7860
        %v7869 = vsub.f32 %v839, %v7861
        %v7870 = vmul.f32 %v7868, 1.442695
        %v7871 = vpow.pop %v7870
        %v7872 = vmul.f32 %v7869, 1.442695
        %v7873 = vpow.pop %v7872
        %v7874 = vmul.f32 %v7871, %v848
        %v7875 = vmul.f32 %v7873, %v851
        %v7876 = vsel %vm1054, %v7865, 0.0
        %7877 = vadd.xlane.f32.xlu0 %v7876
        %v7878 = vpop.xlane.xlu0 %7877
        %v7879 = vsel %vm1054, %v7867, 0.0
        %7880 = vadd.xlane.f32.xlu0 %v7879
        %v7881 = vpop.xlane.xlu0 %7880
        %v7882 = vadd.f32 %v7874, %v7878
        %v7883 = vadd.f32 %v7875, %v7881
        %v7886 = vsel %vm1054, %v7865, 0
        %7888 = vmatprep.subr.mxu0 0.0
        %7889 = vmatpush1.msra.mxu0 %v7707
        %7890 = vmatprep.subr.mxu0 0.0
        %7891 = vmatpush1.msra.mxu0 0.0
        %7892 = vmatprep.subr.mxu0 0.0
        %7893 = vmatpush1.msra.mxu0 0.0
        %7894 = vmatprep.subr.mxu0 0.0
        %7895 = vmatpush1.msra.mxu0 0.0
        %7896 = vmatprep.subr.mxu0 0.0
        %7897 = vmatpush1.msra.mxu0 0.0
        %7898 = vmatprep.subr.mxu0 0.0
        %7899 = vmatpush1.msra.mxu0 0.0
        %7900 = vmatprep.subr.mxu0 0.0
        %7901 = vmatpush1.msra.mxu0 0.0
        %7902 = vmatprep.subr.mxu0 0.0
        %7903 = vmatpush1.msra.mxu0 0.0
        %7904 = vmatprep.subr.mxu0 0.0
        %7905 = vmatpush1.msra.mxu0 0.0
        %7906 = vmatprep.subr.mxu0 0.0
        %7907 = vmatpush1.msra.mxu0 0.0
        %7908 = vmatprep.subr.mxu0 0.0
        %7909 = vmatpush1.msra.mxu0 0.0
        %7910 = vmatprep.subr.mxu0 0.0
        %7911 = vmatpush1.msra.mxu0 0.0
        %7912 = vmatprep.subr.mxu0 0.0
        %7913 = vmatpush1.msra.mxu0 0.0
        %7914 = vmatprep.subr.mxu0 0.0
        %7915 = vmatpush1.msra.mxu0 0.0
        %7916 = vmatprep.subr.mxu0 0.0
        %7917 = vmatpush1.msra.mxu0 0.0
        %7918 = vmatprep.subr.mxu0 0.0
        %7919 = vmatpush1.msra.mxu0 0.0
        %7920 = vmatprep.subr.mxu0 0.0
        %7921 = vmatpush1.msra.mxu0 0.0
        %7922 = vmatprep.subr.mxu0 0.0
        %7923 = vmatpush1.msra.mxu0 0.0
        %7924 = vmatprep.subr.mxu0 0.0
        %7925 = vmatpush1.msra.mxu0 0.0
        %7926 = vmatprep.subr.mxu0 0.0
        %7927 = vmatpush1.msra.mxu0 0.0
        %7928 = vmatprep.subr.mxu0 0.0
        %7929 = vmatpush1.msra.mxu0 0.0
        %7930 = vmatprep.subr.mxu0 0.0
        %7931 = vmatpush1.msra.mxu0 0.0
        %7932 = vmatprep.subr.mxu0 0.0
        %7933 = vmatpush1.msra.mxu0 0.0
        %7934 = vmatprep.subr.mxu0 0.0
        %7935 = vmatpush1.msra.mxu0 0.0
        %7936 = vmatprep.subr.mxu0 0.0
        %7937 = vmatpush1.msra.mxu0 0.0
        %7938 = vmatprep.subr.mxu0 0.0
        %7939 = vmatpush1.msra.mxu0 0.0
        %7940 = vmatprep.subr.mxu0 0.0
        %7941 = vmatpush1.msra.mxu0 0.0
        %7942 = vmatprep.subr.mxu0 0.0
        %7943 = vmatpush1.msra.mxu0 0.0
        %7944 = vmatprep.subr.mxu0 0.0
        %7945 = vmatpush1.msra.mxu0 0.0
        %7946 = vmatprep.subr.mxu0 0.0
        %7947 = vmatpush1.msra.mxu0 0.0
        %7948 = vmatprep.subr.mxu0 0.0
        %7949 = vmatpush1.msra.mxu0 0.0
        %7950 = vmatprep.subr.mxu0 0.0
        %7951 = vmatpush1.msra.mxu0 0.0
        %7952 = vmatprep.mubr.f32.mxu0 0.0
        %7953 = vmatmul.mubr.f32.gmra.mrb[0].mxu0 %v7886
        %v7954 = vpop.f32.mrb[0].mxu0
        %v7955 = vadd.f32 0.0, %v7954
        %v7956 = vpop.f32.mrb[0].mxu0
        %7957 = vdwg.mxu0
        %v7960 = vsel %vm1054, %v7867, 0
        %7962 = vmatprep.subr.mxu0 0.0
        %7963 = vmatpush1.msra.mxu0 %v7781
        %7964 = vmatprep.subr.mxu0 0.0
        %7965 = vmatpush1.msra.mxu0 0.0
        %7966 = vmatprep.subr.mxu0 0.0
        %7967 = vmatpush1.msra.mxu0 0.0
        %7968 = vmatprep.subr.mxu0 0.0
        %7969 = vmatpush1.msra.mxu0 0.0
        %7970 = vmatprep.subr.mxu0 0.0
        %7971 = vmatpush1.msra.mxu0 0.0
        %7972 = vmatprep.subr.mxu0 0.0
        %7973 = vmatpush1.msra.mxu0 0.0
        %7974 = vmatprep.subr.mxu0 0.0
        %7975 = vmatpush1.msra.mxu0 0.0
        %7976 = vmatprep.subr.mxu0 0.0
        %7977 = vmatpush1.msra.mxu0 0.0
        %7978 = vmatprep.subr.mxu0 0.0
        %7979 = vmatpush1.msra.mxu0 0.0
        %7980 = vmatprep.subr.mxu0 0.0
        %7981 = vmatpush1.msra.mxu0 0.0
        %7982 = vmatprep.subr.mxu0 0.0
        %7983 = vmatpush1.msra.mxu0 0.0
        %7984 = vmatprep.subr.mxu0 0.0
        %7985 = vmatpush1.msra.mxu0 0.0
        %7986 = vmatprep.subr.mxu0 0.0
        %7987 = vmatpush1.msra.mxu0 0.0
        %7988 = vmatprep.subr.mxu0 0.0
        %7989 = vmatpush1.msra.mxu0 0.0
        %7990 = vmatprep.subr.mxu0 0.0
        %7991 = vmatpush1.msra.mxu0 0.0
        %7992 = vmatprep.subr.mxu0 0.0
        %7993 = vmatpush1.msra.mxu0 0.0
        %7994 = vmatprep.subr.mxu0 0.0
        %7995 = vmatpush1.msra.mxu0 0.0
        %7996 = vmatprep.subr.mxu0 0.0
        %7997 = vmatpush1.msra.mxu0 0.0
        %7998 = vmatprep.subr.mxu0 0.0
        %7999 = vmatpush1.msra.mxu0 0.0
        %8000 = vmatprep.subr.mxu0 0.0
        %8001 = vmatpush1.msra.mxu0 0.0
        %8002 = vmatprep.subr.mxu0 0.0
        %8003 = vmatpush1.msra.mxu0 0.0
        %8004 = vmatprep.subr.mxu0 0.0
        %8005 = vmatpush1.msra.mxu0 0.0
        %8006 = vmatprep.subr.mxu0 0.0
        %8007 = vmatpush1.msra.mxu0 0.0
        %8008 = vmatprep.subr.mxu0 0.0
        %8009 = vmatpush1.msra.mxu0 0.0
        %8010 = vmatprep.subr.mxu0 0.0
        %8011 = vmatpush1.msra.mxu0 0.0
        %8012 = vmatprep.subr.mxu0 0.0
        %8013 = vmatpush1.msra.mxu0 0.0
        %8014 = vmatprep.subr.mxu0 0.0
        %8015 = vmatpush1.msra.mxu0 0.0
        %8016 = vmatprep.subr.mxu0 0.0
        %8017 = vmatpush1.msra.mxu0 0.0
        %8018 = vmatprep.subr.mxu0 0.0
        %8019 = vmatpush1.msra.mxu0 0.0
        %8020 = vmatprep.subr.mxu0 0.0
        %8021 = vmatpush1.msra.mxu0 0.0
        %8022 = vmatprep.subr.mxu0 0.0
        %8023 = vmatpush1.msra.mxu0 0.0
        %8024 = vmatprep.subr.mxu0 0.0
        %8025 = vmatpush1.msra.mxu0 0.0
        %8026 = vmatprep.mubr.f32.mxu0 0.0
        %8027 = vmatmul.mubr.f32.gmra.mrb[0].mxu0 %v7960
        %v8028 = vpop.f32.mrb[0].mxu0
        %v8029 = vadd.f32 0.0, %v8028
        %v8030 = vpop.f32.mrb[0].mxu0
        %8031 = vdwg.mxu0
        %v8032 = vmul.f32 %v7871, %v1046
        %v8033 = vmul.f32 %v7873, %v1051
        %8036 = vrot.lane.b32.xlu0 %v7955, 32
        %v8037 = vpop.permute.xlu0 %8036
        %8038 = vrot.lane.b32.xlu0 %v8029, 32
        %v8039 = vpop.permute.xlu0 %8038
        %v8042 = vadd.f32 %v8032, %v8037
        %v8043 = vadd.f32 %v8033, %v8039
        %v8044 = vrcp.pop %v7882
        %v8045 = vmul.f32 %v8042, %v8044
        %v8046 = vrcp.pop %v7883
        %v8047 = vmul.f32 %v8043, %v8046
        %8050 = vrot.lane.b32.xlu0 %v8045, 120
        %v8051 = vpop.permute.xlu0 %8050
        %8052 = vrot.lane.b32.xlu0 %v8047, 120
        %v8053 = vpop.permute.xlu0 %8052
        %8056 = vst.msk [vmem:[#allocation2 + $0x8] sm:$0xff] %vm2447, %v8051
        %8057 = vst.msk [vmem:[#allocation2 + $0x18] sm:$0xff] %vm2447, %v8053
        %v8058 = vld [vmem:[#allocation2] sm:$0xff]
        %v8059 = vld [vmem:[#allocation2 + $0x8] sm:$0xff]
        %v8060 = vld [vmem:[#allocation2 + $0x10] sm:$0xff]
        %v8061 = vld [vmem:[#allocation2 + $0x18] sm:$0xff]
        %s8062 = smul.u32 %s29, 160
        %s8063 = smul.addr %s8062, 8
        %s8064 = scalar_lea.vmem [#allocation15], %s8063
        %v8065 = vld [vmem:[%s8064] sm:$0xff]
        %v8066 = vld [vmem:[%s8064 + $0x8] sm:$0xff]
        %v8067 = vld [vmem:[%s8064 + $0x10] sm:$0xff]
        %v8068 = vld [vmem:[%s8064 + $0x18] sm:$0xff]
        %v8069 = vld [vmem:[%s8064 + $0x20] sm:$0xff]
        %v8070 = vld [vmem:[%s8064 + $0x28] sm:$0xff]
        %v8071 = vld [vmem:[%s8064 + $0x30] sm:$0xff]
        %v8072 = vld [vmem:[%s8064 + $0x38] sm:$0xff]
        %v8073 = vld [vmem:[%s8064 + $0x40] sm:$0xff]
        %v8074 = vld [vmem:[%s8064 + $0x48] sm:$0xff]
        %v8075 = vld [vmem:[%s8064 + $0x50] sm:$0xff]
        %v8076 = vld [vmem:[%s8064 + $0x58] sm:$0xff]
        %v8077 = vld [vmem:[%s8064 + $0x60] sm:$0xff]
        %v8078 = vld [vmem:[%s8064 + $0x68] sm:$0xff]
        %v8079 = vld [vmem:[%s8064 + $0x70] sm:$0xff]
        %v8080 = vld [vmem:[%s8064 + $0x78] sm:$0xff]
        %v8081 = vld [vmem:[%s8064 + $0x80] sm:$0xff]
        %v8082 = vld [vmem:[%s8064 + $0x88] sm:$0xff]
        %v8083 = vld [vmem:[%s8064 + $0x90] sm:$0xff]
        %v8084 = vld [vmem:[%s8064 + $0x98] sm:$0xff]
        %v8085 = vld [vmem:[%s8064 + $0xa0] sm:$0xff]
        %v8086 = vld [vmem:[%s8064 + $0xa8] sm:$0xff]
        %v8087 = vld [vmem:[%s8064 + $0xb0] sm:$0xff]
        %v8088 = vld [vmem:[%s8064 + $0xb8] sm:$0xff]
        %v8089 = vld [vmem:[%s8064 + $0xc0] sm:$0xff]
        %v8090 = vld [vmem:[%s8064 + $0xc8] sm:$0xff]
        %v8091 = vld [vmem:[%s8064 + $0xd0] sm:$0xff]
        %v8092 = vld [vmem:[%s8064 + $0xd8] sm:$0xff]
        %v8093 = vld [vmem:[%s8064 + $0xe0] sm:$0xff]
        %v8094 = vld [vmem:[%s8064 + $0xe8] sm:$0xff]
        %v8095 = vld [vmem:[%s8064 + $0xf0] sm:$0xff]
        %v8096 = vld [vmem:[%s8064 + $0xf8] sm:$0xff]
        %v8097 = vld [vmem:[%s8064 + $0x100] sm:$0xff]
        %v8098 = vld [vmem:[%s8064 + $0x108] sm:$0xff]
        %v8099 = vld [vmem:[%s8064 + $0x110] sm:$0xff]
        %v8100 = vld [vmem:[%s8064 + $0x118] sm:$0xff]
        %v8101 = vld [vmem:[%s8064 + $0x120] sm:$0xff]
        %v8102 = vld [vmem:[%s8064 + $0x128] sm:$0xff]
        %v8103 = vld [vmem:[%s8064 + $0x130] sm:$0xff]
        %v8104 = vld [vmem:[%s8064 + $0x138] sm:$0xff]
        %v8105 = vld [vmem:[%s8064 + $0x140] sm:$0xff]
        %v8106 = vld [vmem:[%s8064 + $0x148] sm:$0xff]
        %v8107 = vld [vmem:[%s8064 + $0x150] sm:$0xff]
        %v8108 = vld [vmem:[%s8064 + $0x158] sm:$0xff]
        %v8109 = vld [vmem:[%s8064 + $0x160] sm:$0xff]
        %v8110 = vld [vmem:[%s8064 + $0x168] sm:$0xff]
        %v8111 = vld [vmem:[%s8064 + $0x170] sm:$0xff]
        %v8112 = vld [vmem:[%s8064 + $0x178] sm:$0xff]
        %v8113 = vld [vmem:[%s8064 + $0x180] sm:$0xff]
        %v8114 = vld [vmem:[%s8064 + $0x188] sm:$0xff]
        %v8115 = vld [vmem:[%s8064 + $0x190] sm:$0xff]
        %v8116 = vld [vmem:[%s8064 + $0x198] sm:$0xff]
        %v8117 = vld [vmem:[%s8064 + $0x1a0] sm:$0xff]
        %v8118 = vld [vmem:[%s8064 + $0x1a8] sm:$0xff]
        %v8119 = vld [vmem:[%s8064 + $0x1b0] sm:$0xff]
        %v8120 = vld [vmem:[%s8064 + $0x1b8] sm:$0xff]
        %v8121 = vld [vmem:[%s8064 + $0x1c0] sm:$0xff]
        %v8122 = vld [vmem:[%s8064 + $0x1c8] sm:$0xff]
        %v8123 = vld [vmem:[%s8064 + $0x1d0] sm:$0xff]
        %v8124 = vld [vmem:[%s8064 + $0x1d8] sm:$0xff]
        %v8125 = vld [vmem:[%s8064 + $0x1e0] sm:$0xff]
        %v8126 = vld [vmem:[%s8064 + $0x1e8] sm:$0xff]
        %v8127 = vld [vmem:[%s8064 + $0x1f0] sm:$0xff]
        %v8128 = vld [vmem:[%s8064 + $0x1f8] sm:$0xff]
        %v8129 = vld [vmem:[%s8064 + $0x200] sm:$0xff]
        %v8130 = vld [vmem:[%s8064 + $0x208] sm:$0xff]
        %v8131 = vld [vmem:[%s8064 + $0x210] sm:$0xff]
        %v8132 = vld [vmem:[%s8064 + $0x218] sm:$0xff]
        %v8133 = vld [vmem:[%s8064 + $0x220] sm:$0xff]
        %v8134 = vld [vmem:[%s8064 + $0x228] sm:$0xff]
        %v8135 = vld [vmem:[%s8064 + $0x230] sm:$0xff]
        %v8136 = vld [vmem:[%s8064 + $0x238] sm:$0xff]
        %v8137 = vld [vmem:[%s8064 + $0x240] sm:$0xff]
        %v8138 = vld [vmem:[%s8064 + $0x248] sm:$0xff]
        %v8139 = vld [vmem:[%s8064 + $0x250] sm:$0xff]
        %v8140 = vld [vmem:[%s8064 + $0x258] sm:$0xff]
        %v8141 = vld [vmem:[%s8064 + $0x260] sm:$0xff]
        %v8142 = vld [vmem:[%s8064 + $0x268] sm:$0xff]
        %v8143 = vld [vmem:[%s8064 + $0x270] sm:$0xff]
        %v8144 = vld [vmem:[%s8064 + $0x278] sm:$0xff]
        %v8145 = vld [vmem:[%s8064 + $0x280] sm:$0xff]
        %v8146 = vld [vmem:[%s8064 + $0x288] sm:$0xff]
        %v8147 = vld [vmem:[%s8064 + $0x290] sm:$0xff]
        %v8148 = vld [vmem:[%s8064 + $0x298] sm:$0xff]
        %v8149 = vld [vmem:[%s8064 + $0x2a0] sm:$0xff]
        %v8150 = vld [vmem:[%s8064 + $0x2a8] sm:$0xff]
        %v8151 = vld [vmem:[%s8064 + $0x2b0] sm:$0xff]
        %v8152 = vld [vmem:[%s8064 + $0x2b8] sm:$0xff]
        %v8153 = vld [vmem:[%s8064 + $0x2c0] sm:$0xff]
        %v8154 = vld [vmem:[%s8064 + $0x2c8] sm:$0xff]
        %v8155 = vld [vmem:[%s8064 + $0x2d0] sm:$0xff]
        %v8156 = vld [vmem:[%s8064 + $0x2d8] sm:$0xff]
        %v8157 = vld [vmem:[%s8064 + $0x2e0] sm:$0xff]
        %v8158 = vld [vmem:[%s8064 + $0x2e8] sm:$0xff]
        %v8159 = vld [vmem:[%s8064 + $0x2f0] sm:$0xff]
        %v8160 = vld [vmem:[%s8064 + $0x2f8] sm:$0xff]
        %v8161 = vld [vmem:[%s8064 + $0x300] sm:$0xff]
        %v8162 = vld [vmem:[%s8064 + $0x308] sm:$0xff]
        %v8163 = vld [vmem:[%s8064 + $0x310] sm:$0xff]
        %v8164 = vld [vmem:[%s8064 + $0x318] sm:$0xff]
        %v8165 = vld [vmem:[%s8064 + $0x320] sm:$0xff]
        %v8166 = vld [vmem:[%s8064 + $0x328] sm:$0xff]
        %v8167 = vld [vmem:[%s8064 + $0x330] sm:$0xff]
        %v8168 = vld [vmem:[%s8064 + $0x338] sm:$0xff]
        %v8169 = vld [vmem:[%s8064 + $0x340] sm:$0xff]
        %v8170 = vld [vmem:[%s8064 + $0x348] sm:$0xff]
        %v8171 = vld [vmem:[%s8064 + $0x350] sm:$0xff]
        %v8172 = vld [vmem:[%s8064 + $0x358] sm:$0xff]
        %v8173 = vld [vmem:[%s8064 + $0x360] sm:$0xff]
        %v8174 = vld [vmem:[%s8064 + $0x368] sm:$0xff]
        %v8175 = vld [vmem:[%s8064 + $0x370] sm:$0xff]
        %v8176 = vld [vmem:[%s8064 + $0x378] sm:$0xff]
        %v8177 = vld [vmem:[%s8064 + $0x380] sm:$0xff]
        %v8178 = vld [vmem:[%s8064 + $0x388] sm:$0xff]
        %v8179 = vld [vmem:[%s8064 + $0x390] sm:$0xff]
        %v8180 = vld [vmem:[%s8064 + $0x398] sm:$0xff]
        %v8181 = vld [vmem:[%s8064 + $0x3a0] sm:$0xff]
        %v8182 = vld [vmem:[%s8064 + $0x3a8] sm:$0xff]
        %v8183 = vld [vmem:[%s8064 + $0x3b0] sm:$0xff]
        %v8184 = vld [vmem:[%s8064 + $0x3b8] sm:$0xff]
        %v8185 = vld [vmem:[%s8064 + $0x3c0] sm:$0xff]
        %v8186 = vld [vmem:[%s8064 + $0x3c8] sm:$0xff]
        %v8187 = vld [vmem:[%s8064 + $0x3d0] sm:$0xff]
        %v8188 = vld [vmem:[%s8064 + $0x3d8] sm:$0xff]
        %v8189 = vld [vmem:[%s8064 + $0x3e0] sm:$0xff]
        %v8190 = vld [vmem:[%s8064 + $0x3e8] sm:$0xff]
        %v8191 = vld [vmem:[%s8064 + $0x3f0] sm:$0xff]
        %v8192 = vld [vmem:[%s8064 + $0x3f8] sm:$0xff]
        %v8193 = vld [vmem:[%s8064 + $0x400] sm:$0xff]
        %v8194 = vld [vmem:[%s8064 + $0x408] sm:$0xff]
        %v8195 = vld [vmem:[%s8064 + $0x410] sm:$0xff]
        %v8196 = vld [vmem:[%s8064 + $0x418] sm:$0xff]
        %v8197 = vld [vmem:[%s8064 + $0x420] sm:$0xff]
        %v8198 = vld [vmem:[%s8064 + $0x428] sm:$0xff]
        %v8199 = vld [vmem:[%s8064 + $0x430] sm:$0xff]
        %v8200 = vld [vmem:[%s8064 + $0x438] sm:$0xff]
        %v8201 = vld [vmem:[%s8064 + $0x440] sm:$0xff]
        %v8202 = vld [vmem:[%s8064 + $0x448] sm:$0xff]
        %v8203 = vld [vmem:[%s8064 + $0x450] sm:$0xff]
        %v8204 = vld [vmem:[%s8064 + $0x458] sm:$0xff]
        %v8205 = vld [vmem:[%s8064 + $0x460] sm:$0xff]
        %v8206 = vld [vmem:[%s8064 + $0x468] sm:$0xff]
        %v8207 = vld [vmem:[%s8064 + $0x470] sm:$0xff]
        %v8208 = vld [vmem:[%s8064 + $0x478] sm:$0xff]
        %v8209 = vld [vmem:[%s8064 + $0x480] sm:$0xff]
        %v8210 = vld [vmem:[%s8064 + $0x488] sm:$0xff]
        %v8211 = vld [vmem:[%s8064 + $0x490] sm:$0xff]
        %v8212 = vld [vmem:[%s8064 + $0x498] sm:$0xff]
        %v8213 = vld [vmem:[%s8064 + $0x4a0] sm:$0xff]
        %v8214 = vld [vmem:[%s8064 + $0x4a8] sm:$0xff]
        %v8215 = vld [vmem:[%s8064 + $0x4b0] sm:$0xff]
        %v8216 = vld [vmem:[%s8064 + $0x4b8] sm:$0xff]
        %v8217 = vld [vmem:[%s8064 + $0x4c0] sm:$0xff]
        %v8218 = vld [vmem:[%s8064 + $0x4c8] sm:$0xff]
        %v8219 = vld [vmem:[%s8064 + $0x4d0] sm:$0xff]
        %v8220 = vld [vmem:[%s8064 + $0x4d8] sm:$0xff]
        %v8221 = vld [vmem:[%s8064 + $0x4e0] sm:$0xff]
        %v8222 = vld [vmem:[%s8064 + $0x4e8] sm:$0xff]
        %v8223 = vld [vmem:[%s8064 + $0x4f0] sm:$0xff]
        %v8224 = vld [vmem:[%s8064 + $0x4f8] sm:$0xff]
        %s8225 = smul.u32 %s29, 8
        %s8226 = scalar_lea.vmem [#allocation16], %s8225
        %v8227 = vld [vmem:[%s8226] sm:$0xff]
        %v8229 = vlaneseq
        %v8230 = vshrl.u32 %v8229, 7
        %v8231 = vsub.s32 0, %v8230
        %v8232 = vrot.slane %v8227, %v8231
        %v8233 = vlaneseq
        %v8234 = vshrl.u32 %v8233, 7
        %v8235 = vsub.s32 1, %v8234
        %v8236 = vrot.slane %v8227, %v8235
        %v8237 = vlaneseq
        %v8238 = vshrl.u32 %v8237, 7
        %v8239 = vsub.s32 2, %v8238
        %v8240 = vrot.slane %v8227, %v8239
        %v8241 = vlaneseq
        %v8242 = vshrl.u32 %v8241, 7
        %v8243 = vsub.s32 3, %v8242
        %v8244 = vrot.slane %v8227, %v8243
        %v8245 = vlaneseq
        %v8246 = vshrl.u32 %v8245, 7
        %v8247 = vsub.s32 4, %v8246
        %v8248 = vrot.slane %v8227, %v8247
        %v8249 = vlaneseq
        %v8250 = vshrl.u32 %v8249, 7
        %v8251 = vsub.s32 5, %v8250
        %v8252 = vrot.slane %v8227, %v8251
        %v8253 = vlaneseq
        %v8254 = vshrl.u32 %v8253, 7
        %v8255 = vsub.s32 6, %v8254
        %v8256 = vrot.slane %v8227, %v8255
        %v8257 = vlaneseq
        %v8258 = vshrl.u32 %v8257, 7
        %v8259 = vsub.s32 7, %v8258
        %v8260 = vrot.slane %v8227, %v8259
        %vm8269 = vcmask 261120
        %v8271 = vsel %vm8269, %v8059, 0
        %v8274 = vsel %vm8269, %v8061, 0
        %8276 = vmatprep.subr.mxu0 %v8066
        %8277 = vmatpush1.msra.mxu0 %v8065
        %8278 = vmatprep.subr.mxu0 %v8074
        %8279 = vmatpush1.msra.mxu0 %v8073
        %8280 = vmatprep.subr.mxu0 %v8082
        %8281 = vmatpush1.msra.mxu0 %v8081
        %8282 = vmatprep.subr.mxu0 %v8090
        %8283 = vmatpush1.msra.mxu0 %v8089
        %8284 = vmatprep.subr.mxu0 %v8098
        %8285 = vmatpush1.msra.mxu0 %v8097
        %8286 = vmatprep.subr.mxu0 %v8106
        %8287 = vmatpush1.msra.mxu0 %v8105
        %8288 = vmatprep.subr.mxu0 %v8114
        %8289 = vmatpush1.msra.mxu0 %v8113
        %8290 = vmatprep.subr.mxu0 %v8122
        %8291 = vmatpush1.msra.mxu0 %v8121
        %8292 = vmatprep.subr.mxu0 %v8130
        %8293 = vmatpush1.msra.mxu0 %v8129
        %8294 = vmatprep.subr.mxu0 %v8138
        %8295 = vmatpush1.msra.mxu0 %v8137
        %8296 = vmatprep.subr.mxu0 %v8146
        %8297 = vmatpush1.msra.mxu0 %v8145
        %8298 = vmatprep.subr.mxu0 %v8154
        %8299 = vmatpush1.msra.mxu0 %v8153
        %8300 = vmatprep.subr.mxu0 %v8162
        %8301 = vmatpush1.msra.mxu0 %v8161
        %8302 = vmatprep.subr.mxu0 %v8170
        %8303 = vmatpush1.msra.mxu0 %v8169
        %8304 = vmatprep.subr.mxu0 %v8178
        %8305 = vmatpush1.msra.mxu0 %v8177
        %8306 = vmatprep.subr.mxu0 %v8186
        %8307 = vmatpush1.msra.mxu0 %v8185
        %8308 = vmatprep.subr.mxu0 %v8194
        %8309 = vmatpush1.msra.mxu0 %v8193
        %8310 = vmatprep.subr.mxu0 %v8202
        %8311 = vmatpush1.msra.mxu0 %v8201
        %8312 = vmatprep.subr.mxu0 %v8210
        %8313 = vmatpush1.msra.mxu0 %v8209
        %8314 = vmatprep.subr.mxu0 %v8218
        %8315 = vmatpush1.msra.mxu0 %v8217
        %8316 = vmatprep.subr.mxu0 0.0
        %8317 = vmatpush1.msra.mxu0 0.0
        %8318 = vmatprep.subr.mxu0 0.0
        %8319 = vmatpush1.msra.mxu0 0.0
        %8320 = vmatprep.subr.mxu0 0.0
        %8321 = vmatpush1.msra.mxu0 0.0
        %8322 = vmatprep.subr.mxu0 0.0
        %8323 = vmatpush1.msra.mxu0 0.0
        %8324 = vmatprep.subr.mxu0 0.0
        %8325 = vmatpush1.msra.mxu0 0.0
        %8326 = vmatprep.subr.mxu0 0.0
        %8327 = vmatpush1.msra.mxu0 0.0
        %8328 = vmatprep.subr.mxu0 0.0
        %8329 = vmatpush1.msra.mxu0 0.0
        %8330 = vmatprep.subr.mxu0 0.0
        %8331 = vmatpush1.msra.mxu0 0.0
        %8332 = vmatprep.subr.mxu0 0.0
        %8333 = vmatpush1.msra.mxu0 0.0
        %8334 = vmatprep.subr.mxu0 0.0
        %8335 = vmatpush1.msra.mxu0 0.0
        %8336 = vmatprep.subr.mxu0 0.0
        %8337 = vmatpush1.msra.mxu0 0.0
        %8338 = vmatprep.subr.mxu0 0.0
        %8339 = vmatpush1.msra.mxu0 0.0
        %8340 = vmatprep.mubr.f32.mxu0 %v8271
        %8341 = vmatmul.mubr.f32.gmra.mrb[0].mxu0 %v8058
        %v8342 = vpop.f32.mrb[0].mxu0
        %v8343 = vadd.f32 %v8232, %v8342
        %v8344 = vpop.f32.mrb[0].mxu0
        %v8345 = vadd.f32 %v8236, %v8344
        %8346 = vmatprep.mubr.f32.mxu0 %v8274
        %8347 = vmatmul.mubr.f32.gmra.mrb[0].mxu0 %v8060
        %v8348 = vpop.f32.mrb[0].mxu0
        %v8349 = vadd.f32 %v8232, %v8348
        %v8350 = vpop.f32.mrb[0].mxu0
        %v8351 = vadd.f32 %v8236, %v8350
        %8352 = vdwg.mxu0
        %8353 = vmatprep.subr.mxu0 %v8068
        %8354 = vmatpush1.msra.mxu0 %v8067
        %8355 = vmatprep.subr.mxu0 %v8076
        %8356 = vmatpush1.msra.mxu0 %v8075
        %8357 = vmatprep.subr.mxu0 %v8084
        %8358 = vmatpush1.msra.mxu0 %v8083
        %8359 = vmatprep.subr.mxu0 %v8092
        %8360 = vmatpush1.msra.mxu0 %v8091
        %8361 = vmatprep.subr.mxu0 %v8100
        %8362 = vmatpush1.msra.mxu0 %v8099
        %8363 = vmatprep.subr.mxu0 %v8108
        %8364 = vmatpush1.msra.mxu0 %v8107
        %8365 = vmatprep.subr.mxu0 %v8116
        %8366 = vmatpush1.msra.mxu0 %v8115
        %8367 = vmatprep.subr.mxu0 %v8124
        %8368 = vmatpush1.msra.mxu0 %v8123
        %8369 = vmatprep.subr.mxu0 %v8132
        %8370 = vmatpush1.msra.mxu0 %v8131
        %8371 = vmatprep.subr.mxu0 %v8140
        %8372 = vmatpush1.msra.mxu0 %v8139
        %8373 = vmatprep.subr.mxu0 %v8148
        %8374 = vmatpush1.msra.mxu0 %v8147
        %8375 = vmatprep.subr.mxu0 %v8156
        %8376 = vmatpush1.msra.mxu0 %v8155
        %8377 = vmatprep.subr.mxu0 %v8164
        %8378 = vmatpush1.msra.mxu0 %v8163
        %8379 = vmatprep.subr.mxu0 %v8172
        %8380 = vmatpush1.msra.mxu0 %v8171
        %8381 = vmatprep.subr.mxu0 %v8180
        %8382 = vmatpush1.msra.mxu0 %v8179
        %8383 = vmatprep.subr.mxu0 %v8188
        %8384 = vmatpush1.msra.mxu0 %v8187
        %8385 = vmatprep.subr.mxu0 %v8196
        %8386 = vmatpush1.msra.mxu0 %v8195
        %8387 = vmatprep.subr.mxu0 %v8204
        %8388 = vmatpush1.msra.mxu0 %v8203
        %8389 = vmatprep.subr.mxu0 %v8212
        %8390 = vmatpush1.msra.mxu0 %v8211
        %8391 = vmatprep.subr.mxu0 %v8220
        %8392 = vmatpush1.msra.mxu0 %v8219
        %8393 = vmatprep.subr.mxu0 0.0
        %8394 = vmatpush1.msra.mxu0 0.0
        %8395 = vmatprep.subr.mxu0 0.0
        %8396 = vmatpush1.msra.mxu0 0.0
        %8397 = vmatprep.subr.mxu0 0.0
        %8398 = vmatpush1.msra.mxu0 0.0
        %8399 = vmatprep.subr.mxu0 0.0
        %8400 = vmatpush1.msra.mxu0 0.0
        %8401 = vmatprep.subr.mxu0 0.0
        %8402 = vmatpush1.msra.mxu0 0.0
        %8403 = vmatprep.subr.mxu0 0.0
        %8404 = vmatpush1.msra.mxu0 0.0
        %8405 = vmatprep.subr.mxu0 0.0
        %8406 = vmatpush1.msra.mxu0 0.0
        %8407 = vmatprep.subr.mxu0 0.0
        %8408 = vmatpush1.msra.mxu0 0.0
        %8409 = vmatprep.subr.mxu0 0.0
        %8410 = vmatpush1.msra.mxu0 0.0
        %8411 = vmatprep.subr.mxu0 0.0
        %8412 = vmatpush1.msra.mxu0 0.0
        %8413 = vmatprep.subr.mxu0 0.0
        %8414 = vmatpush1.msra.mxu0 0.0
        %8415 = vmatprep.subr.mxu0 0.0
        %8416 = vmatpush1.msra.mxu0 0.0
        %8417 = vmatprep.mubr.f32.mxu0 %v8271
        %8418 = vmatmul.mubr.f32.gmra.mrb[0].mxu0 %v8058
        %v8419 = vpop.f32.mrb[0].mxu0
        %v8420 = vadd.f32 %v8240, %v8419
        %v8421 = vpop.f32.mrb[0].mxu0
        %v8422 = vadd.f32 %v8244, %v8421
        %8423 = vmatprep.mubr.f32.mxu0 %v8274
        %8424 = vmatmul.mubr.f32.gmra.mrb[0].mxu0 %v8060
        %v8425 = vpop.f32.mrb[0].mxu0
        %v8426 = vadd.f32 %v8240, %v8425
        %v8427 = vpop.f32.mrb[0].mxu0
        %v8428 = vadd.f32 %v8244, %v8427
        %8429 = vdwg.mxu0
        %8430 = vmatprep.subr.mxu0 %v8070
        %8431 = vmatpush1.msra.mxu0 %v8069
        %8432 = vmatprep.subr.mxu0 %v8078
        %8433 = vmatpush1.msra.mxu0 %v8077
        %8434 = vmatprep.subr.mxu0 %v8086
        %8435 = vmatpush1.msra.mxu0 %v8085
        %8436 = vmatprep.subr.mxu0 %v8094
        %8437 = vmatpush1.msra.mxu0 %v8093
        %8438 = vmatprep.subr.mxu0 %v8102
        %8439 = vmatpush1.msra.mxu0 %v8101
        %8440 = vmatprep.subr.mxu0 %v8110
        %8441 = vmatpush1.msra.mxu0 %v8109
        %8442 = vmatprep.subr.mxu0 %v8118
        %8443 = vmatpush1.msra.mxu0 %v8117
        %8444 = vmatprep.subr.mxu0 %v8126
        %8445 = vmatpush1.msra.mxu0 %v8125
        %8446 = vmatprep.subr.mxu0 %v8134
        %8447 = vmatpush1.msra.mxu0 %v8133
        %8448 = vmatprep.subr.mxu0 %v8142
        %8449 = vmatpush1.msra.mxu0 %v8141
        %8450 = vmatprep.subr.mxu0 %v8150
        %8451 = vmatpush1.msra.mxu0 %v8149
        %8452 = vmatprep.subr.mxu0 %v8158
        %8453 = vmatpush1.msra.mxu0 %v8157
        %8454 = vmatprep.subr.mxu0 %v8166
        %8455 = vmatpush1.msra.mxu0 %v8165
        %8456 = vmatprep.subr.mxu0 %v8174
        %8457 = vmatpush1.msra.mxu0 %v8173
        %8458 = vmatprep.subr.mxu0 %v8182
        %8459 = vmatpush1.msra.mxu0 %v8181
        %8460 = vmatprep.subr.mxu0 %v8190
        %8461 = vmatpush1.msra.mxu0 %v8189
        %8462 = vmatprep.subr.mxu0 %v8198
        %8463 = vmatpush1.msra.mxu0 %v8197
        %8464 = vmatprep.subr.mxu0 %v8206
        %8465 = vmatpush1.msra.mxu0 %v8205
        %8466 = vmatprep.subr.mxu0 %v8214
        %8467 = vmatpush1.msra.mxu0 %v8213
        %8468 = vmatprep.subr.mxu0 %v8222
        %8469 = vmatpush1.msra.mxu0 %v8221
        %8470 = vmatprep.subr.mxu0 0.0
        %8471 = vmatpush1.msra.mxu0 0.0
        %8472 = vmatprep.subr.mxu0 0.0
        %8473 = vmatpush1.msra.mxu0 0.0
        %8474 = vmatprep.subr.mxu0 0.0
        %8475 = vmatpush1.msra.mxu0 0.0
        %8476 = vmatprep.subr.mxu0 0.0
        %8477 = vmatpush1.msra.mxu0 0.0
        %8478 = vmatprep.subr.mxu0 0.0
        %8479 = vmatpush1.msra.mxu0 0.0
        %8480 = vmatprep.subr.mxu0 0.0
        %8481 = vmatpush1.msra.mxu0 0.0
        %8482 = vmatprep.subr.mxu0 0.0
        %8483 = vmatpush1.msra.mxu0 0.0
        %8484 = vmatprep.subr.mxu0 0.0
        %8485 = vmatpush1.msra.mxu0 0.0
        %8486 = vmatprep.subr.mxu0 0.0
        %8487 = vmatpush1.msra.mxu0 0.0
        %8488 = vmatprep.subr.mxu0 0.0
        %8489 = vmatpush1.msra.mxu0 0.0
        %8490 = vmatprep.subr.mxu0 0.0
        %8491 = vmatpush1.msra.mxu0 0.0
        %8492 = vmatprep.subr.mxu0 0.0
        %8493 = vmatpush1.msra.mxu0 0.0
        %8494 = vmatprep.mubr.f32.mxu0 %v8271
        %8495 = vmatmul.mubr.f32.gmra.mrb[0].mxu0 %v8058
        %v8496 = vpop.f32.mrb[0].mxu0
        %v8497 = vadd.f32 %v8248, %v8496
        %v8498 = vpop.f32.mrb[0].mxu0
        %v8499 = vadd.f32 %v8252, %v8498
        %8500 = vmatprep.mubr.f32.mxu0 %v8274
        %8501 = vmatmul.mubr.f32.gmra.mrb[0].mxu0 %v8060
        %v8502 = vpop.f32.mrb[0].mxu0
        %v8503 = vadd.f32 %v8248, %v8502
        %v8504 = vpop.f32.mrb[0].mxu0
        %v8505 = vadd.f32 %v8252, %v8504
        %8506 = vdwg.mxu0
        %8507 = vmatprep.subr.mxu0 %v8072
        %8508 = vmatpush1.msra.mxu0 %v8071
        %8509 = vmatprep.subr.mxu0 %v8080
        %8510 = vmatpush1.msra.mxu0 %v8079
        %8511 = vmatprep.subr.mxu0 %v8088
        %8512 = vmatpush1.msra.mxu0 %v8087
        %8513 = vmatprep.subr.mxu0 %v8096
        %8514 = vmatpush1.msra.mxu0 %v8095
        %8515 = vmatprep.subr.mxu0 %v8104
        %8516 = vmatpush1.msra.mxu0 %v8103
        %8517 = vmatprep.subr.mxu0 %v8112
        %8518 = vmatpush1.msra.mxu0 %v8111
        %8519 = vmatprep.subr.mxu0 %v8120
        %8520 = vmatpush1.msra.mxu0 %v8119
        %8521 = vmatprep.subr.mxu0 %v8128
        %8522 = vmatpush1.msra.mxu0 %v8127
        %8523 = vmatprep.subr.mxu0 %v8136
        %8524 = vmatpush1.msra.mxu0 %v8135
        %8525 = vmatprep.subr.mxu0 %v8144
        %8526 = vmatpush1.msra.mxu0 %v8143
        %8527 = vmatprep.subr.mxu0 %v8152
        %8528 = vmatpush1.msra.mxu0 %v8151
        %8529 = vmatprep.subr.mxu0 %v8160
        %8530 = vmatpush1.msra.mxu0 %v8159
        %8531 = vmatprep.subr.mxu0 %v8168
        %8532 = vmatpush1.msra.mxu0 %v8167
        %8533 = vmatprep.subr.mxu0 %v8176
        %8534 = vmatpush1.msra.mxu0 %v8175
        %8535 = vmatprep.subr.mxu0 %v8184
        %8536 = vmatpush1.msra.mxu0 %v8183
        %8537 = vmatprep.subr.mxu0 %v8192
        %8538 = vmatpush1.msra.mxu0 %v8191
        %8539 = vmatprep.subr.mxu0 %v8200
        %8540 = vmatpush1.msra.mxu0 %v8199
        %8541 = vmatprep.subr.mxu0 %v8208
        %8542 = vmatpush1.msra.mxu0 %v8207
        %8543 = vmatprep.subr.mxu0 %v8216
        %8544 = vmatpush1.msra.mxu0 %v8215
        %8545 = vmatprep.subr.mxu0 %v8224
        %8546 = vmatpush1.msra.mxu0 %v8223
        %8547 = vmatprep.subr.mxu0 0.0
        %8548 = vmatpush1.msra.mxu0 0.0
        %8549 = vmatprep.subr.mxu0 0.0
        %8550 = vmatpush1.msra.mxu0 0.0
        %8551 = vmatprep.subr.mxu0 0.0
        %8552 = vmatpush1.msra.mxu0 0.0
        %8553 = vmatprep.subr.mxu0 0.0
        %8554 = vmatpush1.msra.mxu0 0.0
        %8555 = vmatprep.subr.mxu0 0.0
        %8556 = vmatpush1.msra.mxu0 0.0
        %8557 = vmatprep.subr.mxu0 0.0
        %8558 = vmatpush1.msra.mxu0 0.0
        %8559 = vmatprep.subr.mxu0 0.0
        %8560 = vmatpush1.msra.mxu0 0.0
        %8561 = vmatprep.subr.mxu0 0.0
        %8562 = vmatpush1.msra.mxu0 0.0
        %8563 = vmatprep.subr.mxu0 0.0
        %8564 = vmatpush1.msra.mxu0 0.0
        %8565 = vmatprep.subr.mxu0 0.0
        %8566 = vmatpush1.msra.mxu0 0.0
        %8567 = vmatprep.subr.mxu0 0.0
        %8568 = vmatpush1.msra.mxu0 0.0
        %8569 = vmatprep.subr.mxu0 0.0
        %8570 = vmatpush1.msra.mxu0 0.0
        %8571 = vmatprep.mubr.f32.mxu0 %v8271
        %8572 = vmatmul.mubr.f32.gmra.mrb[0].mxu0 %v8058
        %v8573 = vpop.f32.mrb[0].mxu0
        %v8574 = vadd.f32 %v8256, %v8573
        %v8575 = vpop.f32.mrb[0].mxu0
        %v8576 = vadd.f32 %v8260, %v8575
        %8577 = vmatprep.mubr.f32.mxu0 %v8274
        %8578 = vmatmul.mubr.f32.gmra.mrb[0].mxu0 %v8060
        %v8579 = vpop.f32.mrb[0].mxu0
        %v8580 = vadd.f32 %v8256, %v8579
        %v8581 = vpop.f32.mrb[0].mxu0
        %v8582 = vadd.f32 %v8260, %v8581
        %8583 = vdwg.mxu0
        %s8584 = smul.u32 %s29, 128
        %s8585 = sld [smem:[#allocation3 + %s8584]]
        %vm8586 = vcmp.ge.f32.partialorder %v8343, 0.0
        %vm8587 = vcmp.ge.f32.partialorder %v8345, 0.0
        %vm8588 = vcmp.ge.f32.partialorder %v8420, 0.0
        %vm8589 = vcmp.ge.f32.partialorder %v8422, 0.0
        %vm8590 = vcmp.ge.f32.partialorder %v8497, 0.0
        %vm8591 = vcmp.ge.f32.partialorder %v8499, 0.0
        %vm8592 = vcmp.ge.f32.partialorder %v8574, 0.0
        %vm8593 = vcmp.ge.f32.partialorder %v8576, 0.0
        %vm8594 = vcmp.ge.f32.partialorder %v8349, 0.0
        %vm8595 = vcmp.ge.f32.partialorder %v8351, 0.0
        %vm8596 = vcmp.ge.f32.partialorder %v8426, 0.0
        %vm8597 = vcmp.ge.f32.partialorder %v8428, 0.0
        %vm8598 = vcmp.ge.f32.partialorder %v8503, 0.0
        %vm8599 = vcmp.ge.f32.partialorder %v8505, 0.0
        %vm8600 = vcmp.ge.f32.partialorder %v8580, 0.0
        %vm8601 = vcmp.ge.f32.partialorder %v8582, 0.0
        %v8602 = vstv %s8585
        %v8603 = vmul.f32 %v8602, %v8343
        %v8604 = vmul.f32 %v8602, %v8345
        %v8605 = vmul.f32 %v8602, %v8420
        %v8606 = vmul.f32 %v8602, %v8422
        %v8607 = vmul.f32 %v8602, %v8497
        %v8608 = vmul.f32 %v8602, %v8499
        %v8609 = vmul.f32 %v8602, %v8574
        %v8610 = vmul.f32 %v8602, %v8576
        %v8611 = vmul.f32 %v8602, %v8349
        %v8612 = vmul.f32 %v8602, %v8351
        %v8613 = vmul.f32 %v8602, %v8426
        %v8614 = vmul.f32 %v8602, %v8428
        %v8615 = vmul.f32 %v8602, %v8503
        %v8616 = vmul.f32 %v8602, %v8505
        %v8617 = vmul.f32 %v8602, %v8580
        %v8618 = vmul.f32 %v8602, %v8582
        %v8619 = vsel %vm8586, %v8343, %v8603
        %v8620 = vsel %vm8587, %v8345, %v8604
        %v8621 = vsel %vm8588, %v8420, %v8605
        %v8622 = vsel %vm8589, %v8422, %v8606
        %v8623 = vsel %vm8590, %v8497, %v8607
        %v8624 = vsel %vm8591, %v8499, %v8608
        %v8625 = vsel %vm8592, %v8574, %v8609
        %v8626 = vsel %vm8593, %v8576, %v8610
        %v8627 = vsel %vm8594, %v8349, %v8611
        %v8628 = vsel %vm8595, %v8351, %v8612
        %v8629 = vsel %vm8596, %v8426, %v8613
        %v8630 = vsel %vm8597, %v8428, %v8614
        %v8631 = vsel %vm8598, %v8503, %v8615
        %v8632 = vsel %vm8599, %v8505, %v8616
        %v8633 = vsel %vm8600, %v8580, %v8617
        %v8634 = vsel %vm8601, %v8582, %v8618
        %s8635 = smul.u32 %s29, 1024
        %s8636 = scalar_lea.vmem [#allocation18], %s8635
        %v8637 = vld [vmem:[%s8636] sm:$0xff]
        %v8638 = vld [vmem:[%s8636 + $0x8] sm:$0xff]
        %v8639 = vld [vmem:[%s8636 + $0x10] sm:$0xff]
        %v8640 = vld [vmem:[%s8636 + $0x18] sm:$0xff]
        %v8641 = vld [vmem:[%s8636 + $0x20] sm:$0xff]
        %v8642 = vld [vmem:[%s8636 + $0x28] sm:$0xff]
        %v8643 = vld [vmem:[%s8636 + $0x30] sm:$0xff]
        %v8644 = vld [vmem:[%s8636 + $0x38] sm:$0xff]
        %v8645 = vld [vmem:[%s8636 + $0x40] sm:$0xff]
        %v8646 = vld [vmem:[%s8636 + $0x48] sm:$0xff]
        %v8647 = vld [vmem:[%s8636 + $0x50] sm:$0xff]
        %v8648 = vld [vmem:[%s8636 + $0x58] sm:$0xff]
        %v8649 = vld [vmem:[%s8636 + $0x60] sm:$0xff]
        %v8650 = vld [vmem:[%s8636 + $0x68] sm:$0xff]
        %v8651 = vld [vmem:[%s8636 + $0x70] sm:$0xff]
        %v8652 = vld [vmem:[%s8636 + $0x78] sm:$0xff]
        %v8653 = vld [vmem:[%s8636 + $0x80] sm:$0xff]
        %v8654 = vld [vmem:[%s8636 + $0x88] sm:$0xff]
        %v8655 = vld [vmem:[%s8636 + $0x90] sm:$0xff]
        %v8656 = vld [vmem:[%s8636 + $0x98] sm:$0xff]
        %v8657 = vld [vmem:[%s8636 + $0xa0] sm:$0xff]
        %v8658 = vld [vmem:[%s8636 + $0xa8] sm:$0xff]
        %v8659 = vld [vmem:[%s8636 + $0xb0] sm:$0xff]
        %v8660 = vld [vmem:[%s8636 + $0xb8] sm:$0xff]
        %v8661 = vld [vmem:[%s8636 + $0xc0] sm:$0xff]
        %v8662 = vld [vmem:[%s8636 + $0xc8] sm:$0xff]
        %v8663 = vld [vmem:[%s8636 + $0xd0] sm:$0xff]
        %v8664 = vld [vmem:[%s8636 + $0xd8] sm:$0xff]
        %v8665 = vld [vmem:[%s8636 + $0xe0] sm:$0xff]
        %v8666 = vld [vmem:[%s8636 + $0xe8] sm:$0xff]
        %v8667 = vld [vmem:[%s8636 + $0xf0] sm:$0xff]
        %v8668 = vld [vmem:[%s8636 + $0xf8] sm:$0xff]
        %v8669 = vld [vmem:[%s8636 + $0x100] sm:$0xff]
        %v8670 = vld [vmem:[%s8636 + $0x108] sm:$0xff]
        %v8671 = vld [vmem:[%s8636 + $0x110] sm:$0xff]
        %v8672 = vld [vmem:[%s8636 + $0x118] sm:$0xff]
        %v8673 = vld [vmem:[%s8636 + $0x120] sm:$0xff]
        %v8674 = vld [vmem:[%s8636 + $0x128] sm:$0xff]
        %v8675 = vld [vmem:[%s8636 + $0x130] sm:$0xff]
        %v8676 = vld [vmem:[%s8636 + $0x138] sm:$0xff]
        %v8677 = vld [vmem:[%s8636 + $0x140] sm:$0xff]
        %v8678 = vld [vmem:[%s8636 + $0x148] sm:$0xff]
        %v8679 = vld [vmem:[%s8636 + $0x150] sm:$0xff]
        %v8680 = vld [vmem:[%s8636 + $0x158] sm:$0xff]
        %v8681 = vld [vmem:[%s8636 + $0x160] sm:$0xff]
        %v8682 = vld [vmem:[%s8636 + $0x168] sm:$0xff]
        %v8683 = vld [vmem:[%s8636 + $0x170] sm:$0xff]
        %v8684 = vld [vmem:[%s8636 + $0x178] sm:$0xff]
        %v8685 = vld [vmem:[%s8636 + $0x180] sm:$0xff]
        %v8686 = vld [vmem:[%s8636 + $0x188] sm:$0xff]
        %v8687 = vld [vmem:[%s8636 + $0x190] sm:$0xff]
        %v8688 = vld [vmem:[%s8636 + $0x198] sm:$0xff]
        %v8689 = vld [vmem:[%s8636 + $0x1a0] sm:$0xff]
        %v8690 = vld [vmem:[%s8636 + $0x1a8] sm:$0xff]
        %v8691 = vld [vmem:[%s8636 + $0x1b0] sm:$0xff]
        %v8692 = vld [vmem:[%s8636 + $0x1b8] sm:$0xff]
        %v8693 = vld [vmem:[%s8636 + $0x1c0] sm:$0xff]
        %v8694 = vld [vmem:[%s8636 + $0x1c8] sm:$0xff]
        %v8695 = vld [vmem:[%s8636 + $0x1d0] sm:$0xff]
        %v8696 = vld [vmem:[%s8636 + $0x1d8] sm:$0xff]
        %v8697 = vld [vmem:[%s8636 + $0x1e0] sm:$0xff]
        %v8698 = vld [vmem:[%s8636 + $0x1e8] sm:$0xff]
        %v8699 = vld [vmem:[%s8636 + $0x1f0] sm:$0xff]
        %v8700 = vld [vmem:[%s8636 + $0x1f8] sm:$0xff]
        %v8701 = vld [vmem:[%s8636 + $0x200] sm:$0xff]
        %v8702 = vld [vmem:[%s8636 + $0x208] sm:$0xff]
        %v8703 = vld [vmem:[%s8636 + $0x210] sm:$0xff]
        %v8704 = vld [vmem:[%s8636 + $0x218] sm:$0xff]
        %v8705 = vld [vmem:[%s8636 + $0x220] sm:$0xff]
        %v8706 = vld [vmem:[%s8636 + $0x228] sm:$0xff]
        %v8707 = vld [vmem:[%s8636 + $0x230] sm:$0xff]
        %v8708 = vld [vmem:[%s8636 + $0x238] sm:$0xff]
        %v8709 = vld [vmem:[%s8636 + $0x240] sm:$0xff]
        %v8710 = vld [vmem:[%s8636 + $0x248] sm:$0xff]
        %v8711 = vld [vmem:[%s8636 + $0x250] sm:$0xff]
        %v8712 = vld [vmem:[%s8636 + $0x258] sm:$0xff]
        %v8713 = vld [vmem:[%s8636 + $0x260] sm:$0xff]
        %v8714 = vld [vmem:[%s8636 + $0x268] sm:$0xff]
        %v8715 = vld [vmem:[%s8636 + $0x270] sm:$0xff]
        %v8716 = vld [vmem:[%s8636 + $0x278] sm:$0xff]
        %v8717 = vld [vmem:[%s8636 + $0x280] sm:$0xff]
        %v8718 = vld [vmem:[%s8636 + $0x288] sm:$0xff]
        %v8719 = vld [vmem:[%s8636 + $0x290] sm:$0xff]
        %v8720 = vld [vmem:[%s8636 + $0x298] sm:$0xff]
        %v8721 = vld [vmem:[%s8636 + $0x2a0] sm:$0xff]
        %v8722 = vld [vmem:[%s8636 + $0x2a8] sm:$0xff]
        %v8723 = vld [vmem:[%s8636 + $0x2b0] sm:$0xff]
        %v8724 = vld [vmem:[%s8636 + $0x2b8] sm:$0xff]
        %v8725 = vld [vmem:[%s8636 + $0x2c0] sm:$0xff]
        %v8726 = vld [vmem:[%s8636 + $0x2c8] sm:$0xff]
        %v8727 = vld [vmem:[%s8636 + $0x2d0] sm:$0xff]
        %v8728 = vld [vmem:[%s8636 + $0x2d8] sm:$0xff]
        %v8729 = vld [vmem:[%s8636 + $0x2e0] sm:$0xff]
        %v8730 = vld [vmem:[%s8636 + $0x2e8] sm:$0xff]
        %v8731 = vld [vmem:[%s8636 + $0x2f0] sm:$0xff]
        %v8732 = vld [vmem:[%s8636 + $0x2f8] sm:$0xff]
        %v8733 = vld [vmem:[%s8636 + $0x300] sm:$0xff]
        %v8734 = vld [vmem:[%s8636 + $0x308] sm:$0xff]
        %v8735 = vld [vmem:[%s8636 + $0x310] sm:$0xff]
        %v8736 = vld [vmem:[%s8636 + $0x318] sm:$0xff]
        %v8737 = vld [vmem:[%s8636 + $0x320] sm:$0xff]
        %v8738 = vld [vmem:[%s8636 + $0x328] sm:$0xff]
        %v8739 = vld [vmem:[%s8636 + $0x330] sm:$0xff]
        %v8740 = vld [vmem:[%s8636 + $0x338] sm:$0xff]
        %v8741 = vld [vmem:[%s8636 + $0x340] sm:$0xff]
        %v8742 = vld [vmem:[%s8636 + $0x348] sm:$0xff]
        %v8743 = vld [vmem:[%s8636 + $0x350] sm:$0xff]
        %v8744 = vld [vmem:[%s8636 + $0x358] sm:$0xff]
        %v8745 = vld [vmem:[%s8636 + $0x360] sm:$0xff]
        %v8746 = vld [vmem:[%s8636 + $0x368] sm:$0xff]
        %v8747 = vld [vmem:[%s8636 + $0x370] sm:$0xff]
        %v8748 = vld [vmem:[%s8636 + $0x378] sm:$0xff]
        %v8749 = vld [vmem:[%s8636 + $0x380] sm:$0xff]
        %v8750 = vld [vmem:[%s8636 + $0x388] sm:$0xff]
        %v8751 = vld [vmem:[%s8636 + $0x390] sm:$0xff]
        %v8752 = vld [vmem:[%s8636 + $0x398] sm:$0xff]
        %v8753 = vld [vmem:[%s8636 + $0x3a0] sm:$0xff]
        %v8754 = vld [vmem:[%s8636 + $0x3a8] sm:$0xff]
        %v8755 = vld [vmem:[%s8636 + $0x3b0] sm:$0xff]
        %v8756 = vld [vmem:[%s8636 + $0x3b8] sm:$0xff]
        %v8757 = vld [vmem:[%s8636 + $0x3c0] sm:$0xff]
        %v8758 = vld [vmem:[%s8636 + $0x3c8] sm:$0xff]
        %v8759 = vld [vmem:[%s8636 + $0x3d0] sm:$0xff]
        %v8760 = vld [vmem:[%s8636 + $0x3d8] sm:$0xff]
        %v8761 = vld [vmem:[%s8636 + $0x3e0] sm:$0xff]
        %v8762 = vld [vmem:[%s8636 + $0x3e8] sm:$0xff]
        %v8763 = vld [vmem:[%s8636 + $0x3f0] sm:$0xff]
        %v8764 = vld [vmem:[%s8636 + $0x3f8] sm:$0xff]
        %s8765 = scalar_lea.vmem [#allocation19], %s29
        %v8766 = vld [vmem:[%s8765] sm:$0x1]
        %v8768 = vlaneseq
        %v8769 = vshrl.u32 %v8768, 7
        %v8770 = vsub.s32 0, %v8769
        %v8771 = vrot.slane %v8766, %v8770
        %8773 = vmatprep.subr.mxu0 0.0
        %8774 = vmatpush1.msra.mxu0 %v8637
        %8775 = vmatprep.subr.mxu0 0.0
        %8776 = vmatpush1.msra.mxu0 %v8638
        %8777 = vmatprep.subr.mxu0 0.0
        %8778 = vmatpush1.msra.mxu0 %v8639
        %8779 = vmatprep.subr.mxu0 0.0
        %8780 = vmatpush1.msra.mxu0 %v8640
        %8781 = vmatprep.subr.mxu0 0.0
        %8782 = vmatpush1.msra.mxu0 %v8641
        %8783 = vmatprep.subr.mxu0 0.0
        %8784 = vmatpush1.msra.mxu0 %v8642
        %8785 = vmatprep.subr.mxu0 0.0
        %8786 = vmatpush1.msra.mxu0 %v8643
        %8787 = vmatprep.subr.mxu0 0.0
        %8788 = vmatpush1.msra.mxu0 %v8644
        %8789 = vmatprep.subr.mxu0 0.0
        %8790 = vmatpush1.msra.mxu0 %v8645
        %8791 = vmatprep.subr.mxu0 0.0
        %8792 = vmatpush1.msra.mxu0 %v8646
        %8793 = vmatprep.subr.mxu0 0.0
        %8794 = vmatpush1.msra.mxu0 %v8647
        %8795 = vmatprep.subr.mxu0 0.0
        %8796 = vmatpush1.msra.mxu0 %v8648
        %8797 = vmatprep.subr.mxu0 0.0
        %8798 = vmatpush1.msra.mxu0 %v8649
        %8799 = vmatprep.subr.mxu0 0.0
        %8800 = vmatpush1.msra.mxu0 %v8650
        %8801 = vmatprep.subr.mxu0 0.0
        %8802 = vmatpush1.msra.mxu0 %v8651
        %8803 = vmatprep.subr.mxu0 0.0
        %8804 = vmatpush1.msra.mxu0 %v8652
        %8805 = vmatprep.subr.mxu0 0.0
        %8806 = vmatpush1.msra.mxu0 %v8653
        %8807 = vmatprep.subr.mxu0 0.0
        %8808 = vmatpush1.msra.mxu0 %v8654
        %8809 = vmatprep.subr.mxu0 0.0
        %8810 = vmatpush1.msra.mxu0 %v8655
        %8811 = vmatprep.subr.mxu0 0.0
        %8812 = vmatpush1.msra.mxu0 %v8656
        %8813 = vmatprep.subr.mxu0 0.0
        %8814 = vmatpush1.msra.mxu0 %v8657
        %8815 = vmatprep.subr.mxu0 0.0
        %8816 = vmatpush1.msra.mxu0 %v8658
        %8817 = vmatprep.subr.mxu0 0.0
        %8818 = vmatpush1.msra.mxu0 %v8659
        %8819 = vmatprep.subr.mxu0 0.0
        %8820 = vmatpush1.msra.mxu0 %v8660
        %8821 = vmatprep.subr.mxu0 0.0
        %8822 = vmatpush1.msra.mxu0 %v8661
        %8823 = vmatprep.subr.mxu0 0.0
        %8824 = vmatpush1.msra.mxu0 %v8662
        %8825 = vmatprep.subr.mxu0 0.0
        %8826 = vmatpush1.msra.mxu0 %v8663
        %8827 = vmatprep.subr.mxu0 0.0
        %8828 = vmatpush1.msra.mxu0 %v8664
        %8829 = vmatprep.subr.mxu0 0.0
        %8830 = vmatpush1.msra.mxu0 %v8665
        %8831 = vmatprep.subr.mxu0 0.0
        %8832 = vmatpush1.msra.mxu0 %v8666
        %8833 = vmatprep.subr.mxu0 0.0
        %8834 = vmatpush1.msra.mxu0 %v8667
        %8835 = vmatprep.subr.mxu0 0.0
        %8836 = vmatpush1.msra.mxu0 %v8668
        %8837 = vmatprep.mubr.f32.mxu0 %v8620
        %8838 = vmatmul.mubr.f32.gmra.mrb[0].mxu0 %v8619
        %v8839 = vpop.f32.mrb[0].mxu0
        %v8840 = vadd.f32 %v8771, %v8839
        %v8841 = vpop.f32.mrb[0].mxu0
        %8842 = vmatprep.mubr.f32.mxu0 %v8628
        %8843 = vmatmul.mubr.f32.gmra.mrb[0].mxu0 %v8627
        %v8844 = vpop.f32.mrb[0].mxu0
        %v8845 = vadd.f32 %v8771, %v8844
        %v8846 = vpop.f32.mrb[0].mxu0
        %8847 = vdwg.mxu0
        %8848 = vmatprep.subr.mxu0 0.0
        %8849 = vmatpush1.msra.mxu0 %v8669
        %8850 = vmatprep.subr.mxu0 0.0
        %8851 = vmatpush1.msra.mxu0 %v8670
        %8852 = vmatprep.subr.mxu0 0.0
        %8853 = vmatpush1.msra.mxu0 %v8671
        %8854 = vmatprep.subr.mxu0 0.0
        %8855 = vmatpush1.msra.mxu0 %v8672
        %8856 = vmatprep.subr.mxu0 0.0
        %8857 = vmatpush1.msra.mxu0 %v8673
        %8858 = vmatprep.subr.mxu0 0.0
        %8859 = vmatpush1.msra.mxu0 %v8674
        %8860 = vmatprep.subr.mxu0 0.0
        %8861 = vmatpush1.msra.mxu0 %v8675
        %8862 = vmatprep.subr.mxu0 0.0
        %8863 = vmatpush1.msra.mxu0 %v8676
        %8864 = vmatprep.subr.mxu0 0.0
        %8865 = vmatpush1.msra.mxu0 %v8677
        %8866 = vmatprep.subr.mxu0 0.0
        %8867 = vmatpush1.msra.mxu0 %v8678
        %8868 = vmatprep.subr.mxu0 0.0
        %8869 = vmatpush1.msra.mxu0 %v8679
        %8870 = vmatprep.subr.mxu0 0.0
        %8871 = vmatpush1.msra.mxu0 %v8680
        %8872 = vmatprep.subr.mxu0 0.0
        %8873 = vmatpush1.msra.mxu0 %v8681
        %8874 = vmatprep.subr.mxu0 0.0
        %8875 = vmatpush1.msra.mxu0 %v8682
        %8876 = vmatprep.subr.mxu0 0.0
        %8877 = vmatpush1.msra.mxu0 %v8683
        %8878 = vmatprep.subr.mxu0 0.0
        %8879 = vmatpush1.msra.mxu0 %v8684
        %8880 = vmatprep.subr.mxu0 0.0
        %8881 = vmatpush1.msra.mxu0 %v8685
        %8882 = vmatprep.subr.mxu0 0.0
        %8883 = vmatpush1.msra.mxu0 %v8686
        %8884 = vmatprep.subr.mxu0 0.0
        %8885 = vmatpush1.msra.mxu0 %v8687
        %8886 = vmatprep.subr.mxu0 0.0
        %8887 = vmatpush1.msra.mxu0 %v8688
        %8888 = vmatprep.subr.mxu0 0.0
        %8889 = vmatpush1.msra.mxu0 %v8689
        %8890 = vmatprep.subr.mxu0 0.0
        %8891 = vmatpush1.msra.mxu0 %v8690
        %8892 = vmatprep.subr.mxu0 0.0
        %8893 = vmatpush1.msra.mxu0 %v8691
        %8894 = vmatprep.subr.mxu0 0.0
        %8895 = vmatpush1.msra.mxu0 %v8692
        %8896 = vmatprep.subr.mxu0 0.0
        %8897 = vmatpush1.msra.mxu0 %v8693
        %8898 = vmatprep.subr.mxu0 0.0
        %8899 = vmatpush1.msra.mxu0 %v8694
        %8900 = vmatprep.subr.mxu0 0.0
        %8901 = vmatpush1.msra.mxu0 %v8695
        %8902 = vmatprep.subr.mxu0 0.0
        %8903 = vmatpush1.msra.mxu0 %v8696
        %8904 = vmatprep.subr.mxu0 0.0
        %8905 = vmatpush1.msra.mxu0 %v8697
        %8906 = vmatprep.subr.mxu0 0.0
        %8907 = vmatpush1.msra.mxu0 %v8698
        %8908 = vmatprep.subr.mxu0 0.0
        %8909 = vmatpush1.msra.mxu0 %v8699
        %8910 = vmatprep.subr.mxu0 0.0
        %8911 = vmatpush1.msra.mxu0 %v8700
        %8912 = vmatprep.mubr.f32.mxu0 %v8622
        %8913 = vmatmul.mubr.f32.gmra.mrb[0].mxu0 %v8621
        %v8914 = vpop.f32.mrb[0].mxu0
        %v8915 = vadd.f32 %v8840, %v8914
        %v8916 = vpop.f32.mrb[0].mxu0
        %8917 = vmatprep.mubr.f32.mxu0 %v8630
        %8918 = vmatmul.mubr.f32.gmra.mrb[0].mxu0 %v8629
        %v8919 = vpop.f32.mrb[0].mxu0
        %v8920 = vadd.f32 %v8845, %v8919
        %v8921 = vpop.f32.mrb[0].mxu0
        %8922 = vdwg.mxu0
        %8923 = vmatprep.subr.mxu0 0.0
        %8924 = vmatpush1.msra.mxu0 %v8701
        %8925 = vmatprep.subr.mxu0 0.0
        %8926 = vmatpush1.msra.mxu0 %v8702
        %8927 = vmatprep.subr.mxu0 0.0
        %8928 = vmatpush1.msra.mxu0 %v8703
        %8929 = vmatprep.subr.mxu0 0.0
        %8930 = vmatpush1.msra.mxu0 %v8704
        %8931 = vmatprep.subr.mxu0 0.0
        %8932 = vmatpush1.msra.mxu0 %v8705
        %8933 = vmatprep.subr.mxu0 0.0
        %8934 = vmatpush1.msra.mxu0 %v8706
        %8935 = vmatprep.subr.mxu0 0.0
        %8936 = vmatpush1.msra.mxu0 %v8707
        %8937 = vmatprep.subr.mxu0 0.0
        %8938 = vmatpush1.msra.mxu0 %v8708
        %8939 = vmatprep.subr.mxu0 0.0
        %8940 = vmatpush1.msra.mxu0 %v8709
        %8941 = vmatprep.subr.mxu0 0.0
        %8942 = vmatpush1.msra.mxu0 %v8710
        %8943 = vmatprep.subr.mxu0 0.0
        %8944 = vmatpush1.msra.mxu0 %v8711
        %8945 = vmatprep.subr.mxu0 0.0
        %8946 = vmatpush1.msra.mxu0 %v8712
        %8947 = vmatprep.subr.mxu0 0.0
        %8948 = vmatpush1.msra.mxu0 %v8713
        %8949 = vmatprep.subr.mxu0 0.0
        %8950 = vmatpush1.msra.mxu0 %v8714
        %8951 = vmatprep.subr.mxu0 0.0
        %8952 = vmatpush1.msra.mxu0 %v8715
        %8953 = vmatprep.subr.mxu0 0.0
        %8954 = vmatpush1.msra.mxu0 %v8716
        %8955 = vmatprep.subr.mxu0 0.0
        %8956 = vmatpush1.msra.mxu0 %v8717
        %8957 = vmatprep.subr.mxu0 0.0
        %8958 = vmatpush1.msra.mxu0 %v8718
        %8959 = vmatprep.subr.mxu0 0.0
        %8960 = vmatpush1.msra.mxu0 %v8719
        %8961 = vmatprep.subr.mxu0 0.0
        %8962 = vmatpush1.msra.mxu0 %v8720
        %8963 = vmatprep.subr.mxu0 0.0
        %8964 = vmatpush1.msra.mxu0 %v8721
        %8965 = vmatprep.subr.mxu0 0.0
        %8966 = vmatpush1.msra.mxu0 %v8722
        %8967 = vmatprep.subr.mxu0 0.0
        %8968 = vmatpush1.msra.mxu0 %v8723
        %8969 = vmatprep.subr.mxu0 0.0
        %8970 = vmatpush1.msra.mxu0 %v8724
        %8971 = vmatprep.subr.mxu0 0.0
        %8972 = vmatpush1.msra.mxu0 %v8725
        %8973 = vmatprep.subr.mxu0 0.0
        %8974 = vmatpush1.msra.mxu0 %v8726
        %8975 = vmatprep.subr.mxu0 0.0
        %8976 = vmatpush1.msra.mxu0 %v8727
        %8977 = vmatprep.subr.mxu0 0.0
        %8978 = vmatpush1.msra.mxu0 %v8728
        %8979 = vmatprep.subr.mxu0 0.0
        %8980 = vmatpush1.msra.mxu0 %v8729
        %8981 = vmatprep.subr.mxu0 0.0
        %8982 = vmatpush1.msra.mxu0 %v8730
        %8983 = vmatprep.subr.mxu0 0.0
        %8984 = vmatpush1.msra.mxu0 %v8731
        %8985 = vmatprep.subr.mxu0 0.0
        %8986 = vmatpush1.msra.mxu0 %v8732
        %8987 = vmatprep.mubr.f32.mxu0 %v8624
        %8988 = vmatmul.mubr.f32.gmra.mrb[0].mxu0 %v8623
        %v8989 = vpop.f32.mrb[0].mxu0
        %v8990 = vadd.f32 %v8915, %v8989
        %v8991 = vpop.f32.mrb[0].mxu0
        %8992 = vmatprep.mubr.f32.mxu0 %v8632
        %8993 = vmatmul.mubr.f32.gmra.mrb[0].mxu0 %v8631
        %v8994 = vpop.f32.mrb[0].mxu0
        %v8995 = vadd.f32 %v8920, %v8994
        %v8996 = vpop.f32.mrb[0].mxu0
        %8997 = vdwg.mxu0
        %8998 = vmatprep.subr.mxu0 0.0
        %8999 = vmatpush1.msra.mxu0 %v8733
        %9000 = vmatprep.subr.mxu0 0.0
        %9001 = vmatpush1.msra.mxu0 %v8734
        %9002 = vmatprep.subr.mxu0 0.0
        %9003 = vmatpush1.msra.mxu0 %v8735
        %9004 = vmatprep.subr.mxu0 0.0
        %9005 = vmatpush1.msra.mxu0 %v8736
        %9006 = vmatprep.subr.mxu0 0.0
        %9007 = vmatpush1.msra.mxu0 %v8737
        %9008 = vmatprep.subr.mxu0 0.0
        %9009 = vmatpush1.msra.mxu0 %v8738
        %9010 = vmatprep.subr.mxu0 0.0
        %9011 = vmatpush1.msra.mxu0 %v8739
        %9012 = vmatprep.subr.mxu0 0.0
        %9013 = vmatpush1.msra.mxu0 %v8740
        %9014 = vmatprep.subr.mxu0 0.0
        %9015 = vmatpush1.msra.mxu0 %v8741
        %9016 = vmatprep.subr.mxu0 0.0
        %9017 = vmatpush1.msra.mxu0 %v8742
        %9018 = vmatprep.subr.mxu0 0.0
        %9019 = vmatpush1.msra.mxu0 %v8743
        %9020 = vmatprep.subr.mxu0 0.0
        %9021 = vmatpush1.msra.mxu0 %v8744
        %9022 = vmatprep.subr.mxu0 0.0
        %9023 = vmatpush1.msra.mxu0 %v8745
        %9024 = vmatprep.subr.mxu0 0.0
        %9025 = vmatpush1.msra.mxu0 %v8746
        %9026 = vmatprep.subr.mxu0 0.0
        %9027 = vmatpush1.msra.mxu0 %v8747
        %9028 = vmatprep.subr.mxu0 0.0
        %9029 = vmatpush1.msra.mxu0 %v8748
        %9030 = vmatprep.subr.mxu0 0.0
        %9031 = vmatpush1.msra.mxu0 %v8749
        %9032 = vmatprep.subr.mxu0 0.0
        %9033 = vmatpush1.msra.mxu0 %v8750
        %9034 = vmatprep.subr.mxu0 0.0
        %9035 = vmatpush1.msra.mxu0 %v8751
        %9036 = vmatprep.subr.mxu0 0.0
        %9037 = vmatpush1.msra.mxu0 %v8752
        %9038 = vmatprep.subr.mxu0 0.0
        %9039 = vmatpush1.msra.mxu0 %v8753
        %9040 = vmatprep.subr.mxu0 0.0
        %9041 = vmatpush1.msra.mxu0 %v8754
        %9042 = vmatprep.subr.mxu0 0.0
        %9043 = vmatpush1.msra.mxu0 %v8755
        %9044 = vmatprep.subr.mxu0 0.0
        %9045 = vmatpush1.msra.mxu0 %v8756
        %9046 = vmatprep.subr.mxu0 0.0
        %9047 = vmatpush1.msra.mxu0 %v8757
        %9048 = vmatprep.subr.mxu0 0.0
        %9049 = vmatpush1.msra.mxu0 %v8758
        %9050 = vmatprep.subr.mxu0 0.0
        %9051 = vmatpush1.msra.mxu0 %v8759
        %9052 = vmatprep.subr.mxu0 0.0
        %9053 = vmatpush1.msra.mxu0 %v8760
        %9054 = vmatprep.subr.mxu0 0.0
        %9055 = vmatpush1.msra.mxu0 %v8761
        %9056 = vmatprep.subr.mxu0 0.0
        %9057 = vmatpush1.msra.mxu0 %v8762
        %9058 = vmatprep.subr.mxu0 0.0
        %9059 = vmatpush1.msra.mxu0 %v8763
        %9060 = vmatprep.subr.mxu0 0.0
        %9061 = vmatpush1.msra.mxu0 %v8764
        %9062 = vmatprep.mubr.f32.mxu0 %v8626
        %9063 = vmatmul.mubr.f32.gmra.mrb[0].mxu0 %v8625
        %v9064 = vpop.f32.mrb[0].mxu0
        %v9065 = vadd.f32 %v8990, %v9064
        %v9066 = vpop.f32.mrb[0].mxu0
        %9067 = vmatprep.mubr.f32.mxu0 %v8634
        %9068 = vmatmul.mubr.f32.gmra.mrb[0].mxu0 %v8633
        %v9069 = vpop.f32.mrb[0].mxu0
        %v9070 = vadd.f32 %v8995, %v9069
        %v9071 = vpop.f32.mrb[0].mxu0
        %9072 = vdwg.mxu0
        %s9073 = sadd.s32 %s8584, 1
        %s9074 = sld [smem:[#allocation3 + %s9073]]
        %vm9075 = vcmp.ge.f32.partialorder %v9065, 0.0
        %vm9076 = vcmp.ge.f32.partialorder %v9070, 0.0
        %v9077 = vstv %s9074
        %v9078 = vmul.f32 %v9077, %v9065
        %v9079 = vmul.f32 %v9077, %v9070
        %v9080 = vsel %vm9075, %v9065, %v9078
        %v9081 = vsel %vm9076, %v9070, %v9079
        %v9082 = vadd.f32 %v9080, %v565
        %v9083 = vadd.f32 %v9081, %v566
        %v9084 = vsel %vm585, %v9082, 0.0
        %9085 = vadd.xlane.f32.xlu0 %v9084
        %v9086 = vpop.xlane.xlu0 %9085
        %v9087 = vsel %vm585, %v9083, 0.0
        %9088 = vadd.xlane.f32.xlu0 %v9087
        %v9089 = vpop.xlane.xlu0 %9088
        %v9090 = vrcp.pop 40.0
        %v9091 = vmul.f32 %v9086, %v9090
        %v9092 = vmul.f32 %v9089, %v9090
        %v9093 = vsub.f32 %v9082, %v9091
        %v9094 = vsub.f32 %v9083, %v9092
        %v9095 = vmul.f32 %v9093, %v9093
        %v9096 = vmul.f32 %v9094, %v9094
        %v9097 = vsel %vm585, %v9095, 0.0
        %9098 = vadd.xlane.f32.xlu0 %v9097
        %v9099 = vpop.xlane.xlu0 %9098
        %v9100 = vsel %vm585, %v9096, 0.0
        %9101 = vadd.xlane.f32.xlu0 %v9100
        %v9102 = vpop.xlane.xlu0 %9101
        %v9103 = vmul.f32 %v9099, %v9090
        %v9104 = vmul.f32 %v9102, %v9090
        %v9105 = vadd.f32 %v9103, 1e-05
        %v9106 = vadd.f32 %v9104, 1e-05
        %v9107 = vrsqrt.pop %v9105
        %v9108 = vrsqrt.pop %v9106
        %v9109 = vmul.f32 %v9093, %v9107
        %v9110 = vmul.f32 %v9094, %v9108
        %9111 = vst.msk [vmem:[%s526] sm:$0xff] %vm585, %v9109
        %9112 = vst.msk [vmem:[%s526 + $0x8] sm:$0xff] %vm585, %v9110
        %p9113 = scmp.lt.s32.totalorder %s29, 3
        %s9114 = scalar_select %p9113, %s29, 3
        %s9115 = smul.addr %s9114, 2
        %s9116 = smul.addr %s9115, 8
        %s9117 = scalar_lea.vmem %s11, %s9116
        // Predicated region
        $region109: #{utility_layer.1} parent=63 // pred_check
          %p9118 = pneg %p278
        $region110: #{utility_layer.1} parent=63 // pred_check_branch
          %9120 = sbr.rel (%p9118) target = $region112
        $region111: #{utility_layer.1} parent=63 // pred_region
          _
        $region112: #{utility_layer.1} parent=63 // pred_fallthru
          _
      $region64: #{utility_layer.1} parent=5 // pred_fallthru
        _
      %p9121 = scmp.le.s32.totalorder 2, %s24
      // Predicated region
      $region113: #{utility_layer.1} parent=5 // pred_check
        %p9122 = pneg %p9121
      $region114: #{utility_layer.1} parent=5 // pred_check_branch
        %9124 = sbr.rel (%p9122) target = $region116
      $region115: #{utility_layer.1} parent=5 // pred_region
        %s9125 = ssub.s32 %s24, 2
        // Predicated region
        $region117: #{utility_layer.1} parent=115 // pred_check
          %p9126 = pneg %p284
        $region118: #{utility_layer.1} parent=115 // pred_check_branch
          %9128 = sbr.rel (%p9126) target = $region120
        $region119: #{utility_layer.1} parent=115 // pred_region
          %p9129 = scmp.lt.s32.totalorder %s30, 3
          %s9130 = scalar_select %p9129, %s30, 3
          %s9131 = smul.addr %s9130, 2
          %s9132 = smul.addr %s9131, 8
          %s9133 = scalar_lea.vmem %s11, %s9132
        $region120: #{utility_layer.1} parent=115 // pred_fallthru
          _
      $region116: #{utility_layer.1} parent=5 // pred_fallthru
        _
    $region6: #{utility_layer.1} parent=1 // loop_footer
      %s28 = sadd.s32 1, %s24
    $region7: #{utility_layer.1} parent=1 // loop_footer_branch
      %23 = sbr.rel target = $region3
    $region8: #{utility_layer.1} parent=1 // loop_exit
      _
    %9134 = vsyncpa [#allocation4], 1
    %s9135 = scalar_lea.sflag [#allocation4], 1
    %9136 = vsyncpa %s9135, 1
    %9137 = vsyncpa [#allocation8], 1
    %9138 = vsyncpa [#allocation11], 1
    %9139 = vsyncpa [#allocation14], 1
    %9140 = vsyncpa [#allocation17], 1
    %9141 = vsyncpa [#allocation20], 1
    %9142 = vsyncpa [#allocation5], 1
    %s9143 = scalar_lea.sflag [#allocation5], 1
    %9144 = vsyncpa %s9143, 1

</llo_original>
